<compile_context>
chip_gen: v7x
topology: tpu7x:2x2x1
jax: 0.10.0
libtpu: 0.0.40
codegen_flags: <defaults>
</compile_context>

<pallas_src>
import math

import jax
import jax.numpy as jnp
from jax.experimental import pallas as pl
from jax.experimental.pallas import tpu as pltpu

# Logical (PyTorch) dimensions.
IN_FEATURES = 4096      # linear1 in_features
H1 = 1000               # linear1 out_features / bn1 features
H2 = 100                # linear2 out_features / bn2 features

# Lane-padded dimensions (multiples of 128).
H1_PAD = 1024
H2_PAD = 128

# K-axis chunk of the layer-1 contraction (grid = IN_FEATURES // TK steps).
TK = 2048

_BN_EPS = 1e-5
_LEAKY_SLOPE = 0.01     # PyTorch F.leaky_relu default negative_slope


def _shallow2_kernel(x_ref, w1_ref, p1_ref, w2_ref, p2_ref, y_ref, z1_acc):
    """Shallow2 forward; layer-1 contraction tiled over the K grid axis.

    p*_ref pack [bias; gamma; beta] rows as a (3, F_pad) f32 array. Padded feature
    columns carry zero weight/bias/gamma/beta, so they stay exactly 0 through
    BN + LeakyReLU and never contaminate the next layer.
    """
    k = pl.program_id(0)

    @pl.when(k == 0)
    def _():
        z1_acc[...] = jnp.zeros_like(z1_acc)

    # Accumulate this K-chunk of x @ w1 (bf16 operands, f32 accumulation on the MXU).
    z1_acc[...] += jnp.dot(x_ref[...], w1_ref[...],
                           preferred_element_type=jnp.float32)

    @pl.when(k == pl.num_programs(0) - 1)
    def _():
        def bias_bn_lrelu(z, p):
            bias, gamma, beta = p[0:1, :], p[1:2, :], p[2:3, :]
            z = z + bias
            # BatchNorm1d training-mode forward: batch mean, *biased* variance, eps=1e-5.
            mean = jnp.mean(z, axis=0, keepdims=True)
            var = jnp.mean(jnp.square(z - mean), axis=0, keepdims=True)
            z_bn = gamma * ((z - mean) * jax.lax.rsqrt(var + _BN_EPS)) + beta
            # LeakyReLU(0.01)
            return jnp.where(z_bn >= 0.0, z_bn, _LEAKY_SLOPE * z_bn)

        h1 = bias_bn_lrelu(z1_acc[...], p1_ref[...])
        # F.dropout(..., training=False) is the identity -> nothing to emit.
        z2 = jnp.dot(h1.astype(jnp.bfloat16), w2_ref[...],
                     preferred_element_type=jnp.float32)
        # Lane-dense (B, 128) store; wrapper slices back to the logical 100 columns.
        y_ref[...] = bias_bn_lrelu(z2, p2_ref[...])


def shallow2_forward(x, params):
    """x: (B, 4096) f32; params = (w1_bf16, p1_f32, w2_bf16, p2_f32). Returns (B, 100) f32."""
    w1, p1, w2, p2 = params
    B = x.shape[0]
    assert B > 1, "BatchNorm1d training-mode forward needs batch > 1 (var=0 blow-up at B=1)"
    assert IN_FEATURES % TK == 0

    x_bf16 = x.astype(jnp.bfloat16)
    n_k = IN_FEATURES // TK

    cost = pl.CostEstimate(
        flops=2 * B * (IN_FEATURES * H1_PAD + H1_PAD * H2_PAD),
        transcendentals=H1_PAD + H2_PAD,  # rsqrt per BN feature column
        bytes_accessed=(x_bf16.size * 2 + w1.size * 2 + w2.size * 2
                        + p1.size * 4 + p2.size * 4 + B * H2_PAD * 4),
    )

    y_pad = pl.pallas_call(
        _shallow2_kernel,
        out_shape=jax.ShapeDtypeStruct((B, H2_PAD), jnp.float32),
        grid_spec=pltpu.PrefetchScalarGridSpec(
            num_scalar_prefetch=0,
            grid=(n_k,),
            in_specs=[
                pl.BlockSpec((B, TK), lambda k: (0, k)),          # x chunk
                pl.BlockSpec((TK, H1_PAD), lambda k: (k, 0)),     # w1 chunk (double-buffered)
                pl.BlockSpec((3, H1_PAD), lambda k: (0, 0)),      # [bias;gamma;beta] layer 1
                pl.BlockSpec((H1_PAD, H2_PAD), lambda k: (0, 0)), # w2 (resident)
                pl.BlockSpec((3, H2_PAD), lambda k: (0, 0)),      # [bias;gamma;beta] layer 2
            ],
            out_specs=pl.BlockSpec((B, H2_PAD), lambda k: (0, 0)),
            scratch_shapes=[pltpu.VMEM((B, H1_PAD), jnp.float32)],
        ),
        compiler_params=pltpu.CompilerParams(
            dimension_semantics=("arbitrary",),
            # Tiled bf16 footprint is ~9 MiB; keep headroom but stay far under v7x's
            # 64 MiB physical VMEM (and above v5e's 16 MiB default scoped limit).
            vmem_limit_bytes=16 * 1024 * 1024,
        ),
        cost_estimate=cost,
    )(x_bf16, w1, p1, w2, p2)
    return y_pad[:, :H2]


def init_params(key):
    """Deterministic synthetic parameters matching the module's shapes, padded+packed.

    Linear: weight/bias ~ U(-1/sqrt(fan_in), 1/sqrt(fan_in)) (PyTorch default bound).
    BatchNorm1d: gamma=1, beta=0. Padded columns / rows are zero (gamma padding is 0
    too) so padding lanes stay exactly zero through the whole network.
    Weights are stored bf16 (HBM-traffic dominated kernel); packed bias/gamma/beta
    stay f32 (tiny, and keeps BN math in full precision).
    """
    def layer(k, fan_in, fan_out, in_pad, out_pad):
        kw, kb = jax.random.split(k)
        bound = 1.0 / math.sqrt(fan_in)
        w = jax.random.uniform(kw, (fan_in, fan_out), jnp.float32, -bound, bound)
        b = jax.random.uniform(kb, (fan_out,), jnp.float32, -bound, bound)
        w_pad = jnp.zeros((in_pad, out_pad), jnp.float32).at[:fan_in, :fan_out].set(w)
        w_pad = w_pad.astype(jnp.bfloat16)
        p = jnp.zeros((3, out_pad), jnp.float32)
        p = p.at[0, :fan_out].set(b)      # bias
        p = p.at[1, :fan_out].set(1.0)    # gamma
        # beta row stays zero
        return w_pad, p

    k1, k2 = jax.random.split(key)
    w1, p1 = layer(k1, IN_FEATURES, H1, IN_FEATURES, H1_PAD)
    w2, p2 = layer(k2, H1, H2, H1_PAD, H2_PAD)
    return (w1, p1, w2, p2)


def shallow2_reference(x, params):
    """Pure-JAX reference of the same forward on the padded/packed (bf16-weight) params."""
    w1, p1, w2, p2 = params

    def layer(h, w, p):
        z = jnp.dot(h.astype(jnp.bfloat16), w,
                    preferred_element_type=jnp.float32) + p[0:1, :]
        mean = jnp.mean(z, axis=0, keepdims=True)
        var = jnp.mean((z - mean) ** 2, axis=0, keepdims=True)
        z_bn = p[1:2, :] * ((z - mean) * jax.lax.rsqrt(var + _BN_EPS)) + p[2:3, :]
        return jnp.where(z_bn >= 0.0, z_bn, _LEAKY_SLOPE * z_bn)

    h = layer(x, w1, p1)
    h = layer(h, w2, p2)
    return h[:, :H2]


if __name__ == "__main__":
    key = jax.random.PRNGKey(0)
    B = 8  # small batch (>1 so BatchNorm batch statistics are well defined)

    k_x, k_p = jax.random.split(key)
    x = jax.random.normal(k_x, (B, IN_FEATURES), jnp.float32)
    params = init_params(k_p)

    y = jax.jit(shallow2_forward)(x, params)
    y = jax.block_until_ready(y)

    assert y.shape == (B, H2), y.shape
    assert bool(jnp.all(jnp.isfinite(y))), "non-finite output"

    y_ref = shallow2_reference(x, params)
    max_err = float(jnp.max(jnp.abs(y - y_ref)))
    assert bool(jnp.allclose(y, y_ref, rtol=2e-3, atol=2e-3)), f"mismatch vs ref: {max_err}"

    print("KERNEL_OK")
</pallas_src>

<mosaic_0001>
module attributes {stable_mosaic.version = 11 : i64} {
  func.func @_shallow2_kernel(%arg0: i32, %arg1: memref<8x2048xbf16, #tpu.memory_space<vmem>>, %arg2: memref<2048x1024xbf16, #tpu.memory_space<vmem>>, %arg3: memref<3x1024xf32, #tpu.memory_space<vmem>>, %arg4: memref<1024x128xbf16, #tpu.memory_space<vmem>>, %arg5: memref<3x128xf32, #tpu.memory_space<vmem>>, %arg6: memref<8x128xf32, #tpu.memory_space<vmem>>, %arg7: memref<8x1024xf32, #tpu.memory_space<vmem>>) attributes {dimension_semantics = [#tpu.dimension_semantics<arbitrary>], iteration_bounds = array<i64: 2>, scalar_prefetch = 0 : i64, scratch_operands = 1 : i64, tpu.core_type = #tpu.core_type<tc>, window_params = [{transform_indices = @transform_0, window_bounds = array<i64: 8, 2048>}, {transform_indices = @transform_1, window_bounds = array<i64: 2048, 1024>}, {pipeline_mode = #tpu.pipeline_mode<synchronous>, transform_indices = @transform_2, window_bounds = array<i64: 3, 1024>}, {pipeline_mode = #tpu.pipeline_mode<synchronous>, transform_indices = @transform_3, window_bounds = array<i64: 1024, 128>}, {pipeline_mode = #tpu.pipeline_mode<synchronous>, transform_indices = @transform_4, window_bounds = array<i64: 3, 128>}, {pipeline_mode = #tpu.pipeline_mode<synchronous>, transform_indices = @transform_5, window_bounds = array<i64: 8, 128>}]} {
    %c0_i32 = arith.constant 0 : i32
    %0 = arith.cmpi eq, %arg0, %c0_i32 : i32
    %1 = arith.extui %0 : i1 to i32
    %c0_i32_0 = arith.constant 0 : i32
    %2 = arith.cmpi ne, %1, %c0_i32_0 : i32
    scf.if %2 {
      %cst_9 = arith.constant 0.000000e+00 : f32
      %12 = vector.broadcast %cst_9 : f32 to vector<8x1024xf32>
      %c0_10 = arith.constant 0 : index
      %c0_11 = arith.constant 0 : index
      %13 = vector.load %arg7[%c0_10, %c0_11] : memref<8x1024xf32, #tpu.memory_space<vmem>>, vector<8x1024xf32>
      tpu.vector_store %arg7[%c0_10, %c0_11], %12 {strides = array<i32>} : memref<8x1024xf32, #tpu.memory_space<vmem>>, vector<8x1024xf32>,
    } else {
    }
    %c0 = arith.constant 0 : index
    %c0_1 = arith.constant 0 : index
    %3 = vector.load %arg7[%c0, %c0_1] : memref<8x1024xf32, #tpu.memory_space<vmem>>, vector<8x1024xf32>
    %c0_2 = arith.constant 0 : index
    %c0_3 = arith.constant 0 : index
    %4 = vector.load %arg1[%c0_2, %c0_3] : memref<8x2048xbf16, #tpu.memory_space<vmem>>, vector<8x2048xbf16>
    %c0_4 = arith.constant 0 : index
    %c0_5 = arith.constant 0 : index
    %5 = vector.load %arg2[%c0_4, %c0_5] : memref<2048x1024xbf16, #tpu.memory_space<vmem>>, vector<2048x1024xbf16>
    %cst = arith.constant dense<0.000000e+00> : vector<8x1024xf32>
    %6 = tpu.matmul %4, %5, %cst {dimension_numbers = #tpu.dot_dimension_numbers<[1], [0], [0], [1], [0, 0, 1, 1], [], []>} : vector<8x2048xbf16>, vector<2048x1024xbf16>, vector<8x1024xf32> -> vector<8x1024xf32>
    %7 = arith.addf %3, %6 : vector<8x1024xf32>
    %c0_6 = arith.constant 0 : index
    %c0_7 = arith.constant 0 : index
    %8 = vector.load %arg7[%c0_6, %c0_7] : memref<8x1024xf32, #tpu.memory_space<vmem>>, vector<8x1024xf32>
    tpu.vector_store %arg7[%c0_6, %c0_7], %7 {strides = array<i32>} : memref<8x1024xf32, #tpu.memory_space<vmem>>, vector<8x1024xf32>,
    %c1_i32 = arith.constant 1 : i32
    %9 = arith.cmpi eq, %arg0, %c1_i32 : i32
    %10 = arith.extui %9 : i1 to i32
    %c0_i32_8 = arith.constant 0 : i32
    %11 = arith.cmpi ne, %10, %c0_i32_8 : i32
    scf.if %11 {
      %c0_9 = arith.constant 0 : index
      %c0_10 = arith.constant 0 : index
      %12 = vector.load %arg7[%c0_9, %c0_10] : memref<8x1024xf32, #tpu.memory_space<vmem>>, vector<8x1024xf32>
      %c0_11 = arith.constant 0 : index
      %c0_12 = arith.constant 0 : index
      %13 = vector.load %arg3[%c0_11, %c0_12] : memref<3x1024xf32, #tpu.memory_space<vmem>>, vector<3x1024xf32>
      %14 = vector.extract_strided_slice %13 {offsets = [0, 0], sizes = [1, 1024], strides = [1, 1]} : vector<3x1024xf32> to vector<1x1024xf32>
      %15 = vector.extract_strided_slice %13 {offsets = [1, 0], sizes = [1, 1024], strides = [1, 1]} : vector<3x1024xf32> to vector<1x1024xf32>
      %16 = vector.extract_strided_slice %13 {offsets = [2, 0], sizes = [1, 1024], strides = [1, 1]} : vector<3x1024xf32> to vector<1x1024xf32>
      %17 = vector.broadcast %14 : vector<1x1024xf32> to vector<8x1024xf32>
      %18 = arith.addf %12, %17 : vector<8x1024xf32>
      %cst_13 = arith.constant dense<0.000000e+00> : vector<1024xf32>
      %19 = vector.multi_reduction <add>, %18, %cst_13 [0] : vector<8x1024xf32> to vector<1024xf32>
      %20 = vector.shape_cast %19 : vector<1024xf32> to vector<1x1024xf32>
      %cst_14 = arith.constant 8.000000e+00 : f32
      %21 = vector.broadcast %cst_14 : f32 to vector<1x1024xf32>
      %22 = arith.divf %20, %21 : vector<1x1024xf32>
      %23 = vector.broadcast %22 : vector<1x1024xf32> to vector<8x1024xf32>
      %24 = arith.subf %18, %23 : vector<8x1024xf32>
      %25 = arith.mulf %24, %24 : vector<8x1024xf32>
      %cst_15 = arith.constant dense<0.000000e+00> : vector<1024xf32>
      %26 = vector.multi_reduction <add>, %25, %cst_15 [0] : vector<8x1024xf32> to vector<1024xf32>
      %27 = vector.shape_cast %26 : vector<1024xf32> to vector<1x1024xf32>
      %cst_16 = arith.constant 8.000000e+00 : f32
      %28 = vector.broadcast %cst_16 : f32 to vector<1x1024xf32>
      %29 = arith.divf %27, %28 : vector<1x1024xf32>
      %30 = vector.broadcast %22 : vector<1x1024xf32> to vector<8x1024xf32>
      %31 = arith.subf %18, %30 : vector<8x1024xf32>
      %cst_17 = arith.constant 9.99999974E-6 : f32
      %32 = vector.broadcast %cst_17 : f32 to vector<1x1024xf32>
      %33 = arith.addf %29, %32 : vector<1x1024xf32>
      %34 = math.rsqrt %33 : vector<1x1024xf32>
      %35 = vector.broadcast %34 : vector<1x1024xf32> to vector<8x1024xf32>
      %36 = arith.mulf %31, %35 : vector<8x1024xf32>
      %37 = vector.broadcast %15 : vector<1x1024xf32> to vector<8x1024xf32>
      %38 = arith.mulf %37, %36 : vector<8x1024xf32>
      %39 = vector.broadcast %16 : vector<1x1024xf32> to vector<8x1024xf32>
      %40 = arith.addf %38, %39 : vector<8x1024xf32>
      %cst_18 = arith.constant 0.000000e+00 : f32
      %41 = vector.broadcast %cst_18 : f32 to vector<8x1024xf32>
      %42 = arith.cmpf oge, %40, %41 : vector<8x1024xf32>
      %cst_19 = arith.constant 0.00999999977 : f32
      %43 = vector.broadcast %cst_19 : f32 to vector<8x1024xf32>
      %44 = arith.mulf %43, %40 : vector<8x1024xf32>
      %45 = arith.select %42, %40, %44 : vector<8x1024xi1>, vector<8x1024xf32>
      %46 = arith.truncf %45 : vector<8x1024xf32> to vector<8x1024xbf16>
      %c0_20 = arith.constant 0 : index
      %c0_21 = arith.constant 0 : index
      %47 = vector.load %arg4[%c0_20, %c0_21] : memref<1024x128xbf16, #tpu.memory_space<vmem>>, vector<1024x128xbf16>
      %cst_22 = arith.constant dense<0.000000e+00> : vector<8x128xf32>
      %48 = tpu.matmul %46, %47, %cst_22 {dimension_numbers = #tpu.dot_dimension_numbers<[1], [0], [0], [1], [0, 0, 1, 1], [], []>} : vector<8x1024xbf16>, vector<1024x128xbf16>, vector<8x128xf32> -> vector<8x128xf32>
      %c0_23 = arith.constant 0 : index
      %c0_24 = arith.constant 0 : index
      %49 = vector.load %arg5[%c0_23, %c0_24] : memref<3x128xf32, #tpu.memory_space<vmem>>, vector<3x128xf32>
      %50 = vector.extract_strided_slice %49 {offsets = [0, 0], sizes = [1, 128], strides = [1, 1]} : vector<3x128xf32> to vector<1x128xf32>
      %51 = vector.extract_strided_slice %49 {offsets = [1, 0], sizes = [1, 128], strides = [1, 1]} : vector<3x128xf32> to vector<1x128xf32>
      %52 = vector.extract_strided_slice %49 {offsets = [2, 0], sizes = [1, 128], strides = [1, 1]} : vector<3x128xf32> to vector<1x128xf32>
      %53 = vector.broadcast %50 : vector<1x128xf32> to vector<8x128xf32>
      %54 = arith.addf %48, %53 : vector<8x128xf32>
      %cst_25 = arith.constant dense<0.000000e+00> : vector<128xf32>
      %55 = vector.multi_reduction <add>, %54, %cst_25 [0] : vector<8x128xf32> to vector<128xf32>
      %56 = vector.shape_cast %55 : vector<128xf32> to vector<1x128xf32>
      %cst_26 = arith.constant 8.000000e+00 : f32
      %57 = vector.broadcast %cst_26 : f32 to vector<1x128xf32>
      %58 = arith.divf %56, %57 : vector<1x128xf32>
      %59 = vector.broadcast %58 : vector<1x128xf32> to vector<8x128xf32>
      %60 = arith.subf %54, %59 : vector<8x128xf32>
      %61 = arith.mulf %60, %60 : vector<8x128xf32>
      %cst_27 = arith.constant dense<0.000000e+00> : vector<128xf32>
      %62 = vector.multi_reduction <add>, %61, %cst_27 [0] : vector<8x128xf32> to vector<128xf32>
      %63 = vector.shape_cast %62 : vector<128xf32> to vector<1x128xf32>
      %cst_28 = arith.constant 8.000000e+00 : f32
      %64 = vector.broadcast %cst_28 : f32 to vector<1x128xf32>
      %65 = arith.divf %63, %64 : vector<1x128xf32>
      %66 = vector.broadcast %58 : vector<1x128xf32> to vector<8x128xf32>
      %67 = arith.subf %54, %66 : vector<8x128xf32>
      %cst_29 = arith.constant 9.99999974E-6 : f32
      %68 = vector.broadcast %cst_29 : f32 to vector<1x128xf32>
      %69 = arith.addf %65, %68 : vector<1x128xf32>
      %70 = math.rsqrt %69 : vector<1x128xf32>
      %71 = vector.broadcast %70 : vector<1x128xf32> to vector<8x128xf32>
      %72 = arith.mulf %67, %71 : vector<8x128xf32>
      %73 = vector.broadcast %51 : vector<1x128xf32> to vector<8x128xf32>
      %74 = arith.mulf %73, %72 : vector<8x128xf32>
      %75 = vector.broadcast %52 : vector<1x128xf32> to vector<8x128xf32>
      %76 = arith.addf %74, %75 : vector<8x128xf32>
      %cst_30 = arith.constant 0.000000e+00 : f32
      %77 = vector.broadcast %cst_30 : f32 to vector<8x128xf32>
      %78 = arith.cmpf oge, %76, %77 : vector<8x128xf32>
      %cst_31 = arith.constant 0.00999999977 : f32
      %79 = vector.broadcast %cst_31 : f32 to vector<8x128xf32>
      %80 = arith.mulf %79, %76 : vector<8x128xf32>
      %81 = arith.select %78, %76, %80 : vector<8x128xi1>, vector<8x128xf32>
      %c0_32 = arith.constant 0 : index
      %c0_33 = arith.constant 0 : index
      %82 = vector.load %arg6[%c0_32, %c0_33] : memref<8x128xf32, #tpu.memory_space<vmem>>, vector<8x128xf32>
      tpu.vector_store %arg6[%c0_32, %c0_33], %81 {strides = array<i32>} : memref<8x128xf32, #tpu.memory_space<vmem>>, vector<8x128xf32>,
    } else {
    }
    return
  }
  func.func @transform_0(%arg0: i32) -> (i32, i32) {
    %c0_i32 = arith.constant 0 : i32
    %c0_i32_0 = arith.constant 0 : i32
    return %c0_i32, %arg0 : i32, i32
  }
  func.func @transform_1(%arg0: i32) -> (i32, i32) {
    %c0_i32 = arith.constant 0 : i32
    %c0_i32_0 = arith.constant 0 : i32
    return %arg0, %c0_i32 : i32, i32
  }
  func.func @transform_2(%arg0: i32) -> (i32, i32) {
    %c0_i32 = arith.constant 0 : i32
    %c0_i32_0 = arith.constant 0 : i32
    %c0_i32_1 = arith.constant 0 : i32
    return %c0_i32, %c0_i32_0 : i32, i32
  }
  func.func @transform_3(%arg0: i32) -> (i32, i32) {
    %c0_i32 = arith.constant 0 : i32
    %c0_i32_0 = arith.constant 0 : i32
    %c0_i32_1 = arith.constant 0 : i32
    return %c0_i32, %c0_i32_0 : i32, i32
  }
  func.func @transform_4(%arg0: i32) -> (i32, i32) {
    %c0_i32 = arith.constant 0 : i32
    %c0_i32_0 = arith.constant 0 : i32
    %c0_i32_1 = arith.constant 0 : i32
    return %c0_i32, %c0_i32_0 : i32, i32
  }
  func.func @transform_5(%arg0: i32) -> (i32, i32) {
    %c0_i32 = arith.constant 0 : i32
    %c0_i32_0 = arith.constant 0 : i32
    %c0_i32_1 = arith.constant 0 : i32
    return %c0_i32, %c0_i32_0 : i32, i32
  }
}

</mosaic_0001>

<llo_original>
// kernel: shallow2_forward.1
$region0: #{shallow2_forward.1}
  #allocation0 [shape = 'u32[]', space=smem, size = 0x4, offset = 0x4, fixed_abs, tag = 'smem constant byte address 0x4 - core index']
  #allocation1 [shape = 'u32[144,128]{1,0:T(1,128)}', space=vmem, size = 0x12000, scoped, tag = 'internal scratch']
  #allocation2 [shape = 'f32[8,1024]{1,0:T(8,128)}', space=vmem, size = 0x8000, scoped, tag = 'scratch operand']
  %s0 = inlined_call_operand.vmem [shape: bf16[8,4096], index: 0, kind: input, shape index: {}]
  %s1 = inlined_call_operand.hbm [shape: bf16[4096,1024], index: 1, kind: input, shape index: {}]
  %s2 = inlined_call_operand.hbm [shape: f32[3,1024], index: 2, kind: input, shape index: {}]
  %s3 = inlined_call_operand.hbm [shape: bf16[1024,128], index: 3, kind: input, shape index: {}]
  %s4 = inlined_call_operand.hbm [shape: f32[3,128], index: 4, kind: input, shape index: {}]
  %s5 = inlined_call_operand.hbm [shape: f32[8,128], index: 5, kind: output, shape index: {}]
  %s6 = sld [smem:[#allocation0]]
  $region77: #{shallow2_forward.1} parent=0
    _
  %s8 = ssub.s32 1, %s6
  %s9 = scalar_select 0, %s8, %s6
  $region1: #{shallow2_forward.1} parent=0
    #allocation3 [shape = 'u8[8388608]{0}', space=vmem, size = 0x800000, scoped, tag = 'input window, operand 1']
    #allocation4 [shape = 's32[2]{0}', space=sflag, size = 0x8, scoped, tag = 'scoped memory for shallow2_forward.1']
    #allocation5 [shape = 's32[2]{0}', space=sflag, size = 0x8, scoped, tag = 'scoped memory for shallow2_forward.1']
    #allocation6 [shape = 'u8[16384]{0}', space=vmem, size = 0x4000, scoped, tag = 'input window, operand 2, single buffered']
    #allocation7 [shape = 's32[1]{0}', space=sflag, size = 0x4, scoped, tag = 'scoped memory for shallow2_forward.1']
    #allocation8 [shape = 'u8[262144]{0}', space=vmem, size = 0x40000, scoped, tag = 'input window, operand 3, single buffered']
    #allocation9 [shape = 'u8[2048]{0}', space=vmem, size = 0x800, scoped, tag = 'input window, operand 4, single buffered']
    #allocation10 [shape = 's32[1]{0}', space=sflag, size = 0x4, scoped, tag = 'scoped memory for shallow2_forward.1']
    #allocation11 [shape = 'u8[4096]{0}', space=vmem, size = 0x1000, scoped, tag = 'output window, operand 0, single buffered']
    %10 = vsyncpa [#allocation4], 0
    %s11 = scalar_lea.sflag [#allocation4], 1
    %12 = vsyncpa %s11, 0
    %13 = vsyncpa [#allocation7], 0
    %14 = vsyncpa [#allocation10], 0
    %15 = vsyncpa [#allocation5], 0
    loop: start=0, step=1, limit=4
    $region2: #{shallow2_forward.1} parent=1 // loop_pre_header
      _
    $region3: #{shallow2_forward.1} parent=1 // loop_header
      %s17 = sphi 0, %s21
      %p18 = scmp.ge.s32.totalorder %s17, 4
      %s27 = sphi 0, %s29
      %s30 = sphi 0, %s27
      %s31 = sphi 0, %s30
      %s47 = sphi 0, %s31
      %s53 = sphi 0, %s55
      %s56 = sphi 0, %s53
      %s57 = sphi 0, %s56
      %s73 = sphi 0, %s57
      %s77 = sphi 0, %s77
      %s79 = sphi 0, %s77
      %s80 = sphi 0, %s79
      %s94 = sphi 0, %s80
      %s98 = sphi 0, %s98
      %s100 = sphi 0, %s98
      %s101 = sphi 0, %s100
      %s115 = sphi 0, %s101
      %s119 = sphi 0, %s119
      %s121 = sphi 0, %s119
      %s122 = sphi 0, %s121
      %s136 = sphi 0, %s122
      %s140 = sphi 0, %s140
      %s142 = sphi 0, %s140
      %s143 = sphi 0, %s142
      %s157 = sphi 0, %s143
    $region4: #{shallow2_forward.1} parent=1 // loop_header_branch
      %20 = sbr.rel (%p18) target = $region8
    $region5: #{shallow2_forward.1} parent=1 // loop_body
      %s22 = ssub.s32 %s17, 1
      %s23 = ssub.s32 %s17, 2
      %s24 = sadd.s32 %s17, 1
      %s25 = ssub.s32 %s17, %s24
      %p26 = scmp.eq.s32.totalorder %s25, 0
      %s28 = sadd.s32 %s27, 1
      %s29 = scalar_select %p26, %s27, %s28
      %p32 = pneg %p26
      %p33 = scmp.eq.s32.totalorder %s17, 1
      %p34 = por %p32, %p33
      %p35 = scmp.ne.s32.totalorder %s27, %s30
      %p36 = scmp.eq.s32.totalorder %s17, 0
      %p37 = por %p35, %p36
      %p38 = scmp.ne.s32.totalorder %s27, %s30
      %p39 = scmp.eq.s32.totalorder %s22, 1
      %p40 = por %p38, %p39
      %p41 = scmp.ne.s32.totalorder %s30, %s31
      %p42 = scmp.eq.s32.totalorder %s22, 0
      %p43 = por %p41, %p42
      %p44 = scmp.ne.s32.totalorder %s30, %s31
      %p45 = scmp.eq.s32.totalorder %s23, 1
      %p46 = por %p44, %p45
      %p48 = scmp.ne.s32.totalorder %s31, %s47
      %p49 = scmp.eq.s32.totalorder %s23, 0
      %p50 = por %p48, %p49
      %s51 = ssub.s32 %s17, %s24
      %p52 = scmp.eq.s32.totalorder %s51, 0
      %s54 = sadd.s32 %s53, 1
      %s55 = scalar_select %p52, %s53, %s54
      %p58 = pneg %p52
      %p59 = scmp.eq.s32.totalorder %s17, 1
      %p60 = por %p58, %p59
      %p61 = scmp.ne.s32.totalorder %s53, %s56
      %p62 = scmp.eq.s32.totalorder %s17, 0
      %p63 = por %p61, %p62
      %p64 = scmp.ne.s32.totalorder %s53, %s56
      %p65 = scmp.eq.s32.totalorder %s22, 1
      %p66 = por %p64, %p65
      %p67 = scmp.ne.s32.totalorder %s56, %s57
      %p68 = scmp.eq.s32.totalorder %s22, 0
      %p69 = por %p67, %p68
      %p70 = scmp.ne.s32.totalorder %s56, %s57
      %p71 = scmp.eq.s32.totalorder %s23, 1
      %p72 = por %p70, %p71
      %p74 = scmp.ne.s32.totalorder %s57, %s73
      %p75 = scmp.eq.s32.totalorder %s23, 0
      %p76 = por %p74, %p75
      %s78 = sadd.s32 %s77, 1
      %p81 = scmp.eq.s32.totalorder %s17, 1
      %p82 = scmp.ne.s32.totalorder %s77, %s79
      %p83 = scmp.eq.s32.totalorder %s17, 0
      %p84 = por %p82, %p83
      %p85 = scmp.ne.s32.totalorder %s77, %s79
      %p86 = scmp.eq.s32.totalorder %s22, 1
      %p87 = por %p85, %p86
      %p88 = scmp.ne.s32.totalorder %s79, %s80
      %p89 = scmp.eq.s32.totalorder %s22, 0
      %p90 = por %p88, %p89
      %p91 = scmp.ne.s32.totalorder %s79, %s80
      %p92 = scmp.eq.s32.totalorder %s23, 1
      %p93 = por %p91, %p92
      %p95 = scmp.ne.s32.totalorder %s80, %s94
      %p96 = scmp.eq.s32.totalorder %s23, 0
      %p97 = por %p95, %p96
      %s99 = sadd.s32 %s98, 1
      %p102 = scmp.eq.s32.totalorder %s17, 1
      %p103 = scmp.ne.s32.totalorder %s98, %s100
      %p104 = scmp.eq.s32.totalorder %s17, 0
      %p105 = por %p103, %p104
      %p106 = scmp.ne.s32.totalorder %s98, %s100
      %p107 = scmp.eq.s32.totalorder %s22, 1
      %p108 = por %p106, %p107
      %p109 = scmp.ne.s32.totalorder %s100, %s101
      %p110 = scmp.eq.s32.totalorder %s22, 0
      %p111 = por %p109, %p110
      %p112 = scmp.ne.s32.totalorder %s100, %s101
      %p113 = scmp.eq.s32.totalorder %s23, 1
      %p114 = por %p112, %p113
      %p116 = scmp.ne.s32.totalorder %s101, %s115
      %p117 = scmp.eq.s32.totalorder %s23, 0
      %p118 = por %p116, %p117
      %s120 = sadd.s32 %s119, 1
      %p123 = scmp.eq.s32.totalorder %s17, 1
      %p124 = scmp.ne.s32.totalorder %s119, %s121
      %p125 = scmp.eq.s32.totalorder %s17, 0
      %p126 = por %p124, %p125
      %p127 = scmp.ne.s32.totalorder %s119, %s121
      %p128 = scmp.eq.s32.totalorder %s22, 1
      %p129 = por %p127, %p128
      %p130 = scmp.ne.s32.totalorder %s121, %s122
      %p131 = scmp.eq.s32.totalorder %s22, 0
      %p132 = por %p130, %p131
      %p133 = scmp.ne.s32.totalorder %s121, %s122
      %p134 = scmp.eq.s32.totalorder %s23, 1
      %p135 = por %p133, %p134
      %p137 = scmp.ne.s32.totalorder %s122, %s136
      %p138 = scmp.eq.s32.totalorder %s23, 0
      %p139 = por %p137, %p138
      %s141 = sadd.s32 %s140, 1
      %p144 = scmp.eq.s32.totalorder %s17, 1
      %p145 = scmp.ne.s32.totalorder %s140, %s142
      %p146 = scmp.eq.s32.totalorder %s17, 0
      %p147 = por %p145, %p146
      %p148 = scmp.ne.s32.totalorder %s140, %s142
      %p149 = scmp.eq.s32.totalorder %s22, 1
      %p150 = por %p148, %p149
      %p151 = scmp.ne.s32.totalorder %s142, %s143
      %p152 = scmp.eq.s32.totalorder %s22, 0
      %p153 = por %p151, %p152
      %p154 = scmp.ne.s32.totalorder %s142, %s143
      %p155 = scmp.eq.s32.totalorder %s23, 1
      %p156 = por %p154, %p155
      %p158 = scmp.ne.s32.totalorder %s143, %s157
      %p159 = scmp.eq.s32.totalorder %s23, 0
      %p160 = por %p158, %p159
      %p161 = scmp.le.s32.totalorder 1, %s17
      %p162 = scmp.lt.s32.totalorder %s17, 3
      %p163 = pnand %p161, %p162
      %p164 = pneg %p163
      // Predicated region
      $region9: #{shallow2_forward.1} parent=5 // pred_check
        _
      $region10: #{shallow2_forward.1} parent=5 // pred_check_branch
        %166 = sbr.rel (%p163) target = $region12
      $region11: #{shallow2_forward.1} parent=5 // pred_region
        %s167 = ssub.s32 %s17, 1
        // Predicated region
        $region13: #{shallow2_forward.1} parent=11 // pred_check
          %p168 = pneg %p90
        $region14: #{shallow2_forward.1} parent=11 // pred_check_branch
          %170 = sbr.rel (%p168) target = $region16
        $region15: #{shallow2_forward.1} parent=11 // pred_region
          %s172 = ssub.s32 512, 512
          %173 = vsyncadd [#allocation7], %s172
          %s175 = sshll.u32 [#allocation6], 4
          %s176 = int_to_ptr.vmem [resolvable:$true] %s175
          %178 = dma.hbm_to_vmem [thread:$0]  %s2, 512, %s176, [#allocation7]
        $region16: #{shallow2_forward.1} parent=11 // pred_fallthru
          _
        // Predicated region
        $region17: #{shallow2_forward.1} parent=11 // pred_check
          %p179 = pneg %p111
        $region18: #{shallow2_forward.1} parent=11 // pred_check_branch
          %181 = sbr.rel (%p179) target = $region20
        $region19: #{shallow2_forward.1} parent=11 // pred_region
          %s183 = ssub.s32 8192, 8192
          %184 = vsyncadd [#allocation7], %s183
          %s185 = sshll.u32 [#allocation8], 4
          %s186 = int_to_ptr.vmem [resolvable:$true] %s185
          %191 = dma.hbm_to_vmem [thread:$0]  %s3, 8192, %s186, [#allocation7], 64, 64, 4
        $region20: #{shallow2_forward.1} parent=11 // pred_fallthru
          _
        // Predicated region
        $region21: #{shallow2_forward.1} parent=11 // pred_check
          %p192 = pneg %p132
        $region22: #{shallow2_forward.1} parent=11 // pred_check_branch
          %194 = sbr.rel (%p192) target = $region24
        $region23: #{shallow2_forward.1} parent=11 // pred_region
          %s196 = ssub.s32 64, 64
          %197 = vsyncadd [#allocation10], %s196
          %s199 = sshll.u32 [#allocation9], 4
          %s200 = int_to_ptr.vmem [resolvable:$true] %s199
          %202 = dma.hbm_to_vmem [thread:$0]  %s4, 64, %s200, [#allocation10]
        $region24: #{shallow2_forward.1} parent=11 // pred_fallthru
          _
      $region12: #{shallow2_forward.1} parent=5 // pred_fallthru
        _
      %p203 = scmp.lt.s32.totalorder %s17, 2
      // Predicated region
      $region25: #{shallow2_forward.1} parent=5 // pred_check
        %p204 = pneg %p203
      $region26: #{shallow2_forward.1} parent=5 // pred_check_branch
        %206 = sbr.rel (%p204) target = $region28
      $region27: #{shallow2_forward.1} parent=5 // pred_region
        // Predicated region
        $region29: #{shallow2_forward.1} parent=27 // pred_check
          %p207 = pneg %p37
        $region30: #{shallow2_forward.1} parent=27 // pred_check_branch
          %209 = sbr.rel (%p207) target = $region32
        $region31: #{shallow2_forward.1} parent=27 // pred_region
          %s210 = smul.u32 16, %s17
          %p211 = scmp.lt.s32.totalorder %s210, 31
          %s212 = scalar_select %p211, %s210, 31
          %s213 = smul.addr %s212, 4
          %s214 = scalar_lea.vmem %s0, %s213
          %s215 = smul.u32 16, %s17
        $region32: #{shallow2_forward.1} parent=27 // pred_fallthru
          _
        // Predicated region
        $region33: #{shallow2_forward.1} parent=27 // pred_check
          %p216 = pneg %p63
        $region34: #{shallow2_forward.1} parent=27 // pred_check_branch
          %218 = sbr.rel (%p216) target = $region36
        $region35: #{shallow2_forward.1} parent=27 // pred_region
          %s219 = sand.u32 %s53, 1
          %s220 = scalar_lea.sflag [#allocation4], %s219
          %s221 = sand.u32 %s53, 1
          %s222 = smul.addr %s221, 8192
          %s223 = scalar_lea.vmem [#allocation3], %s222
          %s224 = smul.u32 256, %s17
          %s226 = ssub.s32 131072, 131072
          %227 = vsyncadd %s220, %s226
          %s228 = smul.addr %s224, 8
          %s229 = smul.addr %s228, 64
          %s230 = scalar_lea.hbm %s1, %s229
          %s231 = sshll.u32 %s223, 4
          %s232 = int_to_ptr.vmem [resolvable:$true] %s231
          %237 = dma.hbm_to_vmem [thread:$0]  %s230, 131072, %s232, %s220, 512, 512, 32
        $region36: #{shallow2_forward.1} parent=27 // pred_fallthru
          _
      $region28: #{shallow2_forward.1} parent=5 // pred_fallthru
        _
      %p238 = scmp.le.s32.totalorder 1, %s17
      %p239 = scmp.lt.s32.totalorder %s17, 3
      %p240 = pnand %p238, %p239
      %p241 = pneg %p240
      // Predicated region
      $region37: #{shallow2_forward.1} parent=5 // pred_check
        _
      $region38: #{shallow2_forward.1} parent=5 // pred_check_branch
        %243 = sbr.rel (%p240) target = $region40
      $region39: #{shallow2_forward.1} parent=5 // pred_region
        %s244 = ssub.s32 %s17, 1
        %s245 = sand.u32 %s56, 1
        %s246 = scalar_lea.sflag [#allocation4], %s245
        %s247 = sand.u32 %s56, 1
        %s248 = smul.addr %s247, 8192
        %s249 = scalar_lea.vmem [#allocation3], %s248
        // Predicated region
        $region41: #{shallow2_forward.1} parent=39 // pred_check
          %p250 = pneg %p69
        $region42: #{shallow2_forward.1} parent=39 // pred_check_branch
          %252 = sbr.rel (%p250) target = $region44
        $region43: #{shallow2_forward.1} parent=39 // pred_region
          %253 = dma.done %s246, 131072
        $region44: #{shallow2_forward.1} parent=39 // pred_fallthru
          _
        // Predicated region
        $region45: #{shallow2_forward.1} parent=39 // pred_check
          %p254 = pneg %p90
        $region46: #{shallow2_forward.1} parent=39 // pred_check_branch
          %256 = sbr.rel (%p254) target = $region48
        $region47: #{shallow2_forward.1} parent=39 // pred_region
          %257 = dma.done [#allocation7], 512
        $region48: #{shallow2_forward.1} parent=39 // pred_fallthru
          _
        // Predicated region
        $region49: #{shallow2_forward.1} parent=39 // pred_check
          %p258 = pneg %p111
        $region50: #{shallow2_forward.1} parent=39 // pred_check_branch
          %260 = sbr.rel (%p258) target = $region52
        $region51: #{shallow2_forward.1} parent=39 // pred_region
          %261 = dma.done [#allocation7], 8192
        $region52: #{shallow2_forward.1} parent=39 // pred_fallthru
          _
        // Predicated region
        $region53: #{shallow2_forward.1} parent=39 // pred_check
          %p262 = pneg %p132
        $region54: #{shallow2_forward.1} parent=39 // pred_check_branch
          %264 = sbr.rel (%p262) target = $region56
        $region55: #{shallow2_forward.1} parent=39 // pred_region
          %265 = dma.done [#allocation10], 64
        $region56: #{shallow2_forward.1} parent=39 // pred_fallthru
          _
        %s266 = smul.u32 16, %s22
        %p267 = scmp.lt.s32.totalorder %s266, 31
        %s268 = scalar_select %p267, %s266, 31
        %s269 = smul.addr %s268, 4
        %s270 = scalar_lea.vmem %s0, %s269
        %p271 = pneg %p43
        %p272 = pneg %p40
        %s273 = sand.u32 %s56, 1
        %s274 = scalar_lea.sflag [#allocation4], %s273
        %s275 = sand.u32 %s56, 1
        %s276 = smul.addr %s275, 8192
        %s277 = scalar_lea.vmem [#allocation3], %s276
        %p278 = pneg %p69
        %p279 = pneg %p66
        %p280 = pneg %p90
        %p281 = pneg %p87
        %p282 = pneg %p111
        %p283 = pneg %p108
        %p284 = pneg %p132
        %p285 = pneg %p129
        %p286 = pneg %p153
        %p287 = pneg %p150
        %s288 = smul.u32 16, %s22
        %p289 = scmp.lt.s32.totalorder %s288, 31
        %s290 = scalar_select %p289, %s288, 31
        %s291 = smul.addr %s290, 4
        %s292 = scalar_lea.vmem %s0, %s291
        %s293 = smul.u32 16, %s22
        %s294 = smul.u32 256, %s22
        %p296 = scmp.eq.s32.totalorder %s22, 0
        // Predicated region
        $region57: #{shallow2_forward.1} parent=39 // pred_check
          %p297 = pneg %p296
        $region58: #{shallow2_forward.1} parent=39 // pred_check_branch
          %299 = sbr.rel (%p297) target = $region60
        $region59: #{shallow2_forward.1} parent=39 // pred_region
          %300 = vst [vmem:[#allocation2] sm:$0xff] 0.0
          %301 = vst [vmem:[#allocation2 + $0x8] sm:$0xff] 0.0
          %302 = vst [vmem:[#allocation2 + $0x10] sm:$0xff] 0.0
          %303 = vst [vmem:[#allocation2 + $0x18] sm:$0xff] 0.0
          %304 = vst [vmem:[#allocation2 + $0x20] sm:$0xff] 0.0
          %305 = vst [vmem:[#allocation2 + $0x28] sm:$0xff] 0.0
          %306 = vst [vmem:[#allocation2 + $0x30] sm:$0xff] 0.0
          %307 = vst [vmem:[#allocation2 + $0x38] sm:$0xff] 0.0
        $region60: #{shallow2_forward.1} parent=39 // pred_fallthru
          _
        %v308 = vld [vmem:[#allocation2] sm:$0xff]
        %v309 = vld [vmem:[#allocation2 + $0x8] sm:$0xff]
        %v310 = vld [vmem:[#allocation2 + $0x10] sm:$0xff]
        %v311 = vld [vmem:[#allocation2 + $0x18] sm:$0xff]
        %v312 = vld [vmem:[#allocation2 + $0x20] sm:$0xff]
        %v313 = vld [vmem:[#allocation2 + $0x28] sm:$0xff]
        %v314 = vld [vmem:[#allocation2 + $0x30] sm:$0xff]
        %v315 = vld [vmem:[#allocation2 + $0x38] sm:$0xff]
        %v316 = vld [vmem:[%s292] sm:$0xff]
        %v317 = vld [vmem:[%s292 + $0x8] sm:$0xff]
        %v318 = vld [vmem:[%s292 + $0x10] sm:$0xff]
        %v319 = vld [vmem:[%s292 + $0x18] sm:$0xff]
        %v320 = vld [vmem:[%s292 + $0x20] sm:$0xff]
        %v321 = vld [vmem:[%s292 + $0x28] sm:$0xff]
        %v322 = vld [vmem:[%s292 + $0x30] sm:$0xff]
        %v323 = vld [vmem:[%s292 + $0x38] sm:$0xff]
        %v324 = vld [vmem:[%s249] sm:$0xff]
        %v325 = vld [vmem:[%s249 + $0x8] sm:$0xff]
        %v326 = vld [vmem:[%s249 + $0x10] sm:$0xff]
        %v327 = vld [vmem:[%s249 + $0x18] sm:$0xff]
        %v328 = vld [vmem:[%s249 + $0x20] sm:$0xff]
        %v329 = vld [vmem:[%s249 + $0x28] sm:$0xff]
        %v330 = vld [vmem:[%s249 + $0x30] sm:$0xff]
        %v331 = vld [vmem:[%s249 + $0x38] sm:$0xff]
        %v332 = vld [vmem:[%s249 + $0x40] sm:$0xff]
        %v333 = vld [vmem:[%s249 + $0x48] sm:$0xff]
        %v334 = vld [vmem:[%s249 + $0x50] sm:$0xff]
        %v335 = vld [vmem:[%s249 + $0x58] sm:$0xff]
        %v336 = vld [vmem:[%s249 + $0x60] sm:$0xff]
        %v337 = vld [vmem:[%s249 + $0x68] sm:$0xff]
        %v338 = vld [vmem:[%s249 + $0x70] sm:$0xff]
        %v339 = vld [vmem:[%s249 + $0x78] sm:$0xff]
        %v340 = vld [vmem:[%s249 + $0x80] sm:$0xff]
        %v341 = vld [vmem:[%s249 + $0x88] sm:$0xff]
        %v342 = vld [vmem:[%s249 + $0x90] sm:$0xff]
        %v343 = vld [vmem:[%s249 + $0x98] sm:$0xff]
        %v344 = vld [vmem:[%s249 + $0xa0] sm:$0xff]
        %v345 = vld [vmem:[%s249 + $0xa8] sm:$0xff]
        %v346 = vld [vmem:[%s249 + $0xb0] sm:$0xff]
        %v347 = vld [vmem:[%s249 + $0xb8] sm:$0xff]
        %v348 = vld [vmem:[%s249 + $0xc0] sm:$0xff]
        %v349 = vld [vmem:[%s249 + $0xc8] sm:$0xff]
        %v350 = vld [vmem:[%s249 + $0xd0] sm:$0xff]
        %v351 = vld [vmem:[%s249 + $0xd8] sm:$0xff]
        %v352 = vld [vmem:[%s249 + $0xe0] sm:$0xff]
        %v353 = vld [vmem:[%s249 + $0xe8] sm:$0xff]
        %v354 = vld [vmem:[%s249 + $0xf0] sm:$0xff]
        %v355 = vld [vmem:[%s249 + $0xf8] sm:$0xff]
        %v356 = vld [vmem:[%s249 + $0x100] sm:$0xff]
        %v357 = vld [vmem:[%s249 + $0x108] sm:$0xff]
        %v358 = vld [vmem:[%s249 + $0x110] sm:$0xff]
        %v359 = vld [vmem:[%s249 + $0x118] sm:$0xff]
        %v360 = vld [vmem:[%s249 + $0x120] sm:$0xff]
        %v361 = vld [vmem:[%s249 + $0x128] sm:$0xff]
        %v362 = vld [vmem:[%s249 + $0x130] sm:$0xff]
        %v363 = vld [vmem:[%s249 + $0x138] sm:$0xff]
        %v364 = vld [vmem:[%s249 + $0x140] sm:$0xff]
        %v365 = vld [vmem:[%s249 + $0x148] sm:$0xff]
        %v366 = vld [vmem:[%s249 + $0x150] sm:$0xff]
        %v367 = vld [vmem:[%s249 + $0x158] sm:$0xff]
        %v368 = vld [vmem:[%s249 + $0x160] sm:$0xff]
        %v369 = vld [vmem:[%s249 + $0x168] sm:$0xff]
        %v370 = vld [vmem:[%s249 + $0x170] sm:$0xff]
        %v371 = vld [vmem:[%s249 + $0x178] sm:$0xff]
        %v372 = vld [vmem:[%s249 + $0x180] sm:$0xff]
        %v373 = vld [vmem:[%s249 + $0x188] sm:$0xff]
        %v374 = vld [vmem:[%s249 + $0x190] sm:$0xff]
        %v375 = vld [vmem:[%s249 + $0x198] sm:$0xff]
        %v376 = vld [vmem:[%s249 + $0x1a0] sm:$0xff]
        %v377 = vld [vmem:[%s249 + $0x1a8] sm:$0xff]
        %v378 = vld [vmem:[%s249 + $0x1b0] sm:$0xff]
        %v379 = vld [vmem:[%s249 + $0x1b8] sm:$0xff]
        %v380 = vld [vmem:[%s249 + $0x1c0] sm:$0xff]
        %v381 = vld [vmem:[%s249 + $0x1c8] sm:$0xff]
        %v382 = vld [vmem:[%s249 + $0x1d0] sm:$0xff]
        %v383 = vld [vmem:[%s249 + $0x1d8] sm:$0xff]
        %v384 = vld [vmem:[%s249 + $0x1e0] sm:$0xff]
        %v385 = vld [vmem:[%s249 + $0x1e8] sm:$0xff]
        %v386 = vld [vmem:[%s249 + $0x1f0] sm:$0xff]
        %v387 = vld [vmem:[%s249 + $0x1f8] sm:$0xff]
        %v388 = vld [vmem:[%s249 + $0x200] sm:$0xff]
        %v389 = vld [vmem:[%s249 + $0x208] sm:$0xff]
        %v390 = vld [vmem:[%s249 + $0x210] sm:$0xff]
        %v391 = vld [vmem:[%s249 + $0x218] sm:$0xff]
        %v392 = vld [vmem:[%s249 + $0x220] sm:$0xff]
        %v393 = vld [vmem:[%s249 + $0x228] sm:$0xff]
        %v394 = vld [vmem:[%s249 + $0x230] sm:$0xff]
        %v395 = vld [vmem:[%s249 + $0x238] sm:$0xff]
        %v396 = vld [vmem:[%s249 + $0x240] sm:$0xff]
        %v397 = vld [vmem:[%s249 + $0x248] sm:$0xff]
        %v398 = vld [vmem:[%s249 + $0x250] sm:$0xff]
        %v399 = vld [vmem:[%s249 + $0x258] sm:$0xff]
        %v400 = vld [vmem:[%s249 + $0x260] sm:$0xff]
        %v401 = vld [vmem:[%s249 + $0x268] sm:$0xff]
        %v402 = vld [vmem:[%s249 + $0x270] sm:$0xff]
        %v403 = vld [vmem:[%s249 + $0x278] sm:$0xff]
        %v404 = vld [vmem:[%s249 + $0x280] sm:$0xff]
        %v405 = vld [vmem:[%s249 + $0x288] sm:$0xff]
        %v406 = vld [vmem:[%s249 + $0x290] sm:$0xff]
        %v407 = vld [vmem:[%s249 + $0x298] sm:$0xff]
        %v408 = vld [vmem:[%s249 + $0x2a0] sm:$0xff]
        %v409 = vld [vmem:[%s249 + $0x2a8] sm:$0xff]
        %v410 = vld [vmem:[%s249 + $0x2b0] sm:$0xff]
        %v411 = vld [vmem:[%s249 + $0x2b8] sm:$0xff]
        %v412 = vld [vmem:[%s249 + $0x2c0] sm:$0xff]
        %v413 = vld [vmem:[%s249 + $0x2c8] sm:$0xff]
        %v414 = vld [vmem:[%s249 + $0x2d0] sm:$0xff]
        %v415 = vld [vmem:[%s249 + $0x2d8] sm:$0xff]
        %v416 = vld [vmem:[%s249 + $0x2e0] sm:$0xff]
        %v417 = vld [vmem:[%s249 + $0x2e8] sm:$0xff]
        %v418 = vld [vmem:[%s249 + $0x2f0] sm:$0xff]
        %v419 = vld [vmem:[%s249 + $0x2f8] sm:$0xff]
        %v420 = vld [vmem:[%s249 + $0x300] sm:$0xff]
        %v421 = vld [vmem:[%s249 + $0x308] sm:$0xff]
        %v422 = vld [vmem:[%s249 + $0x310] sm:$0xff]
        %v423 = vld [vmem:[%s249 + $0x318] sm:$0xff]
        %v424 = vld [vmem:[%s249 + $0x320] sm:$0xff]
        %v425 = vld [vmem:[%s249 + $0x328] sm:$0xff]
        %v426 = vld [vmem:[%s249 + $0x330] sm:$0xff]
        %v427 = vld [vmem:[%s249 + $0x338] sm:$0xff]
        %v428 = vld [vmem:[%s249 + $0x340] sm:$0xff]
        %v429 = vld [vmem:[%s249 + $0x348] sm:$0xff]
        %v430 = vld [vmem:[%s249 + $0x350] sm:$0xff]
        %v431 = vld [vmem:[%s249 + $0x358] sm:$0xff]
        %v432 = vld [vmem:[%s249 + $0x360] sm:$0xff]
        %v433 = vld [vmem:[%s249 + $0x368] sm:$0xff]
        %v434 = vld [vmem:[%s249 + $0x370] sm:$0xff]
        %v435 = vld [vmem:[%s249 + $0x378] sm:$0xff]
        %v436 = vld [vmem:[%s249 + $0x380] sm:$0xff]
        %v437 = vld [vmem:[%s249 + $0x388] sm:$0xff]
        %v438 = vld [vmem:[%s249 + $0x390] sm:$0xff]
        %v439 = vld [vmem:[%s249 + $0x398] sm:$0xff]
        %v440 = vld [vmem:[%s249 + $0x3a0] sm:$0xff]
        %v441 = vld [vmem:[%s249 + $0x3a8] sm:$0xff]
        %v442 = vld [vmem:[%s249 + $0x3b0] sm:$0xff]
        %v443 = vld [vmem:[%s249 + $0x3b8] sm:$0xff]
        %v444 = vld [vmem:[%s249 + $0x3c0] sm:$0xff]
        %v445 = vld [vmem:[%s249 + $0x3c8] sm:$0xff]
        %v446 = vld [vmem:[%s249 + $0x3d0] sm:$0xff]
        %v447 = vld [vmem:[%s249 + $0x3d8] sm:$0xff]
        %v448 = vld [vmem:[%s249 + $0x3e0] sm:$0xff]
        %v449 = vld [vmem:[%s249 + $0x3e8] sm:$0xff]
        %v450 = vld [vmem:[%s249 + $0x3f0] sm:$0xff]
        %v451 = vld [vmem:[%s249 + $0x3f8] sm:$0xff]
        %v452 = vld [vmem:[%s249 + $0x400] sm:$0xff]
        %v453 = vld [vmem:[%s249 + $0x408] sm:$0xff]
        %v454 = vld [vmem:[%s249 + $0x410] sm:$0xff]
        %v455 = vld [vmem:[%s249 + $0x418] sm:$0xff]
        %v456 = vld [vmem:[%s249 + $0x420] sm:$0xff]
        %v457 = vld [vmem:[%s249 + $0x428] sm:$0xff]
        %v458 = vld [vmem:[%s249 + $0x430] sm:$0xff]
        %v459 = vld [vmem:[%s249 + $0x438] sm:$0xff]
        %v460 = vld [vmem:[%s249 + $0x440] sm:$0xff]
        %v461 = vld [vmem:[%s249 + $0x448] sm:$0xff]
        %v462 = vld [vmem:[%s249 + $0x450] sm:$0xff]
        %v463 = vld [vmem:[%s249 + $0x458] sm:$0xff]
        %v464 = vld [vmem:[%s249 + $0x460] sm:$0xff]
        %v465 = vld [vmem:[%s249 + $0x468] sm:$0xff]
        %v466 = vld [vmem:[%s249 + $0x470] sm:$0xff]
        %v467 = vld [vmem:[%s249 + $0x478] sm:$0xff]
        %v468 = vld [vmem:[%s249 + $0x480] sm:$0xff]
        %v469 = vld [vmem:[%s249 + $0x488] sm:$0xff]
        %v470 = vld [vmem:[%s249 + $0x490] sm:$0xff]
        %v471 = vld [vmem:[%s249 + $0x498] sm:$0xff]
        %v472 = vld [vmem:[%s249 + $0x4a0] sm:$0xff]
        %v473 = vld [vmem:[%s249 + $0x4a8] sm:$0xff]
        %v474 = vld [vmem:[%s249 + $0x4b0] sm:$0xff]
        %v475 = vld [vmem:[%s249 + $0x4b8] sm:$0xff]
        %v476 = vld [vmem:[%s249 + $0x4c0] sm:$0xff]
        %v477 = vld [vmem:[%s249 + $0x4c8] sm:$0xff]
        %v478 = vld [vmem:[%s249 + $0x4d0] sm:$0xff]
        %v479 = vld [vmem:[%s249 + $0x4d8] sm:$0xff]
        %v480 = vld [vmem:[%s249 + $0x4e0] sm:$0xff]
        %v481 = vld [vmem:[%s249 + $0x4e8] sm:$0xff]
        %v482 = vld [vmem:[%s249 + $0x4f0] sm:$0xff]
        %v483 = vld [vmem:[%s249 + $0x4f8] sm:$0xff]
        %v484 = vld [vmem:[%s249 + $0x500] sm:$0xff]
        %v485 = vld [vmem:[%s249 + $0x508] sm:$0xff]
        %v486 = vld [vmem:[%s249 + $0x510] sm:$0xff]
        %v487 = vld [vmem:[%s249 + $0x518] sm:$0xff]
        %v488 = vld [vmem:[%s249 + $0x520] sm:$0xff]
        %v489 = vld [vmem:[%s249 + $0x528] sm:$0xff]
        %v490 = vld [vmem:[%s249 + $0x530] sm:$0xff]
        %v491 = vld [vmem:[%s249 + $0x538] sm:$0xff]
        %v492 = vld [vmem:[%s249 + $0x540] sm:$0xff]
        %v493 = vld [vmem:[%s249 + $0x548] sm:$0xff]
        %v494 = vld [vmem:[%s249 + $0x550] sm:$0xff]
        %v495 = vld [vmem:[%s249 + $0x558] sm:$0xff]
        %v496 = vld [vmem:[%s249 + $0x560] sm:$0xff]
        %v497 = vld [vmem:[%s249 + $0x568] sm:$0xff]
        %v498 = vld [vmem:[%s249 + $0x570] sm:$0xff]
        %v499 = vld [vmem:[%s249 + $0x578] sm:$0xff]
        %v500 = vld [vmem:[%s249 + $0x580] sm:$0xff]
        %v501 = vld [vmem:[%s249 + $0x588] sm:$0xff]
        %v502 = vld [vmem:[%s249 + $0x590] sm:$0xff]
        %v503 = vld [vmem:[%s249 + $0x598] sm:$0xff]
        %v504 = vld [vmem:[%s249 + $0x5a0] sm:$0xff]
        %v505 = vld [vmem:[%s249 + $0x5a8] sm:$0xff]
        %v506 = vld [vmem:[%s249 + $0x5b0] sm:$0xff]
        %v507 = vld [vmem:[%s249 + $0x5b8] sm:$0xff]
        %v508 = vld [vmem:[%s249 + $0x5c0] sm:$0xff]
        %v509 = vld [vmem:[%s249 + $0x5c8] sm:$0xff]
        %v510 = vld [vmem:[%s249 + $0x5d0] sm:$0xff]
        %v511 = vld [vmem:[%s249 + $0x5d8] sm:$0xff]
        %v512 = vld [vmem:[%s249 + $0x5e0] sm:$0xff]
        %v513 = vld [vmem:[%s249 + $0x5e8] sm:$0xff]
        %v514 = vld [vmem:[%s249 + $0x5f0] sm:$0xff]
        %v515 = vld [vmem:[%s249 + $0x5f8] sm:$0xff]
        %v516 = vld [vmem:[%s249 + $0x600] sm:$0xff]
        %v517 = vld [vmem:[%s249 + $0x608] sm:$0xff]
        %v518 = vld [vmem:[%s249 + $0x610] sm:$0xff]
        %v519 = vld [vmem:[%s249 + $0x618] sm:$0xff]
        %v520 = vld [vmem:[%s249 + $0x620] sm:$0xff]
        %v521 = vld [vmem:[%s249 + $0x628] sm:$0xff]
        %v522 = vld [vmem:[%s249 + $0x630] sm:$0xff]
        %v523 = vld [vmem:[%s249 + $0x638] sm:$0xff]
        %v524 = vld [vmem:[%s249 + $0x640] sm:$0xff]
        %v525 = vld [vmem:[%s249 + $0x648] sm:$0xff]
        %v526 = vld [vmem:[%s249 + $0x650] sm:$0xff]
        %v527 = vld [vmem:[%s249 + $0x658] sm:$0xff]
        %v528 = vld [vmem:[%s249 + $0x660] sm:$0xff]
        %v529 = vld [vmem:[%s249 + $0x668] sm:$0xff]
        %v530 = vld [vmem:[%s249 + $0x670] sm:$0xff]
        %v531 = vld [vmem:[%s249 + $0x678] sm:$0xff]
        %v532 = vld [vmem:[%s249 + $0x680] sm:$0xff]
        %v533 = vld [vmem:[%s249 + $0x688] sm:$0xff]
        %v534 = vld [vmem:[%s249 + $0x690] sm:$0xff]
        %v535 = vld [vmem:[%s249 + $0x698] sm:$0xff]
        %v536 = vld [vmem:[%s249 + $0x6a0] sm:$0xff]
        %v537 = vld [vmem:[%s249 + $0x6a8] sm:$0xff]
        %v538 = vld [vmem:[%s249 + $0x6b0] sm:$0xff]
        %v539 = vld [vmem:[%s249 + $0x6b8] sm:$0xff]
        %v540 = vld [vmem:[%s249 + $0x6c0] sm:$0xff]
        %v541 = vld [vmem:[%s249 + $0x6c8] sm:$0xff]
        %v542 = vld [vmem:[%s249 + $0x6d0] sm:$0xff]
        %v543 = vld [vmem:[%s249 + $0x6d8] sm:$0xff]
        %v544 = vld [vmem:[%s249 + $0x6e0] sm:$0xff]
        %v545 = vld [vmem:[%s249 + $0x6e8] sm:$0xff]
        %v546 = vld [vmem:[%s249 + $0x6f0] sm:$0xff]
        %v547 = vld [vmem:[%s249 + $0x6f8] sm:$0xff]
        %v548 = vld [vmem:[%s249 + $0x700] sm:$0xff]
        %v549 = vld [vmem:[%s249 + $0x708] sm:$0xff]
        %v550 = vld [vmem:[%s249 + $0x710] sm:$0xff]
        %v551 = vld [vmem:[%s249 + $0x718] sm:$0xff]
        %v552 = vld [vmem:[%s249 + $0x720] sm:$0xff]
        %v553 = vld [vmem:[%s249 + $0x728] sm:$0xff]
        %v554 = vld [vmem:[%s249 + $0x730] sm:$0xff]
        %v555 = vld [vmem:[%s249 + $0x738] sm:$0xff]
        %v556 = vld [vmem:[%s249 + $0x740] sm:$0xff]
        %v557 = vld [vmem:[%s249 + $0x748] sm:$0xff]
        %v558 = vld [vmem:[%s249 + $0x750] sm:$0xff]
        %v559 = vld [vmem:[%s249 + $0x758] sm:$0xff]
        %v560 = vld [vmem:[%s249 + $0x760] sm:$0xff]
        %v561 = vld [vmem:[%s249 + $0x768] sm:$0xff]
        %v562 = vld [vmem:[%s249 + $0x770] sm:$0xff]
        %v563 = vld [vmem:[%s249 + $0x778] sm:$0xff]
        %v564 = vld [vmem:[%s249 + $0x780] sm:$0xff]
        %v565 = vld [vmem:[%s249 + $0x788] sm:$0xff]
        %v566 = vld [vmem:[%s249 + $0x790] sm:$0xff]
        %v567 = vld [vmem:[%s249 + $0x798] sm:$0xff]
        %v568 = vld [vmem:[%s249 + $0x7a0] sm:$0xff]
        %v569 = vld [vmem:[%s249 + $0x7a8] sm:$0xff]
        %v570 = vld [vmem:[%s249 + $0x7b0] sm:$0xff]
        %v571 = vld [vmem:[%s249 + $0x7b8] sm:$0xff]
        %v572 = vld [vmem:[%s249 + $0x7c0] sm:$0xff]
        %v573 = vld [vmem:[%s249 + $0x7c8] sm:$0xff]
        %v574 = vld [vmem:[%s249 + $0x7d0] sm:$0xff]
        %v575 = vld [vmem:[%s249 + $0x7d8] sm:$0xff]
        %v576 = vld [vmem:[%s249 + $0x7e0] sm:$0xff]
        %v577 = vld [vmem:[%s249 + $0x7e8] sm:$0xff]
        %v578 = vld [vmem:[%s249 + $0x7f0] sm:$0xff]
        %v579 = vld [vmem:[%s249 + $0x7f8] sm:$0xff]
        %v580 = vld [vmem:[%s249 + $0x800] sm:$0xff]
        %v581 = vld [vmem:[%s249 + $0x808] sm:$0xff]
        %v582 = vld [vmem:[%s249 + $0x810] sm:$0xff]
        %v583 = vld [vmem:[%s249 + $0x818] sm:$0xff]
        %v584 = vld [vmem:[%s249 + $0x820] sm:$0xff]
        %v585 = vld [vmem:[%s249 + $0x828] sm:$0xff]
        %v586 = vld [vmem:[%s249 + $0x830] sm:$0xff]
        %v587 = vld [vmem:[%s249 + $0x838] sm:$0xff]
        %v588 = vld [vmem:[%s249 + $0x840] sm:$0xff]
        %v589 = vld [vmem:[%s249 + $0x848] sm:$0xff]
        %v590 = vld [vmem:[%s249 + $0x850] sm:$0xff]
        %v591 = vld [vmem:[%s249 + $0x858] sm:$0xff]
        %v592 = vld [vmem:[%s249 + $0x860] sm:$0xff]
        %v593 = vld [vmem:[%s249 + $0x868] sm:$0xff]
        %v594 = vld [vmem:[%s249 + $0x870] sm:$0xff]
        %v595 = vld [vmem:[%s249 + $0x878] sm:$0xff]
        %v596 = vld [vmem:[%s249 + $0x880] sm:$0xff]
        %v597 = vld [vmem:[%s249 + $0x888] sm:$0xff]
        %v598 = vld [vmem:[%s249 + $0x890] sm:$0xff]
        %v599 = vld [vmem:[%s249 + $0x898] sm:$0xff]
        %v600 = vld [vmem:[%s249 + $0x8a0] sm:$0xff]
        %v601 = vld [vmem:[%s249 + $0x8a8] sm:$0xff]
        %v602 = vld [vmem:[%s249 + $0x8b0] sm:$0xff]
        %v603 = vld [vmem:[%s249 + $0x8b8] sm:$0xff]
        %v604 = vld [vmem:[%s249 + $0x8c0] sm:$0xff]
        %v605 = vld [vmem:[%s249 + $0x8c8] sm:$0xff]
        %v606 = vld [vmem:[%s249 + $0x8d0] sm:$0xff]
        %v607 = vld [vmem:[%s249 + $0x8d8] sm:$0xff]
        %v608 = vld [vmem:[%s249 + $0x8e0] sm:$0xff]
        %v609 = vld [vmem:[%s249 + $0x8e8] sm:$0xff]
        %v610 = vld [vmem:[%s249 + $0x8f0] sm:$0xff]
        %v611 = vld [vmem:[%s249 + $0x8f8] sm:$0xff]
        %v612 = vld [vmem:[%s249 + $0x900] sm:$0xff]
        %v613 = vld [vmem:[%s249 + $0x908] sm:$0xff]
        %v614 = vld [vmem:[%s249 + $0x910] sm:$0xff]
        %v615 = vld [vmem:[%s249 + $0x918] sm:$0xff]
        %v616 = vld [vmem:[%s249 + $0x920] sm:$0xff]
        %v617 = vld [vmem:[%s249 + $0x928] sm:$0xff]
        %v618 = vld [vmem:[%s249 + $0x930] sm:$0xff]
        %v619 = vld [vmem:[%s249 + $0x938] sm:$0xff]
        %v620 = vld [vmem:[%s249 + $0x940] sm:$0xff]
        %v621 = vld [vmem:[%s249 + $0x948] sm:$0xff]
        %v622 = vld [vmem:[%s249 + $0x950] sm:$0xff]
        %v623 = vld [vmem:[%s249 + $0x958] sm:$0xff]
        %v624 = vld [vmem:[%s249 + $0x960] sm:$0xff]
        %v625 = vld [vmem:[%s249 + $0x968] sm:$0xff]
        %v626 = vld [vmem:[%s249 + $0x970] sm:$0xff]
        %v627 = vld [vmem:[%s249 + $0x978] sm:$0xff]
        %v628 = vld [vmem:[%s249 + $0x980] sm:$0xff]
        %v629 = vld [vmem:[%s249 + $0x988] sm:$0xff]
        %v630 = vld [vmem:[%s249 + $0x990] sm:$0xff]
        %v631 = vld [vmem:[%s249 + $0x998] sm:$0xff]
        %v632 = vld [vmem:[%s249 + $0x9a0] sm:$0xff]
        %v633 = vld [vmem:[%s249 + $0x9a8] sm:$0xff]
        %v634 = vld [vmem:[%s249 + $0x9b0] sm:$0xff]
        %v635 = vld [vmem:[%s249 + $0x9b8] sm:$0xff]
        %v636 = vld [vmem:[%s249 + $0x9c0] sm:$0xff]
        %v637 = vld [vmem:[%s249 + $0x9c8] sm:$0xff]
        %v638 = vld [vmem:[%s249 + $0x9d0] sm:$0xff]
        %v639 = vld [vmem:[%s249 + $0x9d8] sm:$0xff]
        %v640 = vld [vmem:[%s249 + $0x9e0] sm:$0xff]
        %v641 = vld [vmem:[%s249 + $0x9e8] sm:$0xff]
        %v642 = vld [vmem:[%s249 + $0x9f0] sm:$0xff]
        %v643 = vld [vmem:[%s249 + $0x9f8] sm:$0xff]
        %v644 = vld [vmem:[%s249 + $0xa00] sm:$0xff]
        %v645 = vld [vmem:[%s249 + $0xa08] sm:$0xff]
        %v646 = vld [vmem:[%s249 + $0xa10] sm:$0xff]
        %v647 = vld [vmem:[%s249 + $0xa18] sm:$0xff]
        %v648 = vld [vmem:[%s249 + $0xa20] sm:$0xff]
        %v649 = vld [vmem:[%s249 + $0xa28] sm:$0xff]
        %v650 = vld [vmem:[%s249 + $0xa30] sm:$0xff]
        %v651 = vld [vmem:[%s249 + $0xa38] sm:$0xff]
        %v652 = vld [vmem:[%s249 + $0xa40] sm:$0xff]
        %v653 = vld [vmem:[%s249 + $0xa48] sm:$0xff]
        %v654 = vld [vmem:[%s249 + $0xa50] sm:$0xff]
        %v655 = vld [vmem:[%s249 + $0xa58] sm:$0xff]
        %v656 = vld [vmem:[%s249 + $0xa60] sm:$0xff]
        %v657 = vld [vmem:[%s249 + $0xa68] sm:$0xff]
        %v658 = vld [vmem:[%s249 + $0xa70] sm:$0xff]
        %v659 = vld [vmem:[%s249 + $0xa78] sm:$0xff]
        %v660 = vld [vmem:[%s249 + $0xa80] sm:$0xff]
        %v661 = vld [vmem:[%s249 + $0xa88] sm:$0xff]
        %v662 = vld [vmem:[%s249 + $0xa90] sm:$0xff]
        %v663 = vld [vmem:[%s249 + $0xa98] sm:$0xff]
        %v664 = vld [vmem:[%s249 + $0xaa0] sm:$0xff]
        %v665 = vld [vmem:[%s249 + $0xaa8] sm:$0xff]
        %v666 = vld [vmem:[%s249 + $0xab0] sm:$0xff]
        %v667 = vld [vmem:[%s249 + $0xab8] sm:$0xff]
        %v668 = vld [vmem:[%s249 + $0xac0] sm:$0xff]
        %v669 = vld [vmem:[%s249 + $0xac8] sm:$0xff]
        %v670 = vld [vmem:[%s249 + $0xad0] sm:$0xff]
        %v671 = vld [vmem:[%s249 + $0xad8] sm:$0xff]
        %v672 = vld [vmem:[%s249 + $0xae0] sm:$0xff]
        %v673 = vld [vmem:[%s249 + $0xae8] sm:$0xff]
        %v674 = vld [vmem:[%s249 + $0xaf0] sm:$0xff]
        %v675 = vld [vmem:[%s249 + $0xaf8] sm:$0xff]
        %v676 = vld [vmem:[%s249 + $0xb00] sm:$0xff]
        %v677 = vld [vmem:[%s249 + $0xb08] sm:$0xff]
        %v678 = vld [vmem:[%s249 + $0xb10] sm:$0xff]
        %v679 = vld [vmem:[%s249 + $0xb18] sm:$0xff]
        %v680 = vld [vmem:[%s249 + $0xb20] sm:$0xff]
        %v681 = vld [vmem:[%s249 + $0xb28] sm:$0xff]
        %v682 = vld [vmem:[%s249 + $0xb30] sm:$0xff]
        %v683 = vld [vmem:[%s249 + $0xb38] sm:$0xff]
        %v684 = vld [vmem:[%s249 + $0xb40] sm:$0xff]
        %v685 = vld [vmem:[%s249 + $0xb48] sm:$0xff]
        %v686 = vld [vmem:[%s249 + $0xb50] sm:$0xff]
        %v687 = vld [vmem:[%s249 + $0xb58] sm:$0xff]
        %v688 = vld [vmem:[%s249 + $0xb60] sm:$0xff]
        %v689 = vld [vmem:[%s249 + $0xb68] sm:$0xff]
        %v690 = vld [vmem:[%s249 + $0xb70] sm:$0xff]
        %v691 = vld [vmem:[%s249 + $0xb78] sm:$0xff]
        %v692 = vld [vmem:[%s249 + $0xb80] sm:$0xff]
        %v693 = vld [vmem:[%s249 + $0xb88] sm:$0xff]
        %v694 = vld [vmem:[%s249 + $0xb90] sm:$0xff]
        %v695 = vld [vmem:[%s249 + $0xb98] sm:$0xff]
        %v696 = vld [vmem:[%s249 + $0xba0] sm:$0xff]
        %v697 = vld [vmem:[%s249 + $0xba8] sm:$0xff]
        %v698 = vld [vmem:[%s249 + $0xbb0] sm:$0xff]
        %v699 = vld [vmem:[%s249 + $0xbb8] sm:$0xff]
        %v700 = vld [vmem:[%s249 + $0xbc0] sm:$0xff]
        %v701 = vld [vmem:[%s249 + $0xbc8] sm:$0xff]
        %v702 = vld [vmem:[%s249 + $0xbd0] sm:$0xff]
        %v703 = vld [vmem:[%s249 + $0xbd8] sm:$0xff]
        %v704 = vld [vmem:[%s249 + $0xbe0] sm:$0xff]
        %v705 = vld [vmem:[%s249 + $0xbe8] sm:$0xff]
        %v706 = vld [vmem:[%s249 + $0xbf0] sm:$0xff]
        %v707 = vld [vmem:[%s249 + $0xbf8] sm:$0xff]
        %v708 = vld [vmem:[%s249 + $0xc00] sm:$0xff]
        %v709 = vld [vmem:[%s249 + $0xc08] sm:$0xff]
        %v710 = vld [vmem:[%s249 + $0xc10] sm:$0xff]
        %v711 = vld [vmem:[%s249 + $0xc18] sm:$0xff]
        %v712 = vld [vmem:[%s249 + $0xc20] sm:$0xff]
        %v713 = vld [vmem:[%s249 + $0xc28] sm:$0xff]
        %v714 = vld [vmem:[%s249 + $0xc30] sm:$0xff]
        %v715 = vld [vmem:[%s249 + $0xc38] sm:$0xff]
        %v716 = vld [vmem:[%s249 + $0xc40] sm:$0xff]
        %v717 = vld [vmem:[%s249 + $0xc48] sm:$0xff]
        %v718 = vld [vmem:[%s249 + $0xc50] sm:$0xff]
        %v719 = vld [vmem:[%s249 + $0xc58] sm:$0xff]
        %v720 = vld [vmem:[%s249 + $0xc60] sm:$0xff]
        %v721 = vld [vmem:[%s249 + $0xc68] sm:$0xff]
        %v722 = vld [vmem:[%s249 + $0xc70] sm:$0xff]
        %v723 = vld [vmem:[%s249 + $0xc78] sm:$0xff]
        %v724 = vld [vmem:[%s249 + $0xc80] sm:$0xff]
        %v725 = vld [vmem:[%s249 + $0xc88] sm:$0xff]
        %v726 = vld [vmem:[%s249 + $0xc90] sm:$0xff]
        %v727 = vld [vmem:[%s249 + $0xc98] sm:$0xff]
        %v728 = vld [vmem:[%s249 + $0xca0] sm:$0xff]
        %v729 = vld [vmem:[%s249 + $0xca8] sm:$0xff]
        %v730 = vld [vmem:[%s249 + $0xcb0] sm:$0xff]
        %v731 = vld [vmem:[%s249 + $0xcb8] sm:$0xff]
        %v732 = vld [vmem:[%s249 + $0xcc0] sm:$0xff]
        %v733 = vld [vmem:[%s249 + $0xcc8] sm:$0xff]
        %v734 = vld [vmem:[%s249 + $0xcd0] sm:$0xff]
        %v735 = vld [vmem:[%s249 + $0xcd8] sm:$0xff]
        %v736 = vld [vmem:[%s249 + $0xce0] sm:$0xff]
        %v737 = vld [vmem:[%s249 + $0xce8] sm:$0xff]
        %v738 = vld [vmem:[%s249 + $0xcf0] sm:$0xff]
        %v739 = vld [vmem:[%s249 + $0xcf8] sm:$0xff]
        %v740 = vld [vmem:[%s249 + $0xd00] sm:$0xff]
        %v741 = vld [vmem:[%s249 + $0xd08] sm:$0xff]
        %v742 = vld [vmem:[%s249 + $0xd10] sm:$0xff]
        %v743 = vld [vmem:[%s249 + $0xd18] sm:$0xff]
        %v744 = vld [vmem:[%s249 + $0xd20] sm:$0xff]
        %v745 = vld [vmem:[%s249 + $0xd28] sm:$0xff]
        %v746 = vld [vmem:[%s249 + $0xd30] sm:$0xff]
        %v747 = vld [vmem:[%s249 + $0xd38] sm:$0xff]
        %v748 = vld [vmem:[%s249 + $0xd40] sm:$0xff]
        %v749 = vld [vmem:[%s249 + $0xd48] sm:$0xff]
        %v750 = vld [vmem:[%s249 + $0xd50] sm:$0xff]
        %v751 = vld [vmem:[%s249 + $0xd58] sm:$0xff]
        %v752 = vld [vmem:[%s249 + $0xd60] sm:$0xff]
        %v753 = vld [vmem:[%s249 + $0xd68] sm:$0xff]
        %v754 = vld [vmem:[%s249 + $0xd70] sm:$0xff]
        %v755 = vld [vmem:[%s249 + $0xd78] sm:$0xff]
        %v756 = vld [vmem:[%s249 + $0xd80] sm:$0xff]
        %v757 = vld [vmem:[%s249 + $0xd88] sm:$0xff]
        %v758 = vld [vmem:[%s249 + $0xd90] sm:$0xff]
        %v759 = vld [vmem:[%s249 + $0xd98] sm:$0xff]
        %v760 = vld [vmem:[%s249 + $0xda0] sm:$0xff]
        %v761 = vld [vmem:[%s249 + $0xda8] sm:$0xff]
        %v762 = vld [vmem:[%s249 + $0xdb0] sm:$0xff]
        %v763 = vld [vmem:[%s249 + $0xdb8] sm:$0xff]
        %v764 = vld [vmem:[%s249 + $0xdc0] sm:$0xff]
        %v765 = vld [vmem:[%s249 + $0xdc8] sm:$0xff]
        %v766 = vld [vmem:[%s249 + $0xdd0] sm:$0xff]
        %v767 = vld [vmem:[%s249 + $0xdd8] sm:$0xff]
        %v768 = vld [vmem:[%s249 + $0xde0] sm:$0xff]
        %v769 = vld [vmem:[%s249 + $0xde8] sm:$0xff]
        %v770 = vld [vmem:[%s249 + $0xdf0] sm:$0xff]
        %v771 = vld [vmem:[%s249 + $0xdf8] sm:$0xff]
        %v772 = vld [vmem:[%s249 + $0xe00] sm:$0xff]
        %v773 = vld [vmem:[%s249 + $0xe08] sm:$0xff]
        %v774 = vld [vmem:[%s249 + $0xe10] sm:$0xff]
        %v775 = vld [vmem:[%s249 + $0xe18] sm:$0xff]
        %v776 = vld [vmem:[%s249 + $0xe20] sm:$0xff]
        %v777 = vld [vmem:[%s249 + $0xe28] sm:$0xff]
        %v778 = vld [vmem:[%s249 + $0xe30] sm:$0xff]
        %v779 = vld [vmem:[%s249 + $0xe38] sm:$0xff]
        %v780 = vld [vmem:[%s249 + $0xe40] sm:$0xff]
        %v781 = vld [vmem:[%s249 + $0xe48] sm:$0xff]
        %v782 = vld [vmem:[%s249 + $0xe50] sm:$0xff]
        %v783 = vld [vmem:[%s249 + $0xe58] sm:$0xff]
        %v784 = vld [vmem:[%s249 + $0xe60] sm:$0xff]
        %v785 = vld [vmem:[%s249 + $0xe68] sm:$0xff]
        %v786 = vld [vmem:[%s249 + $0xe70] sm:$0xff]
        %v787 = vld [vmem:[%s249 + $0xe78] sm:$0xff]
        %v788 = vld [vmem:[%s249 + $0xe80] sm:$0xff]
        %v789 = vld [vmem:[%s249 + $0xe88] sm:$0xff]
        %v790 = vld [vmem:[%s249 + $0xe90] sm:$0xff]
        %v791 = vld [vmem:[%s249 + $0xe98] sm:$0xff]
        %v792 = vld [vmem:[%s249 + $0xea0] sm:$0xff]
        %v793 = vld [vmem:[%s249 + $0xea8] sm:$0xff]
        %v794 = vld [vmem:[%s249 + $0xeb0] sm:$0xff]
        %v795 = vld [vmem:[%s249 + $0xeb8] sm:$0xff]
        %v796 = vld [vmem:[%s249 + $0xec0] sm:$0xff]
        %v797 = vld [vmem:[%s249 + $0xec8] sm:$0xff]
        %v798 = vld [vmem:[%s249 + $0xed0] sm:$0xff]
        %v799 = vld [vmem:[%s249 + $0xed8] sm:$0xff]
        %v800 = vld [vmem:[%s249 + $0xee0] sm:$0xff]
        %v801 = vld [vmem:[%s249 + $0xee8] sm:$0xff]
        %v802 = vld [vmem:[%s249 + $0xef0] sm:$0xff]
        %v803 = vld [vmem:[%s249 + $0xef8] sm:$0xff]
        %v804 = vld [vmem:[%s249 + $0xf00] sm:$0xff]
        %v805 = vld [vmem:[%s249 + $0xf08] sm:$0xff]
        %v806 = vld [vmem:[%s249 + $0xf10] sm:$0xff]
        %v807 = vld [vmem:[%s249 + $0xf18] sm:$0xff]
        %v808 = vld [vmem:[%s249 + $0xf20] sm:$0xff]
        %v809 = vld [vmem:[%s249 + $0xf28] sm:$0xff]
        %v810 = vld [vmem:[%s249 + $0xf30] sm:$0xff]
        %v811 = vld [vmem:[%s249 + $0xf38] sm:$0xff]
        %v812 = vld [vmem:[%s249 + $0xf40] sm:$0xff]
        %v813 = vld [vmem:[%s249 + $0xf48] sm:$0xff]
        %v814 = vld [vmem:[%s249 + $0xf50] sm:$0xff]
        %v815 = vld [vmem:[%s249 + $0xf58] sm:$0xff]
        %v816 = vld [vmem:[%s249 + $0xf60] sm:$0xff]
        %v817 = vld [vmem:[%s249 + $0xf68] sm:$0xff]
        %v818 = vld [vmem:[%s249 + $0xf70] sm:$0xff]
        %v819 = vld [vmem:[%s249 + $0xf78] sm:$0xff]
        %v820 = vld [vmem:[%s249 + $0xf80] sm:$0xff]
        %v821 = vld [vmem:[%s249 + $0xf88] sm:$0xff]
        %v822 = vld [vmem:[%s249 + $0xf90] sm:$0xff]
        %v823 = vld [vmem:[%s249 + $0xf98] sm:$0xff]
        %v824 = vld [vmem:[%s249 + $0xfa0] sm:$0xff]
        %v825 = vld [vmem:[%s249 + $0xfa8] sm:$0xff]
        %v826 = vld [vmem:[%s249 + $0xfb0] sm:$0xff]
        %v827 = vld [vmem:[%s249 + $0xfb8] sm:$0xff]
        %v828 = vld [vmem:[%s249 + $0xfc0] sm:$0xff]
        %v829 = vld [vmem:[%s249 + $0xfc8] sm:$0xff]
        %v830 = vld [vmem:[%s249 + $0xfd0] sm:$0xff]
        %v831 = vld [vmem:[%s249 + $0xfd8] sm:$0xff]
        %v832 = vld [vmem:[%s249 + $0xfe0] sm:$0xff]
        %v833 = vld [vmem:[%s249 + $0xfe8] sm:$0xff]
        %v834 = vld [vmem:[%s249 + $0xff0] sm:$0xff]
        %v835 = vld [vmem:[%s249 + $0xff8] sm:$0xff]
        %v836 = vld [vmem:[%s249 + $0x1000] sm:$0xff]
        %v837 = vld [vmem:[%s249 + $0x1008] sm:$0xff]
        %v838 = vld [vmem:[%s249 + $0x1010] sm:$0xff]
        %v839 = vld [vmem:[%s249 + $0x1018] sm:$0xff]
        %v840 = vld [vmem:[%s249 + $0x1020] sm:$0xff]
        %v841 = vld [vmem:[%s249 + $0x1028] sm:$0xff]
        %v842 = vld [vmem:[%s249 + $0x1030] sm:$0xff]
        %v843 = vld [vmem:[%s249 + $0x1038] sm:$0xff]
        %v844 = vld [vmem:[%s249 + $0x1040] sm:$0xff]
        %v845 = vld [vmem:[%s249 + $0x1048] sm:$0xff]
        %v846 = vld [vmem:[%s249 + $0x1050] sm:$0xff]
        %v847 = vld [vmem:[%s249 + $0x1058] sm:$0xff]
        %v848 = vld [vmem:[%s249 + $0x1060] sm:$0xff]
        %v849 = vld [vmem:[%s249 + $0x1068] sm:$0xff]
        %v850 = vld [vmem:[%s249 + $0x1070] sm:$0xff]
        %v851 = vld [vmem:[%s249 + $0x1078] sm:$0xff]
        %v852 = vld [vmem:[%s249 + $0x1080] sm:$0xff]
        %v853 = vld [vmem:[%s249 + $0x1088] sm:$0xff]
        %v854 = vld [vmem:[%s249 + $0x1090] sm:$0xff]
        %v855 = vld [vmem:[%s249 + $0x1098] sm:$0xff]
        %v856 = vld [vmem:[%s249 + $0x10a0] sm:$0xff]
        %v857 = vld [vmem:[%s249 + $0x10a8] sm:$0xff]
        %v858 = vld [vmem:[%s249 + $0x10b0] sm:$0xff]
        %v859 = vld [vmem:[%s249 + $0x10b8] sm:$0xff]
        %v860 = vld [vmem:[%s249 + $0x10c0] sm:$0xff]
        %v861 = vld [vmem:[%s249 + $0x10c8] sm:$0xff]
        %v862 = vld [vmem:[%s249 + $0x10d0] sm:$0xff]
        %v863 = vld [vmem:[%s249 + $0x10d8] sm:$0xff]
        %v864 = vld [vmem:[%s249 + $0x10e0] sm:$0xff]
        %v865 = vld [vmem:[%s249 + $0x10e8] sm:$0xff]
        %v866 = vld [vmem:[%s249 + $0x10f0] sm:$0xff]
        %v867 = vld [vmem:[%s249 + $0x10f8] sm:$0xff]
        %v868 = vld [vmem:[%s249 + $0x1100] sm:$0xff]
        %v869 = vld [vmem:[%s249 + $0x1108] sm:$0xff]
        %v870 = vld [vmem:[%s249 + $0x1110] sm:$0xff]
        %v871 = vld [vmem:[%s249 + $0x1118] sm:$0xff]
        %v872 = vld [vmem:[%s249 + $0x1120] sm:$0xff]
        %v873 = vld [vmem:[%s249 + $0x1128] sm:$0xff]
        %v874 = vld [vmem:[%s249 + $0x1130] sm:$0xff]
        %v875 = vld [vmem:[%s249 + $0x1138] sm:$0xff]
        %v876 = vld [vmem:[%s249 + $0x1140] sm:$0xff]
        %v877 = vld [vmem:[%s249 + $0x1148] sm:$0xff]
        %v878 = vld [vmem:[%s249 + $0x1150] sm:$0xff]
        %v879 = vld [vmem:[%s249 + $0x1158] sm:$0xff]
        %v880 = vld [vmem:[%s249 + $0x1160] sm:$0xff]
        %v881 = vld [vmem:[%s249 + $0x1168] sm:$0xff]
        %v882 = vld [vmem:[%s249 + $0x1170] sm:$0xff]
        %v883 = vld [vmem:[%s249 + $0x1178] sm:$0xff]
        %v884 = vld [vmem:[%s249 + $0x1180] sm:$0xff]
        %v885 = vld [vmem:[%s249 + $0x1188] sm:$0xff]
        %v886 = vld [vmem:[%s249 + $0x1190] sm:$0xff]
        %v887 = vld [vmem:[%s249 + $0x1198] sm:$0xff]
        %v888 = vld [vmem:[%s249 + $0x11a0] sm:$0xff]
        %v889 = vld [vmem:[%s249 + $0x11a8] sm:$0xff]
        %v890 = vld [vmem:[%s249 + $0x11b0] sm:$0xff]
        %v891 = vld [vmem:[%s249 + $0x11b8] sm:$0xff]
        %v892 = vld [vmem:[%s249 + $0x11c0] sm:$0xff]
        %v893 = vld [vmem:[%s249 + $0x11c8] sm:$0xff]
        %v894 = vld [vmem:[%s249 + $0x11d0] sm:$0xff]
        %v895 = vld [vmem:[%s249 + $0x11d8] sm:$0xff]
        %v896 = vld [vmem:[%s249 + $0x11e0] sm:$0xff]
        %v897 = vld [vmem:[%s249 + $0x11e8] sm:$0xff]
        %v898 = vld [vmem:[%s249 + $0x11f0] sm:$0xff]
        %v899 = vld [vmem:[%s249 + $0x11f8] sm:$0xff]
        %v900 = vld [vmem:[%s249 + $0x1200] sm:$0xff]
        %v901 = vld [vmem:[%s249 + $0x1208] sm:$0xff]
        %v902 = vld [vmem:[%s249 + $0x1210] sm:$0xff]
        %v903 = vld [vmem:[%s249 + $0x1218] sm:$0xff]
        %v904 = vld [vmem:[%s249 + $0x1220] sm:$0xff]
        %v905 = vld [vmem:[%s249 + $0x1228] sm:$0xff]
        %v906 = vld [vmem:[%s249 + $0x1230] sm:$0xff]
        %v907 = vld [vmem:[%s249 + $0x1238] sm:$0xff]
        %v908 = vld [vmem:[%s249 + $0x1240] sm:$0xff]
        %v909 = vld [vmem:[%s249 + $0x1248] sm:$0xff]
        %v910 = vld [vmem:[%s249 + $0x1250] sm:$0xff]
        %v911 = vld [vmem:[%s249 + $0x1258] sm:$0xff]
        %v912 = vld [vmem:[%s249 + $0x1260] sm:$0xff]
        %v913 = vld [vmem:[%s249 + $0x1268] sm:$0xff]
        %v914 = vld [vmem:[%s249 + $0x1270] sm:$0xff]
        %v915 = vld [vmem:[%s249 + $0x1278] sm:$0xff]
        %v916 = vld [vmem:[%s249 + $0x1280] sm:$0xff]
        %v917 = vld [vmem:[%s249 + $0x1288] sm:$0xff]
        %v918 = vld [vmem:[%s249 + $0x1290] sm:$0xff]
        %v919 = vld [vmem:[%s249 + $0x1298] sm:$0xff]
        %v920 = vld [vmem:[%s249 + $0x12a0] sm:$0xff]
        %v921 = vld [vmem:[%s249 + $0x12a8] sm:$0xff]
        %v922 = vld [vmem:[%s249 + $0x12b0] sm:$0xff]
        %v923 = vld [vmem:[%s249 + $0x12b8] sm:$0xff]
        %v924 = vld [vmem:[%s249 + $0x12c0] sm:$0xff]
        %v925 = vld [vmem:[%s249 + $0x12c8] sm:$0xff]
        %v926 = vld [vmem:[%s249 + $0x12d0] sm:$0xff]
        %v927 = vld [vmem:[%s249 + $0x12d8] sm:$0xff]
        %v928 = vld [vmem:[%s249 + $0x12e0] sm:$0xff]
        %v929 = vld [vmem:[%s249 + $0x12e8] sm:$0xff]
        %v930 = vld [vmem:[%s249 + $0x12f0] sm:$0xff]
        %v931 = vld [vmem:[%s249 + $0x12f8] sm:$0xff]
        %v932 = vld [vmem:[%s249 + $0x1300] sm:$0xff]
        %v933 = vld [vmem:[%s249 + $0x1308] sm:$0xff]
        %v934 = vld [vmem:[%s249 + $0x1310] sm:$0xff]
        %v935 = vld [vmem:[%s249 + $0x1318] sm:$0xff]
        %v936 = vld [vmem:[%s249 + $0x1320] sm:$0xff]
        %v937 = vld [vmem:[%s249 + $0x1328] sm:$0xff]
        %v938 = vld [vmem:[%s249 + $0x1330] sm:$0xff]
        %v939 = vld [vmem:[%s249 + $0x1338] sm:$0xff]
        %v940 = vld [vmem:[%s249 + $0x1340] sm:$0xff]
        %v941 = vld [vmem:[%s249 + $0x1348] sm:$0xff]
        %v942 = vld [vmem:[%s249 + $0x1350] sm:$0xff]
        %v943 = vld [vmem:[%s249 + $0x1358] sm:$0xff]
        %v944 = vld [vmem:[%s249 + $0x1360] sm:$0xff]
        %v945 = vld [vmem:[%s249 + $0x1368] sm:$0xff]
        %v946 = vld [vmem:[%s249 + $0x1370] sm:$0xff]
        %v947 = vld [vmem:[%s249 + $0x1378] sm:$0xff]
        %v948 = vld [vmem:[%s249 + $0x1380] sm:$0xff]
        %v949 = vld [vmem:[%s249 + $0x1388] sm:$0xff]
        %v950 = vld [vmem:[%s249 + $0x1390] sm:$0xff]
        %v951 = vld [vmem:[%s249 + $0x1398] sm:$0xff]
        %v952 = vld [vmem:[%s249 + $0x13a0] sm:$0xff]
        %v953 = vld [vmem:[%s249 + $0x13a8] sm:$0xff]
        %v954 = vld [vmem:[%s249 + $0x13b0] sm:$0xff]
        %v955 = vld [vmem:[%s249 + $0x13b8] sm:$0xff]
        %v956 = vld [vmem:[%s249 + $0x13c0] sm:$0xff]
        %v957 = vld [vmem:[%s249 + $0x13c8] sm:$0xff]
        %v958 = vld [vmem:[%s249 + $0x13d0] sm:$0xff]
        %v959 = vld [vmem:[%s249 + $0x13d8] sm:$0xff]
        %v960 = vld [vmem:[%s249 + $0x13e0] sm:$0xff]
        %v961 = vld [vmem:[%s249 + $0x13e8] sm:$0xff]
        %v962 = vld [vmem:[%s249 + $0x13f0] sm:$0xff]
        %v963 = vld [vmem:[%s249 + $0x13f8] sm:$0xff]
        %v964 = vld [vmem:[%s249 + $0x1400] sm:$0xff]
        %v965 = vld [vmem:[%s249 + $0x1408] sm:$0xff]
        %v966 = vld [vmem:[%s249 + $0x1410] sm:$0xff]
        %v967 = vld [vmem:[%s249 + $0x1418] sm:$0xff]
        %v968 = vld [vmem:[%s249 + $0x1420] sm:$0xff]
        %v969 = vld [vmem:[%s249 + $0x1428] sm:$0xff]
        %v970 = vld [vmem:[%s249 + $0x1430] sm:$0xff]
        %v971 = vld [vmem:[%s249 + $0x1438] sm:$0xff]
        %v972 = vld [vmem:[%s249 + $0x1440] sm:$0xff]
        %v973 = vld [vmem:[%s249 + $0x1448] sm:$0xff]
        %v974 = vld [vmem:[%s249 + $0x1450] sm:$0xff]
        %v975 = vld [vmem:[%s249 + $0x1458] sm:$0xff]
        %v976 = vld [vmem:[%s249 + $0x1460] sm:$0xff]
        %v977 = vld [vmem:[%s249 + $0x1468] sm:$0xff]
        %v978 = vld [vmem:[%s249 + $0x1470] sm:$0xff]
        %v979 = vld [vmem:[%s249 + $0x1478] sm:$0xff]
        %v980 = vld [vmem:[%s249 + $0x1480] sm:$0xff]
        %v981 = vld [vmem:[%s249 + $0x1488] sm:$0xff]
        %v982 = vld [vmem:[%s249 + $0x1490] sm:$0xff]
        %v983 = vld [vmem:[%s249 + $0x1498] sm:$0xff]
        %v984 = vld [vmem:[%s249 + $0x14a0] sm:$0xff]
        %v985 = vld [vmem:[%s249 + $0x14a8] sm:$0xff]
        %v986 = vld [vmem:[%s249 + $0x14b0] sm:$0xff]
        %v987 = vld [vmem:[%s249 + $0x14b8] sm:$0xff]
        %v988 = vld [vmem:[%s249 + $0x14c0] sm:$0xff]
        %v989 = vld [vmem:[%s249 + $0x14c8] sm:$0xff]
        %v990 = vld [vmem:[%s249 + $0x14d0] sm:$0xff]
        %v991 = vld [vmem:[%s249 + $0x14d8] sm:$0xff]
        %v992 = vld [vmem:[%s249 + $0x14e0] sm:$0xff]
        %v993 = vld [vmem:[%s249 + $0x14e8] sm:$0xff]
        %v994 = vld [vmem:[%s249 + $0x14f0] sm:$0xff]
        %v995 = vld [vmem:[%s249 + $0x14f8] sm:$0xff]
        %v996 = vld [vmem:[%s249 + $0x1500] sm:$0xff]
        %v997 = vld [vmem:[%s249 + $0x1508] sm:$0xff]
        %v998 = vld [vmem:[%s249 + $0x1510] sm:$0xff]
        %v999 = vld [vmem:[%s249 + $0x1518] sm:$0xff]
        %v1000 = vld [vmem:[%s249 + $0x1520] sm:$0xff]
        %v1001 = vld [vmem:[%s249 + $0x1528] sm:$0xff]
        %v1002 = vld [vmem:[%s249 + $0x1530] sm:$0xff]
        %v1003 = vld [vmem:[%s249 + $0x1538] sm:$0xff]
        %v1004 = vld [vmem:[%s249 + $0x1540] sm:$0xff]
        %v1005 = vld [vmem:[%s249 + $0x1548] sm:$0xff]
        %v1006 = vld [vmem:[%s249 + $0x1550] sm:$0xff]
        %v1007 = vld [vmem:[%s249 + $0x1558] sm:$0xff]
        %v1008 = vld [vmem:[%s249 + $0x1560] sm:$0xff]
        %v1009 = vld [vmem:[%s249 + $0x1568] sm:$0xff]
        %v1010 = vld [vmem:[%s249 + $0x1570] sm:$0xff]
        %v1011 = vld [vmem:[%s249 + $0x1578] sm:$0xff]
        %v1012 = vld [vmem:[%s249 + $0x1580] sm:$0xff]
        %v1013 = vld [vmem:[%s249 + $0x1588] sm:$0xff]
        %v1014 = vld [vmem:[%s249 + $0x1590] sm:$0xff]
        %v1015 = vld [vmem:[%s249 + $0x1598] sm:$0xff]
        %v1016 = vld [vmem:[%s249 + $0x15a0] sm:$0xff]
        %v1017 = vld [vmem:[%s249 + $0x15a8] sm:$0xff]
        %v1018 = vld [vmem:[%s249 + $0x15b0] sm:$0xff]
        %v1019 = vld [vmem:[%s249 + $0x15b8] sm:$0xff]
        %v1020 = vld [vmem:[%s249 + $0x15c0] sm:$0xff]
        %v1021 = vld [vmem:[%s249 + $0x15c8] sm:$0xff]
        %v1022 = vld [vmem:[%s249 + $0x15d0] sm:$0xff]
        %v1023 = vld [vmem:[%s249 + $0x15d8] sm:$0xff]
        %v1024 = vld [vmem:[%s249 + $0x15e0] sm:$0xff]
        %v1025 = vld [vmem:[%s249 + $0x15e8] sm:$0xff]
        %v1026 = vld [vmem:[%s249 + $0x15f0] sm:$0xff]
        %v1027 = vld [vmem:[%s249 + $0x15f8] sm:$0xff]
        %v1028 = vld [vmem:[%s249 + $0x1600] sm:$0xff]
        %v1029 = vld [vmem:[%s249 + $0x1608] sm:$0xff]
        %v1030 = vld [vmem:[%s249 + $0x1610] sm:$0xff]
        %v1031 = vld [vmem:[%s249 + $0x1618] sm:$0xff]
        %v1032 = vld [vmem:[%s249 + $0x1620] sm:$0xff]
        %v1033 = vld [vmem:[%s249 + $0x1628] sm:$0xff]
        %v1034 = vld [vmem:[%s249 + $0x1630] sm:$0xff]
        %v1035 = vld [vmem:[%s249 + $0x1638] sm:$0xff]
        %v1036 = vld [vmem:[%s249 + $0x1640] sm:$0xff]
        %v1037 = vld [vmem:[%s249 + $0x1648] sm:$0xff]
        %v1038 = vld [vmem:[%s249 + $0x1650] sm:$0xff]
        %v1039 = vld [vmem:[%s249 + $0x1658] sm:$0xff]
        %v1040 = vld [vmem:[%s249 + $0x1660] sm:$0xff]
        %v1041 = vld [vmem:[%s249 + $0x1668] sm:$0xff]
        %v1042 = vld [vmem:[%s249 + $0x1670] sm:$0xff]
        %v1043 = vld [vmem:[%s249 + $0x1678] sm:$0xff]
        %v1044 = vld [vmem:[%s249 + $0x1680] sm:$0xff]
        %v1045 = vld [vmem:[%s249 + $0x1688] sm:$0xff]
        %v1046 = vld [vmem:[%s249 + $0x1690] sm:$0xff]
        %v1047 = vld [vmem:[%s249 + $0x1698] sm:$0xff]
        %v1048 = vld [vmem:[%s249 + $0x16a0] sm:$0xff]
        %v1049 = vld [vmem:[%s249 + $0x16a8] sm:$0xff]
        %v1050 = vld [vmem:[%s249 + $0x16b0] sm:$0xff]
        %v1051 = vld [vmem:[%s249 + $0x16b8] sm:$0xff]
        %v1052 = vld [vmem:[%s249 + $0x16c0] sm:$0xff]
        %v1053 = vld [vmem:[%s249 + $0x16c8] sm:$0xff]
        %v1054 = vld [vmem:[%s249 + $0x16d0] sm:$0xff]
        %v1055 = vld [vmem:[%s249 + $0x16d8] sm:$0xff]
        %v1056 = vld [vmem:[%s249 + $0x16e0] sm:$0xff]
        %v1057 = vld [vmem:[%s249 + $0x16e8] sm:$0xff]
        %v1058 = vld [vmem:[%s249 + $0x16f0] sm:$0xff]
        %v1059 = vld [vmem:[%s249 + $0x16f8] sm:$0xff]
        %v1060 = vld [vmem:[%s249 + $0x1700] sm:$0xff]
        %v1061 = vld [vmem:[%s249 + $0x1708] sm:$0xff]
        %v1062 = vld [vmem:[%s249 + $0x1710] sm:$0xff]
        %v1063 = vld [vmem:[%s249 + $0x1718] sm:$0xff]
        %v1064 = vld [vmem:[%s249 + $0x1720] sm:$0xff]
        %v1065 = vld [vmem:[%s249 + $0x1728] sm:$0xff]
        %v1066 = vld [vmem:[%s249 + $0x1730] sm:$0xff]
        %v1067 = vld [vmem:[%s249 + $0x1738] sm:$0xff]
        %v1068 = vld [vmem:[%s249 + $0x1740] sm:$0xff]
        %v1069 = vld [vmem:[%s249 + $0x1748] sm:$0xff]
        %v1070 = vld [vmem:[%s249 + $0x1750] sm:$0xff]
        %v1071 = vld [vmem:[%s249 + $0x1758] sm:$0xff]
        %v1072 = vld [vmem:[%s249 + $0x1760] sm:$0xff]
        %v1073 = vld [vmem:[%s249 + $0x1768] sm:$0xff]
        %v1074 = vld [vmem:[%s249 + $0x1770] sm:$0xff]
        %v1075 = vld [vmem:[%s249 + $0x1778] sm:$0xff]
        %v1076 = vld [vmem:[%s249 + $0x1780] sm:$0xff]
        %v1077 = vld [vmem:[%s249 + $0x1788] sm:$0xff]
        %v1078 = vld [vmem:[%s249 + $0x1790] sm:$0xff]
        %v1079 = vld [vmem:[%s249 + $0x1798] sm:$0xff]
        %v1080 = vld [vmem:[%s249 + $0x17a0] sm:$0xff]
        %v1081 = vld [vmem:[%s249 + $0x17a8] sm:$0xff]
        %v1082 = vld [vmem:[%s249 + $0x17b0] sm:$0xff]
        %v1083 = vld [vmem:[%s249 + $0x17b8] sm:$0xff]
        %v1084 = vld [vmem:[%s249 + $0x17c0] sm:$0xff]
        %v1085 = vld [vmem:[%s249 + $0x17c8] sm:$0xff]
        %v1086 = vld [vmem:[%s249 + $0x17d0] sm:$0xff]
        %v1087 = vld [vmem:[%s249 + $0x17d8] sm:$0xff]
        %v1088 = vld [vmem:[%s249 + $0x17e0] sm:$0xff]
        %v1089 = vld [vmem:[%s249 + $0x17e8] sm:$0xff]
        %v1090 = vld [vmem:[%s249 + $0x17f0] sm:$0xff]
        %v1091 = vld [vmem:[%s249 + $0x17f8] sm:$0xff]
        %v1092 = vld [vmem:[%s249 + $0x1800] sm:$0xff]
        %v1093 = vld [vmem:[%s249 + $0x1808] sm:$0xff]
        %v1094 = vld [vmem:[%s249 + $0x1810] sm:$0xff]
        %v1095 = vld [vmem:[%s249 + $0x1818] sm:$0xff]
        %v1096 = vld [vmem:[%s249 + $0x1820] sm:$0xff]
        %v1097 = vld [vmem:[%s249 + $0x1828] sm:$0xff]
        %v1098 = vld [vmem:[%s249 + $0x1830] sm:$0xff]
        %v1099 = vld [vmem:[%s249 + $0x1838] sm:$0xff]
        %v1100 = vld [vmem:[%s249 + $0x1840] sm:$0xff]
        %v1101 = vld [vmem:[%s249 + $0x1848] sm:$0xff]
        %v1102 = vld [vmem:[%s249 + $0x1850] sm:$0xff]
        %v1103 = vld [vmem:[%s249 + $0x1858] sm:$0xff]
        %v1104 = vld [vmem:[%s249 + $0x1860] sm:$0xff]
        %v1105 = vld [vmem:[%s249 + $0x1868] sm:$0xff]
        %v1106 = vld [vmem:[%s249 + $0x1870] sm:$0xff]
        %v1107 = vld [vmem:[%s249 + $0x1878] sm:$0xff]
        %v1108 = vld [vmem:[%s249 + $0x1880] sm:$0xff]
        %v1109 = vld [vmem:[%s249 + $0x1888] sm:$0xff]
        %v1110 = vld [vmem:[%s249 + $0x1890] sm:$0xff]
        %v1111 = vld [vmem:[%s249 + $0x1898] sm:$0xff]
        %v1112 = vld [vmem:[%s249 + $0x18a0] sm:$0xff]
        %v1113 = vld [vmem:[%s249 + $0x18a8] sm:$0xff]
        %v1114 = vld [vmem:[%s249 + $0x18b0] sm:$0xff]
        %v1115 = vld [vmem:[%s249 + $0x18b8] sm:$0xff]
        %v1116 = vld [vmem:[%s249 + $0x18c0] sm:$0xff]
        %v1117 = vld [vmem:[%s249 + $0x18c8] sm:$0xff]
        %v1118 = vld [vmem:[%s249 + $0x18d0] sm:$0xff]
        %v1119 = vld [vmem:[%s249 + $0x18d8] sm:$0xff]
        %v1120 = vld [vmem:[%s249 + $0x18e0] sm:$0xff]
        %v1121 = vld [vmem:[%s249 + $0x18e8] sm:$0xff]
        %v1122 = vld [vmem:[%s249 + $0x18f0] sm:$0xff]
        %v1123 = vld [vmem:[%s249 + $0x18f8] sm:$0xff]
        %v1124 = vld [vmem:[%s249 + $0x1900] sm:$0xff]
        %v1125 = vld [vmem:[%s249 + $0x1908] sm:$0xff]
        %v1126 = vld [vmem:[%s249 + $0x1910] sm:$0xff]
        %v1127 = vld [vmem:[%s249 + $0x1918] sm:$0xff]
        %v1128 = vld [vmem:[%s249 + $0x1920] sm:$0xff]
        %v1129 = vld [vmem:[%s249 + $0x1928] sm:$0xff]
        %v1130 = vld [vmem:[%s249 + $0x1930] sm:$0xff]
        %v1131 = vld [vmem:[%s249 + $0x1938] sm:$0xff]
        %v1132 = vld [vmem:[%s249 + $0x1940] sm:$0xff]
        %v1133 = vld [vmem:[%s249 + $0x1948] sm:$0xff]
        %v1134 = vld [vmem:[%s249 + $0x1950] sm:$0xff]
        %v1135 = vld [vmem:[%s249 + $0x1958] sm:$0xff]
        %v1136 = vld [vmem:[%s249 + $0x1960] sm:$0xff]
        %v1137 = vld [vmem:[%s249 + $0x1968] sm:$0xff]
        %v1138 = vld [vmem:[%s249 + $0x1970] sm:$0xff]
        %v1139 = vld [vmem:[%s249 + $0x1978] sm:$0xff]
        %v1140 = vld [vmem:[%s249 + $0x1980] sm:$0xff]
        %v1141 = vld [vmem:[%s249 + $0x1988] sm:$0xff]
        %v1142 = vld [vmem:[%s249 + $0x1990] sm:$0xff]
        %v1143 = vld [vmem:[%s249 + $0x1998] sm:$0xff]
        %v1144 = vld [vmem:[%s249 + $0x19a0] sm:$0xff]
        %v1145 = vld [vmem:[%s249 + $0x19a8] sm:$0xff]
        %v1146 = vld [vmem:[%s249 + $0x19b0] sm:$0xff]
        %v1147 = vld [vmem:[%s249 + $0x19b8] sm:$0xff]
        %v1148 = vld [vmem:[%s249 + $0x19c0] sm:$0xff]
        %v1149 = vld [vmem:[%s249 + $0x19c8] sm:$0xff]
        %v1150 = vld [vmem:[%s249 + $0x19d0] sm:$0xff]
        %v1151 = vld [vmem:[%s249 + $0x19d8] sm:$0xff]
        %v1152 = vld [vmem:[%s249 + $0x19e0] sm:$0xff]
        %v1153 = vld [vmem:[%s249 + $0x19e8] sm:$0xff]
        %v1154 = vld [vmem:[%s249 + $0x19f0] sm:$0xff]
        %v1155 = vld [vmem:[%s249 + $0x19f8] sm:$0xff]
        %v1156 = vld [vmem:[%s249 + $0x1a00] sm:$0xff]
        %v1157 = vld [vmem:[%s249 + $0x1a08] sm:$0xff]
        %v1158 = vld [vmem:[%s249 + $0x1a10] sm:$0xff]
        %v1159 = vld [vmem:[%s249 + $0x1a18] sm:$0xff]
        %v1160 = vld [vmem:[%s249 + $0x1a20] sm:$0xff]
        %v1161 = vld [vmem:[%s249 + $0x1a28] sm:$0xff]
        %v1162 = vld [vmem:[%s249 + $0x1a30] sm:$0xff]
        %v1163 = vld [vmem:[%s249 + $0x1a38] sm:$0xff]
        %v1164 = vld [vmem:[%s249 + $0x1a40] sm:$0xff]
        %v1165 = vld [vmem:[%s249 + $0x1a48] sm:$0xff]
        %v1166 = vld [vmem:[%s249 + $0x1a50] sm:$0xff]
        %v1167 = vld [vmem:[%s249 + $0x1a58] sm:$0xff]
        %v1168 = vld [vmem:[%s249 + $0x1a60] sm:$0xff]
        %v1169 = vld [vmem:[%s249 + $0x1a68] sm:$0xff]
        %v1170 = vld [vmem:[%s249 + $0x1a70] sm:$0xff]
        %v1171 = vld [vmem:[%s249 + $0x1a78] sm:$0xff]
        %v1172 = vld [vmem:[%s249 + $0x1a80] sm:$0xff]
        %v1173 = vld [vmem:[%s249 + $0x1a88] sm:$0xff]
        %v1174 = vld [vmem:[%s249 + $0x1a90] sm:$0xff]
        %v1175 = vld [vmem:[%s249 + $0x1a98] sm:$0xff]
        %v1176 = vld [vmem:[%s249 + $0x1aa0] sm:$0xff]
        %v1177 = vld [vmem:[%s249 + $0x1aa8] sm:$0xff]
        %v1178 = vld [vmem:[%s249 + $0x1ab0] sm:$0xff]
        %v1179 = vld [vmem:[%s249 + $0x1ab8] sm:$0xff]
        %v1180 = vld [vmem:[%s249 + $0x1ac0] sm:$0xff]
        %v1181 = vld [vmem:[%s249 + $0x1ac8] sm:$0xff]
        %v1182 = vld [vmem:[%s249 + $0x1ad0] sm:$0xff]
        %v1183 = vld [vmem:[%s249 + $0x1ad8] sm:$0xff]
        %v1184 = vld [vmem:[%s249 + $0x1ae0] sm:$0xff]
        %v1185 = vld [vmem:[%s249 + $0x1ae8] sm:$0xff]
        %v1186 = vld [vmem:[%s249 + $0x1af0] sm:$0xff]
        %v1187 = vld [vmem:[%s249 + $0x1af8] sm:$0xff]
        %v1188 = vld [vmem:[%s249 + $0x1b00] sm:$0xff]
        %v1189 = vld [vmem:[%s249 + $0x1b08] sm:$0xff]
        %v1190 = vld [vmem:[%s249 + $0x1b10] sm:$0xff]
        %v1191 = vld [vmem:[%s249 + $0x1b18] sm:$0xff]
        %v1192 = vld [vmem:[%s249 + $0x1b20] sm:$0xff]
        %v1193 = vld [vmem:[%s249 + $0x1b28] sm:$0xff]
        %v1194 = vld [vmem:[%s249 + $0x1b30] sm:$0xff]
        %v1195 = vld [vmem:[%s249 + $0x1b38] sm:$0xff]
        %v1196 = vld [vmem:[%s249 + $0x1b40] sm:$0xff]
        %v1197 = vld [vmem:[%s249 + $0x1b48] sm:$0xff]
        %v1198 = vld [vmem:[%s249 + $0x1b50] sm:$0xff]
        %v1199 = vld [vmem:[%s249 + $0x1b58] sm:$0xff]
        %v1200 = vld [vmem:[%s249 + $0x1b60] sm:$0xff]
        %v1201 = vld [vmem:[%s249 + $0x1b68] sm:$0xff]
        %v1202 = vld [vmem:[%s249 + $0x1b70] sm:$0xff]
        %v1203 = vld [vmem:[%s249 + $0x1b78] sm:$0xff]
        %v1204 = vld [vmem:[%s249 + $0x1b80] sm:$0xff]
        %v1205 = vld [vmem:[%s249 + $0x1b88] sm:$0xff]
        %v1206 = vld [vmem:[%s249 + $0x1b90] sm:$0xff]
        %v1207 = vld [vmem:[%s249 + $0x1b98] sm:$0xff]
        %v1208 = vld [vmem:[%s249 + $0x1ba0] sm:$0xff]
        %v1209 = vld [vmem:[%s249 + $0x1ba8] sm:$0xff]
        %v1210 = vld [vmem:[%s249 + $0x1bb0] sm:$0xff]
        %v1211 = vld [vmem:[%s249 + $0x1bb8] sm:$0xff]
        %v1212 = vld [vmem:[%s249 + $0x1bc0] sm:$0xff]
        %v1213 = vld [vmem:[%s249 + $0x1bc8] sm:$0xff]
        %v1214 = vld [vmem:[%s249 + $0x1bd0] sm:$0xff]
        %v1215 = vld [vmem:[%s249 + $0x1bd8] sm:$0xff]
        %v1216 = vld [vmem:[%s249 + $0x1be0] sm:$0xff]
        %v1217 = vld [vmem:[%s249 + $0x1be8] sm:$0xff]
        %v1218 = vld [vmem:[%s249 + $0x1bf0] sm:$0xff]
        %v1219 = vld [vmem:[%s249 + $0x1bf8] sm:$0xff]
        %v1220 = vld [vmem:[%s249 + $0x1c00] sm:$0xff]
        %v1221 = vld [vmem:[%s249 + $0x1c08] sm:$0xff]
        %v1222 = vld [vmem:[%s249 + $0x1c10] sm:$0xff]
        %v1223 = vld [vmem:[%s249 + $0x1c18] sm:$0xff]
        %v1224 = vld [vmem:[%s249 + $0x1c20] sm:$0xff]
        %v1225 = vld [vmem:[%s249 + $0x1c28] sm:$0xff]
        %v1226 = vld [vmem:[%s249 + $0x1c30] sm:$0xff]
        %v1227 = vld [vmem:[%s249 + $0x1c38] sm:$0xff]
        %v1228 = vld [vmem:[%s249 + $0x1c40] sm:$0xff]
        %v1229 = vld [vmem:[%s249 + $0x1c48] sm:$0xff]
        %v1230 = vld [vmem:[%s249 + $0x1c50] sm:$0xff]
        %v1231 = vld [vmem:[%s249 + $0x1c58] sm:$0xff]
        %v1232 = vld [vmem:[%s249 + $0x1c60] sm:$0xff]
        %v1233 = vld [vmem:[%s249 + $0x1c68] sm:$0xff]
        %v1234 = vld [vmem:[%s249 + $0x1c70] sm:$0xff]
        %v1235 = vld [vmem:[%s249 + $0x1c78] sm:$0xff]
        %v1236 = vld [vmem:[%s249 + $0x1c80] sm:$0xff]
        %v1237 = vld [vmem:[%s249 + $0x1c88] sm:$0xff]
        %v1238 = vld [vmem:[%s249 + $0x1c90] sm:$0xff]
        %v1239 = vld [vmem:[%s249 + $0x1c98] sm:$0xff]
        %v1240 = vld [vmem:[%s249 + $0x1ca0] sm:$0xff]
        %v1241 = vld [vmem:[%s249 + $0x1ca8] sm:$0xff]
        %v1242 = vld [vmem:[%s249 + $0x1cb0] sm:$0xff]
        %v1243 = vld [vmem:[%s249 + $0x1cb8] sm:$0xff]
        %v1244 = vld [vmem:[%s249 + $0x1cc0] sm:$0xff]
        %v1245 = vld [vmem:[%s249 + $0x1cc8] sm:$0xff]
        %v1246 = vld [vmem:[%s249 + $0x1cd0] sm:$0xff]
        %v1247 = vld [vmem:[%s249 + $0x1cd8] sm:$0xff]
        %v1248 = vld [vmem:[%s249 + $0x1ce0] sm:$0xff]
        %v1249 = vld [vmem:[%s249 + $0x1ce8] sm:$0xff]
        %v1250 = vld [vmem:[%s249 + $0x1cf0] sm:$0xff]
        %v1251 = vld [vmem:[%s249 + $0x1cf8] sm:$0xff]
        %v1252 = vld [vmem:[%s249 + $0x1d00] sm:$0xff]
        %v1253 = vld [vmem:[%s249 + $0x1d08] sm:$0xff]
        %v1254 = vld [vmem:[%s249 + $0x1d10] sm:$0xff]
        %v1255 = vld [vmem:[%s249 + $0x1d18] sm:$0xff]
        %v1256 = vld [vmem:[%s249 + $0x1d20] sm:$0xff]
        %v1257 = vld [vmem:[%s249 + $0x1d28] sm:$0xff]
        %v1258 = vld [vmem:[%s249 + $0x1d30] sm:$0xff]
        %v1259 = vld [vmem:[%s249 + $0x1d38] sm:$0xff]
        %v1260 = vld [vmem:[%s249 + $0x1d40] sm:$0xff]
        %v1261 = vld [vmem:[%s249 + $0x1d48] sm:$0xff]
        %v1262 = vld [vmem:[%s249 + $0x1d50] sm:$0xff]
        %v1263 = vld [vmem:[%s249 + $0x1d58] sm:$0xff]
        %v1264 = vld [vmem:[%s249 + $0x1d60] sm:$0xff]
        %v1265 = vld [vmem:[%s249 + $0x1d68] sm:$0xff]
        %v1266 = vld [vmem:[%s249 + $0x1d70] sm:$0xff]
        %v1267 = vld [vmem:[%s249 + $0x1d78] sm:$0xff]
        %v1268 = vld [vmem:[%s249 + $0x1d80] sm:$0xff]
        %v1269 = vld [vmem:[%s249 + $0x1d88] sm:$0xff]
        %v1270 = vld [vmem:[%s249 + $0x1d90] sm:$0xff]
        %v1271 = vld [vmem:[%s249 + $0x1d98] sm:$0xff]
        %v1272 = vld [vmem:[%s249 + $0x1da0] sm:$0xff]
        %v1273 = vld [vmem:[%s249 + $0x1da8] sm:$0xff]
        %v1274 = vld [vmem:[%s249 + $0x1db0] sm:$0xff]
        %v1275 = vld [vmem:[%s249 + $0x1db8] sm:$0xff]
        %v1276 = vld [vmem:[%s249 + $0x1dc0] sm:$0xff]
        %v1277 = vld [vmem:[%s249 + $0x1dc8] sm:$0xff]
        %v1278 = vld [vmem:[%s249 + $0x1dd0] sm:$0xff]
        %v1279 = vld [vmem:[%s249 + $0x1dd8] sm:$0xff]
        %v1280 = vld [vmem:[%s249 + $0x1de0] sm:$0xff]
        %v1281 = vld [vmem:[%s249 + $0x1de8] sm:$0xff]
        %v1282 = vld [vmem:[%s249 + $0x1df0] sm:$0xff]
        %v1283 = vld [vmem:[%s249 + $0x1df8] sm:$0xff]
        %v1284 = vld [vmem:[%s249 + $0x1e00] sm:$0xff]
        %v1285 = vld [vmem:[%s249 + $0x1e08] sm:$0xff]
        %v1286 = vld [vmem:[%s249 + $0x1e10] sm:$0xff]
        %v1287 = vld [vmem:[%s249 + $0x1e18] sm:$0xff]
        %v1288 = vld [vmem:[%s249 + $0x1e20] sm:$0xff]
        %v1289 = vld [vmem:[%s249 + $0x1e28] sm:$0xff]
        %v1290 = vld [vmem:[%s249 + $0x1e30] sm:$0xff]
        %v1291 = vld [vmem:[%s249 + $0x1e38] sm:$0xff]
        %v1292 = vld [vmem:[%s249 + $0x1e40] sm:$0xff]
        %v1293 = vld [vmem:[%s249 + $0x1e48] sm:$0xff]
        %v1294 = vld [vmem:[%s249 + $0x1e50] sm:$0xff]
        %v1295 = vld [vmem:[%s249 + $0x1e58] sm:$0xff]
        %v1296 = vld [vmem:[%s249 + $0x1e60] sm:$0xff]
        %v1297 = vld [vmem:[%s249 + $0x1e68] sm:$0xff]
        %v1298 = vld [vmem:[%s249 + $0x1e70] sm:$0xff]
        %v1299 = vld [vmem:[%s249 + $0x1e78] sm:$0xff]
        %v1300 = vld [vmem:[%s249 + $0x1e80] sm:$0xff]
        %v1301 = vld [vmem:[%s249 + $0x1e88] sm:$0xff]
        %v1302 = vld [vmem:[%s249 + $0x1e90] sm:$0xff]
        %v1303 = vld [vmem:[%s249 + $0x1e98] sm:$0xff]
        %v1304 = vld [vmem:[%s249 + $0x1ea0] sm:$0xff]
        %v1305 = vld [vmem:[%s249 + $0x1ea8] sm:$0xff]
        %v1306 = vld [vmem:[%s249 + $0x1eb0] sm:$0xff]
        %v1307 = vld [vmem:[%s249 + $0x1eb8] sm:$0xff]
        %v1308 = vld [vmem:[%s249 + $0x1ec0] sm:$0xff]
        %v1309 = vld [vmem:[%s249 + $0x1ec8] sm:$0xff]
        %v1310 = vld [vmem:[%s249 + $0x1ed0] sm:$0xff]
        %v1311 = vld [vmem:[%s249 + $0x1ed8] sm:$0xff]
        %v1312 = vld [vmem:[%s249 + $0x1ee0] sm:$0xff]
        %v1313 = vld [vmem:[%s249 + $0x1ee8] sm:$0xff]
        %v1314 = vld [vmem:[%s249 + $0x1ef0] sm:$0xff]
        %v1315 = vld [vmem:[%s249 + $0x1ef8] sm:$0xff]
        %v1316 = vld [vmem:[%s249 + $0x1f00] sm:$0xff]
        %v1317 = vld [vmem:[%s249 + $0x1f08] sm:$0xff]
        %v1318 = vld [vmem:[%s249 + $0x1f10] sm:$0xff]
        %v1319 = vld [vmem:[%s249 + $0x1f18] sm:$0xff]
        %v1320 = vld [vmem:[%s249 + $0x1f20] sm:$0xff]
        %v1321 = vld [vmem:[%s249 + $0x1f28] sm:$0xff]
        %v1322 = vld [vmem:[%s249 + $0x1f30] sm:$0xff]
        %v1323 = vld [vmem:[%s249 + $0x1f38] sm:$0xff]
        %v1324 = vld [vmem:[%s249 + $0x1f40] sm:$0xff]
        %v1325 = vld [vmem:[%s249 + $0x1f48] sm:$0xff]
        %v1326 = vld [vmem:[%s249 + $0x1f50] sm:$0xff]
        %v1327 = vld [vmem:[%s249 + $0x1f58] sm:$0xff]
        %v1328 = vld [vmem:[%s249 + $0x1f60] sm:$0xff]
        %v1329 = vld [vmem:[%s249 + $0x1f68] sm:$0xff]
        %v1330 = vld [vmem:[%s249 + $0x1f70] sm:$0xff]
        %v1331 = vld [vmem:[%s249 + $0x1f78] sm:$0xff]
        %v1332 = vld [vmem:[%s249 + $0x1f80] sm:$0xff]
        %v1333 = vld [vmem:[%s249 + $0x1f88] sm:$0xff]
        %v1334 = vld [vmem:[%s249 + $0x1f90] sm:$0xff]
        %v1335 = vld [vmem:[%s249 + $0x1f98] sm:$0xff]
        %v1336 = vld [vmem:[%s249 + $0x1fa0] sm:$0xff]
        %v1337 = vld [vmem:[%s249 + $0x1fa8] sm:$0xff]
        %v1338 = vld [vmem:[%s249 + $0x1fb0] sm:$0xff]
        %v1339 = vld [vmem:[%s249 + $0x1fb8] sm:$0xff]
        %v1340 = vld [vmem:[%s249 + $0x1fc0] sm:$0xff]
        %v1341 = vld [vmem:[%s249 + $0x1fc8] sm:$0xff]
        %v1342 = vld [vmem:[%s249 + $0x1fd0] sm:$0xff]
        %v1343 = vld [vmem:[%s249 + $0x1fd8] sm:$0xff]
        %v1344 = vld [vmem:[%s249 + $0x1fe0] sm:$0xff]
        %v1345 = vld [vmem:[%s249 + $0x1fe8] sm:$0xff]
        %v1346 = vld [vmem:[%s249 + $0x1ff0] sm:$0xff]
        %v1347 = vld [vmem:[%s249 + $0x1ff8] sm:$0xff]
        %v1356 = vunpack.c.l.b16 %v316
        %v1357 = vunpack.c.h.b16 %v316
        %v1358 = vunpack.c.l.b16 %v317
        %v1359 = vunpack.c.h.b16 %v317
        %v1360 = vunpack.c.l.b16 %v318
        %v1361 = vunpack.c.h.b16 %v318
        %v1362 = vunpack.c.l.b16 %v319
        %v1363 = vunpack.c.h.b16 %v319
        %v1364 = vunpack.c.l.b16 %v320
        %v1365 = vunpack.c.h.b16 %v320
        %v1366 = vunpack.c.l.b16 %v321
        %v1367 = vunpack.c.h.b16 %v321
        %v1368 = vunpack.c.l.b16 %v322
        %v1369 = vunpack.c.h.b16 %v322
        %v1370 = vunpack.c.l.b16 %v323
        %v1371 = vunpack.c.h.b16 %v323
        %v1372 = vpack.c.b16 %v1356, %v1356
        %v1373 = vpack.c.b16 %v1357, %v1357
        %v1374 = vpack.c.b16 %v1358, %v1358
        %v1375 = vpack.c.b16 %v1359, %v1359
        %v1376 = vpack.c.b16 %v1360, %v1360
        %v1377 = vpack.c.b16 %v1361, %v1361
        %v1378 = vpack.c.b16 %v1362, %v1362
        %v1379 = vpack.c.b16 %v1363, %v1363
        %v1380 = vpack.c.b16 %v1364, %v1364
        %v1381 = vpack.c.b16 %v1365, %v1365
        %v1382 = vpack.c.b16 %v1366, %v1366
        %v1383 = vpack.c.b16 %v1367, %v1367
        %v1384 = vpack.c.b16 %v1368, %v1368
        %v1385 = vpack.c.b16 %v1369, %v1369
        %v1386 = vpack.c.b16 %v1370, %v1370
        %v1387 = vpack.c.b16 %v1371, %v1371
        %v2428 = vunpack.c.l.b16 %v324
        %v2429 = vunpack.c.h.b16 %v324
        %v2430 = vunpack.c.l.b16 %v325
        %v2431 = vunpack.c.h.b16 %v325
        %v2432 = vunpack.c.l.b16 %v326
        %v2433 = vunpack.c.h.b16 %v326
        %v2434 = vunpack.c.l.b16 %v327
        %v2435 = vunpack.c.h.b16 %v327
        %v2436 = vunpack.c.l.b16 %v328
        %v2437 = vunpack.c.h.b16 %v328
        %v2438 = vunpack.c.l.b16 %v329
        %v2439 = vunpack.c.h.b16 %v329
        %v2440 = vunpack.c.l.b16 %v330
        %v2441 = vunpack.c.h.b16 %v330
        %v2442 = vunpack.c.l.b16 %v331
        %v2443 = vunpack.c.h.b16 %v331
        %v2444 = vunpack.c.l.b16 %v332
        %v2445 = vunpack.c.h.b16 %v332
        %v2446 = vunpack.c.l.b16 %v333
        %v2447 = vunpack.c.h.b16 %v333
        %v2448 = vunpack.c.l.b16 %v334
        %v2449 = vunpack.c.h.b16 %v334
        %v2450 = vunpack.c.l.b16 %v335
        %v2451 = vunpack.c.h.b16 %v335
        %v2452 = vunpack.c.l.b16 %v336
        %v2453 = vunpack.c.h.b16 %v336
        %v2454 = vunpack.c.l.b16 %v337
        %v2455 = vunpack.c.h.b16 %v337
        %v2456 = vunpack.c.l.b16 %v338
        %v2457 = vunpack.c.h.b16 %v338
        %v2458 = vunpack.c.l.b16 %v339
        %v2459 = vunpack.c.h.b16 %v339
        %v2460 = vunpack.c.l.b16 %v340
        %v2461 = vunpack.c.h.b16 %v340
        %v2462 = vunpack.c.l.b16 %v341
        %v2463 = vunpack.c.h.b16 %v341
        %v2464 = vunpack.c.l.b16 %v342
        %v2465 = vunpack.c.h.b16 %v342
        %v2466 = vunpack.c.l.b16 %v343
        %v2467 = vunpack.c.h.b16 %v343
        %v2468 = vunpack.c.l.b16 %v344
        %v2469 = vunpack.c.h.b16 %v344
        %v2470 = vunpack.c.l.b16 %v345
        %v2471 = vunpack.c.h.b16 %v345
        %v2472 = vunpack.c.l.b16 %v346
        %v2473 = vunpack.c.h.b16 %v346
        %v2474 = vunpack.c.l.b16 %v347
        %v2475 = vunpack.c.h.b16 %v347
        %v2476 = vunpack.c.l.b16 %v348
        %v2477 = vunpack.c.h.b16 %v348
        %v2478 = vunpack.c.l.b16 %v349
        %v2479 = vunpack.c.h.b16 %v349
        %v2480 = vunpack.c.l.b16 %v350
        %v2481 = vunpack.c.h.b16 %v350
        %v2482 = vunpack.c.l.b16 %v351
        %v2483 = vunpack.c.h.b16 %v351
        %v2484 = vunpack.c.l.b16 %v352
        %v2485 = vunpack.c.h.b16 %v352
        %v2486 = vunpack.c.l.b16 %v353
        %v2487 = vunpack.c.h.b16 %v353
        %v2488 = vunpack.c.l.b16 %v354
        %v2489 = vunpack.c.h.b16 %v354
        %v2490 = vunpack.c.l.b16 %v355
        %v2491 = vunpack.c.h.b16 %v355
        %v2492 = vunpack.c.l.b16 %v356
        %v2493 = vunpack.c.h.b16 %v356
        %v2494 = vunpack.c.l.b16 %v357
        %v2495 = vunpack.c.h.b16 %v357
        %v2496 = vunpack.c.l.b16 %v358
        %v2497 = vunpack.c.h.b16 %v358
        %v2498 = vunpack.c.l.b16 %v359
        %v2499 = vunpack.c.h.b16 %v359
        %v2500 = vunpack.c.l.b16 %v360
        %v2501 = vunpack.c.h.b16 %v360
        %v2502 = vunpack.c.l.b16 %v361
        %v2503 = vunpack.c.h.b16 %v361
        %v2504 = vunpack.c.l.b16 %v362
        %v2505 = vunpack.c.h.b16 %v362
        %v2506 = vunpack.c.l.b16 %v363
        %v2507 = vunpack.c.h.b16 %v363
        %v2508 = vunpack.c.l.b16 %v364
        %v2509 = vunpack.c.h.b16 %v364
        %v2510 = vunpack.c.l.b16 %v365
        %v2511 = vunpack.c.h.b16 %v365
        %v2512 = vunpack.c.l.b16 %v366
        %v2513 = vunpack.c.h.b16 %v366
        %v2514 = vunpack.c.l.b16 %v367
        %v2515 = vunpack.c.h.b16 %v367
        %v2516 = vunpack.c.l.b16 %v368
        %v2517 = vunpack.c.h.b16 %v368
        %v2518 = vunpack.c.l.b16 %v369
        %v2519 = vunpack.c.h.b16 %v369
        %v2520 = vunpack.c.l.b16 %v370
        %v2521 = vunpack.c.h.b16 %v370
        %v2522 = vunpack.c.l.b16 %v371
        %v2523 = vunpack.c.h.b16 %v371
        %v2524 = vunpack.c.l.b16 %v372
        %v2525 = vunpack.c.h.b16 %v372
        %v2526 = vunpack.c.l.b16 %v373
        %v2527 = vunpack.c.h.b16 %v373
        %v2528 = vunpack.c.l.b16 %v374
        %v2529 = vunpack.c.h.b16 %v374
        %v2530 = vunpack.c.l.b16 %v375
        %v2531 = vunpack.c.h.b16 %v375
        %v2532 = vunpack.c.l.b16 %v376
        %v2533 = vunpack.c.h.b16 %v376
        %v2534 = vunpack.c.l.b16 %v377
        %v2535 = vunpack.c.h.b16 %v377
        %v2536 = vunpack.c.l.b16 %v378
        %v2537 = vunpack.c.h.b16 %v378
        %v2538 = vunpack.c.l.b16 %v379
        %v2539 = vunpack.c.h.b16 %v379
        %v2540 = vunpack.c.l.b16 %v380
        %v2541 = vunpack.c.h.b16 %v380
        %v2542 = vunpack.c.l.b16 %v381
        %v2543 = vunpack.c.h.b16 %v381
        %v2544 = vunpack.c.l.b16 %v382
        %v2545 = vunpack.c.h.b16 %v382
        %v2546 = vunpack.c.l.b16 %v383
        %v2547 = vunpack.c.h.b16 %v383
        %v2548 = vunpack.c.l.b16 %v384
        %v2549 = vunpack.c.h.b16 %v384
        %v2550 = vunpack.c.l.b16 %v385
        %v2551 = vunpack.c.h.b16 %v385
        %v2552 = vunpack.c.l.b16 %v386
        %v2553 = vunpack.c.h.b16 %v386
        %v2554 = vunpack.c.l.b16 %v387
        %v2555 = vunpack.c.h.b16 %v387
        %v2556 = vunpack.c.l.b16 %v388
        %v2557 = vunpack.c.h.b16 %v388
        %v2558 = vunpack.c.l.b16 %v389
        %v2559 = vunpack.c.h.b16 %v389
        %v2560 = vunpack.c.l.b16 %v390
        %v2561 = vunpack.c.h.b16 %v390
        %v2562 = vunpack.c.l.b16 %v391
        %v2563 = vunpack.c.h.b16 %v391
        %v2564 = vunpack.c.l.b16 %v392
        %v2565 = vunpack.c.h.b16 %v392
        %v2566 = vunpack.c.l.b16 %v393
        %v2567 = vunpack.c.h.b16 %v393
        %v2568 = vunpack.c.l.b16 %v394
        %v2569 = vunpack.c.h.b16 %v394
        %v2570 = vunpack.c.l.b16 %v395
        %v2571 = vunpack.c.h.b16 %v395
        %v2572 = vunpack.c.l.b16 %v396
        %v2573 = vunpack.c.h.b16 %v396
        %v2574 = vunpack.c.l.b16 %v397
        %v2575 = vunpack.c.h.b16 %v397
        %v2576 = vunpack.c.l.b16 %v398
        %v2577 = vunpack.c.h.b16 %v398
        %v2578 = vunpack.c.l.b16 %v399
        %v2579 = vunpack.c.h.b16 %v399
        %v2580 = vunpack.c.l.b16 %v400
        %v2581 = vunpack.c.h.b16 %v400
        %v2582 = vunpack.c.l.b16 %v401
        %v2583 = vunpack.c.h.b16 %v401
        %v2584 = vunpack.c.l.b16 %v402
        %v2585 = vunpack.c.h.b16 %v402
        %v2586 = vunpack.c.l.b16 %v403
        %v2587 = vunpack.c.h.b16 %v403
        %v2588 = vunpack.c.l.b16 %v404
        %v2589 = vunpack.c.h.b16 %v404
        %v2590 = vunpack.c.l.b16 %v405
        %v2591 = vunpack.c.h.b16 %v405
        %v2592 = vunpack.c.l.b16 %v406
        %v2593 = vunpack.c.h.b16 %v406
        %v2594 = vunpack.c.l.b16 %v407
        %v2595 = vunpack.c.h.b16 %v407
        %v2596 = vunpack.c.l.b16 %v408
        %v2597 = vunpack.c.h.b16 %v408
        %v2598 = vunpack.c.l.b16 %v409
        %v2599 = vunpack.c.h.b16 %v409
        %v2600 = vunpack.c.l.b16 %v410
        %v2601 = vunpack.c.h.b16 %v410
        %v2602 = vunpack.c.l.b16 %v411
        %v2603 = vunpack.c.h.b16 %v411
        %v2604 = vunpack.c.l.b16 %v412
        %v2605 = vunpack.c.h.b16 %v412
        %v2606 = vunpack.c.l.b16 %v413
        %v2607 = vunpack.c.h.b16 %v413
        %v2608 = vunpack.c.l.b16 %v414
        %v2609 = vunpack.c.h.b16 %v414
        %v2610 = vunpack.c.l.b16 %v415
        %v2611 = vunpack.c.h.b16 %v415
        %v2612 = vunpack.c.l.b16 %v416
        %v2613 = vunpack.c.h.b16 %v416
        %v2614 = vunpack.c.l.b16 %v417
        %v2615 = vunpack.c.h.b16 %v417
        %v2616 = vunpack.c.l.b16 %v418
        %v2617 = vunpack.c.h.b16 %v418
        %v2618 = vunpack.c.l.b16 %v419
        %v2619 = vunpack.c.h.b16 %v419
        %v2620 = vunpack.c.l.b16 %v420
        %v2621 = vunpack.c.h.b16 %v420
        %v2622 = vunpack.c.l.b16 %v421
        %v2623 = vunpack.c.h.b16 %v421
        %v2624 = vunpack.c.l.b16 %v422
        %v2625 = vunpack.c.h.b16 %v422
        %v2626 = vunpack.c.l.b16 %v423
        %v2627 = vunpack.c.h.b16 %v423
        %v2628 = vunpack.c.l.b16 %v424
        %v2629 = vunpack.c.h.b16 %v424
        %v2630 = vunpack.c.l.b16 %v425
        %v2631 = vunpack.c.h.b16 %v425
        %v2632 = vunpack.c.l.b16 %v426
        %v2633 = vunpack.c.h.b16 %v426
        %v2634 = vunpack.c.l.b16 %v427
        %v2635 = vunpack.c.h.b16 %v427
        %v2636 = vunpack.c.l.b16 %v428
        %v2637 = vunpack.c.h.b16 %v428
        %v2638 = vunpack.c.l.b16 %v429
        %v2639 = vunpack.c.h.b16 %v429
        %v2640 = vunpack.c.l.b16 %v430
        %v2641 = vunpack.c.h.b16 %v430
        %v2642 = vunpack.c.l.b16 %v431
        %v2643 = vunpack.c.h.b16 %v431
        %v2644 = vunpack.c.l.b16 %v432
        %v2645 = vunpack.c.h.b16 %v432
        %v2646 = vunpack.c.l.b16 %v433
        %v2647 = vunpack.c.h.b16 %v433
        %v2648 = vunpack.c.l.b16 %v434
        %v2649 = vunpack.c.h.b16 %v434
        %v2650 = vunpack.c.l.b16 %v435
        %v2651 = vunpack.c.h.b16 %v435
        %v2652 = vunpack.c.l.b16 %v436
        %v2653 = vunpack.c.h.b16 %v436
        %v2654 = vunpack.c.l.b16 %v437
        %v2655 = vunpack.c.h.b16 %v437
        %v2656 = vunpack.c.l.b16 %v438
        %v2657 = vunpack.c.h.b16 %v438
        %v2658 = vunpack.c.l.b16 %v439
        %v2659 = vunpack.c.h.b16 %v439
        %v2660 = vunpack.c.l.b16 %v440
        %v2661 = vunpack.c.h.b16 %v440
        %v2662 = vunpack.c.l.b16 %v441
        %v2663 = vunpack.c.h.b16 %v441
        %v2664 = vunpack.c.l.b16 %v442
        %v2665 = vunpack.c.h.b16 %v442
        %v2666 = vunpack.c.l.b16 %v443
        %v2667 = vunpack.c.h.b16 %v443
        %v2668 = vunpack.c.l.b16 %v444
        %v2669 = vunpack.c.h.b16 %v444
        %v2670 = vunpack.c.l.b16 %v445
        %v2671 = vunpack.c.h.b16 %v445
        %v2672 = vunpack.c.l.b16 %v446
        %v2673 = vunpack.c.h.b16 %v446
        %v2674 = vunpack.c.l.b16 %v447
        %v2675 = vunpack.c.h.b16 %v447
        %v2676 = vunpack.c.l.b16 %v448
        %v2677 = vunpack.c.h.b16 %v448
        %v2678 = vunpack.c.l.b16 %v449
        %v2679 = vunpack.c.h.b16 %v449
        %v2680 = vunpack.c.l.b16 %v450
        %v2681 = vunpack.c.h.b16 %v450
        %v2682 = vunpack.c.l.b16 %v451
        %v2683 = vunpack.c.h.b16 %v451
        %v2684 = vunpack.c.l.b16 %v452
        %v2685 = vunpack.c.h.b16 %v452
        %v2686 = vunpack.c.l.b16 %v453
        %v2687 = vunpack.c.h.b16 %v453
        %v2688 = vunpack.c.l.b16 %v454
        %v2689 = vunpack.c.h.b16 %v454
        %v2690 = vunpack.c.l.b16 %v455
        %v2691 = vunpack.c.h.b16 %v455
        %v2692 = vunpack.c.l.b16 %v456
        %v2693 = vunpack.c.h.b16 %v456
        %v2694 = vunpack.c.l.b16 %v457
        %v2695 = vunpack.c.h.b16 %v457
        %v2696 = vunpack.c.l.b16 %v458
        %v2697 = vunpack.c.h.b16 %v458
        %v2698 = vunpack.c.l.b16 %v459
        %v2699 = vunpack.c.h.b16 %v459
        %v2700 = vunpack.c.l.b16 %v460
        %v2701 = vunpack.c.h.b16 %v460
        %v2702 = vunpack.c.l.b16 %v461
        %v2703 = vunpack.c.h.b16 %v461
        %v2704 = vunpack.c.l.b16 %v462
        %v2705 = vunpack.c.h.b16 %v462
        %v2706 = vunpack.c.l.b16 %v463
        %v2707 = vunpack.c.h.b16 %v463
        %v2708 = vunpack.c.l.b16 %v464
        %v2709 = vunpack.c.h.b16 %v464
        %v2710 = vunpack.c.l.b16 %v465
        %v2711 = vunpack.c.h.b16 %v465
        %v2712 = vunpack.c.l.b16 %v466
        %v2713 = vunpack.c.h.b16 %v466
        %v2714 = vunpack.c.l.b16 %v467
        %v2715 = vunpack.c.h.b16 %v467
        %v2716 = vunpack.c.l.b16 %v468
        %v2717 = vunpack.c.h.b16 %v468
        %v2718 = vunpack.c.l.b16 %v469
        %v2719 = vunpack.c.h.b16 %v469
        %v2720 = vunpack.c.l.b16 %v470
        %v2721 = vunpack.c.h.b16 %v470
        %v2722 = vunpack.c.l.b16 %v471
        %v2723 = vunpack.c.h.b16 %v471
        %v2724 = vunpack.c.l.b16 %v472
        %v2725 = vunpack.c.h.b16 %v472
        %v2726 = vunpack.c.l.b16 %v473
        %v2727 = vunpack.c.h.b16 %v473
        %v2728 = vunpack.c.l.b16 %v474
        %v2729 = vunpack.c.h.b16 %v474
        %v2730 = vunpack.c.l.b16 %v475
        %v2731 = vunpack.c.h.b16 %v475
        %v2732 = vunpack.c.l.b16 %v476
        %v2733 = vunpack.c.h.b16 %v476
        %v2734 = vunpack.c.l.b16 %v477
        %v2735 = vunpack.c.h.b16 %v477
        %v2736 = vunpack.c.l.b16 %v478
        %v2737 = vunpack.c.h.b16 %v478
        %v2738 = vunpack.c.l.b16 %v479
        %v2739 = vunpack.c.h.b16 %v479
        %v2740 = vunpack.c.l.b16 %v480
        %v2741 = vunpack.c.h.b16 %v480
        %v2742 = vunpack.c.l.b16 %v481
        %v2743 = vunpack.c.h.b16 %v481
        %v2744 = vunpack.c.l.b16 %v482
        %v2745 = vunpack.c.h.b16 %v482
        %v2746 = vunpack.c.l.b16 %v483
        %v2747 = vunpack.c.h.b16 %v483
        %v2748 = vunpack.c.l.b16 %v484
        %v2749 = vunpack.c.h.b16 %v484
        %v2750 = vunpack.c.l.b16 %v485
        %v2751 = vunpack.c.h.b16 %v485
        %v2752 = vunpack.c.l.b16 %v486
        %v2753 = vunpack.c.h.b16 %v486
        %v2754 = vunpack.c.l.b16 %v487
        %v2755 = vunpack.c.h.b16 %v487
        %v2756 = vunpack.c.l.b16 %v488
        %v2757 = vunpack.c.h.b16 %v488
        %v2758 = vunpack.c.l.b16 %v489
        %v2759 = vunpack.c.h.b16 %v489
        %v2760 = vunpack.c.l.b16 %v490
        %v2761 = vunpack.c.h.b16 %v490
        %v2762 = vunpack.c.l.b16 %v491
        %v2763 = vunpack.c.h.b16 %v491
        %v2764 = vunpack.c.l.b16 %v492
        %v2765 = vunpack.c.h.b16 %v492
        %v2766 = vunpack.c.l.b16 %v493
        %v2767 = vunpack.c.h.b16 %v493
        %v2768 = vunpack.c.l.b16 %v494
        %v2769 = vunpack.c.h.b16 %v494
        %v2770 = vunpack.c.l.b16 %v495
        %v2771 = vunpack.c.h.b16 %v495
        %v2772 = vunpack.c.l.b16 %v496
        %v2773 = vunpack.c.h.b16 %v496
        %v2774 = vunpack.c.l.b16 %v497
        %v2775 = vunpack.c.h.b16 %v497
        %v2776 = vunpack.c.l.b16 %v498
        %v2777 = vunpack.c.h.b16 %v498
        %v2778 = vunpack.c.l.b16 %v499
        %v2779 = vunpack.c.h.b16 %v499
        %v2780 = vunpack.c.l.b16 %v500
        %v2781 = vunpack.c.h.b16 %v500
        %v2782 = vunpack.c.l.b16 %v501
        %v2783 = vunpack.c.h.b16 %v501
        %v2784 = vunpack.c.l.b16 %v502
        %v2785 = vunpack.c.h.b16 %v502
        %v2786 = vunpack.c.l.b16 %v503
        %v2787 = vunpack.c.h.b16 %v503
        %v2788 = vunpack.c.l.b16 %v504
        %v2789 = vunpack.c.h.b16 %v504
        %v2790 = vunpack.c.l.b16 %v505
        %v2791 = vunpack.c.h.b16 %v505
        %v2792 = vunpack.c.l.b16 %v506
        %v2793 = vunpack.c.h.b16 %v506
        %v2794 = vunpack.c.l.b16 %v507
        %v2795 = vunpack.c.h.b16 %v507
        %v2796 = vunpack.c.l.b16 %v508
        %v2797 = vunpack.c.h.b16 %v508
        %v2798 = vunpack.c.l.b16 %v509
        %v2799 = vunpack.c.h.b16 %v509
        %v2800 = vunpack.c.l.b16 %v510
        %v2801 = vunpack.c.h.b16 %v510
        %v2802 = vunpack.c.l.b16 %v511
        %v2803 = vunpack.c.h.b16 %v511
        %v2804 = vunpack.c.l.b16 %v512
        %v2805 = vunpack.c.h.b16 %v512
        %v2806 = vunpack.c.l.b16 %v513
        %v2807 = vunpack.c.h.b16 %v513
        %v2808 = vunpack.c.l.b16 %v514
        %v2809 = vunpack.c.h.b16 %v514
        %v2810 = vunpack.c.l.b16 %v515
        %v2811 = vunpack.c.h.b16 %v515
        %v2812 = vunpack.c.l.b16 %v516
        %v2813 = vunpack.c.h.b16 %v516
        %v2814 = vunpack.c.l.b16 %v517
        %v2815 = vunpack.c.h.b16 %v517
        %v2816 = vunpack.c.l.b16 %v518
        %v2817 = vunpack.c.h.b16 %v518
        %v2818 = vunpack.c.l.b16 %v519
        %v2819 = vunpack.c.h.b16 %v519
        %v2820 = vunpack.c.l.b16 %v520
        %v2821 = vunpack.c.h.b16 %v520
        %v2822 = vunpack.c.l.b16 %v521
        %v2823 = vunpack.c.h.b16 %v521
        %v2824 = vunpack.c.l.b16 %v522
        %v2825 = vunpack.c.h.b16 %v522
        %v2826 = vunpack.c.l.b16 %v523
        %v2827 = vunpack.c.h.b16 %v523
        %v2828 = vunpack.c.l.b16 %v524
        %v2829 = vunpack.c.h.b16 %v524
        %v2830 = vunpack.c.l.b16 %v525
        %v2831 = vunpack.c.h.b16 %v525
        %v2832 = vunpack.c.l.b16 %v526
        %v2833 = vunpack.c.h.b16 %v526
        %v2834 = vunpack.c.l.b16 %v527
        %v2835 = vunpack.c.h.b16 %v527
        %v2836 = vunpack.c.l.b16 %v528
        %v2837 = vunpack.c.h.b16 %v528
        %v2838 = vunpack.c.l.b16 %v529
        %v2839 = vunpack.c.h.b16 %v529
        %v2840 = vunpack.c.l.b16 %v530
        %v2841 = vunpack.c.h.b16 %v530
        %v2842 = vunpack.c.l.b16 %v531
        %v2843 = vunpack.c.h.b16 %v531
        %v2844 = vunpack.c.l.b16 %v532
        %v2845 = vunpack.c.h.b16 %v532
        %v2846 = vunpack.c.l.b16 %v533
        %v2847 = vunpack.c.h.b16 %v533
        %v2848 = vunpack.c.l.b16 %v534
        %v2849 = vunpack.c.h.b16 %v534
        %v2850 = vunpack.c.l.b16 %v535
        %v2851 = vunpack.c.h.b16 %v535
        %v2852 = vunpack.c.l.b16 %v536
        %v2853 = vunpack.c.h.b16 %v536
        %v2854 = vunpack.c.l.b16 %v537
        %v2855 = vunpack.c.h.b16 %v537
        %v2856 = vunpack.c.l.b16 %v538
        %v2857 = vunpack.c.h.b16 %v538
        %v2858 = vunpack.c.l.b16 %v539
        %v2859 = vunpack.c.h.b16 %v539
        %v2860 = vunpack.c.l.b16 %v540
        %v2861 = vunpack.c.h.b16 %v540
        %v2862 = vunpack.c.l.b16 %v541
        %v2863 = vunpack.c.h.b16 %v541
        %v2864 = vunpack.c.l.b16 %v542
        %v2865 = vunpack.c.h.b16 %v542
        %v2866 = vunpack.c.l.b16 %v543
        %v2867 = vunpack.c.h.b16 %v543
        %v2868 = vunpack.c.l.b16 %v544
        %v2869 = vunpack.c.h.b16 %v544
        %v2870 = vunpack.c.l.b16 %v545
        %v2871 = vunpack.c.h.b16 %v545
        %v2872 = vunpack.c.l.b16 %v546
        %v2873 = vunpack.c.h.b16 %v546
        %v2874 = vunpack.c.l.b16 %v547
        %v2875 = vunpack.c.h.b16 %v547
        %v2876 = vunpack.c.l.b16 %v548
        %v2877 = vunpack.c.h.b16 %v548
        %v2878 = vunpack.c.l.b16 %v549
        %v2879 = vunpack.c.h.b16 %v549
        %v2880 = vunpack.c.l.b16 %v550
        %v2881 = vunpack.c.h.b16 %v550
        %v2882 = vunpack.c.l.b16 %v551
        %v2883 = vunpack.c.h.b16 %v551
        %v2884 = vunpack.c.l.b16 %v552
        %v2885 = vunpack.c.h.b16 %v552
        %v2886 = vunpack.c.l.b16 %v553
        %v2887 = vunpack.c.h.b16 %v553
        %v2888 = vunpack.c.l.b16 %v554
        %v2889 = vunpack.c.h.b16 %v554
        %v2890 = vunpack.c.l.b16 %v555
        %v2891 = vunpack.c.h.b16 %v555
        %v2892 = vunpack.c.l.b16 %v556
        %v2893 = vunpack.c.h.b16 %v556
        %v2894 = vunpack.c.l.b16 %v557
        %v2895 = vunpack.c.h.b16 %v557
        %v2896 = vunpack.c.l.b16 %v558
        %v2897 = vunpack.c.h.b16 %v558
        %v2898 = vunpack.c.l.b16 %v559
        %v2899 = vunpack.c.h.b16 %v559
        %v2900 = vunpack.c.l.b16 %v560
        %v2901 = vunpack.c.h.b16 %v560
        %v2902 = vunpack.c.l.b16 %v561
        %v2903 = vunpack.c.h.b16 %v561
        %v2904 = vunpack.c.l.b16 %v562
        %v2905 = vunpack.c.h.b16 %v562
        %v2906 = vunpack.c.l.b16 %v563
        %v2907 = vunpack.c.h.b16 %v563
        %v2908 = vunpack.c.l.b16 %v564
        %v2909 = vunpack.c.h.b16 %v564
        %v2910 = vunpack.c.l.b16 %v565
        %v2911 = vunpack.c.h.b16 %v565
        %v2912 = vunpack.c.l.b16 %v566
        %v2913 = vunpack.c.h.b16 %v566
        %v2914 = vunpack.c.l.b16 %v567
        %v2915 = vunpack.c.h.b16 %v567
        %v2916 = vunpack.c.l.b16 %v568
        %v2917 = vunpack.c.h.b16 %v568
        %v2918 = vunpack.c.l.b16 %v569
        %v2919 = vunpack.c.h.b16 %v569
        %v2920 = vunpack.c.l.b16 %v570
        %v2921 = vunpack.c.h.b16 %v570
        %v2922 = vunpack.c.l.b16 %v571
        %v2923 = vunpack.c.h.b16 %v571
        %v2924 = vunpack.c.l.b16 %v572
        %v2925 = vunpack.c.h.b16 %v572
        %v2926 = vunpack.c.l.b16 %v573
        %v2927 = vunpack.c.h.b16 %v573
        %v2928 = vunpack.c.l.b16 %v574
        %v2929 = vunpack.c.h.b16 %v574
        %v2930 = vunpack.c.l.b16 %v575
        %v2931 = vunpack.c.h.b16 %v575
        %v2932 = vunpack.c.l.b16 %v576
        %v2933 = vunpack.c.h.b16 %v576
        %v2934 = vunpack.c.l.b16 %v577
        %v2935 = vunpack.c.h.b16 %v577
        %v2936 = vunpack.c.l.b16 %v578
        %v2937 = vunpack.c.h.b16 %v578
        %v2938 = vunpack.c.l.b16 %v579
        %v2939 = vunpack.c.h.b16 %v579
        %v2940 = vunpack.c.l.b16 %v580
        %v2941 = vunpack.c.h.b16 %v580
        %v2942 = vunpack.c.l.b16 %v581
        %v2943 = vunpack.c.h.b16 %v581
        %v2944 = vunpack.c.l.b16 %v582
        %v2945 = vunpack.c.h.b16 %v582
        %v2946 = vunpack.c.l.b16 %v583
        %v2947 = vunpack.c.h.b16 %v583
        %v2948 = vunpack.c.l.b16 %v584
        %v2949 = vunpack.c.h.b16 %v584
        %v2950 = vunpack.c.l.b16 %v585
        %v2951 = vunpack.c.h.b16 %v585
        %v2952 = vunpack.c.l.b16 %v586
        %v2953 = vunpack.c.h.b16 %v586
        %v2954 = vunpack.c.l.b16 %v587
        %v2955 = vunpack.c.h.b16 %v587
        %v2956 = vunpack.c.l.b16 %v588
        %v2957 = vunpack.c.h.b16 %v588
        %v2958 = vunpack.c.l.b16 %v589
        %v2959 = vunpack.c.h.b16 %v589
        %v2960 = vunpack.c.l.b16 %v590
        %v2961 = vunpack.c.h.b16 %v590
        %v2962 = vunpack.c.l.b16 %v591
        %v2963 = vunpack.c.h.b16 %v591
        %v2964 = vunpack.c.l.b16 %v592
        %v2965 = vunpack.c.h.b16 %v592
        %v2966 = vunpack.c.l.b16 %v593
        %v2967 = vunpack.c.h.b16 %v593
        %v2968 = vunpack.c.l.b16 %v594
        %v2969 = vunpack.c.h.b16 %v594
        %v2970 = vunpack.c.l.b16 %v595
        %v2971 = vunpack.c.h.b16 %v595
        %v2972 = vunpack.c.l.b16 %v596
        %v2973 = vunpack.c.h.b16 %v596
        %v2974 = vunpack.c.l.b16 %v597
        %v2975 = vunpack.c.h.b16 %v597
        %v2976 = vunpack.c.l.b16 %v598
        %v2977 = vunpack.c.h.b16 %v598
        %v2978 = vunpack.c.l.b16 %v599
        %v2979 = vunpack.c.h.b16 %v599
        %v2980 = vunpack.c.l.b16 %v600
        %v2981 = vunpack.c.h.b16 %v600
        %v2982 = vunpack.c.l.b16 %v601
        %v2983 = vunpack.c.h.b16 %v601
        %v2984 = vunpack.c.l.b16 %v602
        %v2985 = vunpack.c.h.b16 %v602
        %v2986 = vunpack.c.l.b16 %v603
        %v2987 = vunpack.c.h.b16 %v603
        %v2988 = vunpack.c.l.b16 %v604
        %v2989 = vunpack.c.h.b16 %v604
        %v2990 = vunpack.c.l.b16 %v605
        %v2991 = vunpack.c.h.b16 %v605
        %v2992 = vunpack.c.l.b16 %v606
        %v2993 = vunpack.c.h.b16 %v606
        %v2994 = vunpack.c.l.b16 %v607
        %v2995 = vunpack.c.h.b16 %v607
        %v2996 = vunpack.c.l.b16 %v608
        %v2997 = vunpack.c.h.b16 %v608
        %v2998 = vunpack.c.l.b16 %v609
        %v2999 = vunpack.c.h.b16 %v609
        %v3000 = vunpack.c.l.b16 %v610
        %v3001 = vunpack.c.h.b16 %v610
        %v3002 = vunpack.c.l.b16 %v611
        %v3003 = vunpack.c.h.b16 %v611
        %v3004 = vunpack.c.l.b16 %v612
        %v3005 = vunpack.c.h.b16 %v612
        %v3006 = vunpack.c.l.b16 %v613
        %v3007 = vunpack.c.h.b16 %v613
        %v3008 = vunpack.c.l.b16 %v614
        %v3009 = vunpack.c.h.b16 %v614
        %v3010 = vunpack.c.l.b16 %v615
        %v3011 = vunpack.c.h.b16 %v615
        %v3012 = vunpack.c.l.b16 %v616
        %v3013 = vunpack.c.h.b16 %v616
        %v3014 = vunpack.c.l.b16 %v617
        %v3015 = vunpack.c.h.b16 %v617
        %v3016 = vunpack.c.l.b16 %v618
        %v3017 = vunpack.c.h.b16 %v618
        %v3018 = vunpack.c.l.b16 %v619
        %v3019 = vunpack.c.h.b16 %v619
        %v3020 = vunpack.c.l.b16 %v620
        %v3021 = vunpack.c.h.b16 %v620
        %v3022 = vunpack.c.l.b16 %v621
        %v3023 = vunpack.c.h.b16 %v621
        %v3024 = vunpack.c.l.b16 %v622
        %v3025 = vunpack.c.h.b16 %v622
        %v3026 = vunpack.c.l.b16 %v623
        %v3027 = vunpack.c.h.b16 %v623
        %v3028 = vunpack.c.l.b16 %v624
        %v3029 = vunpack.c.h.b16 %v624
        %v3030 = vunpack.c.l.b16 %v625
        %v3031 = vunpack.c.h.b16 %v625
        %v3032 = vunpack.c.l.b16 %v626
        %v3033 = vunpack.c.h.b16 %v626
        %v3034 = vunpack.c.l.b16 %v627
        %v3035 = vunpack.c.h.b16 %v627
        %v3036 = vunpack.c.l.b16 %v628
        %v3037 = vunpack.c.h.b16 %v628
        %v3038 = vunpack.c.l.b16 %v629
        %v3039 = vunpack.c.h.b16 %v629
        %v3040 = vunpack.c.l.b16 %v630
        %v3041 = vunpack.c.h.b16 %v630
        %v3042 = vunpack.c.l.b16 %v631
        %v3043 = vunpack.c.h.b16 %v631
        %v3044 = vunpack.c.l.b16 %v632
        %v3045 = vunpack.c.h.b16 %v632
        %v3046 = vunpack.c.l.b16 %v633
        %v3047 = vunpack.c.h.b16 %v633
        %v3048 = vunpack.c.l.b16 %v634
        %v3049 = vunpack.c.h.b16 %v634
        %v3050 = vunpack.c.l.b16 %v635
        %v3051 = vunpack.c.h.b16 %v635
        %v3052 = vunpack.c.l.b16 %v636
        %v3053 = vunpack.c.h.b16 %v636
        %v3054 = vunpack.c.l.b16 %v637
        %v3055 = vunpack.c.h.b16 %v637
        %v3056 = vunpack.c.l.b16 %v638
        %v3057 = vunpack.c.h.b16 %v638
        %v3058 = vunpack.c.l.b16 %v639
        %v3059 = vunpack.c.h.b16 %v639
        %v3060 = vunpack.c.l.b16 %v640
        %v3061 = vunpack.c.h.b16 %v640
        %v3062 = vunpack.c.l.b16 %v641
        %v3063 = vunpack.c.h.b16 %v641
        %v3064 = vunpack.c.l.b16 %v642
        %v3065 = vunpack.c.h.b16 %v642
        %v3066 = vunpack.c.l.b16 %v643
        %v3067 = vunpack.c.h.b16 %v643
        %v3068 = vunpack.c.l.b16 %v644
        %v3069 = vunpack.c.h.b16 %v644
        %v3070 = vunpack.c.l.b16 %v645
        %v3071 = vunpack.c.h.b16 %v645
        %v3072 = vunpack.c.l.b16 %v646
        %v3073 = vunpack.c.h.b16 %v646
        %v3074 = vunpack.c.l.b16 %v647
        %v3075 = vunpack.c.h.b16 %v647
        %v3076 = vunpack.c.l.b16 %v648
        %v3077 = vunpack.c.h.b16 %v648
        %v3078 = vunpack.c.l.b16 %v649
        %v3079 = vunpack.c.h.b16 %v649
        %v3080 = vunpack.c.l.b16 %v650
        %v3081 = vunpack.c.h.b16 %v650
        %v3082 = vunpack.c.l.b16 %v651
        %v3083 = vunpack.c.h.b16 %v651
        %v3084 = vunpack.c.l.b16 %v652
        %v3085 = vunpack.c.h.b16 %v652
        %v3086 = vunpack.c.l.b16 %v653
        %v3087 = vunpack.c.h.b16 %v653
        %v3088 = vunpack.c.l.b16 %v654
        %v3089 = vunpack.c.h.b16 %v654
        %v3090 = vunpack.c.l.b16 %v655
        %v3091 = vunpack.c.h.b16 %v655
        %v3092 = vunpack.c.l.b16 %v656
        %v3093 = vunpack.c.h.b16 %v656
        %v3094 = vunpack.c.l.b16 %v657
        %v3095 = vunpack.c.h.b16 %v657
        %v3096 = vunpack.c.l.b16 %v658
        %v3097 = vunpack.c.h.b16 %v658
        %v3098 = vunpack.c.l.b16 %v659
        %v3099 = vunpack.c.h.b16 %v659
        %v3100 = vunpack.c.l.b16 %v660
        %v3101 = vunpack.c.h.b16 %v660
        %v3102 = vunpack.c.l.b16 %v661
        %v3103 = vunpack.c.h.b16 %v661
        %v3104 = vunpack.c.l.b16 %v662
        %v3105 = vunpack.c.h.b16 %v662
        %v3106 = vunpack.c.l.b16 %v663
        %v3107 = vunpack.c.h.b16 %v663
        %v3108 = vunpack.c.l.b16 %v664
        %v3109 = vunpack.c.h.b16 %v664
        %v3110 = vunpack.c.l.b16 %v665
        %v3111 = vunpack.c.h.b16 %v665
        %v3112 = vunpack.c.l.b16 %v666
        %v3113 = vunpack.c.h.b16 %v666
        %v3114 = vunpack.c.l.b16 %v667
        %v3115 = vunpack.c.h.b16 %v667
        %v3116 = vunpack.c.l.b16 %v668
        %v3117 = vunpack.c.h.b16 %v668
        %v3118 = vunpack.c.l.b16 %v669
        %v3119 = vunpack.c.h.b16 %v669
        %v3120 = vunpack.c.l.b16 %v670
        %v3121 = vunpack.c.h.b16 %v670
        %v3122 = vunpack.c.l.b16 %v671
        %v3123 = vunpack.c.h.b16 %v671
        %v3124 = vunpack.c.l.b16 %v672
        %v3125 = vunpack.c.h.b16 %v672
        %v3126 = vunpack.c.l.b16 %v673
        %v3127 = vunpack.c.h.b16 %v673
        %v3128 = vunpack.c.l.b16 %v674
        %v3129 = vunpack.c.h.b16 %v674
        %v3130 = vunpack.c.l.b16 %v675
        %v3131 = vunpack.c.h.b16 %v675
        %v3132 = vunpack.c.l.b16 %v676
        %v3133 = vunpack.c.h.b16 %v676
        %v3134 = vunpack.c.l.b16 %v677
        %v3135 = vunpack.c.h.b16 %v677
        %v3136 = vunpack.c.l.b16 %v678
        %v3137 = vunpack.c.h.b16 %v678
        %v3138 = vunpack.c.l.b16 %v679
        %v3139 = vunpack.c.h.b16 %v679
        %v3140 = vunpack.c.l.b16 %v680
        %v3141 = vunpack.c.h.b16 %v680
        %v3142 = vunpack.c.l.b16 %v681
        %v3143 = vunpack.c.h.b16 %v681
        %v3144 = vunpack.c.l.b16 %v682
        %v3145 = vunpack.c.h.b16 %v682
        %v3146 = vunpack.c.l.b16 %v683
        %v3147 = vunpack.c.h.b16 %v683
        %v3148 = vunpack.c.l.b16 %v684
        %v3149 = vunpack.c.h.b16 %v684
        %v3150 = vunpack.c.l.b16 %v685
        %v3151 = vunpack.c.h.b16 %v685
        %v3152 = vunpack.c.l.b16 %v686
        %v3153 = vunpack.c.h.b16 %v686
        %v3154 = vunpack.c.l.b16 %v687
        %v3155 = vunpack.c.h.b16 %v687
        %v3156 = vunpack.c.l.b16 %v688
        %v3157 = vunpack.c.h.b16 %v688
        %v3158 = vunpack.c.l.b16 %v689
        %v3159 = vunpack.c.h.b16 %v689
        %v3160 = vunpack.c.l.b16 %v690
        %v3161 = vunpack.c.h.b16 %v690
        %v3162 = vunpack.c.l.b16 %v691
        %v3163 = vunpack.c.h.b16 %v691
        %v3164 = vunpack.c.l.b16 %v692
        %v3165 = vunpack.c.h.b16 %v692
        %v3166 = vunpack.c.l.b16 %v693
        %v3167 = vunpack.c.h.b16 %v693
        %v3168 = vunpack.c.l.b16 %v694
        %v3169 = vunpack.c.h.b16 %v694
        %v3170 = vunpack.c.l.b16 %v695
        %v3171 = vunpack.c.h.b16 %v695
        %v3172 = vunpack.c.l.b16 %v696
        %v3173 = vunpack.c.h.b16 %v696
        %v3174 = vunpack.c.l.b16 %v697
        %v3175 = vunpack.c.h.b16 %v697
        %v3176 = vunpack.c.l.b16 %v698
        %v3177 = vunpack.c.h.b16 %v698
        %v3178 = vunpack.c.l.b16 %v699
        %v3179 = vunpack.c.h.b16 %v699
        %v3180 = vunpack.c.l.b16 %v700
        %v3181 = vunpack.c.h.b16 %v700
        %v3182 = vunpack.c.l.b16 %v701
        %v3183 = vunpack.c.h.b16 %v701
        %v3184 = vunpack.c.l.b16 %v702
        %v3185 = vunpack.c.h.b16 %v702
        %v3186 = vunpack.c.l.b16 %v703
        %v3187 = vunpack.c.h.b16 %v703
        %v3188 = vunpack.c.l.b16 %v704
        %v3189 = vunpack.c.h.b16 %v704
        %v3190 = vunpack.c.l.b16 %v705
        %v3191 = vunpack.c.h.b16 %v705
        %v3192 = vunpack.c.l.b16 %v706
        %v3193 = vunpack.c.h.b16 %v706
        %v3194 = vunpack.c.l.b16 %v707
        %v3195 = vunpack.c.h.b16 %v707
        %v3196 = vunpack.c.l.b16 %v708
        %v3197 = vunpack.c.h.b16 %v708
        %v3198 = vunpack.c.l.b16 %v709
        %v3199 = vunpack.c.h.b16 %v709
        %v3200 = vunpack.c.l.b16 %v710
        %v3201 = vunpack.c.h.b16 %v710
        %v3202 = vunpack.c.l.b16 %v711
        %v3203 = vunpack.c.h.b16 %v711
        %v3204 = vunpack.c.l.b16 %v712
        %v3205 = vunpack.c.h.b16 %v712
        %v3206 = vunpack.c.l.b16 %v713
        %v3207 = vunpack.c.h.b16 %v713
        %v3208 = vunpack.c.l.b16 %v714
        %v3209 = vunpack.c.h.b16 %v714
        %v3210 = vunpack.c.l.b16 %v715
        %v3211 = vunpack.c.h.b16 %v715
        %v3212 = vunpack.c.l.b16 %v716
        %v3213 = vunpack.c.h.b16 %v716
        %v3214 = vunpack.c.l.b16 %v717
        %v3215 = vunpack.c.h.b16 %v717
        %v3216 = vunpack.c.l.b16 %v718
        %v3217 = vunpack.c.h.b16 %v718
        %v3218 = vunpack.c.l.b16 %v719
        %v3219 = vunpack.c.h.b16 %v719
        %v3220 = vunpack.c.l.b16 %v720
        %v3221 = vunpack.c.h.b16 %v720
        %v3222 = vunpack.c.l.b16 %v721
        %v3223 = vunpack.c.h.b16 %v721
        %v3224 = vunpack.c.l.b16 %v722
        %v3225 = vunpack.c.h.b16 %v722
        %v3226 = vunpack.c.l.b16 %v723
        %v3227 = vunpack.c.h.b16 %v723
        %v3228 = vunpack.c.l.b16 %v724
        %v3229 = vunpack.c.h.b16 %v724
        %v3230 = vunpack.c.l.b16 %v725
        %v3231 = vunpack.c.h.b16 %v725
        %v3232 = vunpack.c.l.b16 %v726
        %v3233 = vunpack.c.h.b16 %v726
        %v3234 = vunpack.c.l.b16 %v727
        %v3235 = vunpack.c.h.b16 %v727
        %v3236 = vunpack.c.l.b16 %v728
        %v3237 = vunpack.c.h.b16 %v728
        %v3238 = vunpack.c.l.b16 %v729
        %v3239 = vunpack.c.h.b16 %v729
        %v3240 = vunpack.c.l.b16 %v730
        %v3241 = vunpack.c.h.b16 %v730
        %v3242 = vunpack.c.l.b16 %v731
        %v3243 = vunpack.c.h.b16 %v731
        %v3244 = vunpack.c.l.b16 %v732
        %v3245 = vunpack.c.h.b16 %v732
        %v3246 = vunpack.c.l.b16 %v733
        %v3247 = vunpack.c.h.b16 %v733
        %v3248 = vunpack.c.l.b16 %v734
        %v3249 = vunpack.c.h.b16 %v734
        %v3250 = vunpack.c.l.b16 %v735
        %v3251 = vunpack.c.h.b16 %v735
        %v3252 = vunpack.c.l.b16 %v736
        %v3253 = vunpack.c.h.b16 %v736
        %v3254 = vunpack.c.l.b16 %v737
        %v3255 = vunpack.c.h.b16 %v737
        %v3256 = vunpack.c.l.b16 %v738
        %v3257 = vunpack.c.h.b16 %v738
        %v3258 = vunpack.c.l.b16 %v739
        %v3259 = vunpack.c.h.b16 %v739
        %v3260 = vunpack.c.l.b16 %v740
        %v3261 = vunpack.c.h.b16 %v740
        %v3262 = vunpack.c.l.b16 %v741
        %v3263 = vunpack.c.h.b16 %v741
        %v3264 = vunpack.c.l.b16 %v742
        %v3265 = vunpack.c.h.b16 %v742
        %v3266 = vunpack.c.l.b16 %v743
        %v3267 = vunpack.c.h.b16 %v743
        %v3268 = vunpack.c.l.b16 %v744
        %v3269 = vunpack.c.h.b16 %v744
        %v3270 = vunpack.c.l.b16 %v745
        %v3271 = vunpack.c.h.b16 %v745
        %v3272 = vunpack.c.l.b16 %v746
        %v3273 = vunpack.c.h.b16 %v746
        %v3274 = vunpack.c.l.b16 %v747
        %v3275 = vunpack.c.h.b16 %v747
        %v3276 = vunpack.c.l.b16 %v748
        %v3277 = vunpack.c.h.b16 %v748
        %v3278 = vunpack.c.l.b16 %v749
        %v3279 = vunpack.c.h.b16 %v749
        %v3280 = vunpack.c.l.b16 %v750
        %v3281 = vunpack.c.h.b16 %v750
        %v3282 = vunpack.c.l.b16 %v751
        %v3283 = vunpack.c.h.b16 %v751
        %v3284 = vunpack.c.l.b16 %v752
        %v3285 = vunpack.c.h.b16 %v752
        %v3286 = vunpack.c.l.b16 %v753
        %v3287 = vunpack.c.h.b16 %v753
        %v3288 = vunpack.c.l.b16 %v754
        %v3289 = vunpack.c.h.b16 %v754
        %v3290 = vunpack.c.l.b16 %v755
        %v3291 = vunpack.c.h.b16 %v755
        %v3292 = vunpack.c.l.b16 %v756
        %v3293 = vunpack.c.h.b16 %v756
        %v3294 = vunpack.c.l.b16 %v757
        %v3295 = vunpack.c.h.b16 %v757
        %v3296 = vunpack.c.l.b16 %v758
        %v3297 = vunpack.c.h.b16 %v758
        %v3298 = vunpack.c.l.b16 %v759
        %v3299 = vunpack.c.h.b16 %v759
        %v3300 = vunpack.c.l.b16 %v760
        %v3301 = vunpack.c.h.b16 %v760
        %v3302 = vunpack.c.l.b16 %v761
        %v3303 = vunpack.c.h.b16 %v761
        %v3304 = vunpack.c.l.b16 %v762
        %v3305 = vunpack.c.h.b16 %v762
        %v3306 = vunpack.c.l.b16 %v763
        %v3307 = vunpack.c.h.b16 %v763
        %v3308 = vunpack.c.l.b16 %v764
        %v3309 = vunpack.c.h.b16 %v764
        %v3310 = vunpack.c.l.b16 %v765
        %v3311 = vunpack.c.h.b16 %v765
        %v3312 = vunpack.c.l.b16 %v766
        %v3313 = vunpack.c.h.b16 %v766
        %v3314 = vunpack.c.l.b16 %v767
        %v3315 = vunpack.c.h.b16 %v767
        %v3316 = vunpack.c.l.b16 %v768
        %v3317 = vunpack.c.h.b16 %v768
        %v3318 = vunpack.c.l.b16 %v769
        %v3319 = vunpack.c.h.b16 %v769
        %v3320 = vunpack.c.l.b16 %v770
        %v3321 = vunpack.c.h.b16 %v770
        %v3322 = vunpack.c.l.b16 %v771
        %v3323 = vunpack.c.h.b16 %v771
        %v3324 = vunpack.c.l.b16 %v772
        %v3325 = vunpack.c.h.b16 %v772
        %v3326 = vunpack.c.l.b16 %v773
        %v3327 = vunpack.c.h.b16 %v773
        %v3328 = vunpack.c.l.b16 %v774
        %v3329 = vunpack.c.h.b16 %v774
        %v3330 = vunpack.c.l.b16 %v775
        %v3331 = vunpack.c.h.b16 %v775
        %v3332 = vunpack.c.l.b16 %v776
        %v3333 = vunpack.c.h.b16 %v776
        %v3334 = vunpack.c.l.b16 %v777
        %v3335 = vunpack.c.h.b16 %v777
        %v3336 = vunpack.c.l.b16 %v778
        %v3337 = vunpack.c.h.b16 %v778
        %v3338 = vunpack.c.l.b16 %v779
        %v3339 = vunpack.c.h.b16 %v779
        %v3340 = vunpack.c.l.b16 %v780
        %v3341 = vunpack.c.h.b16 %v780
        %v3342 = vunpack.c.l.b16 %v781
        %v3343 = vunpack.c.h.b16 %v781
        %v3344 = vunpack.c.l.b16 %v782
        %v3345 = vunpack.c.h.b16 %v782
        %v3346 = vunpack.c.l.b16 %v783
        %v3347 = vunpack.c.h.b16 %v783
        %v3348 = vunpack.c.l.b16 %v784
        %v3349 = vunpack.c.h.b16 %v784
        %v3350 = vunpack.c.l.b16 %v785
        %v3351 = vunpack.c.h.b16 %v785
        %v3352 = vunpack.c.l.b16 %v786
        %v3353 = vunpack.c.h.b16 %v786
        %v3354 = vunpack.c.l.b16 %v787
        %v3355 = vunpack.c.h.b16 %v787
        %v3356 = vunpack.c.l.b16 %v788
        %v3357 = vunpack.c.h.b16 %v788
        %v3358 = vunpack.c.l.b16 %v789
        %v3359 = vunpack.c.h.b16 %v789
        %v3360 = vunpack.c.l.b16 %v790
        %v3361 = vunpack.c.h.b16 %v790
        %v3362 = vunpack.c.l.b16 %v791
        %v3363 = vunpack.c.h.b16 %v791
        %v3364 = vunpack.c.l.b16 %v792
        %v3365 = vunpack.c.h.b16 %v792
        %v3366 = vunpack.c.l.b16 %v793
        %v3367 = vunpack.c.h.b16 %v793
        %v3368 = vunpack.c.l.b16 %v794
        %v3369 = vunpack.c.h.b16 %v794
        %v3370 = vunpack.c.l.b16 %v795
        %v3371 = vunpack.c.h.b16 %v795
        %v3372 = vunpack.c.l.b16 %v796
        %v3373 = vunpack.c.h.b16 %v796
        %v3374 = vunpack.c.l.b16 %v797
        %v3375 = vunpack.c.h.b16 %v797
        %v3376 = vunpack.c.l.b16 %v798
        %v3377 = vunpack.c.h.b16 %v798
        %v3378 = vunpack.c.l.b16 %v799
        %v3379 = vunpack.c.h.b16 %v799
        %v3380 = vunpack.c.l.b16 %v800
        %v3381 = vunpack.c.h.b16 %v800
        %v3382 = vunpack.c.l.b16 %v801
        %v3383 = vunpack.c.h.b16 %v801
        %v3384 = vunpack.c.l.b16 %v802
        %v3385 = vunpack.c.h.b16 %v802
        %v3386 = vunpack.c.l.b16 %v803
        %v3387 = vunpack.c.h.b16 %v803
        %v3388 = vunpack.c.l.b16 %v804
        %v3389 = vunpack.c.h.b16 %v804
        %v3390 = vunpack.c.l.b16 %v805
        %v3391 = vunpack.c.h.b16 %v805
        %v3392 = vunpack.c.l.b16 %v806
        %v3393 = vunpack.c.h.b16 %v806
        %v3394 = vunpack.c.l.b16 %v807
        %v3395 = vunpack.c.h.b16 %v807
        %v3396 = vunpack.c.l.b16 %v808
        %v3397 = vunpack.c.h.b16 %v808
        %v3398 = vunpack.c.l.b16 %v809
        %v3399 = vunpack.c.h.b16 %v809
        %v3400 = vunpack.c.l.b16 %v810
        %v3401 = vunpack.c.h.b16 %v810
        %v3402 = vunpack.c.l.b16 %v811
        %v3403 = vunpack.c.h.b16 %v811
        %v3404 = vunpack.c.l.b16 %v812
        %v3405 = vunpack.c.h.b16 %v812
        %v3406 = vunpack.c.l.b16 %v813
        %v3407 = vunpack.c.h.b16 %v813
        %v3408 = vunpack.c.l.b16 %v814
        %v3409 = vunpack.c.h.b16 %v814
        %v3410 = vunpack.c.l.b16 %v815
        %v3411 = vunpack.c.h.b16 %v815
        %v3412 = vunpack.c.l.b16 %v816
        %v3413 = vunpack.c.h.b16 %v816
        %v3414 = vunpack.c.l.b16 %v817
        %v3415 = vunpack.c.h.b16 %v817
        %v3416 = vunpack.c.l.b16 %v818
        %v3417 = vunpack.c.h.b16 %v818
        %v3418 = vunpack.c.l.b16 %v819
        %v3419 = vunpack.c.h.b16 %v819
        %v3420 = vunpack.c.l.b16 %v820
        %v3421 = vunpack.c.h.b16 %v820
        %v3422 = vunpack.c.l.b16 %v821
        %v3423 = vunpack.c.h.b16 %v821
        %v3424 = vunpack.c.l.b16 %v822
        %v3425 = vunpack.c.h.b16 %v822
        %v3426 = vunpack.c.l.b16 %v823
        %v3427 = vunpack.c.h.b16 %v823
        %v3428 = vunpack.c.l.b16 %v824
        %v3429 = vunpack.c.h.b16 %v824
        %v3430 = vunpack.c.l.b16 %v825
        %v3431 = vunpack.c.h.b16 %v825
        %v3432 = vunpack.c.l.b16 %v826
        %v3433 = vunpack.c.h.b16 %v826
        %v3434 = vunpack.c.l.b16 %v827
        %v3435 = vunpack.c.h.b16 %v827
        %v3436 = vunpack.c.l.b16 %v828
        %v3437 = vunpack.c.h.b16 %v828
        %v3438 = vunpack.c.l.b16 %v829
        %v3439 = vunpack.c.h.b16 %v829
        %v3440 = vunpack.c.l.b16 %v830
        %v3441 = vunpack.c.h.b16 %v830
        %v3442 = vunpack.c.l.b16 %v831
        %v3443 = vunpack.c.h.b16 %v831
        %v3444 = vunpack.c.l.b16 %v832
        %v3445 = vunpack.c.h.b16 %v832
        %v3446 = vunpack.c.l.b16 %v833
        %v3447 = vunpack.c.h.b16 %v833
        %v3448 = vunpack.c.l.b16 %v834
        %v3449 = vunpack.c.h.b16 %v834
        %v3450 = vunpack.c.l.b16 %v835
        %v3451 = vunpack.c.h.b16 %v835
        %v3452 = vunpack.c.l.b16 %v836
        %v3453 = vunpack.c.h.b16 %v836
        %v3454 = vunpack.c.l.b16 %v837
        %v3455 = vunpack.c.h.b16 %v837
        %v3456 = vunpack.c.l.b16 %v838
        %v3457 = vunpack.c.h.b16 %v838
        %v3458 = vunpack.c.l.b16 %v839
        %v3459 = vunpack.c.h.b16 %v839
        %v3460 = vunpack.c.l.b16 %v840
        %v3461 = vunpack.c.h.b16 %v840
        %v3462 = vunpack.c.l.b16 %v841
        %v3463 = vunpack.c.h.b16 %v841
        %v3464 = vunpack.c.l.b16 %v842
        %v3465 = vunpack.c.h.b16 %v842
        %v3466 = vunpack.c.l.b16 %v843
        %v3467 = vunpack.c.h.b16 %v843
        %v3468 = vunpack.c.l.b16 %v844
        %v3469 = vunpack.c.h.b16 %v844
        %v3470 = vunpack.c.l.b16 %v845
        %v3471 = vunpack.c.h.b16 %v845
        %v3472 = vunpack.c.l.b16 %v846
        %v3473 = vunpack.c.h.b16 %v846
        %v3474 = vunpack.c.l.b16 %v847
        %v3475 = vunpack.c.h.b16 %v847
        %v3476 = vunpack.c.l.b16 %v848
        %v3477 = vunpack.c.h.b16 %v848
        %v3478 = vunpack.c.l.b16 %v849
        %v3479 = vunpack.c.h.b16 %v849
        %v3480 = vunpack.c.l.b16 %v850
        %v3481 = vunpack.c.h.b16 %v850
        %v3482 = vunpack.c.l.b16 %v851
        %v3483 = vunpack.c.h.b16 %v851
        %v3484 = vunpack.c.l.b16 %v852
        %v3485 = vunpack.c.h.b16 %v852
        %v3486 = vunpack.c.l.b16 %v853
        %v3487 = vunpack.c.h.b16 %v853
        %v3488 = vunpack.c.l.b16 %v854
        %v3489 = vunpack.c.h.b16 %v854
        %v3490 = vunpack.c.l.b16 %v855
        %v3491 = vunpack.c.h.b16 %v855
        %v3492 = vunpack.c.l.b16 %v856
        %v3493 = vunpack.c.h.b16 %v856
        %v3494 = vunpack.c.l.b16 %v857
        %v3495 = vunpack.c.h.b16 %v857
        %v3496 = vunpack.c.l.b16 %v858
        %v3497 = vunpack.c.h.b16 %v858
        %v3498 = vunpack.c.l.b16 %v859
        %v3499 = vunpack.c.h.b16 %v859
        %v3500 = vunpack.c.l.b16 %v860
        %v3501 = vunpack.c.h.b16 %v860
        %v3502 = vunpack.c.l.b16 %v861
        %v3503 = vunpack.c.h.b16 %v861
        %v3504 = vunpack.c.l.b16 %v862
        %v3505 = vunpack.c.h.b16 %v862
        %v3506 = vunpack.c.l.b16 %v863
        %v3507 = vunpack.c.h.b16 %v863
        %v3508 = vunpack.c.l.b16 %v864
        %v3509 = vunpack.c.h.b16 %v864
        %v3510 = vunpack.c.l.b16 %v865
        %v3511 = vunpack.c.h.b16 %v865
        %v3512 = vunpack.c.l.b16 %v866
        %v3513 = vunpack.c.h.b16 %v866
        %v3514 = vunpack.c.l.b16 %v867
        %v3515 = vunpack.c.h.b16 %v867
        %v3516 = vunpack.c.l.b16 %v868
        %v3517 = vunpack.c.h.b16 %v868
        %v3518 = vunpack.c.l.b16 %v869
        %v3519 = vunpack.c.h.b16 %v869
        %v3520 = vunpack.c.l.b16 %v870
        %v3521 = vunpack.c.h.b16 %v870
        %v3522 = vunpack.c.l.b16 %v871
        %v3523 = vunpack.c.h.b16 %v871
        %v3524 = vunpack.c.l.b16 %v872
        %v3525 = vunpack.c.h.b16 %v872
        %v3526 = vunpack.c.l.b16 %v873
        %v3527 = vunpack.c.h.b16 %v873
        %v3528 = vunpack.c.l.b16 %v874
        %v3529 = vunpack.c.h.b16 %v874
        %v3530 = vunpack.c.l.b16 %v875
        %v3531 = vunpack.c.h.b16 %v875
        %v3532 = vunpack.c.l.b16 %v876
        %v3533 = vunpack.c.h.b16 %v876
        %v3534 = vunpack.c.l.b16 %v877
        %v3535 = vunpack.c.h.b16 %v877
        %v3536 = vunpack.c.l.b16 %v878
        %v3537 = vunpack.c.h.b16 %v878
        %v3538 = vunpack.c.l.b16 %v879
        %v3539 = vunpack.c.h.b16 %v879
        %v3540 = vunpack.c.l.b16 %v880
        %v3541 = vunpack.c.h.b16 %v880
        %v3542 = vunpack.c.l.b16 %v881
        %v3543 = vunpack.c.h.b16 %v881
        %v3544 = vunpack.c.l.b16 %v882
        %v3545 = vunpack.c.h.b16 %v882
        %v3546 = vunpack.c.l.b16 %v883
        %v3547 = vunpack.c.h.b16 %v883
        %v3548 = vunpack.c.l.b16 %v884
        %v3549 = vunpack.c.h.b16 %v884
        %v3550 = vunpack.c.l.b16 %v885
        %v3551 = vunpack.c.h.b16 %v885
        %v3552 = vunpack.c.l.b16 %v886
        %v3553 = vunpack.c.h.b16 %v886
        %v3554 = vunpack.c.l.b16 %v887
        %v3555 = vunpack.c.h.b16 %v887
        %v3556 = vunpack.c.l.b16 %v888
        %v3557 = vunpack.c.h.b16 %v888
        %v3558 = vunpack.c.l.b16 %v889
        %v3559 = vunpack.c.h.b16 %v889
        %v3560 = vunpack.c.l.b16 %v890
        %v3561 = vunpack.c.h.b16 %v890
        %v3562 = vunpack.c.l.b16 %v891
        %v3563 = vunpack.c.h.b16 %v891
        %v3564 = vunpack.c.l.b16 %v892
        %v3565 = vunpack.c.h.b16 %v892
        %v3566 = vunpack.c.l.b16 %v893
        %v3567 = vunpack.c.h.b16 %v893
        %v3568 = vunpack.c.l.b16 %v894
        %v3569 = vunpack.c.h.b16 %v894
        %v3570 = vunpack.c.l.b16 %v895
        %v3571 = vunpack.c.h.b16 %v895
        %v3572 = vunpack.c.l.b16 %v896
        %v3573 = vunpack.c.h.b16 %v896
        %v3574 = vunpack.c.l.b16 %v897
        %v3575 = vunpack.c.h.b16 %v897
        %v3576 = vunpack.c.l.b16 %v898
        %v3577 = vunpack.c.h.b16 %v898
        %v3578 = vunpack.c.l.b16 %v899
        %v3579 = vunpack.c.h.b16 %v899
        %v3580 = vunpack.c.l.b16 %v900
        %v3581 = vunpack.c.h.b16 %v900
        %v3582 = vunpack.c.l.b16 %v901
        %v3583 = vunpack.c.h.b16 %v901
        %v3584 = vunpack.c.l.b16 %v902
        %v3585 = vunpack.c.h.b16 %v902
        %v3586 = vunpack.c.l.b16 %v903
        %v3587 = vunpack.c.h.b16 %v903
        %v3588 = vunpack.c.l.b16 %v904
        %v3589 = vunpack.c.h.b16 %v904
        %v3590 = vunpack.c.l.b16 %v905
        %v3591 = vunpack.c.h.b16 %v905
        %v3592 = vunpack.c.l.b16 %v906
        %v3593 = vunpack.c.h.b16 %v906
        %v3594 = vunpack.c.l.b16 %v907
        %v3595 = vunpack.c.h.b16 %v907
        %v3596 = vunpack.c.l.b16 %v908
        %v3597 = vunpack.c.h.b16 %v908
        %v3598 = vunpack.c.l.b16 %v909
        %v3599 = vunpack.c.h.b16 %v909
        %v3600 = vunpack.c.l.b16 %v910
        %v3601 = vunpack.c.h.b16 %v910
        %v3602 = vunpack.c.l.b16 %v911
        %v3603 = vunpack.c.h.b16 %v911
        %v3604 = vunpack.c.l.b16 %v912
        %v3605 = vunpack.c.h.b16 %v912
        %v3606 = vunpack.c.l.b16 %v913
        %v3607 = vunpack.c.h.b16 %v913
        %v3608 = vunpack.c.l.b16 %v914
        %v3609 = vunpack.c.h.b16 %v914
        %v3610 = vunpack.c.l.b16 %v915
        %v3611 = vunpack.c.h.b16 %v915
        %v3612 = vunpack.c.l.b16 %v916
        %v3613 = vunpack.c.h.b16 %v916
        %v3614 = vunpack.c.l.b16 %v917
        %v3615 = vunpack.c.h.b16 %v917
        %v3616 = vunpack.c.l.b16 %v918
        %v3617 = vunpack.c.h.b16 %v918
        %v3618 = vunpack.c.l.b16 %v919
        %v3619 = vunpack.c.h.b16 %v919
        %v3620 = vunpack.c.l.b16 %v920
        %v3621 = vunpack.c.h.b16 %v920
        %v3622 = vunpack.c.l.b16 %v921
        %v3623 = vunpack.c.h.b16 %v921
        %v3624 = vunpack.c.l.b16 %v922
        %v3625 = vunpack.c.h.b16 %v922
        %v3626 = vunpack.c.l.b16 %v923
        %v3627 = vunpack.c.h.b16 %v923
        %v3628 = vunpack.c.l.b16 %v924
        %v3629 = vunpack.c.h.b16 %v924
        %v3630 = vunpack.c.l.b16 %v925
        %v3631 = vunpack.c.h.b16 %v925
        %v3632 = vunpack.c.l.b16 %v926
        %v3633 = vunpack.c.h.b16 %v926
        %v3634 = vunpack.c.l.b16 %v927
        %v3635 = vunpack.c.h.b16 %v927
        %v3636 = vunpack.c.l.b16 %v928
        %v3637 = vunpack.c.h.b16 %v928
        %v3638 = vunpack.c.l.b16 %v929
        %v3639 = vunpack.c.h.b16 %v929
        %v3640 = vunpack.c.l.b16 %v930
        %v3641 = vunpack.c.h.b16 %v930
        %v3642 = vunpack.c.l.b16 %v931
        %v3643 = vunpack.c.h.b16 %v931
        %v3644 = vunpack.c.l.b16 %v932
        %v3645 = vunpack.c.h.b16 %v932
        %v3646 = vunpack.c.l.b16 %v933
        %v3647 = vunpack.c.h.b16 %v933
        %v3648 = vunpack.c.l.b16 %v934
        %v3649 = vunpack.c.h.b16 %v934
        %v3650 = vunpack.c.l.b16 %v935
        %v3651 = vunpack.c.h.b16 %v935
        %v3652 = vunpack.c.l.b16 %v936
        %v3653 = vunpack.c.h.b16 %v936
        %v3654 = vunpack.c.l.b16 %v937
        %v3655 = vunpack.c.h.b16 %v937
        %v3656 = vunpack.c.l.b16 %v938
        %v3657 = vunpack.c.h.b16 %v938
        %v3658 = vunpack.c.l.b16 %v939
        %v3659 = vunpack.c.h.b16 %v939
        %v3660 = vunpack.c.l.b16 %v940
        %v3661 = vunpack.c.h.b16 %v940
        %v3662 = vunpack.c.l.b16 %v941
        %v3663 = vunpack.c.h.b16 %v941
        %v3664 = vunpack.c.l.b16 %v942
        %v3665 = vunpack.c.h.b16 %v942
        %v3666 = vunpack.c.l.b16 %v943
        %v3667 = vunpack.c.h.b16 %v943
        %v3668 = vunpack.c.l.b16 %v944
        %v3669 = vunpack.c.h.b16 %v944
        %v3670 = vunpack.c.l.b16 %v945
        %v3671 = vunpack.c.h.b16 %v945
        %v3672 = vunpack.c.l.b16 %v946
        %v3673 = vunpack.c.h.b16 %v946
        %v3674 = vunpack.c.l.b16 %v947
        %v3675 = vunpack.c.h.b16 %v947
        %v3676 = vunpack.c.l.b16 %v948
        %v3677 = vunpack.c.h.b16 %v948
        %v3678 = vunpack.c.l.b16 %v949
        %v3679 = vunpack.c.h.b16 %v949
        %v3680 = vunpack.c.l.b16 %v950
        %v3681 = vunpack.c.h.b16 %v950
        %v3682 = vunpack.c.l.b16 %v951
        %v3683 = vunpack.c.h.b16 %v951
        %v3684 = vunpack.c.l.b16 %v952
        %v3685 = vunpack.c.h.b16 %v952
        %v3686 = vunpack.c.l.b16 %v953
        %v3687 = vunpack.c.h.b16 %v953
        %v3688 = vunpack.c.l.b16 %v954
        %v3689 = vunpack.c.h.b16 %v954
        %v3690 = vunpack.c.l.b16 %v955
        %v3691 = vunpack.c.h.b16 %v955
        %v3692 = vunpack.c.l.b16 %v956
        %v3693 = vunpack.c.h.b16 %v956
        %v3694 = vunpack.c.l.b16 %v957
        %v3695 = vunpack.c.h.b16 %v957
        %v3696 = vunpack.c.l.b16 %v958
        %v3697 = vunpack.c.h.b16 %v958
        %v3698 = vunpack.c.l.b16 %v959
        %v3699 = vunpack.c.h.b16 %v959
        %v3700 = vunpack.c.l.b16 %v960
        %v3701 = vunpack.c.h.b16 %v960
        %v3702 = vunpack.c.l.b16 %v961
        %v3703 = vunpack.c.h.b16 %v961
        %v3704 = vunpack.c.l.b16 %v962
        %v3705 = vunpack.c.h.b16 %v962
        %v3706 = vunpack.c.l.b16 %v963
        %v3707 = vunpack.c.h.b16 %v963
        %v3708 = vunpack.c.l.b16 %v964
        %v3709 = vunpack.c.h.b16 %v964
        %v3710 = vunpack.c.l.b16 %v965
        %v3711 = vunpack.c.h.b16 %v965
        %v3712 = vunpack.c.l.b16 %v966
        %v3713 = vunpack.c.h.b16 %v966
        %v3714 = vunpack.c.l.b16 %v967
        %v3715 = vunpack.c.h.b16 %v967
        %v3716 = vunpack.c.l.b16 %v968
        %v3717 = vunpack.c.h.b16 %v968
        %v3718 = vunpack.c.l.b16 %v969
        %v3719 = vunpack.c.h.b16 %v969
        %v3720 = vunpack.c.l.b16 %v970
        %v3721 = vunpack.c.h.b16 %v970
        %v3722 = vunpack.c.l.b16 %v971
        %v3723 = vunpack.c.h.b16 %v971
        %v3724 = vunpack.c.l.b16 %v972
        %v3725 = vunpack.c.h.b16 %v972
        %v3726 = vunpack.c.l.b16 %v973
        %v3727 = vunpack.c.h.b16 %v973
        %v3728 = vunpack.c.l.b16 %v974
        %v3729 = vunpack.c.h.b16 %v974
        %v3730 = vunpack.c.l.b16 %v975
        %v3731 = vunpack.c.h.b16 %v975
        %v3732 = vunpack.c.l.b16 %v976
        %v3733 = vunpack.c.h.b16 %v976
        %v3734 = vunpack.c.l.b16 %v977
        %v3735 = vunpack.c.h.b16 %v977
        %v3736 = vunpack.c.l.b16 %v978
        %v3737 = vunpack.c.h.b16 %v978
        %v3738 = vunpack.c.l.b16 %v979
        %v3739 = vunpack.c.h.b16 %v979
        %v3740 = vunpack.c.l.b16 %v980
        %v3741 = vunpack.c.h.b16 %v980
        %v3742 = vunpack.c.l.b16 %v981
        %v3743 = vunpack.c.h.b16 %v981
        %v3744 = vunpack.c.l.b16 %v982
        %v3745 = vunpack.c.h.b16 %v982
        %v3746 = vunpack.c.l.b16 %v983
        %v3747 = vunpack.c.h.b16 %v983
        %v3748 = vunpack.c.l.b16 %v984
        %v3749 = vunpack.c.h.b16 %v984
        %v3750 = vunpack.c.l.b16 %v985
        %v3751 = vunpack.c.h.b16 %v985
        %v3752 = vunpack.c.l.b16 %v986
        %v3753 = vunpack.c.h.b16 %v986
        %v3754 = vunpack.c.l.b16 %v987
        %v3755 = vunpack.c.h.b16 %v987
        %v3756 = vunpack.c.l.b16 %v988
        %v3757 = vunpack.c.h.b16 %v988
        %v3758 = vunpack.c.l.b16 %v989
        %v3759 = vunpack.c.h.b16 %v989
        %v3760 = vunpack.c.l.b16 %v990
        %v3761 = vunpack.c.h.b16 %v990
        %v3762 = vunpack.c.l.b16 %v991
        %v3763 = vunpack.c.h.b16 %v991
        %v3764 = vunpack.c.l.b16 %v992
        %v3765 = vunpack.c.h.b16 %v992
        %v3766 = vunpack.c.l.b16 %v993
        %v3767 = vunpack.c.h.b16 %v993
        %v3768 = vunpack.c.l.b16 %v994
        %v3769 = vunpack.c.h.b16 %v994
        %v3770 = vunpack.c.l.b16 %v995
        %v3771 = vunpack.c.h.b16 %v995
        %v3772 = vunpack.c.l.b16 %v996
        %v3773 = vunpack.c.h.b16 %v996
        %v3774 = vunpack.c.l.b16 %v997
        %v3775 = vunpack.c.h.b16 %v997
        %v3776 = vunpack.c.l.b16 %v998
        %v3777 = vunpack.c.h.b16 %v998
        %v3778 = vunpack.c.l.b16 %v999
        %v3779 = vunpack.c.h.b16 %v999
        %v3780 = vunpack.c.l.b16 %v1000
        %v3781 = vunpack.c.h.b16 %v1000
        %v3782 = vunpack.c.l.b16 %v1001
        %v3783 = vunpack.c.h.b16 %v1001
        %v3784 = vunpack.c.l.b16 %v1002
        %v3785 = vunpack.c.h.b16 %v1002
        %v3786 = vunpack.c.l.b16 %v1003
        %v3787 = vunpack.c.h.b16 %v1003
        %v3788 = vunpack.c.l.b16 %v1004
        %v3789 = vunpack.c.h.b16 %v1004
        %v3790 = vunpack.c.l.b16 %v1005
        %v3791 = vunpack.c.h.b16 %v1005
        %v3792 = vunpack.c.l.b16 %v1006
        %v3793 = vunpack.c.h.b16 %v1006
        %v3794 = vunpack.c.l.b16 %v1007
        %v3795 = vunpack.c.h.b16 %v1007
        %v3796 = vunpack.c.l.b16 %v1008
        %v3797 = vunpack.c.h.b16 %v1008
        %v3798 = vunpack.c.l.b16 %v1009
        %v3799 = vunpack.c.h.b16 %v1009
        %v3800 = vunpack.c.l.b16 %v1010
        %v3801 = vunpack.c.h.b16 %v1010
        %v3802 = vunpack.c.l.b16 %v1011
        %v3803 = vunpack.c.h.b16 %v1011
        %v3804 = vunpack.c.l.b16 %v1012
        %v3805 = vunpack.c.h.b16 %v1012
        %v3806 = vunpack.c.l.b16 %v1013
        %v3807 = vunpack.c.h.b16 %v1013
        %v3808 = vunpack.c.l.b16 %v1014
        %v3809 = vunpack.c.h.b16 %v1014
        %v3810 = vunpack.c.l.b16 %v1015
        %v3811 = vunpack.c.h.b16 %v1015
        %v3812 = vunpack.c.l.b16 %v1016
        %v3813 = vunpack.c.h.b16 %v1016
        %v3814 = vunpack.c.l.b16 %v1017
        %v3815 = vunpack.c.h.b16 %v1017
        %v3816 = vunpack.c.l.b16 %v1018
        %v3817 = vunpack.c.h.b16 %v1018
        %v3818 = vunpack.c.l.b16 %v1019
        %v3819 = vunpack.c.h.b16 %v1019
        %v3820 = vunpack.c.l.b16 %v1020
        %v3821 = vunpack.c.h.b16 %v1020
        %v3822 = vunpack.c.l.b16 %v1021
        %v3823 = vunpack.c.h.b16 %v1021
        %v3824 = vunpack.c.l.b16 %v1022
        %v3825 = vunpack.c.h.b16 %v1022
        %v3826 = vunpack.c.l.b16 %v1023
        %v3827 = vunpack.c.h.b16 %v1023
        %v3828 = vunpack.c.l.b16 %v1024
        %v3829 = vunpack.c.h.b16 %v1024
        %v3830 = vunpack.c.l.b16 %v1025
        %v3831 = vunpack.c.h.b16 %v1025
        %v3832 = vunpack.c.l.b16 %v1026
        %v3833 = vunpack.c.h.b16 %v1026
        %v3834 = vunpack.c.l.b16 %v1027
        %v3835 = vunpack.c.h.b16 %v1027
        %v3836 = vunpack.c.l.b16 %v1028
        %v3837 = vunpack.c.h.b16 %v1028
        %v3838 = vunpack.c.l.b16 %v1029
        %v3839 = vunpack.c.h.b16 %v1029
        %v3840 = vunpack.c.l.b16 %v1030
        %v3841 = vunpack.c.h.b16 %v1030
        %v3842 = vunpack.c.l.b16 %v1031
        %v3843 = vunpack.c.h.b16 %v1031
        %v3844 = vunpack.c.l.b16 %v1032
        %v3845 = vunpack.c.h.b16 %v1032
        %v3846 = vunpack.c.l.b16 %v1033
        %v3847 = vunpack.c.h.b16 %v1033
        %v3848 = vunpack.c.l.b16 %v1034
        %v3849 = vunpack.c.h.b16 %v1034
        %v3850 = vunpack.c.l.b16 %v1035
        %v3851 = vunpack.c.h.b16 %v1035
        %v3852 = vunpack.c.l.b16 %v1036
        %v3853 = vunpack.c.h.b16 %v1036
        %v3854 = vunpack.c.l.b16 %v1037
        %v3855 = vunpack.c.h.b16 %v1037
        %v3856 = vunpack.c.l.b16 %v1038
        %v3857 = vunpack.c.h.b16 %v1038
        %v3858 = vunpack.c.l.b16 %v1039
        %v3859 = vunpack.c.h.b16 %v1039
        %v3860 = vunpack.c.l.b16 %v1040
        %v3861 = vunpack.c.h.b16 %v1040
        %v3862 = vunpack.c.l.b16 %v1041
        %v3863 = vunpack.c.h.b16 %v1041
        %v3864 = vunpack.c.l.b16 %v1042
        %v3865 = vunpack.c.h.b16 %v1042
        %v3866 = vunpack.c.l.b16 %v1043
        %v3867 = vunpack.c.h.b16 %v1043
        %v3868 = vunpack.c.l.b16 %v1044
        %v3869 = vunpack.c.h.b16 %v1044
        %v3870 = vunpack.c.l.b16 %v1045
        %v3871 = vunpack.c.h.b16 %v1045
        %v3872 = vunpack.c.l.b16 %v1046
        %v3873 = vunpack.c.h.b16 %v1046
        %v3874 = vunpack.c.l.b16 %v1047
        %v3875 = vunpack.c.h.b16 %v1047
        %v3876 = vunpack.c.l.b16 %v1048
        %v3877 = vunpack.c.h.b16 %v1048
        %v3878 = vunpack.c.l.b16 %v1049
        %v3879 = vunpack.c.h.b16 %v1049
        %v3880 = vunpack.c.l.b16 %v1050
        %v3881 = vunpack.c.h.b16 %v1050
        %v3882 = vunpack.c.l.b16 %v1051
        %v3883 = vunpack.c.h.b16 %v1051
        %v3884 = vunpack.c.l.b16 %v1052
        %v3885 = vunpack.c.h.b16 %v1052
        %v3886 = vunpack.c.l.b16 %v1053
        %v3887 = vunpack.c.h.b16 %v1053
        %v3888 = vunpack.c.l.b16 %v1054
        %v3889 = vunpack.c.h.b16 %v1054
        %v3890 = vunpack.c.l.b16 %v1055
        %v3891 = vunpack.c.h.b16 %v1055
        %v3892 = vunpack.c.l.b16 %v1056
        %v3893 = vunpack.c.h.b16 %v1056
        %v3894 = vunpack.c.l.b16 %v1057
        %v3895 = vunpack.c.h.b16 %v1057
        %v3896 = vunpack.c.l.b16 %v1058
        %v3897 = vunpack.c.h.b16 %v1058
        %v3898 = vunpack.c.l.b16 %v1059
        %v3899 = vunpack.c.h.b16 %v1059
        %v3900 = vunpack.c.l.b16 %v1060
        %v3901 = vunpack.c.h.b16 %v1060
        %v3902 = vunpack.c.l.b16 %v1061
        %v3903 = vunpack.c.h.b16 %v1061
        %v3904 = vunpack.c.l.b16 %v1062
        %v3905 = vunpack.c.h.b16 %v1062
        %v3906 = vunpack.c.l.b16 %v1063
        %v3907 = vunpack.c.h.b16 %v1063
        %v3908 = vunpack.c.l.b16 %v1064
        %v3909 = vunpack.c.h.b16 %v1064
        %v3910 = vunpack.c.l.b16 %v1065
        %v3911 = vunpack.c.h.b16 %v1065
        %v3912 = vunpack.c.l.b16 %v1066
        %v3913 = vunpack.c.h.b16 %v1066
        %v3914 = vunpack.c.l.b16 %v1067
        %v3915 = vunpack.c.h.b16 %v1067
        %v3916 = vunpack.c.l.b16 %v1068
        %v3917 = vunpack.c.h.b16 %v1068
        %v3918 = vunpack.c.l.b16 %v1069
        %v3919 = vunpack.c.h.b16 %v1069
        %v3920 = vunpack.c.l.b16 %v1070
        %v3921 = vunpack.c.h.b16 %v1070
        %v3922 = vunpack.c.l.b16 %v1071
        %v3923 = vunpack.c.h.b16 %v1071
        %v3924 = vunpack.c.l.b16 %v1072
        %v3925 = vunpack.c.h.b16 %v1072
        %v3926 = vunpack.c.l.b16 %v1073
        %v3927 = vunpack.c.h.b16 %v1073
        %v3928 = vunpack.c.l.b16 %v1074
        %v3929 = vunpack.c.h.b16 %v1074
        %v3930 = vunpack.c.l.b16 %v1075
        %v3931 = vunpack.c.h.b16 %v1075
        %v3932 = vunpack.c.l.b16 %v1076
        %v3933 = vunpack.c.h.b16 %v1076
        %v3934 = vunpack.c.l.b16 %v1077
        %v3935 = vunpack.c.h.b16 %v1077
        %v3936 = vunpack.c.l.b16 %v1078
        %v3937 = vunpack.c.h.b16 %v1078
        %v3938 = vunpack.c.l.b16 %v1079
        %v3939 = vunpack.c.h.b16 %v1079
        %v3940 = vunpack.c.l.b16 %v1080
        %v3941 = vunpack.c.h.b16 %v1080
        %v3942 = vunpack.c.l.b16 %v1081
        %v3943 = vunpack.c.h.b16 %v1081
        %v3944 = vunpack.c.l.b16 %v1082
        %v3945 = vunpack.c.h.b16 %v1082
        %v3946 = vunpack.c.l.b16 %v1083
        %v3947 = vunpack.c.h.b16 %v1083
        %v3948 = vunpack.c.l.b16 %v1084
        %v3949 = vunpack.c.h.b16 %v1084
        %v3950 = vunpack.c.l.b16 %v1085
        %v3951 = vunpack.c.h.b16 %v1085
        %v3952 = vunpack.c.l.b16 %v1086
        %v3953 = vunpack.c.h.b16 %v1086
        %v3954 = vunpack.c.l.b16 %v1087
        %v3955 = vunpack.c.h.b16 %v1087
        %v3956 = vunpack.c.l.b16 %v1088
        %v3957 = vunpack.c.h.b16 %v1088
        %v3958 = vunpack.c.l.b16 %v1089
        %v3959 = vunpack.c.h.b16 %v1089
        %v3960 = vunpack.c.l.b16 %v1090
        %v3961 = vunpack.c.h.b16 %v1090
        %v3962 = vunpack.c.l.b16 %v1091
        %v3963 = vunpack.c.h.b16 %v1091
        %v3964 = vunpack.c.l.b16 %v1092
        %v3965 = vunpack.c.h.b16 %v1092
        %v3966 = vunpack.c.l.b16 %v1093
        %v3967 = vunpack.c.h.b16 %v1093
        %v3968 = vunpack.c.l.b16 %v1094
        %v3969 = vunpack.c.h.b16 %v1094
        %v3970 = vunpack.c.l.b16 %v1095
        %v3971 = vunpack.c.h.b16 %v1095
        %v3972 = vunpack.c.l.b16 %v1096
        %v3973 = vunpack.c.h.b16 %v1096
        %v3974 = vunpack.c.l.b16 %v1097
        %v3975 = vunpack.c.h.b16 %v1097
        %v3976 = vunpack.c.l.b16 %v1098
        %v3977 = vunpack.c.h.b16 %v1098
        %v3978 = vunpack.c.l.b16 %v1099
        %v3979 = vunpack.c.h.b16 %v1099
        %v3980 = vunpack.c.l.b16 %v1100
        %v3981 = vunpack.c.h.b16 %v1100
        %v3982 = vunpack.c.l.b16 %v1101
        %v3983 = vunpack.c.h.b16 %v1101
        %v3984 = vunpack.c.l.b16 %v1102
        %v3985 = vunpack.c.h.b16 %v1102
        %v3986 = vunpack.c.l.b16 %v1103
        %v3987 = vunpack.c.h.b16 %v1103
        %v3988 = vunpack.c.l.b16 %v1104
        %v3989 = vunpack.c.h.b16 %v1104
        %v3990 = vunpack.c.l.b16 %v1105
        %v3991 = vunpack.c.h.b16 %v1105
        %v3992 = vunpack.c.l.b16 %v1106
        %v3993 = vunpack.c.h.b16 %v1106
        %v3994 = vunpack.c.l.b16 %v1107
        %v3995 = vunpack.c.h.b16 %v1107
        %v3996 = vunpack.c.l.b16 %v1108
        %v3997 = vunpack.c.h.b16 %v1108
        %v3998 = vunpack.c.l.b16 %v1109
        %v3999 = vunpack.c.h.b16 %v1109
        %v4000 = vunpack.c.l.b16 %v1110
        %v4001 = vunpack.c.h.b16 %v1110
        %v4002 = vunpack.c.l.b16 %v1111
        %v4003 = vunpack.c.h.b16 %v1111
        %v4004 = vunpack.c.l.b16 %v1112
        %v4005 = vunpack.c.h.b16 %v1112
        %v4006 = vunpack.c.l.b16 %v1113
        %v4007 = vunpack.c.h.b16 %v1113
        %v4008 = vunpack.c.l.b16 %v1114
        %v4009 = vunpack.c.h.b16 %v1114
        %v4010 = vunpack.c.l.b16 %v1115
        %v4011 = vunpack.c.h.b16 %v1115
        %v4012 = vunpack.c.l.b16 %v1116
        %v4013 = vunpack.c.h.b16 %v1116
        %v4014 = vunpack.c.l.b16 %v1117
        %v4015 = vunpack.c.h.b16 %v1117
        %v4016 = vunpack.c.l.b16 %v1118
        %v4017 = vunpack.c.h.b16 %v1118
        %v4018 = vunpack.c.l.b16 %v1119
        %v4019 = vunpack.c.h.b16 %v1119
        %v4020 = vunpack.c.l.b16 %v1120
        %v4021 = vunpack.c.h.b16 %v1120
        %v4022 = vunpack.c.l.b16 %v1121
        %v4023 = vunpack.c.h.b16 %v1121
        %v4024 = vunpack.c.l.b16 %v1122
        %v4025 = vunpack.c.h.b16 %v1122
        %v4026 = vunpack.c.l.b16 %v1123
        %v4027 = vunpack.c.h.b16 %v1123
        %v4028 = vunpack.c.l.b16 %v1124
        %v4029 = vunpack.c.h.b16 %v1124
        %v4030 = vunpack.c.l.b16 %v1125
        %v4031 = vunpack.c.h.b16 %v1125
        %v4032 = vunpack.c.l.b16 %v1126
        %v4033 = vunpack.c.h.b16 %v1126
        %v4034 = vunpack.c.l.b16 %v1127
        %v4035 = vunpack.c.h.b16 %v1127
        %v4036 = vunpack.c.l.b16 %v1128
        %v4037 = vunpack.c.h.b16 %v1128
        %v4038 = vunpack.c.l.b16 %v1129
        %v4039 = vunpack.c.h.b16 %v1129
        %v4040 = vunpack.c.l.b16 %v1130
        %v4041 = vunpack.c.h.b16 %v1130
        %v4042 = vunpack.c.l.b16 %v1131
        %v4043 = vunpack.c.h.b16 %v1131
        %v4044 = vunpack.c.l.b16 %v1132
        %v4045 = vunpack.c.h.b16 %v1132
        %v4046 = vunpack.c.l.b16 %v1133
        %v4047 = vunpack.c.h.b16 %v1133
        %v4048 = vunpack.c.l.b16 %v1134
        %v4049 = vunpack.c.h.b16 %v1134
        %v4050 = vunpack.c.l.b16 %v1135
        %v4051 = vunpack.c.h.b16 %v1135
        %v4052 = vunpack.c.l.b16 %v1136
        %v4053 = vunpack.c.h.b16 %v1136
        %v4054 = vunpack.c.l.b16 %v1137
        %v4055 = vunpack.c.h.b16 %v1137
        %v4056 = vunpack.c.l.b16 %v1138
        %v4057 = vunpack.c.h.b16 %v1138
        %v4058 = vunpack.c.l.b16 %v1139
        %v4059 = vunpack.c.h.b16 %v1139
        %v4060 = vunpack.c.l.b16 %v1140
        %v4061 = vunpack.c.h.b16 %v1140
        %v4062 = vunpack.c.l.b16 %v1141
        %v4063 = vunpack.c.h.b16 %v1141
        %v4064 = vunpack.c.l.b16 %v1142
        %v4065 = vunpack.c.h.b16 %v1142
        %v4066 = vunpack.c.l.b16 %v1143
        %v4067 = vunpack.c.h.b16 %v1143
        %v4068 = vunpack.c.l.b16 %v1144
        %v4069 = vunpack.c.h.b16 %v1144
        %v4070 = vunpack.c.l.b16 %v1145
        %v4071 = vunpack.c.h.b16 %v1145
        %v4072 = vunpack.c.l.b16 %v1146
        %v4073 = vunpack.c.h.b16 %v1146
        %v4074 = vunpack.c.l.b16 %v1147
        %v4075 = vunpack.c.h.b16 %v1147
        %v4076 = vunpack.c.l.b16 %v1148
        %v4077 = vunpack.c.h.b16 %v1148
        %v4078 = vunpack.c.l.b16 %v1149
        %v4079 = vunpack.c.h.b16 %v1149
        %v4080 = vunpack.c.l.b16 %v1150
        %v4081 = vunpack.c.h.b16 %v1150
        %v4082 = vunpack.c.l.b16 %v1151
        %v4083 = vunpack.c.h.b16 %v1151
        %v4084 = vunpack.c.l.b16 %v1152
        %v4085 = vunpack.c.h.b16 %v1152
        %v4086 = vunpack.c.l.b16 %v1153
        %v4087 = vunpack.c.h.b16 %v1153
        %v4088 = vunpack.c.l.b16 %v1154
        %v4089 = vunpack.c.h.b16 %v1154
        %v4090 = vunpack.c.l.b16 %v1155
        %v4091 = vunpack.c.h.b16 %v1155
        %v4092 = vunpack.c.l.b16 %v1156
        %v4093 = vunpack.c.h.b16 %v1156
        %v4094 = vunpack.c.l.b16 %v1157
        %v4095 = vunpack.c.h.b16 %v1157
        %v4096 = vunpack.c.l.b16 %v1158
        %v4097 = vunpack.c.h.b16 %v1158
        %v4098 = vunpack.c.l.b16 %v1159
        %v4099 = vunpack.c.h.b16 %v1159
        %v4100 = vunpack.c.l.b16 %v1160
        %v4101 = vunpack.c.h.b16 %v1160
        %v4102 = vunpack.c.l.b16 %v1161
        %v4103 = vunpack.c.h.b16 %v1161
        %v4104 = vunpack.c.l.b16 %v1162
        %v4105 = vunpack.c.h.b16 %v1162
        %v4106 = vunpack.c.l.b16 %v1163
        %v4107 = vunpack.c.h.b16 %v1163
        %v4108 = vunpack.c.l.b16 %v1164
        %v4109 = vunpack.c.h.b16 %v1164
        %v4110 = vunpack.c.l.b16 %v1165
        %v4111 = vunpack.c.h.b16 %v1165
        %v4112 = vunpack.c.l.b16 %v1166
        %v4113 = vunpack.c.h.b16 %v1166
        %v4114 = vunpack.c.l.b16 %v1167
        %v4115 = vunpack.c.h.b16 %v1167
        %v4116 = vunpack.c.l.b16 %v1168
        %v4117 = vunpack.c.h.b16 %v1168
        %v4118 = vunpack.c.l.b16 %v1169
        %v4119 = vunpack.c.h.b16 %v1169
        %v4120 = vunpack.c.l.b16 %v1170
        %v4121 = vunpack.c.h.b16 %v1170
        %v4122 = vunpack.c.l.b16 %v1171
        %v4123 = vunpack.c.h.b16 %v1171
        %v4124 = vunpack.c.l.b16 %v1172
        %v4125 = vunpack.c.h.b16 %v1172
        %v4126 = vunpack.c.l.b16 %v1173
        %v4127 = vunpack.c.h.b16 %v1173
        %v4128 = vunpack.c.l.b16 %v1174
        %v4129 = vunpack.c.h.b16 %v1174
        %v4130 = vunpack.c.l.b16 %v1175
        %v4131 = vunpack.c.h.b16 %v1175
        %v4132 = vunpack.c.l.b16 %v1176
        %v4133 = vunpack.c.h.b16 %v1176
        %v4134 = vunpack.c.l.b16 %v1177
        %v4135 = vunpack.c.h.b16 %v1177
        %v4136 = vunpack.c.l.b16 %v1178
        %v4137 = vunpack.c.h.b16 %v1178
        %v4138 = vunpack.c.l.b16 %v1179
        %v4139 = vunpack.c.h.b16 %v1179
        %v4140 = vunpack.c.l.b16 %v1180
        %v4141 = vunpack.c.h.b16 %v1180
        %v4142 = vunpack.c.l.b16 %v1181
        %v4143 = vunpack.c.h.b16 %v1181
        %v4144 = vunpack.c.l.b16 %v1182
        %v4145 = vunpack.c.h.b16 %v1182
        %v4146 = vunpack.c.l.b16 %v1183
        %v4147 = vunpack.c.h.b16 %v1183
        %v4148 = vunpack.c.l.b16 %v1184
        %v4149 = vunpack.c.h.b16 %v1184
        %v4150 = vunpack.c.l.b16 %v1185
        %v4151 = vunpack.c.h.b16 %v1185
        %v4152 = vunpack.c.l.b16 %v1186
        %v4153 = vunpack.c.h.b16 %v1186
        %v4154 = vunpack.c.l.b16 %v1187
        %v4155 = vunpack.c.h.b16 %v1187
        %v4156 = vunpack.c.l.b16 %v1188
        %v4157 = vunpack.c.h.b16 %v1188
        %v4158 = vunpack.c.l.b16 %v1189
        %v4159 = vunpack.c.h.b16 %v1189
        %v4160 = vunpack.c.l.b16 %v1190
        %v4161 = vunpack.c.h.b16 %v1190
        %v4162 = vunpack.c.l.b16 %v1191
        %v4163 = vunpack.c.h.b16 %v1191
        %v4164 = vunpack.c.l.b16 %v1192
        %v4165 = vunpack.c.h.b16 %v1192
        %v4166 = vunpack.c.l.b16 %v1193
        %v4167 = vunpack.c.h.b16 %v1193
        %v4168 = vunpack.c.l.b16 %v1194
        %v4169 = vunpack.c.h.b16 %v1194
        %v4170 = vunpack.c.l.b16 %v1195
        %v4171 = vunpack.c.h.b16 %v1195
        %v4172 = vunpack.c.l.b16 %v1196
        %v4173 = vunpack.c.h.b16 %v1196
        %v4174 = vunpack.c.l.b16 %v1197
        %v4175 = vunpack.c.h.b16 %v1197
        %v4176 = vunpack.c.l.b16 %v1198
        %v4177 = vunpack.c.h.b16 %v1198
        %v4178 = vunpack.c.l.b16 %v1199
        %v4179 = vunpack.c.h.b16 %v1199
        %v4180 = vunpack.c.l.b16 %v1200
        %v4181 = vunpack.c.h.b16 %v1200
        %v4182 = vunpack.c.l.b16 %v1201
        %v4183 = vunpack.c.h.b16 %v1201
        %v4184 = vunpack.c.l.b16 %v1202
        %v4185 = vunpack.c.h.b16 %v1202
        %v4186 = vunpack.c.l.b16 %v1203
        %v4187 = vunpack.c.h.b16 %v1203
        %v4188 = vunpack.c.l.b16 %v1204
        %v4189 = vunpack.c.h.b16 %v1204
        %v4190 = vunpack.c.l.b16 %v1205
        %v4191 = vunpack.c.h.b16 %v1205
        %v4192 = vunpack.c.l.b16 %v1206
        %v4193 = vunpack.c.h.b16 %v1206
        %v4194 = vunpack.c.l.b16 %v1207
        %v4195 = vunpack.c.h.b16 %v1207
        %v4196 = vunpack.c.l.b16 %v1208
        %v4197 = vunpack.c.h.b16 %v1208
        %v4198 = vunpack.c.l.b16 %v1209
        %v4199 = vunpack.c.h.b16 %v1209
        %v4200 = vunpack.c.l.b16 %v1210
        %v4201 = vunpack.c.h.b16 %v1210
        %v4202 = vunpack.c.l.b16 %v1211
        %v4203 = vunpack.c.h.b16 %v1211
        %v4204 = vunpack.c.l.b16 %v1212
        %v4205 = vunpack.c.h.b16 %v1212
        %v4206 = vunpack.c.l.b16 %v1213
        %v4207 = vunpack.c.h.b16 %v1213
        %v4208 = vunpack.c.l.b16 %v1214
        %v4209 = vunpack.c.h.b16 %v1214
        %v4210 = vunpack.c.l.b16 %v1215
        %v4211 = vunpack.c.h.b16 %v1215
        %v4212 = vunpack.c.l.b16 %v1216
        %v4213 = vunpack.c.h.b16 %v1216
        %v4214 = vunpack.c.l.b16 %v1217
        %v4215 = vunpack.c.h.b16 %v1217
        %v4216 = vunpack.c.l.b16 %v1218
        %v4217 = vunpack.c.h.b16 %v1218
        %v4218 = vunpack.c.l.b16 %v1219
        %v4219 = vunpack.c.h.b16 %v1219
        %v4220 = vunpack.c.l.b16 %v1220
        %v4221 = vunpack.c.h.b16 %v1220
        %v4222 = vunpack.c.l.b16 %v1221
        %v4223 = vunpack.c.h.b16 %v1221
        %v4224 = vunpack.c.l.b16 %v1222
        %v4225 = vunpack.c.h.b16 %v1222
        %v4226 = vunpack.c.l.b16 %v1223
        %v4227 = vunpack.c.h.b16 %v1223
        %v4228 = vunpack.c.l.b16 %v1224
        %v4229 = vunpack.c.h.b16 %v1224
        %v4230 = vunpack.c.l.b16 %v1225
        %v4231 = vunpack.c.h.b16 %v1225
        %v4232 = vunpack.c.l.b16 %v1226
        %v4233 = vunpack.c.h.b16 %v1226
        %v4234 = vunpack.c.l.b16 %v1227
        %v4235 = vunpack.c.h.b16 %v1227
        %v4236 = vunpack.c.l.b16 %v1228
        %v4237 = vunpack.c.h.b16 %v1228
        %v4238 = vunpack.c.l.b16 %v1229
        %v4239 = vunpack.c.h.b16 %v1229
        %v4240 = vunpack.c.l.b16 %v1230
        %v4241 = vunpack.c.h.b16 %v1230
        %v4242 = vunpack.c.l.b16 %v1231
        %v4243 = vunpack.c.h.b16 %v1231
        %v4244 = vunpack.c.l.b16 %v1232
        %v4245 = vunpack.c.h.b16 %v1232
        %v4246 = vunpack.c.l.b16 %v1233
        %v4247 = vunpack.c.h.b16 %v1233
        %v4248 = vunpack.c.l.b16 %v1234
        %v4249 = vunpack.c.h.b16 %v1234
        %v4250 = vunpack.c.l.b16 %v1235
        %v4251 = vunpack.c.h.b16 %v1235
        %v4252 = vunpack.c.l.b16 %v1236
        %v4253 = vunpack.c.h.b16 %v1236
        %v4254 = vunpack.c.l.b16 %v1237
        %v4255 = vunpack.c.h.b16 %v1237
        %v4256 = vunpack.c.l.b16 %v1238
        %v4257 = vunpack.c.h.b16 %v1238
        %v4258 = vunpack.c.l.b16 %v1239
        %v4259 = vunpack.c.h.b16 %v1239
        %v4260 = vunpack.c.l.b16 %v1240
        %v4261 = vunpack.c.h.b16 %v1240
        %v4262 = vunpack.c.l.b16 %v1241
        %v4263 = vunpack.c.h.b16 %v1241
        %v4264 = vunpack.c.l.b16 %v1242
        %v4265 = vunpack.c.h.b16 %v1242
        %v4266 = vunpack.c.l.b16 %v1243
        %v4267 = vunpack.c.h.b16 %v1243
        %v4268 = vunpack.c.l.b16 %v1244
        %v4269 = vunpack.c.h.b16 %v1244
        %v4270 = vunpack.c.l.b16 %v1245
        %v4271 = vunpack.c.h.b16 %v1245
        %v4272 = vunpack.c.l.b16 %v1246
        %v4273 = vunpack.c.h.b16 %v1246
        %v4274 = vunpack.c.l.b16 %v1247
        %v4275 = vunpack.c.h.b16 %v1247
        %v4276 = vunpack.c.l.b16 %v1248
        %v4277 = vunpack.c.h.b16 %v1248
        %v4278 = vunpack.c.l.b16 %v1249
        %v4279 = vunpack.c.h.b16 %v1249
        %v4280 = vunpack.c.l.b16 %v1250
        %v4281 = vunpack.c.h.b16 %v1250
        %v4282 = vunpack.c.l.b16 %v1251
        %v4283 = vunpack.c.h.b16 %v1251
        %v4284 = vunpack.c.l.b16 %v1252
        %v4285 = vunpack.c.h.b16 %v1252
        %v4286 = vunpack.c.l.b16 %v1253
        %v4287 = vunpack.c.h.b16 %v1253
        %v4288 = vunpack.c.l.b16 %v1254
        %v4289 = vunpack.c.h.b16 %v1254
        %v4290 = vunpack.c.l.b16 %v1255
        %v4291 = vunpack.c.h.b16 %v1255
        %v4292 = vunpack.c.l.b16 %v1256
        %v4293 = vunpack.c.h.b16 %v1256
        %v4294 = vunpack.c.l.b16 %v1257
        %v4295 = vunpack.c.h.b16 %v1257
        %v4296 = vunpack.c.l.b16 %v1258
        %v4297 = vunpack.c.h.b16 %v1258
        %v4298 = vunpack.c.l.b16 %v1259
        %v4299 = vunpack.c.h.b16 %v1259
        %v4300 = vunpack.c.l.b16 %v1260
        %v4301 = vunpack.c.h.b16 %v1260
        %v4302 = vunpack.c.l.b16 %v1261
        %v4303 = vunpack.c.h.b16 %v1261
        %v4304 = vunpack.c.l.b16 %v1262
        %v4305 = vunpack.c.h.b16 %v1262
        %v4306 = vunpack.c.l.b16 %v1263
        %v4307 = vunpack.c.h.b16 %v1263
        %v4308 = vunpack.c.l.b16 %v1264
        %v4309 = vunpack.c.h.b16 %v1264
        %v4310 = vunpack.c.l.b16 %v1265
        %v4311 = vunpack.c.h.b16 %v1265
        %v4312 = vunpack.c.l.b16 %v1266
        %v4313 = vunpack.c.h.b16 %v1266
        %v4314 = vunpack.c.l.b16 %v1267
        %v4315 = vunpack.c.h.b16 %v1267
        %v4316 = vunpack.c.l.b16 %v1268
        %v4317 = vunpack.c.h.b16 %v1268
        %v4318 = vunpack.c.l.b16 %v1269
        %v4319 = vunpack.c.h.b16 %v1269
        %v4320 = vunpack.c.l.b16 %v1270
        %v4321 = vunpack.c.h.b16 %v1270
        %v4322 = vunpack.c.l.b16 %v1271
        %v4323 = vunpack.c.h.b16 %v1271
        %v4324 = vunpack.c.l.b16 %v1272
        %v4325 = vunpack.c.h.b16 %v1272
        %v4326 = vunpack.c.l.b16 %v1273
        %v4327 = vunpack.c.h.b16 %v1273
        %v4328 = vunpack.c.l.b16 %v1274
        %v4329 = vunpack.c.h.b16 %v1274
        %v4330 = vunpack.c.l.b16 %v1275
        %v4331 = vunpack.c.h.b16 %v1275
        %v4332 = vunpack.c.l.b16 %v1276
        %v4333 = vunpack.c.h.b16 %v1276
        %v4334 = vunpack.c.l.b16 %v1277
        %v4335 = vunpack.c.h.b16 %v1277
        %v4336 = vunpack.c.l.b16 %v1278
        %v4337 = vunpack.c.h.b16 %v1278
        %v4338 = vunpack.c.l.b16 %v1279
        %v4339 = vunpack.c.h.b16 %v1279
        %v4340 = vunpack.c.l.b16 %v1280
        %v4341 = vunpack.c.h.b16 %v1280
        %v4342 = vunpack.c.l.b16 %v1281
        %v4343 = vunpack.c.h.b16 %v1281
        %v4344 = vunpack.c.l.b16 %v1282
        %v4345 = vunpack.c.h.b16 %v1282
        %v4346 = vunpack.c.l.b16 %v1283
        %v4347 = vunpack.c.h.b16 %v1283
        %v4348 = vunpack.c.l.b16 %v1284
        %v4349 = vunpack.c.h.b16 %v1284
        %v4350 = vunpack.c.l.b16 %v1285
        %v4351 = vunpack.c.h.b16 %v1285
        %v4352 = vunpack.c.l.b16 %v1286
        %v4353 = vunpack.c.h.b16 %v1286
        %v4354 = vunpack.c.l.b16 %v1287
        %v4355 = vunpack.c.h.b16 %v1287
        %v4356 = vunpack.c.l.b16 %v1288
        %v4357 = vunpack.c.h.b16 %v1288
        %v4358 = vunpack.c.l.b16 %v1289
        %v4359 = vunpack.c.h.b16 %v1289
        %v4360 = vunpack.c.l.b16 %v1290
        %v4361 = vunpack.c.h.b16 %v1290
        %v4362 = vunpack.c.l.b16 %v1291
        %v4363 = vunpack.c.h.b16 %v1291
        %v4364 = vunpack.c.l.b16 %v1292
        %v4365 = vunpack.c.h.b16 %v1292
        %v4366 = vunpack.c.l.b16 %v1293
        %v4367 = vunpack.c.h.b16 %v1293
        %v4368 = vunpack.c.l.b16 %v1294
        %v4369 = vunpack.c.h.b16 %v1294
        %v4370 = vunpack.c.l.b16 %v1295
        %v4371 = vunpack.c.h.b16 %v1295
        %v4372 = vunpack.c.l.b16 %v1296
        %v4373 = vunpack.c.h.b16 %v1296
        %v4374 = vunpack.c.l.b16 %v1297
        %v4375 = vunpack.c.h.b16 %v1297
        %v4376 = vunpack.c.l.b16 %v1298
        %v4377 = vunpack.c.h.b16 %v1298
        %v4378 = vunpack.c.l.b16 %v1299
        %v4379 = vunpack.c.h.b16 %v1299
        %v4380 = vunpack.c.l.b16 %v1300
        %v4381 = vunpack.c.h.b16 %v1300
        %v4382 = vunpack.c.l.b16 %v1301
        %v4383 = vunpack.c.h.b16 %v1301
        %v4384 = vunpack.c.l.b16 %v1302
        %v4385 = vunpack.c.h.b16 %v1302
        %v4386 = vunpack.c.l.b16 %v1303
        %v4387 = vunpack.c.h.b16 %v1303
        %v4388 = vunpack.c.l.b16 %v1304
        %v4389 = vunpack.c.h.b16 %v1304
        %v4390 = vunpack.c.l.b16 %v1305
        %v4391 = vunpack.c.h.b16 %v1305
        %v4392 = vunpack.c.l.b16 %v1306
        %v4393 = vunpack.c.h.b16 %v1306
        %v4394 = vunpack.c.l.b16 %v1307
        %v4395 = vunpack.c.h.b16 %v1307
        %v4396 = vunpack.c.l.b16 %v1308
        %v4397 = vunpack.c.h.b16 %v1308
        %v4398 = vunpack.c.l.b16 %v1309
        %v4399 = vunpack.c.h.b16 %v1309
        %v4400 = vunpack.c.l.b16 %v1310
        %v4401 = vunpack.c.h.b16 %v1310
        %v4402 = vunpack.c.l.b16 %v1311
        %v4403 = vunpack.c.h.b16 %v1311
        %v4404 = vunpack.c.l.b16 %v1312
        %v4405 = vunpack.c.h.b16 %v1312
        %v4406 = vunpack.c.l.b16 %v1313
        %v4407 = vunpack.c.h.b16 %v1313
        %v4408 = vunpack.c.l.b16 %v1314
        %v4409 = vunpack.c.h.b16 %v1314
        %v4410 = vunpack.c.l.b16 %v1315
        %v4411 = vunpack.c.h.b16 %v1315
        %v4412 = vunpack.c.l.b16 %v1316
        %v4413 = vunpack.c.h.b16 %v1316
        %v4414 = vunpack.c.l.b16 %v1317
        %v4415 = vunpack.c.h.b16 %v1317
        %v4416 = vunpack.c.l.b16 %v1318
        %v4417 = vunpack.c.h.b16 %v1318
        %v4418 = vunpack.c.l.b16 %v1319
        %v4419 = vunpack.c.h.b16 %v1319
        %v4420 = vunpack.c.l.b16 %v1320
        %v4421 = vunpack.c.h.b16 %v1320
        %v4422 = vunpack.c.l.b16 %v1321
        %v4423 = vunpack.c.h.b16 %v1321
        %v4424 = vunpack.c.l.b16 %v1322
        %v4425 = vunpack.c.h.b16 %v1322
        %v4426 = vunpack.c.l.b16 %v1323
        %v4427 = vunpack.c.h.b16 %v1323
        %v4428 = vunpack.c.l.b16 %v1324
        %v4429 = vunpack.c.h.b16 %v1324
        %v4430 = vunpack.c.l.b16 %v1325
        %v4431 = vunpack.c.h.b16 %v1325
        %v4432 = vunpack.c.l.b16 %v1326
        %v4433 = vunpack.c.h.b16 %v1326
        %v4434 = vunpack.c.l.b16 %v1327
        %v4435 = vunpack.c.h.b16 %v1327
        %v4436 = vunpack.c.l.b16 %v1328
        %v4437 = vunpack.c.h.b16 %v1328
        %v4438 = vunpack.c.l.b16 %v1329
        %v4439 = vunpack.c.h.b16 %v1329
        %v4440 = vunpack.c.l.b16 %v1330
        %v4441 = vunpack.c.h.b16 %v1330
        %v4442 = vunpack.c.l.b16 %v1331
        %v4443 = vunpack.c.h.b16 %v1331
        %v4444 = vunpack.c.l.b16 %v1332
        %v4445 = vunpack.c.h.b16 %v1332
        %v4446 = vunpack.c.l.b16 %v1333
        %v4447 = vunpack.c.h.b16 %v1333
        %v4448 = vunpack.c.l.b16 %v1334
        %v4449 = vunpack.c.h.b16 %v1334
        %v4450 = vunpack.c.l.b16 %v1335
        %v4451 = vunpack.c.h.b16 %v1335
        %v4452 = vunpack.c.l.b16 %v1336
        %v4453 = vunpack.c.h.b16 %v1336
        %v4454 = vunpack.c.l.b16 %v1337
        %v4455 = vunpack.c.h.b16 %v1337
        %v4456 = vunpack.c.l.b16 %v1338
        %v4457 = vunpack.c.h.b16 %v1338
        %v4458 = vunpack.c.l.b16 %v1339
        %v4459 = vunpack.c.h.b16 %v1339
        %v4460 = vunpack.c.l.b16 %v1340
        %v4461 = vunpack.c.h.b16 %v1340
        %v4462 = vunpack.c.l.b16 %v1341
        %v4463 = vunpack.c.h.b16 %v1341
        %v4464 = vunpack.c.l.b16 %v1342
        %v4465 = vunpack.c.h.b16 %v1342
        %v4466 = vunpack.c.l.b16 %v1343
        %v4467 = vunpack.c.h.b16 %v1343
        %v4468 = vunpack.c.l.b16 %v1344
        %v4469 = vunpack.c.h.b16 %v1344
        %v4470 = vunpack.c.l.b16 %v1345
        %v4471 = vunpack.c.h.b16 %v1345
        %v4472 = vunpack.c.l.b16 %v1346
        %v4473 = vunpack.c.h.b16 %v1346
        %v4474 = vunpack.c.l.b16 %v1347
        %v4475 = vunpack.c.h.b16 %v1347
        %v4476 = vpack.c.b16 %v2436, %v2428
        %v4477 = vpack.c.b16 %v2437, %v2429
        %v4478 = vpack.c.b16 %v2438, %v2430
        %v4479 = vpack.c.b16 %v2439, %v2431
        %v4480 = vpack.c.b16 %v2440, %v2432
        %v4481 = vpack.c.b16 %v2441, %v2433
        %v4482 = vpack.c.b16 %v2442, %v2434
        %v4483 = vpack.c.b16 %v2443, %v2435
        %v4484 = vpack.c.b16 %v2452, %v2444
        %v4485 = vpack.c.b16 %v2453, %v2445
        %v4486 = vpack.c.b16 %v2454, %v2446
        %v4487 = vpack.c.b16 %v2455, %v2447
        %v4488 = vpack.c.b16 %v2456, %v2448
        %v4489 = vpack.c.b16 %v2457, %v2449
        %v4490 = vpack.c.b16 %v2458, %v2450
        %v4491 = vpack.c.b16 %v2459, %v2451
        %v4492 = vpack.c.b16 %v2468, %v2460
        %v4493 = vpack.c.b16 %v2469, %v2461
        %v4494 = vpack.c.b16 %v2470, %v2462
        %v4495 = vpack.c.b16 %v2471, %v2463
        %v4496 = vpack.c.b16 %v2472, %v2464
        %v4497 = vpack.c.b16 %v2473, %v2465
        %v4498 = vpack.c.b16 %v2474, %v2466
        %v4499 = vpack.c.b16 %v2475, %v2467
        %v4500 = vpack.c.b16 %v2484, %v2476
        %v4501 = vpack.c.b16 %v2485, %v2477
        %v4502 = vpack.c.b16 %v2486, %v2478
        %v4503 = vpack.c.b16 %v2487, %v2479
        %v4504 = vpack.c.b16 %v2488, %v2480
        %v4505 = vpack.c.b16 %v2489, %v2481
        %v4506 = vpack.c.b16 %v2490, %v2482
        %v4507 = vpack.c.b16 %v2491, %v2483
        %v4508 = vpack.c.b16 %v2500, %v2492
        %v4509 = vpack.c.b16 %v2501, %v2493
        %v4510 = vpack.c.b16 %v2502, %v2494
        %v4511 = vpack.c.b16 %v2503, %v2495
        %v4512 = vpack.c.b16 %v2504, %v2496
        %v4513 = vpack.c.b16 %v2505, %v2497
        %v4514 = vpack.c.b16 %v2506, %v2498
        %v4515 = vpack.c.b16 %v2507, %v2499
        %v4516 = vpack.c.b16 %v2516, %v2508
        %v4517 = vpack.c.b16 %v2517, %v2509
        %v4518 = vpack.c.b16 %v2518, %v2510
        %v4519 = vpack.c.b16 %v2519, %v2511
        %v4520 = vpack.c.b16 %v2520, %v2512
        %v4521 = vpack.c.b16 %v2521, %v2513
        %v4522 = vpack.c.b16 %v2522, %v2514
        %v4523 = vpack.c.b16 %v2523, %v2515
        %v4524 = vpack.c.b16 %v2532, %v2524
        %v4525 = vpack.c.b16 %v2533, %v2525
        %v4526 = vpack.c.b16 %v2534, %v2526
        %v4527 = vpack.c.b16 %v2535, %v2527
        %v4528 = vpack.c.b16 %v2536, %v2528
        %v4529 = vpack.c.b16 %v2537, %v2529
        %v4530 = vpack.c.b16 %v2538, %v2530
        %v4531 = vpack.c.b16 %v2539, %v2531
        %v4532 = vpack.c.b16 %v2548, %v2540
        %v4533 = vpack.c.b16 %v2549, %v2541
        %v4534 = vpack.c.b16 %v2550, %v2542
        %v4535 = vpack.c.b16 %v2551, %v2543
        %v4536 = vpack.c.b16 %v2552, %v2544
        %v4537 = vpack.c.b16 %v2553, %v2545
        %v4538 = vpack.c.b16 %v2554, %v2546
        %v4539 = vpack.c.b16 %v2555, %v2547
        %v4540 = vpack.c.b16 %v2564, %v2556
        %v4541 = vpack.c.b16 %v2565, %v2557
        %v4542 = vpack.c.b16 %v2566, %v2558
        %v4543 = vpack.c.b16 %v2567, %v2559
        %v4544 = vpack.c.b16 %v2568, %v2560
        %v4545 = vpack.c.b16 %v2569, %v2561
        %v4546 = vpack.c.b16 %v2570, %v2562
        %v4547 = vpack.c.b16 %v2571, %v2563
        %v4548 = vpack.c.b16 %v2580, %v2572
        %v4549 = vpack.c.b16 %v2581, %v2573
        %v4550 = vpack.c.b16 %v2582, %v2574
        %v4551 = vpack.c.b16 %v2583, %v2575
        %v4552 = vpack.c.b16 %v2584, %v2576
        %v4553 = vpack.c.b16 %v2585, %v2577
        %v4554 = vpack.c.b16 %v2586, %v2578
        %v4555 = vpack.c.b16 %v2587, %v2579
        %v4556 = vpack.c.b16 %v2596, %v2588
        %v4557 = vpack.c.b16 %v2597, %v2589
        %v4558 = vpack.c.b16 %v2598, %v2590
        %v4559 = vpack.c.b16 %v2599, %v2591
        %v4560 = vpack.c.b16 %v2600, %v2592
        %v4561 = vpack.c.b16 %v2601, %v2593
        %v4562 = vpack.c.b16 %v2602, %v2594
        %v4563 = vpack.c.b16 %v2603, %v2595
        %v4564 = vpack.c.b16 %v2612, %v2604
        %v4565 = vpack.c.b16 %v2613, %v2605
        %v4566 = vpack.c.b16 %v2614, %v2606
        %v4567 = vpack.c.b16 %v2615, %v2607
        %v4568 = vpack.c.b16 %v2616, %v2608
        %v4569 = vpack.c.b16 %v2617, %v2609
        %v4570 = vpack.c.b16 %v2618, %v2610
        %v4571 = vpack.c.b16 %v2619, %v2611
        %v4572 = vpack.c.b16 %v2628, %v2620
        %v4573 = vpack.c.b16 %v2629, %v2621
        %v4574 = vpack.c.b16 %v2630, %v2622
        %v4575 = vpack.c.b16 %v2631, %v2623
        %v4576 = vpack.c.b16 %v2632, %v2624
        %v4577 = vpack.c.b16 %v2633, %v2625
        %v4578 = vpack.c.b16 %v2634, %v2626
        %v4579 = vpack.c.b16 %v2635, %v2627
        %v4580 = vpack.c.b16 %v2644, %v2636
        %v4581 = vpack.c.b16 %v2645, %v2637
        %v4582 = vpack.c.b16 %v2646, %v2638
        %v4583 = vpack.c.b16 %v2647, %v2639
        %v4584 = vpack.c.b16 %v2648, %v2640
        %v4585 = vpack.c.b16 %v2649, %v2641
        %v4586 = vpack.c.b16 %v2650, %v2642
        %v4587 = vpack.c.b16 %v2651, %v2643
        %v4588 = vpack.c.b16 %v2660, %v2652
        %v4589 = vpack.c.b16 %v2661, %v2653
        %v4590 = vpack.c.b16 %v2662, %v2654
        %v4591 = vpack.c.b16 %v2663, %v2655
        %v4592 = vpack.c.b16 %v2664, %v2656
        %v4593 = vpack.c.b16 %v2665, %v2657
        %v4594 = vpack.c.b16 %v2666, %v2658
        %v4595 = vpack.c.b16 %v2667, %v2659
        %v4596 = vpack.c.b16 %v2676, %v2668
        %v4597 = vpack.c.b16 %v2677, %v2669
        %v4598 = vpack.c.b16 %v2678, %v2670
        %v4599 = vpack.c.b16 %v2679, %v2671
        %v4600 = vpack.c.b16 %v2680, %v2672
        %v4601 = vpack.c.b16 %v2681, %v2673
        %v4602 = vpack.c.b16 %v2682, %v2674
        %v4603 = vpack.c.b16 %v2683, %v2675
        %v4604 = vpack.c.b16 %v2692, %v2684
        %v4605 = vpack.c.b16 %v2693, %v2685
        %v4606 = vpack.c.b16 %v2694, %v2686
        %v4607 = vpack.c.b16 %v2695, %v2687
        %v4608 = vpack.c.b16 %v2696, %v2688
        %v4609 = vpack.c.b16 %v2697, %v2689
        %v4610 = vpack.c.b16 %v2698, %v2690
        %v4611 = vpack.c.b16 %v2699, %v2691
        %v4612 = vpack.c.b16 %v2708, %v2700
        %v4613 = vpack.c.b16 %v2709, %v2701
        %v4614 = vpack.c.b16 %v2710, %v2702
        %v4615 = vpack.c.b16 %v2711, %v2703
        %v4616 = vpack.c.b16 %v2712, %v2704
        %v4617 = vpack.c.b16 %v2713, %v2705
        %v4618 = vpack.c.b16 %v2714, %v2706
        %v4619 = vpack.c.b16 %v2715, %v2707
        %v4620 = vpack.c.b16 %v2724, %v2716
        %v4621 = vpack.c.b16 %v2725, %v2717
        %v4622 = vpack.c.b16 %v2726, %v2718
        %v4623 = vpack.c.b16 %v2727, %v2719
        %v4624 = vpack.c.b16 %v2728, %v2720
        %v4625 = vpack.c.b16 %v2729, %v2721
        %v4626 = vpack.c.b16 %v2730, %v2722
        %v4627 = vpack.c.b16 %v2731, %v2723
        %v4628 = vpack.c.b16 %v2740, %v2732
        %v4629 = vpack.c.b16 %v2741, %v2733
        %v4630 = vpack.c.b16 %v2742, %v2734
        %v4631 = vpack.c.b16 %v2743, %v2735
        %v4632 = vpack.c.b16 %v2744, %v2736
        %v4633 = vpack.c.b16 %v2745, %v2737
        %v4634 = vpack.c.b16 %v2746, %v2738
        %v4635 = vpack.c.b16 %v2747, %v2739
        %v4636 = vpack.c.b16 %v2756, %v2748
        %v4637 = vpack.c.b16 %v2757, %v2749
        %v4638 = vpack.c.b16 %v2758, %v2750
        %v4639 = vpack.c.b16 %v2759, %v2751
        %v4640 = vpack.c.b16 %v2760, %v2752
        %v4641 = vpack.c.b16 %v2761, %v2753
        %v4642 = vpack.c.b16 %v2762, %v2754
        %v4643 = vpack.c.b16 %v2763, %v2755
        %v4644 = vpack.c.b16 %v2772, %v2764
        %v4645 = vpack.c.b16 %v2773, %v2765
        %v4646 = vpack.c.b16 %v2774, %v2766
        %v4647 = vpack.c.b16 %v2775, %v2767
        %v4648 = vpack.c.b16 %v2776, %v2768
        %v4649 = vpack.c.b16 %v2777, %v2769
        %v4650 = vpack.c.b16 %v2778, %v2770
        %v4651 = vpack.c.b16 %v2779, %v2771
        %v4652 = vpack.c.b16 %v2788, %v2780
        %v4653 = vpack.c.b16 %v2789, %v2781
        %v4654 = vpack.c.b16 %v2790, %v2782
        %v4655 = vpack.c.b16 %v2791, %v2783
        %v4656 = vpack.c.b16 %v2792, %v2784
        %v4657 = vpack.c.b16 %v2793, %v2785
        %v4658 = vpack.c.b16 %v2794, %v2786
        %v4659 = vpack.c.b16 %v2795, %v2787
        %v4660 = vpack.c.b16 %v2804, %v2796
        %v4661 = vpack.c.b16 %v2805, %v2797
        %v4662 = vpack.c.b16 %v2806, %v2798
        %v4663 = vpack.c.b16 %v2807, %v2799
        %v4664 = vpack.c.b16 %v2808, %v2800
        %v4665 = vpack.c.b16 %v2809, %v2801
        %v4666 = vpack.c.b16 %v2810, %v2802
        %v4667 = vpack.c.b16 %v2811, %v2803
        %v4668 = vpack.c.b16 %v2820, %v2812
        %v4669 = vpack.c.b16 %v2821, %v2813
        %v4670 = vpack.c.b16 %v2822, %v2814
        %v4671 = vpack.c.b16 %v2823, %v2815
        %v4672 = vpack.c.b16 %v2824, %v2816
        %v4673 = vpack.c.b16 %v2825, %v2817
        %v4674 = vpack.c.b16 %v2826, %v2818
        %v4675 = vpack.c.b16 %v2827, %v2819
        %v4676 = vpack.c.b16 %v2836, %v2828
        %v4677 = vpack.c.b16 %v2837, %v2829
        %v4678 = vpack.c.b16 %v2838, %v2830
        %v4679 = vpack.c.b16 %v2839, %v2831
        %v4680 = vpack.c.b16 %v2840, %v2832
        %v4681 = vpack.c.b16 %v2841, %v2833
        %v4682 = vpack.c.b16 %v2842, %v2834
        %v4683 = vpack.c.b16 %v2843, %v2835
        %v4684 = vpack.c.b16 %v2852, %v2844
        %v4685 = vpack.c.b16 %v2853, %v2845
        %v4686 = vpack.c.b16 %v2854, %v2846
        %v4687 = vpack.c.b16 %v2855, %v2847
        %v4688 = vpack.c.b16 %v2856, %v2848
        %v4689 = vpack.c.b16 %v2857, %v2849
        %v4690 = vpack.c.b16 %v2858, %v2850
        %v4691 = vpack.c.b16 %v2859, %v2851
        %v4692 = vpack.c.b16 %v2868, %v2860
        %v4693 = vpack.c.b16 %v2869, %v2861
        %v4694 = vpack.c.b16 %v2870, %v2862
        %v4695 = vpack.c.b16 %v2871, %v2863
        %v4696 = vpack.c.b16 %v2872, %v2864
        %v4697 = vpack.c.b16 %v2873, %v2865
        %v4698 = vpack.c.b16 %v2874, %v2866
        %v4699 = vpack.c.b16 %v2875, %v2867
        %v4700 = vpack.c.b16 %v2884, %v2876
        %v4701 = vpack.c.b16 %v2885, %v2877
        %v4702 = vpack.c.b16 %v2886, %v2878
        %v4703 = vpack.c.b16 %v2887, %v2879
        %v4704 = vpack.c.b16 %v2888, %v2880
        %v4705 = vpack.c.b16 %v2889, %v2881
        %v4706 = vpack.c.b16 %v2890, %v2882
        %v4707 = vpack.c.b16 %v2891, %v2883
        %v4708 = vpack.c.b16 %v2900, %v2892
        %v4709 = vpack.c.b16 %v2901, %v2893
        %v4710 = vpack.c.b16 %v2902, %v2894
        %v4711 = vpack.c.b16 %v2903, %v2895
        %v4712 = vpack.c.b16 %v2904, %v2896
        %v4713 = vpack.c.b16 %v2905, %v2897
        %v4714 = vpack.c.b16 %v2906, %v2898
        %v4715 = vpack.c.b16 %v2907, %v2899
        %v4716 = vpack.c.b16 %v2916, %v2908
        %v4717 = vpack.c.b16 %v2917, %v2909
        %v4718 = vpack.c.b16 %v2918, %v2910
        %v4719 = vpack.c.b16 %v2919, %v2911
        %v4720 = vpack.c.b16 %v2920, %v2912
        %v4721 = vpack.c.b16 %v2921, %v2913
        %v4722 = vpack.c.b16 %v2922, %v2914
        %v4723 = vpack.c.b16 %v2923, %v2915
        %v4724 = vpack.c.b16 %v2932, %v2924
        %v4725 = vpack.c.b16 %v2933, %v2925
        %v4726 = vpack.c.b16 %v2934, %v2926
        %v4727 = vpack.c.b16 %v2935, %v2927
        %v4728 = vpack.c.b16 %v2936, %v2928
        %v4729 = vpack.c.b16 %v2937, %v2929
        %v4730 = vpack.c.b16 %v2938, %v2930
        %v4731 = vpack.c.b16 %v2939, %v2931
        %v4732 = vpack.c.b16 %v2948, %v2940
        %v4733 = vpack.c.b16 %v2949, %v2941
        %v4734 = vpack.c.b16 %v2950, %v2942
        %v4735 = vpack.c.b16 %v2951, %v2943
        %v4736 = vpack.c.b16 %v2952, %v2944
        %v4737 = vpack.c.b16 %v2953, %v2945
        %v4738 = vpack.c.b16 %v2954, %v2946
        %v4739 = vpack.c.b16 %v2955, %v2947
        %v4740 = vpack.c.b16 %v2964, %v2956
        %v4741 = vpack.c.b16 %v2965, %v2957
        %v4742 = vpack.c.b16 %v2966, %v2958
        %v4743 = vpack.c.b16 %v2967, %v2959
        %v4744 = vpack.c.b16 %v2968, %v2960
        %v4745 = vpack.c.b16 %v2969, %v2961
        %v4746 = vpack.c.b16 %v2970, %v2962
        %v4747 = vpack.c.b16 %v2971, %v2963
        %v4748 = vpack.c.b16 %v2980, %v2972
        %v4749 = vpack.c.b16 %v2981, %v2973
        %v4750 = vpack.c.b16 %v2982, %v2974
        %v4751 = vpack.c.b16 %v2983, %v2975
        %v4752 = vpack.c.b16 %v2984, %v2976
        %v4753 = vpack.c.b16 %v2985, %v2977
        %v4754 = vpack.c.b16 %v2986, %v2978
        %v4755 = vpack.c.b16 %v2987, %v2979
        %v4756 = vpack.c.b16 %v2996, %v2988
        %v4757 = vpack.c.b16 %v2997, %v2989
        %v4758 = vpack.c.b16 %v2998, %v2990
        %v4759 = vpack.c.b16 %v2999, %v2991
        %v4760 = vpack.c.b16 %v3000, %v2992
        %v4761 = vpack.c.b16 %v3001, %v2993
        %v4762 = vpack.c.b16 %v3002, %v2994
        %v4763 = vpack.c.b16 %v3003, %v2995
        %v4764 = vpack.c.b16 %v3012, %v3004
        %v4765 = vpack.c.b16 %v3013, %v3005
        %v4766 = vpack.c.b16 %v3014, %v3006
        %v4767 = vpack.c.b16 %v3015, %v3007
        %v4768 = vpack.c.b16 %v3016, %v3008
        %v4769 = vpack.c.b16 %v3017, %v3009
        %v4770 = vpack.c.b16 %v3018, %v3010
        %v4771 = vpack.c.b16 %v3019, %v3011
        %v4772 = vpack.c.b16 %v3028, %v3020
        %v4773 = vpack.c.b16 %v3029, %v3021
        %v4774 = vpack.c.b16 %v3030, %v3022
        %v4775 = vpack.c.b16 %v3031, %v3023
        %v4776 = vpack.c.b16 %v3032, %v3024
        %v4777 = vpack.c.b16 %v3033, %v3025
        %v4778 = vpack.c.b16 %v3034, %v3026
        %v4779 = vpack.c.b16 %v3035, %v3027
        %v4780 = vpack.c.b16 %v3044, %v3036
        %v4781 = vpack.c.b16 %v3045, %v3037
        %v4782 = vpack.c.b16 %v3046, %v3038
        %v4783 = vpack.c.b16 %v3047, %v3039
        %v4784 = vpack.c.b16 %v3048, %v3040
        %v4785 = vpack.c.b16 %v3049, %v3041
        %v4786 = vpack.c.b16 %v3050, %v3042
        %v4787 = vpack.c.b16 %v3051, %v3043
        %v4788 = vpack.c.b16 %v3060, %v3052
        %v4789 = vpack.c.b16 %v3061, %v3053
        %v4790 = vpack.c.b16 %v3062, %v3054
        %v4791 = vpack.c.b16 %v3063, %v3055
        %v4792 = vpack.c.b16 %v3064, %v3056
        %v4793 = vpack.c.b16 %v3065, %v3057
        %v4794 = vpack.c.b16 %v3066, %v3058
        %v4795 = vpack.c.b16 %v3067, %v3059
        %v4796 = vpack.c.b16 %v3076, %v3068
        %v4797 = vpack.c.b16 %v3077, %v3069
        %v4798 = vpack.c.b16 %v3078, %v3070
        %v4799 = vpack.c.b16 %v3079, %v3071
        %v4800 = vpack.c.b16 %v3080, %v3072
        %v4801 = vpack.c.b16 %v3081, %v3073
        %v4802 = vpack.c.b16 %v3082, %v3074
        %v4803 = vpack.c.b16 %v3083, %v3075
        %v4804 = vpack.c.b16 %v3092, %v3084
        %v4805 = vpack.c.b16 %v3093, %v3085
        %v4806 = vpack.c.b16 %v3094, %v3086
        %v4807 = vpack.c.b16 %v3095, %v3087
        %v4808 = vpack.c.b16 %v3096, %v3088
        %v4809 = vpack.c.b16 %v3097, %v3089
        %v4810 = vpack.c.b16 %v3098, %v3090
        %v4811 = vpack.c.b16 %v3099, %v3091
        %v4812 = vpack.c.b16 %v3108, %v3100
        %v4813 = vpack.c.b16 %v3109, %v3101
        %v4814 = vpack.c.b16 %v3110, %v3102
        %v4815 = vpack.c.b16 %v3111, %v3103
        %v4816 = vpack.c.b16 %v3112, %v3104
        %v4817 = vpack.c.b16 %v3113, %v3105
        %v4818 = vpack.c.b16 %v3114, %v3106
        %v4819 = vpack.c.b16 %v3115, %v3107
        %v4820 = vpack.c.b16 %v3124, %v3116
        %v4821 = vpack.c.b16 %v3125, %v3117
        %v4822 = vpack.c.b16 %v3126, %v3118
        %v4823 = vpack.c.b16 %v3127, %v3119
        %v4824 = vpack.c.b16 %v3128, %v3120
        %v4825 = vpack.c.b16 %v3129, %v3121
        %v4826 = vpack.c.b16 %v3130, %v3122
        %v4827 = vpack.c.b16 %v3131, %v3123
        %v4828 = vpack.c.b16 %v3140, %v3132
        %v4829 = vpack.c.b16 %v3141, %v3133
        %v4830 = vpack.c.b16 %v3142, %v3134
        %v4831 = vpack.c.b16 %v3143, %v3135
        %v4832 = vpack.c.b16 %v3144, %v3136
        %v4833 = vpack.c.b16 %v3145, %v3137
        %v4834 = vpack.c.b16 %v3146, %v3138
        %v4835 = vpack.c.b16 %v3147, %v3139
        %v4836 = vpack.c.b16 %v3156, %v3148
        %v4837 = vpack.c.b16 %v3157, %v3149
        %v4838 = vpack.c.b16 %v3158, %v3150
        %v4839 = vpack.c.b16 %v3159, %v3151
        %v4840 = vpack.c.b16 %v3160, %v3152
        %v4841 = vpack.c.b16 %v3161, %v3153
        %v4842 = vpack.c.b16 %v3162, %v3154
        %v4843 = vpack.c.b16 %v3163, %v3155
        %v4844 = vpack.c.b16 %v3172, %v3164
        %v4845 = vpack.c.b16 %v3173, %v3165
        %v4846 = vpack.c.b16 %v3174, %v3166
        %v4847 = vpack.c.b16 %v3175, %v3167
        %v4848 = vpack.c.b16 %v3176, %v3168
        %v4849 = vpack.c.b16 %v3177, %v3169
        %v4850 = vpack.c.b16 %v3178, %v3170
        %v4851 = vpack.c.b16 %v3179, %v3171
        %v4852 = vpack.c.b16 %v3188, %v3180
        %v4853 = vpack.c.b16 %v3189, %v3181
        %v4854 = vpack.c.b16 %v3190, %v3182
        %v4855 = vpack.c.b16 %v3191, %v3183
        %v4856 = vpack.c.b16 %v3192, %v3184
        %v4857 = vpack.c.b16 %v3193, %v3185
        %v4858 = vpack.c.b16 %v3194, %v3186
        %v4859 = vpack.c.b16 %v3195, %v3187
        %v4860 = vpack.c.b16 %v3204, %v3196
        %v4861 = vpack.c.b16 %v3205, %v3197
        %v4862 = vpack.c.b16 %v3206, %v3198
        %v4863 = vpack.c.b16 %v3207, %v3199
        %v4864 = vpack.c.b16 %v3208, %v3200
        %v4865 = vpack.c.b16 %v3209, %v3201
        %v4866 = vpack.c.b16 %v3210, %v3202
        %v4867 = vpack.c.b16 %v3211, %v3203
        %v4868 = vpack.c.b16 %v3220, %v3212
        %v4869 = vpack.c.b16 %v3221, %v3213
        %v4870 = vpack.c.b16 %v3222, %v3214
        %v4871 = vpack.c.b16 %v3223, %v3215
        %v4872 = vpack.c.b16 %v3224, %v3216
        %v4873 = vpack.c.b16 %v3225, %v3217
        %v4874 = vpack.c.b16 %v3226, %v3218
        %v4875 = vpack.c.b16 %v3227, %v3219
        %v4876 = vpack.c.b16 %v3236, %v3228
        %v4877 = vpack.c.b16 %v3237, %v3229
        %v4878 = vpack.c.b16 %v3238, %v3230
        %v4879 = vpack.c.b16 %v3239, %v3231
        %v4880 = vpack.c.b16 %v3240, %v3232
        %v4881 = vpack.c.b16 %v3241, %v3233
        %v4882 = vpack.c.b16 %v3242, %v3234
        %v4883 = vpack.c.b16 %v3243, %v3235
        %v4884 = vpack.c.b16 %v3252, %v3244
        %v4885 = vpack.c.b16 %v3253, %v3245
        %v4886 = vpack.c.b16 %v3254, %v3246
        %v4887 = vpack.c.b16 %v3255, %v3247
        %v4888 = vpack.c.b16 %v3256, %v3248
        %v4889 = vpack.c.b16 %v3257, %v3249
        %v4890 = vpack.c.b16 %v3258, %v3250
        %v4891 = vpack.c.b16 %v3259, %v3251
        %v4892 = vpack.c.b16 %v3268, %v3260
        %v4893 = vpack.c.b16 %v3269, %v3261
        %v4894 = vpack.c.b16 %v3270, %v3262
        %v4895 = vpack.c.b16 %v3271, %v3263
        %v4896 = vpack.c.b16 %v3272, %v3264
        %v4897 = vpack.c.b16 %v3273, %v3265
        %v4898 = vpack.c.b16 %v3274, %v3266
        %v4899 = vpack.c.b16 %v3275, %v3267
        %v4900 = vpack.c.b16 %v3284, %v3276
        %v4901 = vpack.c.b16 %v3285, %v3277
        %v4902 = vpack.c.b16 %v3286, %v3278
        %v4903 = vpack.c.b16 %v3287, %v3279
        %v4904 = vpack.c.b16 %v3288, %v3280
        %v4905 = vpack.c.b16 %v3289, %v3281
        %v4906 = vpack.c.b16 %v3290, %v3282
        %v4907 = vpack.c.b16 %v3291, %v3283
        %v4908 = vpack.c.b16 %v3300, %v3292
        %v4909 = vpack.c.b16 %v3301, %v3293
        %v4910 = vpack.c.b16 %v3302, %v3294
        %v4911 = vpack.c.b16 %v3303, %v3295
        %v4912 = vpack.c.b16 %v3304, %v3296
        %v4913 = vpack.c.b16 %v3305, %v3297
        %v4914 = vpack.c.b16 %v3306, %v3298
        %v4915 = vpack.c.b16 %v3307, %v3299
        %v4916 = vpack.c.b16 %v3316, %v3308
        %v4917 = vpack.c.b16 %v3317, %v3309
        %v4918 = vpack.c.b16 %v3318, %v3310
        %v4919 = vpack.c.b16 %v3319, %v3311
        %v4920 = vpack.c.b16 %v3320, %v3312
        %v4921 = vpack.c.b16 %v3321, %v3313
        %v4922 = vpack.c.b16 %v3322, %v3314
        %v4923 = vpack.c.b16 %v3323, %v3315
        %v4924 = vpack.c.b16 %v3332, %v3324
        %v4925 = vpack.c.b16 %v3333, %v3325
        %v4926 = vpack.c.b16 %v3334, %v3326
        %v4927 = vpack.c.b16 %v3335, %v3327
        %v4928 = vpack.c.b16 %v3336, %v3328
        %v4929 = vpack.c.b16 %v3337, %v3329
        %v4930 = vpack.c.b16 %v3338, %v3330
        %v4931 = vpack.c.b16 %v3339, %v3331
        %v4932 = vpack.c.b16 %v3348, %v3340
        %v4933 = vpack.c.b16 %v3349, %v3341
        %v4934 = vpack.c.b16 %v3350, %v3342
        %v4935 = vpack.c.b16 %v3351, %v3343
        %v4936 = vpack.c.b16 %v3352, %v3344
        %v4937 = vpack.c.b16 %v3353, %v3345
        %v4938 = vpack.c.b16 %v3354, %v3346
        %v4939 = vpack.c.b16 %v3355, %v3347
        %v4940 = vpack.c.b16 %v3364, %v3356
        %v4941 = vpack.c.b16 %v3365, %v3357
        %v4942 = vpack.c.b16 %v3366, %v3358
        %v4943 = vpack.c.b16 %v3367, %v3359
        %v4944 = vpack.c.b16 %v3368, %v3360
        %v4945 = vpack.c.b16 %v3369, %v3361
        %v4946 = vpack.c.b16 %v3370, %v3362
        %v4947 = vpack.c.b16 %v3371, %v3363
        %v4948 = vpack.c.b16 %v3380, %v3372
        %v4949 = vpack.c.b16 %v3381, %v3373
        %v4950 = vpack.c.b16 %v3382, %v3374
        %v4951 = vpack.c.b16 %v3383, %v3375
        %v4952 = vpack.c.b16 %v3384, %v3376
        %v4953 = vpack.c.b16 %v3385, %v3377
        %v4954 = vpack.c.b16 %v3386, %v3378
        %v4955 = vpack.c.b16 %v3387, %v3379
        %v4956 = vpack.c.b16 %v3396, %v3388
        %v4957 = vpack.c.b16 %v3397, %v3389
        %v4958 = vpack.c.b16 %v3398, %v3390
        %v4959 = vpack.c.b16 %v3399, %v3391
        %v4960 = vpack.c.b16 %v3400, %v3392
        %v4961 = vpack.c.b16 %v3401, %v3393
        %v4962 = vpack.c.b16 %v3402, %v3394
        %v4963 = vpack.c.b16 %v3403, %v3395
        %v4964 = vpack.c.b16 %v3412, %v3404
        %v4965 = vpack.c.b16 %v3413, %v3405
        %v4966 = vpack.c.b16 %v3414, %v3406
        %v4967 = vpack.c.b16 %v3415, %v3407
        %v4968 = vpack.c.b16 %v3416, %v3408
        %v4969 = vpack.c.b16 %v3417, %v3409
        %v4970 = vpack.c.b16 %v3418, %v3410
        %v4971 = vpack.c.b16 %v3419, %v3411
        %v4972 = vpack.c.b16 %v3428, %v3420
        %v4973 = vpack.c.b16 %v3429, %v3421
        %v4974 = vpack.c.b16 %v3430, %v3422
        %v4975 = vpack.c.b16 %v3431, %v3423
        %v4976 = vpack.c.b16 %v3432, %v3424
        %v4977 = vpack.c.b16 %v3433, %v3425
        %v4978 = vpack.c.b16 %v3434, %v3426
        %v4979 = vpack.c.b16 %v3435, %v3427
        %v4980 = vpack.c.b16 %v3444, %v3436
        %v4981 = vpack.c.b16 %v3445, %v3437
        %v4982 = vpack.c.b16 %v3446, %v3438
        %v4983 = vpack.c.b16 %v3447, %v3439
        %v4984 = vpack.c.b16 %v3448, %v3440
        %v4985 = vpack.c.b16 %v3449, %v3441
        %v4986 = vpack.c.b16 %v3450, %v3442
        %v4987 = vpack.c.b16 %v3451, %v3443
        %v4988 = vpack.c.b16 %v3460, %v3452
        %v4989 = vpack.c.b16 %v3461, %v3453
        %v4990 = vpack.c.b16 %v3462, %v3454
        %v4991 = vpack.c.b16 %v3463, %v3455
        %v4992 = vpack.c.b16 %v3464, %v3456
        %v4993 = vpack.c.b16 %v3465, %v3457
        %v4994 = vpack.c.b16 %v3466, %v3458
        %v4995 = vpack.c.b16 %v3467, %v3459
        %v4996 = vpack.c.b16 %v3476, %v3468
        %v4997 = vpack.c.b16 %v3477, %v3469
        %v4998 = vpack.c.b16 %v3478, %v3470
        %v4999 = vpack.c.b16 %v3479, %v3471
        %v5000 = vpack.c.b16 %v3480, %v3472
        %v5001 = vpack.c.b16 %v3481, %v3473
        %v5002 = vpack.c.b16 %v3482, %v3474
        %v5003 = vpack.c.b16 %v3483, %v3475
        %v5004 = vpack.c.b16 %v3492, %v3484
        %v5005 = vpack.c.b16 %v3493, %v3485
        %v5006 = vpack.c.b16 %v3494, %v3486
        %v5007 = vpack.c.b16 %v3495, %v3487
        %v5008 = vpack.c.b16 %v3496, %v3488
        %v5009 = vpack.c.b16 %v3497, %v3489
        %v5010 = vpack.c.b16 %v3498, %v3490
        %v5011 = vpack.c.b16 %v3499, %v3491
        %v5012 = vpack.c.b16 %v3508, %v3500
        %v5013 = vpack.c.b16 %v3509, %v3501
        %v5014 = vpack.c.b16 %v3510, %v3502
        %v5015 = vpack.c.b16 %v3511, %v3503
        %v5016 = vpack.c.b16 %v3512, %v3504
        %v5017 = vpack.c.b16 %v3513, %v3505
        %v5018 = vpack.c.b16 %v3514, %v3506
        %v5019 = vpack.c.b16 %v3515, %v3507
        %v5020 = vpack.c.b16 %v3524, %v3516
        %v5021 = vpack.c.b16 %v3525, %v3517
        %v5022 = vpack.c.b16 %v3526, %v3518
        %v5023 = vpack.c.b16 %v3527, %v3519
        %v5024 = vpack.c.b16 %v3528, %v3520
        %v5025 = vpack.c.b16 %v3529, %v3521
        %v5026 = vpack.c.b16 %v3530, %v3522
        %v5027 = vpack.c.b16 %v3531, %v3523
        %v5028 = vpack.c.b16 %v3540, %v3532
        %v5029 = vpack.c.b16 %v3541, %v3533
        %v5030 = vpack.c.b16 %v3542, %v3534
        %v5031 = vpack.c.b16 %v3543, %v3535
        %v5032 = vpack.c.b16 %v3544, %v3536
        %v5033 = vpack.c.b16 %v3545, %v3537
        %v5034 = vpack.c.b16 %v3546, %v3538
        %v5035 = vpack.c.b16 %v3547, %v3539
        %v5036 = vpack.c.b16 %v3556, %v3548
        %v5037 = vpack.c.b16 %v3557, %v3549
        %v5038 = vpack.c.b16 %v3558, %v3550
        %v5039 = vpack.c.b16 %v3559, %v3551
        %v5040 = vpack.c.b16 %v3560, %v3552
        %v5041 = vpack.c.b16 %v3561, %v3553
        %v5042 = vpack.c.b16 %v3562, %v3554
        %v5043 = vpack.c.b16 %v3563, %v3555
        %v5044 = vpack.c.b16 %v3572, %v3564
        %v5045 = vpack.c.b16 %v3573, %v3565
        %v5046 = vpack.c.b16 %v3574, %v3566
        %v5047 = vpack.c.b16 %v3575, %v3567
        %v5048 = vpack.c.b16 %v3576, %v3568
        %v5049 = vpack.c.b16 %v3577, %v3569
        %v5050 = vpack.c.b16 %v3578, %v3570
        %v5051 = vpack.c.b16 %v3579, %v3571
        %v5052 = vpack.c.b16 %v3588, %v3580
        %v5053 = vpack.c.b16 %v3589, %v3581
        %v5054 = vpack.c.b16 %v3590, %v3582
        %v5055 = vpack.c.b16 %v3591, %v3583
        %v5056 = vpack.c.b16 %v3592, %v3584
        %v5057 = vpack.c.b16 %v3593, %v3585
        %v5058 = vpack.c.b16 %v3594, %v3586
        %v5059 = vpack.c.b16 %v3595, %v3587
        %v5060 = vpack.c.b16 %v3604, %v3596
        %v5061 = vpack.c.b16 %v3605, %v3597
        %v5062 = vpack.c.b16 %v3606, %v3598
        %v5063 = vpack.c.b16 %v3607, %v3599
        %v5064 = vpack.c.b16 %v3608, %v3600
        %v5065 = vpack.c.b16 %v3609, %v3601
        %v5066 = vpack.c.b16 %v3610, %v3602
        %v5067 = vpack.c.b16 %v3611, %v3603
        %v5068 = vpack.c.b16 %v3620, %v3612
        %v5069 = vpack.c.b16 %v3621, %v3613
        %v5070 = vpack.c.b16 %v3622, %v3614
        %v5071 = vpack.c.b16 %v3623, %v3615
        %v5072 = vpack.c.b16 %v3624, %v3616
        %v5073 = vpack.c.b16 %v3625, %v3617
        %v5074 = vpack.c.b16 %v3626, %v3618
        %v5075 = vpack.c.b16 %v3627, %v3619
        %v5076 = vpack.c.b16 %v3636, %v3628
        %v5077 = vpack.c.b16 %v3637, %v3629
        %v5078 = vpack.c.b16 %v3638, %v3630
        %v5079 = vpack.c.b16 %v3639, %v3631
        %v5080 = vpack.c.b16 %v3640, %v3632
        %v5081 = vpack.c.b16 %v3641, %v3633
        %v5082 = vpack.c.b16 %v3642, %v3634
        %v5083 = vpack.c.b16 %v3643, %v3635
        %v5084 = vpack.c.b16 %v3652, %v3644
        %v5085 = vpack.c.b16 %v3653, %v3645
        %v5086 = vpack.c.b16 %v3654, %v3646
        %v5087 = vpack.c.b16 %v3655, %v3647
        %v5088 = vpack.c.b16 %v3656, %v3648
        %v5089 = vpack.c.b16 %v3657, %v3649
        %v5090 = vpack.c.b16 %v3658, %v3650
        %v5091 = vpack.c.b16 %v3659, %v3651
        %v5092 = vpack.c.b16 %v3668, %v3660
        %v5093 = vpack.c.b16 %v3669, %v3661
        %v5094 = vpack.c.b16 %v3670, %v3662
        %v5095 = vpack.c.b16 %v3671, %v3663
        %v5096 = vpack.c.b16 %v3672, %v3664
        %v5097 = vpack.c.b16 %v3673, %v3665
        %v5098 = vpack.c.b16 %v3674, %v3666
        %v5099 = vpack.c.b16 %v3675, %v3667
        %v5100 = vpack.c.b16 %v3684, %v3676
        %v5101 = vpack.c.b16 %v3685, %v3677
        %v5102 = vpack.c.b16 %v3686, %v3678
        %v5103 = vpack.c.b16 %v3687, %v3679
        %v5104 = vpack.c.b16 %v3688, %v3680
        %v5105 = vpack.c.b16 %v3689, %v3681
        %v5106 = vpack.c.b16 %v3690, %v3682
        %v5107 = vpack.c.b16 %v3691, %v3683
        %v5108 = vpack.c.b16 %v3700, %v3692
        %v5109 = vpack.c.b16 %v3701, %v3693
        %v5110 = vpack.c.b16 %v3702, %v3694
        %v5111 = vpack.c.b16 %v3703, %v3695
        %v5112 = vpack.c.b16 %v3704, %v3696
        %v5113 = vpack.c.b16 %v3705, %v3697
        %v5114 = vpack.c.b16 %v3706, %v3698
        %v5115 = vpack.c.b16 %v3707, %v3699
        %v5116 = vpack.c.b16 %v3716, %v3708
        %v5117 = vpack.c.b16 %v3717, %v3709
        %v5118 = vpack.c.b16 %v3718, %v3710
        %v5119 = vpack.c.b16 %v3719, %v3711
        %v5120 = vpack.c.b16 %v3720, %v3712
        %v5121 = vpack.c.b16 %v3721, %v3713
        %v5122 = vpack.c.b16 %v3722, %v3714
        %v5123 = vpack.c.b16 %v3723, %v3715
        %v5124 = vpack.c.b16 %v3732, %v3724
        %v5125 = vpack.c.b16 %v3733, %v3725
        %v5126 = vpack.c.b16 %v3734, %v3726
        %v5127 = vpack.c.b16 %v3735, %v3727
        %v5128 = vpack.c.b16 %v3736, %v3728
        %v5129 = vpack.c.b16 %v3737, %v3729
        %v5130 = vpack.c.b16 %v3738, %v3730
        %v5131 = vpack.c.b16 %v3739, %v3731
        %v5132 = vpack.c.b16 %v3748, %v3740
        %v5133 = vpack.c.b16 %v3749, %v3741
        %v5134 = vpack.c.b16 %v3750, %v3742
        %v5135 = vpack.c.b16 %v3751, %v3743
        %v5136 = vpack.c.b16 %v3752, %v3744
        %v5137 = vpack.c.b16 %v3753, %v3745
        %v5138 = vpack.c.b16 %v3754, %v3746
        %v5139 = vpack.c.b16 %v3755, %v3747
        %v5140 = vpack.c.b16 %v3764, %v3756
        %v5141 = vpack.c.b16 %v3765, %v3757
        %v5142 = vpack.c.b16 %v3766, %v3758
        %v5143 = vpack.c.b16 %v3767, %v3759
        %v5144 = vpack.c.b16 %v3768, %v3760
        %v5145 = vpack.c.b16 %v3769, %v3761
        %v5146 = vpack.c.b16 %v3770, %v3762
        %v5147 = vpack.c.b16 %v3771, %v3763
        %v5148 = vpack.c.b16 %v3780, %v3772
        %v5149 = vpack.c.b16 %v3781, %v3773
        %v5150 = vpack.c.b16 %v3782, %v3774
        %v5151 = vpack.c.b16 %v3783, %v3775
        %v5152 = vpack.c.b16 %v3784, %v3776
        %v5153 = vpack.c.b16 %v3785, %v3777
        %v5154 = vpack.c.b16 %v3786, %v3778
        %v5155 = vpack.c.b16 %v3787, %v3779
        %v5156 = vpack.c.b16 %v3796, %v3788
        %v5157 = vpack.c.b16 %v3797, %v3789
        %v5158 = vpack.c.b16 %v3798, %v3790
        %v5159 = vpack.c.b16 %v3799, %v3791
        %v5160 = vpack.c.b16 %v3800, %v3792
        %v5161 = vpack.c.b16 %v3801, %v3793
        %v5162 = vpack.c.b16 %v3802, %v3794
        %v5163 = vpack.c.b16 %v3803, %v3795
        %v5164 = vpack.c.b16 %v3812, %v3804
        %v5165 = vpack.c.b16 %v3813, %v3805
        %v5166 = vpack.c.b16 %v3814, %v3806
        %v5167 = vpack.c.b16 %v3815, %v3807
        %v5168 = vpack.c.b16 %v3816, %v3808
        %v5169 = vpack.c.b16 %v3817, %v3809
        %v5170 = vpack.c.b16 %v3818, %v3810
        %v5171 = vpack.c.b16 %v3819, %v3811
        %v5172 = vpack.c.b16 %v3828, %v3820
        %v5173 = vpack.c.b16 %v3829, %v3821
        %v5174 = vpack.c.b16 %v3830, %v3822
        %v5175 = vpack.c.b16 %v3831, %v3823
        %v5176 = vpack.c.b16 %v3832, %v3824
        %v5177 = vpack.c.b16 %v3833, %v3825
        %v5178 = vpack.c.b16 %v3834, %v3826
        %v5179 = vpack.c.b16 %v3835, %v3827
        %v5180 = vpack.c.b16 %v3844, %v3836
        %v5181 = vpack.c.b16 %v3845, %v3837
        %v5182 = vpack.c.b16 %v3846, %v3838
        %v5183 = vpack.c.b16 %v3847, %v3839
        %v5184 = vpack.c.b16 %v3848, %v3840
        %v5185 = vpack.c.b16 %v3849, %v3841
        %v5186 = vpack.c.b16 %v3850, %v3842
        %v5187 = vpack.c.b16 %v3851, %v3843
        %v5188 = vpack.c.b16 %v3860, %v3852
        %v5189 = vpack.c.b16 %v3861, %v3853
        %v5190 = vpack.c.b16 %v3862, %v3854
        %v5191 = vpack.c.b16 %v3863, %v3855
        %v5192 = vpack.c.b16 %v3864, %v3856
        %v5193 = vpack.c.b16 %v3865, %v3857
        %v5194 = vpack.c.b16 %v3866, %v3858
        %v5195 = vpack.c.b16 %v3867, %v3859
        %v5196 = vpack.c.b16 %v3876, %v3868
        %v5197 = vpack.c.b16 %v3877, %v3869
        %v5198 = vpack.c.b16 %v3878, %v3870
        %v5199 = vpack.c.b16 %v3879, %v3871
        %v5200 = vpack.c.b16 %v3880, %v3872
        %v5201 = vpack.c.b16 %v3881, %v3873
        %v5202 = vpack.c.b16 %v3882, %v3874
        %v5203 = vpack.c.b16 %v3883, %v3875
        %v5204 = vpack.c.b16 %v3892, %v3884
        %v5205 = vpack.c.b16 %v3893, %v3885
        %v5206 = vpack.c.b16 %v3894, %v3886
        %v5207 = vpack.c.b16 %v3895, %v3887
        %v5208 = vpack.c.b16 %v3896, %v3888
        %v5209 = vpack.c.b16 %v3897, %v3889
        %v5210 = vpack.c.b16 %v3898, %v3890
        %v5211 = vpack.c.b16 %v3899, %v3891
        %v5212 = vpack.c.b16 %v3908, %v3900
        %v5213 = vpack.c.b16 %v3909, %v3901
        %v5214 = vpack.c.b16 %v3910, %v3902
        %v5215 = vpack.c.b16 %v3911, %v3903
        %v5216 = vpack.c.b16 %v3912, %v3904
        %v5217 = vpack.c.b16 %v3913, %v3905
        %v5218 = vpack.c.b16 %v3914, %v3906
        %v5219 = vpack.c.b16 %v3915, %v3907
        %v5220 = vpack.c.b16 %v3924, %v3916
        %v5221 = vpack.c.b16 %v3925, %v3917
        %v5222 = vpack.c.b16 %v3926, %v3918
        %v5223 = vpack.c.b16 %v3927, %v3919
        %v5224 = vpack.c.b16 %v3928, %v3920
        %v5225 = vpack.c.b16 %v3929, %v3921
        %v5226 = vpack.c.b16 %v3930, %v3922
        %v5227 = vpack.c.b16 %v3931, %v3923
        %v5228 = vpack.c.b16 %v3940, %v3932
        %v5229 = vpack.c.b16 %v3941, %v3933
        %v5230 = vpack.c.b16 %v3942, %v3934
        %v5231 = vpack.c.b16 %v3943, %v3935
        %v5232 = vpack.c.b16 %v3944, %v3936
        %v5233 = vpack.c.b16 %v3945, %v3937
        %v5234 = vpack.c.b16 %v3946, %v3938
        %v5235 = vpack.c.b16 %v3947, %v3939
        %v5236 = vpack.c.b16 %v3956, %v3948
        %v5237 = vpack.c.b16 %v3957, %v3949
        %v5238 = vpack.c.b16 %v3958, %v3950
        %v5239 = vpack.c.b16 %v3959, %v3951
        %v5240 = vpack.c.b16 %v3960, %v3952
        %v5241 = vpack.c.b16 %v3961, %v3953
        %v5242 = vpack.c.b16 %v3962, %v3954
        %v5243 = vpack.c.b16 %v3963, %v3955
        %v5244 = vpack.c.b16 %v3972, %v3964
        %v5245 = vpack.c.b16 %v3973, %v3965
        %v5246 = vpack.c.b16 %v3974, %v3966
        %v5247 = vpack.c.b16 %v3975, %v3967
        %v5248 = vpack.c.b16 %v3976, %v3968
        %v5249 = vpack.c.b16 %v3977, %v3969
        %v5250 = vpack.c.b16 %v3978, %v3970
        %v5251 = vpack.c.b16 %v3979, %v3971
        %v5252 = vpack.c.b16 %v3988, %v3980
        %v5253 = vpack.c.b16 %v3989, %v3981
        %v5254 = vpack.c.b16 %v3990, %v3982
        %v5255 = vpack.c.b16 %v3991, %v3983
        %v5256 = vpack.c.b16 %v3992, %v3984
        %v5257 = vpack.c.b16 %v3993, %v3985
        %v5258 = vpack.c.b16 %v3994, %v3986
        %v5259 = vpack.c.b16 %v3995, %v3987
        %v5260 = vpack.c.b16 %v4004, %v3996
        %v5261 = vpack.c.b16 %v4005, %v3997
        %v5262 = vpack.c.b16 %v4006, %v3998
        %v5263 = vpack.c.b16 %v4007, %v3999
        %v5264 = vpack.c.b16 %v4008, %v4000
        %v5265 = vpack.c.b16 %v4009, %v4001
        %v5266 = vpack.c.b16 %v4010, %v4002
        %v5267 = vpack.c.b16 %v4011, %v4003
        %v5268 = vpack.c.b16 %v4020, %v4012
        %v5269 = vpack.c.b16 %v4021, %v4013
        %v5270 = vpack.c.b16 %v4022, %v4014
        %v5271 = vpack.c.b16 %v4023, %v4015
        %v5272 = vpack.c.b16 %v4024, %v4016
        %v5273 = vpack.c.b16 %v4025, %v4017
        %v5274 = vpack.c.b16 %v4026, %v4018
        %v5275 = vpack.c.b16 %v4027, %v4019
        %v5276 = vpack.c.b16 %v4036, %v4028
        %v5277 = vpack.c.b16 %v4037, %v4029
        %v5278 = vpack.c.b16 %v4038, %v4030
        %v5279 = vpack.c.b16 %v4039, %v4031
        %v5280 = vpack.c.b16 %v4040, %v4032
        %v5281 = vpack.c.b16 %v4041, %v4033
        %v5282 = vpack.c.b16 %v4042, %v4034
        %v5283 = vpack.c.b16 %v4043, %v4035
        %v5284 = vpack.c.b16 %v4052, %v4044
        %v5285 = vpack.c.b16 %v4053, %v4045
        %v5286 = vpack.c.b16 %v4054, %v4046
        %v5287 = vpack.c.b16 %v4055, %v4047
        %v5288 = vpack.c.b16 %v4056, %v4048
        %v5289 = vpack.c.b16 %v4057, %v4049
        %v5290 = vpack.c.b16 %v4058, %v4050
        %v5291 = vpack.c.b16 %v4059, %v4051
        %v5292 = vpack.c.b16 %v4068, %v4060
        %v5293 = vpack.c.b16 %v4069, %v4061
        %v5294 = vpack.c.b16 %v4070, %v4062
        %v5295 = vpack.c.b16 %v4071, %v4063
        %v5296 = vpack.c.b16 %v4072, %v4064
        %v5297 = vpack.c.b16 %v4073, %v4065
        %v5298 = vpack.c.b16 %v4074, %v4066
        %v5299 = vpack.c.b16 %v4075, %v4067
        %v5300 = vpack.c.b16 %v4084, %v4076
        %v5301 = vpack.c.b16 %v4085, %v4077
        %v5302 = vpack.c.b16 %v4086, %v4078
        %v5303 = vpack.c.b16 %v4087, %v4079
        %v5304 = vpack.c.b16 %v4088, %v4080
        %v5305 = vpack.c.b16 %v4089, %v4081
        %v5306 = vpack.c.b16 %v4090, %v4082
        %v5307 = vpack.c.b16 %v4091, %v4083
        %v5308 = vpack.c.b16 %v4100, %v4092
        %v5309 = vpack.c.b16 %v4101, %v4093
        %v5310 = vpack.c.b16 %v4102, %v4094
        %v5311 = vpack.c.b16 %v4103, %v4095
        %v5312 = vpack.c.b16 %v4104, %v4096
        %v5313 = vpack.c.b16 %v4105, %v4097
        %v5314 = vpack.c.b16 %v4106, %v4098
        %v5315 = vpack.c.b16 %v4107, %v4099
        %v5316 = vpack.c.b16 %v4116, %v4108
        %v5317 = vpack.c.b16 %v4117, %v4109
        %v5318 = vpack.c.b16 %v4118, %v4110
        %v5319 = vpack.c.b16 %v4119, %v4111
        %v5320 = vpack.c.b16 %v4120, %v4112
        %v5321 = vpack.c.b16 %v4121, %v4113
        %v5322 = vpack.c.b16 %v4122, %v4114
        %v5323 = vpack.c.b16 %v4123, %v4115
        %v5324 = vpack.c.b16 %v4132, %v4124
        %v5325 = vpack.c.b16 %v4133, %v4125
        %v5326 = vpack.c.b16 %v4134, %v4126
        %v5327 = vpack.c.b16 %v4135, %v4127
        %v5328 = vpack.c.b16 %v4136, %v4128
        %v5329 = vpack.c.b16 %v4137, %v4129
        %v5330 = vpack.c.b16 %v4138, %v4130
        %v5331 = vpack.c.b16 %v4139, %v4131
        %v5332 = vpack.c.b16 %v4148, %v4140
        %v5333 = vpack.c.b16 %v4149, %v4141
        %v5334 = vpack.c.b16 %v4150, %v4142
        %v5335 = vpack.c.b16 %v4151, %v4143
        %v5336 = vpack.c.b16 %v4152, %v4144
        %v5337 = vpack.c.b16 %v4153, %v4145
        %v5338 = vpack.c.b16 %v4154, %v4146
        %v5339 = vpack.c.b16 %v4155, %v4147
        %v5340 = vpack.c.b16 %v4164, %v4156
        %v5341 = vpack.c.b16 %v4165, %v4157
        %v5342 = vpack.c.b16 %v4166, %v4158
        %v5343 = vpack.c.b16 %v4167, %v4159
        %v5344 = vpack.c.b16 %v4168, %v4160
        %v5345 = vpack.c.b16 %v4169, %v4161
        %v5346 = vpack.c.b16 %v4170, %v4162
        %v5347 = vpack.c.b16 %v4171, %v4163
        %v5348 = vpack.c.b16 %v4180, %v4172
        %v5349 = vpack.c.b16 %v4181, %v4173
        %v5350 = vpack.c.b16 %v4182, %v4174
        %v5351 = vpack.c.b16 %v4183, %v4175
        %v5352 = vpack.c.b16 %v4184, %v4176
        %v5353 = vpack.c.b16 %v4185, %v4177
        %v5354 = vpack.c.b16 %v4186, %v4178
        %v5355 = vpack.c.b16 %v4187, %v4179
        %v5356 = vpack.c.b16 %v4196, %v4188
        %v5357 = vpack.c.b16 %v4197, %v4189
        %v5358 = vpack.c.b16 %v4198, %v4190
        %v5359 = vpack.c.b16 %v4199, %v4191
        %v5360 = vpack.c.b16 %v4200, %v4192
        %v5361 = vpack.c.b16 %v4201, %v4193
        %v5362 = vpack.c.b16 %v4202, %v4194
        %v5363 = vpack.c.b16 %v4203, %v4195
        %v5364 = vpack.c.b16 %v4212, %v4204
        %v5365 = vpack.c.b16 %v4213, %v4205
        %v5366 = vpack.c.b16 %v4214, %v4206
        %v5367 = vpack.c.b16 %v4215, %v4207
        %v5368 = vpack.c.b16 %v4216, %v4208
        %v5369 = vpack.c.b16 %v4217, %v4209
        %v5370 = vpack.c.b16 %v4218, %v4210
        %v5371 = vpack.c.b16 %v4219, %v4211
        %v5372 = vpack.c.b16 %v4228, %v4220
        %v5373 = vpack.c.b16 %v4229, %v4221
        %v5374 = vpack.c.b16 %v4230, %v4222
        %v5375 = vpack.c.b16 %v4231, %v4223
        %v5376 = vpack.c.b16 %v4232, %v4224
        %v5377 = vpack.c.b16 %v4233, %v4225
        %v5378 = vpack.c.b16 %v4234, %v4226
        %v5379 = vpack.c.b16 %v4235, %v4227
        %v5380 = vpack.c.b16 %v4244, %v4236
        %v5381 = vpack.c.b16 %v4245, %v4237
        %v5382 = vpack.c.b16 %v4246, %v4238
        %v5383 = vpack.c.b16 %v4247, %v4239
        %v5384 = vpack.c.b16 %v4248, %v4240
        %v5385 = vpack.c.b16 %v4249, %v4241
        %v5386 = vpack.c.b16 %v4250, %v4242
        %v5387 = vpack.c.b16 %v4251, %v4243
        %v5388 = vpack.c.b16 %v4260, %v4252
        %v5389 = vpack.c.b16 %v4261, %v4253
        %v5390 = vpack.c.b16 %v4262, %v4254
        %v5391 = vpack.c.b16 %v4263, %v4255
        %v5392 = vpack.c.b16 %v4264, %v4256
        %v5393 = vpack.c.b16 %v4265, %v4257
        %v5394 = vpack.c.b16 %v4266, %v4258
        %v5395 = vpack.c.b16 %v4267, %v4259
        %v5396 = vpack.c.b16 %v4276, %v4268
        %v5397 = vpack.c.b16 %v4277, %v4269
        %v5398 = vpack.c.b16 %v4278, %v4270
        %v5399 = vpack.c.b16 %v4279, %v4271
        %v5400 = vpack.c.b16 %v4280, %v4272
        %v5401 = vpack.c.b16 %v4281, %v4273
        %v5402 = vpack.c.b16 %v4282, %v4274
        %v5403 = vpack.c.b16 %v4283, %v4275
        %v5404 = vpack.c.b16 %v4292, %v4284
        %v5405 = vpack.c.b16 %v4293, %v4285
        %v5406 = vpack.c.b16 %v4294, %v4286
        %v5407 = vpack.c.b16 %v4295, %v4287
        %v5408 = vpack.c.b16 %v4296, %v4288
        %v5409 = vpack.c.b16 %v4297, %v4289
        %v5410 = vpack.c.b16 %v4298, %v4290
        %v5411 = vpack.c.b16 %v4299, %v4291
        %v5412 = vpack.c.b16 %v4308, %v4300
        %v5413 = vpack.c.b16 %v4309, %v4301
        %v5414 = vpack.c.b16 %v4310, %v4302
        %v5415 = vpack.c.b16 %v4311, %v4303
        %v5416 = vpack.c.b16 %v4312, %v4304
        %v5417 = vpack.c.b16 %v4313, %v4305
        %v5418 = vpack.c.b16 %v4314, %v4306
        %v5419 = vpack.c.b16 %v4315, %v4307
        %v5420 = vpack.c.b16 %v4324, %v4316
        %v5421 = vpack.c.b16 %v4325, %v4317
        %v5422 = vpack.c.b16 %v4326, %v4318
        %v5423 = vpack.c.b16 %v4327, %v4319
        %v5424 = vpack.c.b16 %v4328, %v4320
        %v5425 = vpack.c.b16 %v4329, %v4321
        %v5426 = vpack.c.b16 %v4330, %v4322
        %v5427 = vpack.c.b16 %v4331, %v4323
        %v5428 = vpack.c.b16 %v4340, %v4332
        %v5429 = vpack.c.b16 %v4341, %v4333
        %v5430 = vpack.c.b16 %v4342, %v4334
        %v5431 = vpack.c.b16 %v4343, %v4335
        %v5432 = vpack.c.b16 %v4344, %v4336
        %v5433 = vpack.c.b16 %v4345, %v4337
        %v5434 = vpack.c.b16 %v4346, %v4338
        %v5435 = vpack.c.b16 %v4347, %v4339
        %v5436 = vpack.c.b16 %v4356, %v4348
        %v5437 = vpack.c.b16 %v4357, %v4349
        %v5438 = vpack.c.b16 %v4358, %v4350
        %v5439 = vpack.c.b16 %v4359, %v4351
        %v5440 = vpack.c.b16 %v4360, %v4352
        %v5441 = vpack.c.b16 %v4361, %v4353
        %v5442 = vpack.c.b16 %v4362, %v4354
        %v5443 = vpack.c.b16 %v4363, %v4355
        %v5444 = vpack.c.b16 %v4372, %v4364
        %v5445 = vpack.c.b16 %v4373, %v4365
        %v5446 = vpack.c.b16 %v4374, %v4366
        %v5447 = vpack.c.b16 %v4375, %v4367
        %v5448 = vpack.c.b16 %v4376, %v4368
        %v5449 = vpack.c.b16 %v4377, %v4369
        %v5450 = vpack.c.b16 %v4378, %v4370
        %v5451 = vpack.c.b16 %v4379, %v4371
        %v5452 = vpack.c.b16 %v4388, %v4380
        %v5453 = vpack.c.b16 %v4389, %v4381
        %v5454 = vpack.c.b16 %v4390, %v4382
        %v5455 = vpack.c.b16 %v4391, %v4383
        %v5456 = vpack.c.b16 %v4392, %v4384
        %v5457 = vpack.c.b16 %v4393, %v4385
        %v5458 = vpack.c.b16 %v4394, %v4386
        %v5459 = vpack.c.b16 %v4395, %v4387
        %v5460 = vpack.c.b16 %v4404, %v4396
        %v5461 = vpack.c.b16 %v4405, %v4397
        %v5462 = vpack.c.b16 %v4406, %v4398
        %v5463 = vpack.c.b16 %v4407, %v4399
        %v5464 = vpack.c.b16 %v4408, %v4400
        %v5465 = vpack.c.b16 %v4409, %v4401
        %v5466 = vpack.c.b16 %v4410, %v4402
        %v5467 = vpack.c.b16 %v4411, %v4403
        %v5468 = vpack.c.b16 %v4420, %v4412
        %v5469 = vpack.c.b16 %v4421, %v4413
        %v5470 = vpack.c.b16 %v4422, %v4414
        %v5471 = vpack.c.b16 %v4423, %v4415
        %v5472 = vpack.c.b16 %v4424, %v4416
        %v5473 = vpack.c.b16 %v4425, %v4417
        %v5474 = vpack.c.b16 %v4426, %v4418
        %v5475 = vpack.c.b16 %v4427, %v4419
        %v5476 = vpack.c.b16 %v4436, %v4428
        %v5477 = vpack.c.b16 %v4437, %v4429
        %v5478 = vpack.c.b16 %v4438, %v4430
        %v5479 = vpack.c.b16 %v4439, %v4431
        %v5480 = vpack.c.b16 %v4440, %v4432
        %v5481 = vpack.c.b16 %v4441, %v4433
        %v5482 = vpack.c.b16 %v4442, %v4434
        %v5483 = vpack.c.b16 %v4443, %v4435
        %v5484 = vpack.c.b16 %v4452, %v4444
        %v5485 = vpack.c.b16 %v4453, %v4445
        %v5486 = vpack.c.b16 %v4454, %v4446
        %v5487 = vpack.c.b16 %v4455, %v4447
        %v5488 = vpack.c.b16 %v4456, %v4448
        %v5489 = vpack.c.b16 %v4457, %v4449
        %v5490 = vpack.c.b16 %v4458, %v4450
        %v5491 = vpack.c.b16 %v4459, %v4451
        %v5492 = vpack.c.b16 %v4468, %v4460
        %v5493 = vpack.c.b16 %v4469, %v4461
        %v5494 = vpack.c.b16 %v4470, %v4462
        %v5495 = vpack.c.b16 %v4471, %v4463
        %v5496 = vpack.c.b16 %v4472, %v4464
        %v5497 = vpack.c.b16 %v4473, %v4465
        %v5498 = vpack.c.b16 %v4474, %v4466
        %v5499 = vpack.c.b16 %v4475, %v4467
        %6524 = vmatprep.subr.bf16.mxu0 %v4477
        %6525 = vmatpush1.bf16.msra.mxu0 %v4476
        %6526 = vmatprep.subr.bf16.mxu0 %v4485
        %6527 = vmatpush1.bf16.msra.mxu0 %v4484
        %6528 = vmatprep.subr.bf16.mxu0 %v4493
        %6529 = vmatpush1.bf16.msra.mxu0 %v4492
        %6530 = vmatprep.subr.bf16.mxu0 %v4501
        %6531 = vmatpush1.bf16.msra.mxu0 %v4500
        %6532 = vmatprep.subr.bf16.mxu0 %v4509
        %6533 = vmatpush1.bf16.msra.mxu0 %v4508
        %6534 = vmatprep.subr.bf16.mxu0 %v4517
        %6535 = vmatpush1.bf16.msra.mxu0 %v4516
        %6536 = vmatprep.subr.bf16.mxu0 %v4525
        %6537 = vmatpush1.bf16.msra.mxu0 %v4524
        %6538 = vmatprep.subr.bf16.mxu0 %v4533
        %6539 = vmatpush1.bf16.msra.mxu0 %v4532
        %6540 = vmatprep.subr.bf16.mxu0 %v4541
        %6541 = vmatpush1.bf16.msra.mxu0 %v4540
        %6542 = vmatprep.subr.bf16.mxu0 %v4549
        %6543 = vmatpush1.bf16.msra.mxu0 %v4548
        %6544 = vmatprep.subr.bf16.mxu0 %v4557
        %6545 = vmatpush1.bf16.msra.mxu0 %v4556
        %6546 = vmatprep.subr.bf16.mxu0 %v4565
        %6547 = vmatpush1.bf16.msra.mxu0 %v4564
        %6548 = vmatprep.subr.bf16.mxu0 %v4573
        %6549 = vmatpush1.bf16.msra.mxu0 %v4572
        %6550 = vmatprep.subr.bf16.mxu0 %v4581
        %6551 = vmatpush1.bf16.msra.mxu0 %v4580
        %6552 = vmatprep.subr.bf16.mxu0 %v4589
        %6553 = vmatpush1.bf16.msra.mxu0 %v4588
        %6554 = vmatprep.subr.bf16.mxu0 %v4597
        %6555 = vmatpush1.bf16.msra.mxu0 %v4596
        %6556 = vmatprep.mubr.bf16.mxu0 %v1373
        %6557 = vmatmul.mubr.bf16.gmra.mrb[0].mxu0 %v1372
        %v6558 = vpop.f32.mrb[0].mxu0
        %v6559 = vadd.f32 0.0, %v6558
        %v6560 = vpop.f32.mrb[0].mxu0
        %v6561 = vadd.f32 0.0, %v6560
        %v6562 = vpop.f32.mrb[0].mxu0
        %v6563 = vpop.f32.mrb[0].mxu0
        %6564 = vdwg.mxu0
        %6565 = vmatprep.subr.bf16.mxu0 %v4605
        %6566 = vmatpush1.bf16.msra.mxu0 %v4604
        %6567 = vmatprep.subr.bf16.mxu0 %v4613
        %6568 = vmatpush1.bf16.msra.mxu0 %v4612
        %6569 = vmatprep.subr.bf16.mxu0 %v4621
        %6570 = vmatpush1.bf16.msra.mxu0 %v4620
        %6571 = vmatprep.subr.bf16.mxu0 %v4629
        %6572 = vmatpush1.bf16.msra.mxu0 %v4628
        %6573 = vmatprep.subr.bf16.mxu0 %v4637
        %6574 = vmatpush1.bf16.msra.mxu0 %v4636
        %6575 = vmatprep.subr.bf16.mxu0 %v4645
        %6576 = vmatpush1.bf16.msra.mxu0 %v4644
        %6577 = vmatprep.subr.bf16.mxu0 %v4653
        %6578 = vmatpush1.bf16.msra.mxu0 %v4652
        %6579 = vmatprep.subr.bf16.mxu0 %v4661
        %6580 = vmatpush1.bf16.msra.mxu0 %v4660
        %6581 = vmatprep.subr.bf16.mxu0 %v4669
        %6582 = vmatpush1.bf16.msra.mxu0 %v4668
        %6583 = vmatprep.subr.bf16.mxu0 %v4677
        %6584 = vmatpush1.bf16.msra.mxu0 %v4676
        %6585 = vmatprep.subr.bf16.mxu0 %v4685
        %6586 = vmatpush1.bf16.msra.mxu0 %v4684
        %6587 = vmatprep.subr.bf16.mxu0 %v4693
        %6588 = vmatpush1.bf16.msra.mxu0 %v4692
        %6589 = vmatprep.subr.bf16.mxu0 %v4701
        %6590 = vmatpush1.bf16.msra.mxu0 %v4700
        %6591 = vmatprep.subr.bf16.mxu0 %v4709
        %6592 = vmatpush1.bf16.msra.mxu0 %v4708
        %6593 = vmatprep.subr.bf16.mxu0 %v4717
        %6594 = vmatpush1.bf16.msra.mxu0 %v4716
        %6595 = vmatprep.subr.bf16.mxu0 %v4725
        %6596 = vmatpush1.bf16.msra.mxu0 %v4724
        %6597 = vmatprep.mubr.bf16.mxu0 %v1375
        %6598 = vmatmul.mubr.bf16.gmra.mrb[0].mxu0 %v1374
        %v6599 = vpop.f32.mrb[0].mxu0
        %v6600 = vadd.f32 %v6559, %v6599
        %v6601 = vpop.f32.mrb[0].mxu0
        %v6602 = vadd.f32 %v6561, %v6601
        %v6603 = vpop.f32.mrb[0].mxu0
        %v6604 = vpop.f32.mrb[0].mxu0
        %6605 = vdwg.mxu0
        %6606 = vmatprep.subr.bf16.mxu0 %v4733
        %6607 = vmatpush1.bf16.msra.mxu0 %v4732
        %6608 = vmatprep.subr.bf16.mxu0 %v4741
        %6609 = vmatpush1.bf16.msra.mxu0 %v4740
        %6610 = vmatprep.subr.bf16.mxu0 %v4749
        %6611 = vmatpush1.bf16.msra.mxu0 %v4748
        %6612 = vmatprep.subr.bf16.mxu0 %v4757
        %6613 = vmatpush1.bf16.msra.mxu0 %v4756
        %6614 = vmatprep.subr.bf16.mxu0 %v4765
        %6615 = vmatpush1.bf16.msra.mxu0 %v4764
        %6616 = vmatprep.subr.bf16.mxu0 %v4773
        %6617 = vmatpush1.bf16.msra.mxu0 %v4772
        %6618 = vmatprep.subr.bf16.mxu0 %v4781
        %6619 = vmatpush1.bf16.msra.mxu0 %v4780
        %6620 = vmatprep.subr.bf16.mxu0 %v4789
        %6621 = vmatpush1.bf16.msra.mxu0 %v4788
        %6622 = vmatprep.subr.bf16.mxu0 %v4797
        %6623 = vmatpush1.bf16.msra.mxu0 %v4796
        %6624 = vmatprep.subr.bf16.mxu0 %v4805
        %6625 = vmatpush1.bf16.msra.mxu0 %v4804
        %6626 = vmatprep.subr.bf16.mxu0 %v4813
        %6627 = vmatpush1.bf16.msra.mxu0 %v4812
        %6628 = vmatprep.subr.bf16.mxu0 %v4821
        %6629 = vmatpush1.bf16.msra.mxu0 %v4820
        %6630 = vmatprep.subr.bf16.mxu0 %v4829
        %6631 = vmatpush1.bf16.msra.mxu0 %v4828
        %6632 = vmatprep.subr.bf16.mxu0 %v4837
        %6633 = vmatpush1.bf16.msra.mxu0 %v4836
        %6634 = vmatprep.subr.bf16.mxu0 %v4845
        %6635 = vmatpush1.bf16.msra.mxu0 %v4844
        %6636 = vmatprep.subr.bf16.mxu0 %v4853
        %6637 = vmatpush1.bf16.msra.mxu0 %v4852
        %6638 = vmatprep.mubr.bf16.mxu0 %v1377
        %6639 = vmatmul.mubr.bf16.gmra.mrb[0].mxu0 %v1376
        %v6640 = vpop.f32.mrb[0].mxu0
        %v6641 = vadd.f32 %v6600, %v6640
        %v6642 = vpop.f32.mrb[0].mxu0
        %v6643 = vadd.f32 %v6602, %v6642
        %v6644 = vpop.f32.mrb[0].mxu0
        %v6645 = vpop.f32.mrb[0].mxu0
        %6646 = vdwg.mxu0
        %6647 = vmatprep.subr.bf16.mxu0 %v4861
        %6648 = vmatpush1.bf16.msra.mxu0 %v4860
        %6649 = vmatprep.subr.bf16.mxu0 %v4869
        %6650 = vmatpush1.bf16.msra.mxu0 %v4868
        %6651 = vmatprep.subr.bf16.mxu0 %v4877
        %6652 = vmatpush1.bf16.msra.mxu0 %v4876
        %6653 = vmatprep.subr.bf16.mxu0 %v4885
        %6654 = vmatpush1.bf16.msra.mxu0 %v4884
        %6655 = vmatprep.subr.bf16.mxu0 %v4893
        %6656 = vmatpush1.bf16.msra.mxu0 %v4892
        %6657 = vmatprep.subr.bf16.mxu0 %v4901
        %6658 = vmatpush1.bf16.msra.mxu0 %v4900
        %6659 = vmatprep.subr.bf16.mxu0 %v4909
        %6660 = vmatpush1.bf16.msra.mxu0 %v4908
        %6661 = vmatprep.subr.bf16.mxu0 %v4917
        %6662 = vmatpush1.bf16.msra.mxu0 %v4916
        %6663 = vmatprep.subr.bf16.mxu0 %v4925
        %6664 = vmatpush1.bf16.msra.mxu0 %v4924
        %6665 = vmatprep.subr.bf16.mxu0 %v4933
        %6666 = vmatpush1.bf16.msra.mxu0 %v4932
        %6667 = vmatprep.subr.bf16.mxu0 %v4941
        %6668 = vmatpush1.bf16.msra.mxu0 %v4940
        %6669 = vmatprep.subr.bf16.mxu0 %v4949
        %6670 = vmatpush1.bf16.msra.mxu0 %v4948
        %6671 = vmatprep.subr.bf16.mxu0 %v4957
        %6672 = vmatpush1.bf16.msra.mxu0 %v4956
        %6673 = vmatprep.subr.bf16.mxu0 %v4965
        %6674 = vmatpush1.bf16.msra.mxu0 %v4964
        %6675 = vmatprep.subr.bf16.mxu0 %v4973
        %6676 = vmatpush1.bf16.msra.mxu0 %v4972
        %6677 = vmatprep.subr.bf16.mxu0 %v4981
        %6678 = vmatpush1.bf16.msra.mxu0 %v4980
        %6679 = vmatprep.mubr.bf16.mxu0 %v1379
        %6680 = vmatmul.mubr.bf16.gmra.mrb[0].mxu0 %v1378
        %v6681 = vpop.f32.mrb[0].mxu0
        %v6682 = vadd.f32 %v6641, %v6681
        %v6683 = vpop.f32.mrb[0].mxu0
        %v6684 = vadd.f32 %v6643, %v6683
        %v6685 = vpop.f32.mrb[0].mxu0
        %v6686 = vpop.f32.mrb[0].mxu0
        %6687 = vdwg.mxu0
        %6688 = vmatprep.subr.bf16.mxu0 %v4989
        %6689 = vmatpush1.bf16.msra.mxu0 %v4988
        %6690 = vmatprep.subr.bf16.mxu0 %v4997
        %6691 = vmatpush1.bf16.msra.mxu0 %v4996
        %6692 = vmatprep.subr.bf16.mxu0 %v5005
        %6693 = vmatpush1.bf16.msra.mxu0 %v5004
        %6694 = vmatprep.subr.bf16.mxu0 %v5013
        %6695 = vmatpush1.bf16.msra.mxu0 %v5012
        %6696 = vmatprep.subr.bf16.mxu0 %v5021
        %6697 = vmatpush1.bf16.msra.mxu0 %v5020
        %6698 = vmatprep.subr.bf16.mxu0 %v5029
        %6699 = vmatpush1.bf16.msra.mxu0 %v5028
        %6700 = vmatprep.subr.bf16.mxu0 %v5037
        %6701 = vmatpush1.bf16.msra.mxu0 %v5036
        %6702 = vmatprep.subr.bf16.mxu0 %v5045
        %6703 = vmatpush1.bf16.msra.mxu0 %v5044
        %6704 = vmatprep.subr.bf16.mxu0 %v5053
        %6705 = vmatpush1.bf16.msra.mxu0 %v5052
        %6706 = vmatprep.subr.bf16.mxu0 %v5061
        %6707 = vmatpush1.bf16.msra.mxu0 %v5060
        %6708 = vmatprep.subr.bf16.mxu0 %v5069
        %6709 = vmatpush1.bf16.msra.mxu0 %v5068
        %6710 = vmatprep.subr.bf16.mxu0 %v5077
        %6711 = vmatpush1.bf16.msra.mxu0 %v5076
        %6712 = vmatprep.subr.bf16.mxu0 %v5085
        %6713 = vmatpush1.bf16.msra.mxu0 %v5084
        %6714 = vmatprep.subr.bf16.mxu0 %v5093
        %6715 = vmatpush1.bf16.msra.mxu0 %v5092
        %6716 = vmatprep.subr.bf16.mxu0 %v5101
        %6717 = vmatpush1.bf16.msra.mxu0 %v5100
        %6718 = vmatprep.subr.bf16.mxu0 %v5109
        %6719 = vmatpush1.bf16.msra.mxu0 %v5108
        %6720 = vmatprep.mubr.bf16.mxu0 %v1381
        %6721 = vmatmul.mubr.bf16.gmra.mrb[0].mxu0 %v1380
        %v6722 = vpop.f32.mrb[0].mxu0
        %v6723 = vadd.f32 %v6682, %v6722
        %v6724 = vpop.f32.mrb[0].mxu0
        %v6725 = vadd.f32 %v6684, %v6724
        %v6726 = vpop.f32.mrb[0].mxu0
        %v6727 = vpop.f32.mrb[0].mxu0
        %6728 = vdwg.mxu0
        %6729 = vmatprep.subr.bf16.mxu0 %v5117
        %6730 = vmatpush1.bf16.msra.mxu0 %v5116
        %6731 = vmatprep.subr.bf16.mxu0 %v5125
        %6732 = vmatpush1.bf16.msra.mxu0 %v5124
        %6733 = vmatprep.subr.bf16.mxu0 %v5133
        %6734 = vmatpush1.bf16.msra.mxu0 %v5132
        %6735 = vmatprep.subr.bf16.mxu0 %v5141
        %6736 = vmatpush1.bf16.msra.mxu0 %v5140
        %6737 = vmatprep.subr.bf16.mxu0 %v5149
        %6738 = vmatpush1.bf16.msra.mxu0 %v5148
        %6739 = vmatprep.subr.bf16.mxu0 %v5157
        %6740 = vmatpush1.bf16.msra.mxu0 %v5156
        %6741 = vmatprep.subr.bf16.mxu0 %v5165
        %6742 = vmatpush1.bf16.msra.mxu0 %v5164
        %6743 = vmatprep.subr.bf16.mxu0 %v5173
        %6744 = vmatpush1.bf16.msra.mxu0 %v5172
        %6745 = vmatprep.subr.bf16.mxu0 %v5181
        %6746 = vmatpush1.bf16.msra.mxu0 %v5180
        %6747 = vmatprep.subr.bf16.mxu0 %v5189
        %6748 = vmatpush1.bf16.msra.mxu0 %v5188
        %6749 = vmatprep.subr.bf16.mxu0 %v5197
        %6750 = vmatpush1.bf16.msra.mxu0 %v5196
        %6751 = vmatprep.subr.bf16.mxu0 %v5205
        %6752 = vmatpush1.bf16.msra.mxu0 %v5204
        %6753 = vmatprep.subr.bf16.mxu0 %v5213
        %6754 = vmatpush1.bf16.msra.mxu0 %v5212
        %6755 = vmatprep.subr.bf16.mxu0 %v5221
        %6756 = vmatpush1.bf16.msra.mxu0 %v5220
        %6757 = vmatprep.subr.bf16.mxu0 %v5229
        %6758 = vmatpush1.bf16.msra.mxu0 %v5228
        %6759 = vmatprep.subr.bf16.mxu0 %v5237
        %6760 = vmatpush1.bf16.msra.mxu0 %v5236
        %6761 = vmatprep.mubr.bf16.mxu0 %v1383
        %6762 = vmatmul.mubr.bf16.gmra.mrb[0].mxu0 %v1382
        %v6763 = vpop.f32.mrb[0].mxu0
        %v6764 = vadd.f32 %v6723, %v6763
        %v6765 = vpop.f32.mrb[0].mxu0
        %v6766 = vadd.f32 %v6725, %v6765
        %v6767 = vpop.f32.mrb[0].mxu0
        %v6768 = vpop.f32.mrb[0].mxu0
        %6769 = vdwg.mxu0
        %6770 = vmatprep.subr.bf16.mxu0 %v5245
        %6771 = vmatpush1.bf16.msra.mxu0 %v5244
        %6772 = vmatprep.subr.bf16.mxu0 %v5253
        %6773 = vmatpush1.bf16.msra.mxu0 %v5252
        %6774 = vmatprep.subr.bf16.mxu0 %v5261
        %6775 = vmatpush1.bf16.msra.mxu0 %v5260
        %6776 = vmatprep.subr.bf16.mxu0 %v5269
        %6777 = vmatpush1.bf16.msra.mxu0 %v5268
        %6778 = vmatprep.subr.bf16.mxu0 %v5277
        %6779 = vmatpush1.bf16.msra.mxu0 %v5276
        %6780 = vmatprep.subr.bf16.mxu0 %v5285
        %6781 = vmatpush1.bf16.msra.mxu0 %v5284
        %6782 = vmatprep.subr.bf16.mxu0 %v5293
        %6783 = vmatpush1.bf16.msra.mxu0 %v5292
        %6784 = vmatprep.subr.bf16.mxu0 %v5301
        %6785 = vmatpush1.bf16.msra.mxu0 %v5300
        %6786 = vmatprep.subr.bf16.mxu0 %v5309
        %6787 = vmatpush1.bf16.msra.mxu0 %v5308
        %6788 = vmatprep.subr.bf16.mxu0 %v5317
        %6789 = vmatpush1.bf16.msra.mxu0 %v5316
        %6790 = vmatprep.subr.bf16.mxu0 %v5325
        %6791 = vmatpush1.bf16.msra.mxu0 %v5324
        %6792 = vmatprep.subr.bf16.mxu0 %v5333
        %6793 = vmatpush1.bf16.msra.mxu0 %v5332
        %6794 = vmatprep.subr.bf16.mxu0 %v5341
        %6795 = vmatpush1.bf16.msra.mxu0 %v5340
        %6796 = vmatprep.subr.bf16.mxu0 %v5349
        %6797 = vmatpush1.bf16.msra.mxu0 %v5348
        %6798 = vmatprep.subr.bf16.mxu0 %v5357
        %6799 = vmatpush1.bf16.msra.mxu0 %v5356
        %6800 = vmatprep.subr.bf16.mxu0 %v5365
        %6801 = vmatpush1.bf16.msra.mxu0 %v5364
        %6802 = vmatprep.mubr.bf16.mxu0 %v1385
        %6803 = vmatmul.mubr.bf16.gmra.mrb[0].mxu0 %v1384
        %v6804 = vpop.f32.mrb[0].mxu0
        %v6805 = vadd.f32 %v6764, %v6804
        %v6806 = vpop.f32.mrb[0].mxu0
        %v6807 = vadd.f32 %v6766, %v6806
        %v6808 = vpop.f32.mrb[0].mxu0
        %v6809 = vpop.f32.mrb[0].mxu0
        %6810 = vdwg.mxu0
        %6811 = vmatprep.subr.bf16.mxu0 %v5373
        %6812 = vmatpush1.bf16.msra.mxu0 %v5372
        %6813 = vmatprep.subr.bf16.mxu0 %v5381
        %6814 = vmatpush1.bf16.msra.mxu0 %v5380
        %6815 = vmatprep.subr.bf16.mxu0 %v5389
        %6816 = vmatpush1.bf16.msra.mxu0 %v5388
        %6817 = vmatprep.subr.bf16.mxu0 %v5397
        %6818 = vmatpush1.bf16.msra.mxu0 %v5396
        %6819 = vmatprep.subr.bf16.mxu0 %v5405
        %6820 = vmatpush1.bf16.msra.mxu0 %v5404
        %6821 = vmatprep.subr.bf16.mxu0 %v5413
        %6822 = vmatpush1.bf16.msra.mxu0 %v5412
        %6823 = vmatprep.subr.bf16.mxu0 %v5421
        %6824 = vmatpush1.bf16.msra.mxu0 %v5420
        %6825 = vmatprep.subr.bf16.mxu0 %v5429
        %6826 = vmatpush1.bf16.msra.mxu0 %v5428
        %6827 = vmatprep.subr.bf16.mxu0 %v5437
        %6828 = vmatpush1.bf16.msra.mxu0 %v5436
        %6829 = vmatprep.subr.bf16.mxu0 %v5445
        %6830 = vmatpush1.bf16.msra.mxu0 %v5444
        %6831 = vmatprep.subr.bf16.mxu0 %v5453
        %6832 = vmatpush1.bf16.msra.mxu0 %v5452
        %6833 = vmatprep.subr.bf16.mxu0 %v5461
        %6834 = vmatpush1.bf16.msra.mxu0 %v5460
        %6835 = vmatprep.subr.bf16.mxu0 %v5469
        %6836 = vmatpush1.bf16.msra.mxu0 %v5468
        %6837 = vmatprep.subr.bf16.mxu0 %v5477
        %6838 = vmatpush1.bf16.msra.mxu0 %v5476
        %6839 = vmatprep.subr.bf16.mxu0 %v5485
        %6840 = vmatpush1.bf16.msra.mxu0 %v5484
        %6841 = vmatprep.subr.bf16.mxu0 %v5493
        %6842 = vmatpush1.bf16.msra.mxu0 %v5492
        %6843 = vmatprep.mubr.bf16.mxu0 %v1387
        %6844 = vmatmul.mubr.bf16.gmra.mrb[0].mxu0 %v1386
        %v6845 = vpop.f32.mrb[0].mxu0
        %v6846 = vadd.f32 %v6805, %v6845
        %v6847 = vpop.f32.mrb[0].mxu0
        %v6848 = vadd.f32 %v6807, %v6847
        %v6849 = vpop.f32.mrb[0].mxu0
        %v6850 = vpop.f32.mrb[0].mxu0
        %6851 = vdwg.mxu0
        %6852 = vmatprep.subr.bf16.mxu0 %v4479
        %6853 = vmatpush1.bf16.msra.mxu0 %v4478
        %6854 = vmatprep.subr.bf16.mxu0 %v4487
        %6855 = vmatpush1.bf16.msra.mxu0 %v4486
        %6856 = vmatprep.subr.bf16.mxu0 %v4495
        %6857 = vmatpush1.bf16.msra.mxu0 %v4494
        %6858 = vmatprep.subr.bf16.mxu0 %v4503
        %6859 = vmatpush1.bf16.msra.mxu0 %v4502
        %6860 = vmatprep.subr.bf16.mxu0 %v4511
        %6861 = vmatpush1.bf16.msra.mxu0 %v4510
        %6862 = vmatprep.subr.bf16.mxu0 %v4519
        %6863 = vmatpush1.bf16.msra.mxu0 %v4518
        %6864 = vmatprep.subr.bf16.mxu0 %v4527
        %6865 = vmatpush1.bf16.msra.mxu0 %v4526
        %6866 = vmatprep.subr.bf16.mxu0 %v4535
        %6867 = vmatpush1.bf16.msra.mxu0 %v4534
        %6868 = vmatprep.subr.bf16.mxu0 %v4543
        %6869 = vmatpush1.bf16.msra.mxu0 %v4542
        %6870 = vmatprep.subr.bf16.mxu0 %v4551
        %6871 = vmatpush1.bf16.msra.mxu0 %v4550
        %6872 = vmatprep.subr.bf16.mxu0 %v4559
        %6873 = vmatpush1.bf16.msra.mxu0 %v4558
        %6874 = vmatprep.subr.bf16.mxu0 %v4567
        %6875 = vmatpush1.bf16.msra.mxu0 %v4566
        %6876 = vmatprep.subr.bf16.mxu0 %v4575
        %6877 = vmatpush1.bf16.msra.mxu0 %v4574
        %6878 = vmatprep.subr.bf16.mxu0 %v4583
        %6879 = vmatpush1.bf16.msra.mxu0 %v4582
        %6880 = vmatprep.subr.bf16.mxu0 %v4591
        %6881 = vmatpush1.bf16.msra.mxu0 %v4590
        %6882 = vmatprep.subr.bf16.mxu0 %v4599
        %6883 = vmatpush1.bf16.msra.mxu0 %v4598
        %6884 = vmatprep.mubr.bf16.mxu0 %v1373
        %6885 = vmatmul.mubr.bf16.gmra.mrb[0].mxu0 %v1372
        %v6886 = vpop.f32.mrb[0].mxu0
        %v6887 = vadd.f32 0.0, %v6886
        %v6888 = vpop.f32.mrb[0].mxu0
        %v6889 = vadd.f32 0.0, %v6888
        %v6890 = vpop.f32.mrb[0].mxu0
        %v6891 = vpop.f32.mrb[0].mxu0
        %6892 = vdwg.mxu0
        %6893 = vmatprep.subr.bf16.mxu0 %v4607
        %6894 = vmatpush1.bf16.msra.mxu0 %v4606
        %6895 = vmatprep.subr.bf16.mxu0 %v4615
        %6896 = vmatpush1.bf16.msra.mxu0 %v4614
        %6897 = vmatprep.subr.bf16.mxu0 %v4623
        %6898 = vmatpush1.bf16.msra.mxu0 %v4622
        %6899 = vmatprep.subr.bf16.mxu0 %v4631
        %6900 = vmatpush1.bf16.msra.mxu0 %v4630
        %6901 = vmatprep.subr.bf16.mxu0 %v4639
        %6902 = vmatpush1.bf16.msra.mxu0 %v4638
        %6903 = vmatprep.subr.bf16.mxu0 %v4647
        %6904 = vmatpush1.bf16.msra.mxu0 %v4646
        %6905 = vmatprep.subr.bf16.mxu0 %v4655
        %6906 = vmatpush1.bf16.msra.mxu0 %v4654
        %6907 = vmatprep.subr.bf16.mxu0 %v4663
        %6908 = vmatpush1.bf16.msra.mxu0 %v4662
        %6909 = vmatprep.subr.bf16.mxu0 %v4671
        %6910 = vmatpush1.bf16.msra.mxu0 %v4670
        %6911 = vmatprep.subr.bf16.mxu0 %v4679
        %6912 = vmatpush1.bf16.msra.mxu0 %v4678
        %6913 = vmatprep.subr.bf16.mxu0 %v4687
        %6914 = vmatpush1.bf16.msra.mxu0 %v4686
        %6915 = vmatprep.subr.bf16.mxu0 %v4695
        %6916 = vmatpush1.bf16.msra.mxu0 %v4694
        %6917 = vmatprep.subr.bf16.mxu0 %v4703
        %6918 = vmatpush1.bf16.msra.mxu0 %v4702
        %6919 = vmatprep.subr.bf16.mxu0 %v4711
        %6920 = vmatpush1.bf16.msra.mxu0 %v4710
        %6921 = vmatprep.subr.bf16.mxu0 %v4719
        %6922 = vmatpush1.bf16.msra.mxu0 %v4718
        %6923 = vmatprep.subr.bf16.mxu0 %v4727
        %6924 = vmatpush1.bf16.msra.mxu0 %v4726
        %6925 = vmatprep.mubr.bf16.mxu0 %v1375
        %6926 = vmatmul.mubr.bf16.gmra.mrb[0].mxu0 %v1374
        %v6927 = vpop.f32.mrb[0].mxu0
        %v6928 = vadd.f32 %v6887, %v6927
        %v6929 = vpop.f32.mrb[0].mxu0
        %v6930 = vadd.f32 %v6889, %v6929
        %v6931 = vpop.f32.mrb[0].mxu0
        %v6932 = vpop.f32.mrb[0].mxu0
        %6933 = vdwg.mxu0
        %6934 = vmatprep.subr.bf16.mxu0 %v4735
        %6935 = vmatpush1.bf16.msra.mxu0 %v4734
        %6936 = vmatprep.subr.bf16.mxu0 %v4743
        %6937 = vmatpush1.bf16.msra.mxu0 %v4742
        %6938 = vmatprep.subr.bf16.mxu0 %v4751
        %6939 = vmatpush1.bf16.msra.mxu0 %v4750
        %6940 = vmatprep.subr.bf16.mxu0 %v4759
        %6941 = vmatpush1.bf16.msra.mxu0 %v4758
        %6942 = vmatprep.subr.bf16.mxu0 %v4767
        %6943 = vmatpush1.bf16.msra.mxu0 %v4766
        %6944 = vmatprep.subr.bf16.mxu0 %v4775
        %6945 = vmatpush1.bf16.msra.mxu0 %v4774
        %6946 = vmatprep.subr.bf16.mxu0 %v4783
        %6947 = vmatpush1.bf16.msra.mxu0 %v4782
        %6948 = vmatprep.subr.bf16.mxu0 %v4791
        %6949 = vmatpush1.bf16.msra.mxu0 %v4790
        %6950 = vmatprep.subr.bf16.mxu0 %v4799
        %6951 = vmatpush1.bf16.msra.mxu0 %v4798
        %6952 = vmatprep.subr.bf16.mxu0 %v4807
        %6953 = vmatpush1.bf16.msra.mxu0 %v4806
        %6954 = vmatprep.subr.bf16.mxu0 %v4815
        %6955 = vmatpush1.bf16.msra.mxu0 %v4814
        %6956 = vmatprep.subr.bf16.mxu0 %v4823
        %6957 = vmatpush1.bf16.msra.mxu0 %v4822
        %6958 = vmatprep.subr.bf16.mxu0 %v4831
        %6959 = vmatpush1.bf16.msra.mxu0 %v4830
        %6960 = vmatprep.subr.bf16.mxu0 %v4839
        %6961 = vmatpush1.bf16.msra.mxu0 %v4838
        %6962 = vmatprep.subr.bf16.mxu0 %v4847
        %6963 = vmatpush1.bf16.msra.mxu0 %v4846
        %6964 = vmatprep.subr.bf16.mxu0 %v4855
        %6965 = vmatpush1.bf16.msra.mxu0 %v4854
        %6966 = vmatprep.mubr.bf16.mxu0 %v1377
        %6967 = vmatmul.mubr.bf16.gmra.mrb[0].mxu0 %v1376
        %v6968 = vpop.f32.mrb[0].mxu0
        %v6969 = vadd.f32 %v6928, %v6968
        %v6970 = vpop.f32.mrb[0].mxu0
        %v6971 = vadd.f32 %v6930, %v6970
        %v6972 = vpop.f32.mrb[0].mxu0
        %v6973 = vpop.f32.mrb[0].mxu0
        %6974 = vdwg.mxu0
        %6975 = vmatprep.subr.bf16.mxu0 %v4863
        %6976 = vmatpush1.bf16.msra.mxu0 %v4862
        %6977 = vmatprep.subr.bf16.mxu0 %v4871
        %6978 = vmatpush1.bf16.msra.mxu0 %v4870
        %6979 = vmatprep.subr.bf16.mxu0 %v4879
        %6980 = vmatpush1.bf16.msra.mxu0 %v4878
        %6981 = vmatprep.subr.bf16.mxu0 %v4887
        %6982 = vmatpush1.bf16.msra.mxu0 %v4886
        %6983 = vmatprep.subr.bf16.mxu0 %v4895
        %6984 = vmatpush1.bf16.msra.mxu0 %v4894
        %6985 = vmatprep.subr.bf16.mxu0 %v4903
        %6986 = vmatpush1.bf16.msra.mxu0 %v4902
        %6987 = vmatprep.subr.bf16.mxu0 %v4911
        %6988 = vmatpush1.bf16.msra.mxu0 %v4910
        %6989 = vmatprep.subr.bf16.mxu0 %v4919
        %6990 = vmatpush1.bf16.msra.mxu0 %v4918
        %6991 = vmatprep.subr.bf16.mxu0 %v4927
        %6992 = vmatpush1.bf16.msra.mxu0 %v4926
        %6993 = vmatprep.subr.bf16.mxu0 %v4935
        %6994 = vmatpush1.bf16.msra.mxu0 %v4934
        %6995 = vmatprep.subr.bf16.mxu0 %v4943
        %6996 = vmatpush1.bf16.msra.mxu0 %v4942
        %6997 = vmatprep.subr.bf16.mxu0 %v4951
        %6998 = vmatpush1.bf16.msra.mxu0 %v4950
        %6999 = vmatprep.subr.bf16.mxu0 %v4959
        %7000 = vmatpush1.bf16.msra.mxu0 %v4958
        %7001 = vmatprep.subr.bf16.mxu0 %v4967
        %7002 = vmatpush1.bf16.msra.mxu0 %v4966
        %7003 = vmatprep.subr.bf16.mxu0 %v4975
        %7004 = vmatpush1.bf16.msra.mxu0 %v4974
        %7005 = vmatprep.subr.bf16.mxu0 %v4983
        %7006 = vmatpush1.bf16.msra.mxu0 %v4982
        %7007 = vmatprep.mubr.bf16.mxu0 %v1379
        %7008 = vmatmul.mubr.bf16.gmra.mrb[0].mxu0 %v1378
        %v7009 = vpop.f32.mrb[0].mxu0
        %v7010 = vadd.f32 %v6969, %v7009
        %v7011 = vpop.f32.mrb[0].mxu0
        %v7012 = vadd.f32 %v6971, %v7011
        %v7013 = vpop.f32.mrb[0].mxu0
        %v7014 = vpop.f32.mrb[0].mxu0
        %7015 = vdwg.mxu0
        %7016 = vmatprep.subr.bf16.mxu0 %v4991
        %7017 = vmatpush1.bf16.msra.mxu0 %v4990
        %7018 = vmatprep.subr.bf16.mxu0 %v4999
        %7019 = vmatpush1.bf16.msra.mxu0 %v4998
        %7020 = vmatprep.subr.bf16.mxu0 %v5007
        %7021 = vmatpush1.bf16.msra.mxu0 %v5006
        %7022 = vmatprep.subr.bf16.mxu0 %v5015
        %7023 = vmatpush1.bf16.msra.mxu0 %v5014
        %7024 = vmatprep.subr.bf16.mxu0 %v5023
        %7025 = vmatpush1.bf16.msra.mxu0 %v5022
        %7026 = vmatprep.subr.bf16.mxu0 %v5031
        %7027 = vmatpush1.bf16.msra.mxu0 %v5030
        %7028 = vmatprep.subr.bf16.mxu0 %v5039
        %7029 = vmatpush1.bf16.msra.mxu0 %v5038
        %7030 = vmatprep.subr.bf16.mxu0 %v5047
        %7031 = vmatpush1.bf16.msra.mxu0 %v5046
        %7032 = vmatprep.subr.bf16.mxu0 %v5055
        %7033 = vmatpush1.bf16.msra.mxu0 %v5054
        %7034 = vmatprep.subr.bf16.mxu0 %v5063
        %7035 = vmatpush1.bf16.msra.mxu0 %v5062
        %7036 = vmatprep.subr.bf16.mxu0 %v5071
        %7037 = vmatpush1.bf16.msra.mxu0 %v5070
        %7038 = vmatprep.subr.bf16.mxu0 %v5079
        %7039 = vmatpush1.bf16.msra.mxu0 %v5078
        %7040 = vmatprep.subr.bf16.mxu0 %v5087
        %7041 = vmatpush1.bf16.msra.mxu0 %v5086
        %7042 = vmatprep.subr.bf16.mxu0 %v5095
        %7043 = vmatpush1.bf16.msra.mxu0 %v5094
        %7044 = vmatprep.subr.bf16.mxu0 %v5103
        %7045 = vmatpush1.bf16.msra.mxu0 %v5102
        %7046 = vmatprep.subr.bf16.mxu0 %v5111
        %7047 = vmatpush1.bf16.msra.mxu0 %v5110
        %7048 = vmatprep.mubr.bf16.mxu0 %v1381
        %7049 = vmatmul.mubr.bf16.gmra.mrb[0].mxu0 %v1380
        %v7050 = vpop.f32.mrb[0].mxu0
        %v7051 = vadd.f32 %v7010, %v7050
        %v7052 = vpop.f32.mrb[0].mxu0
        %v7053 = vadd.f32 %v7012, %v7052
        %v7054 = vpop.f32.mrb[0].mxu0
        %v7055 = vpop.f32.mrb[0].mxu0
        %7056 = vdwg.mxu0
        %7057 = vmatprep.subr.bf16.mxu0 %v5119
        %7058 = vmatpush1.bf16.msra.mxu0 %v5118
        %7059 = vmatprep.subr.bf16.mxu0 %v5127
        %7060 = vmatpush1.bf16.msra.mxu0 %v5126
        %7061 = vmatprep.subr.bf16.mxu0 %v5135
        %7062 = vmatpush1.bf16.msra.mxu0 %v5134
        %7063 = vmatprep.subr.bf16.mxu0 %v5143
        %7064 = vmatpush1.bf16.msra.mxu0 %v5142
        %7065 = vmatprep.subr.bf16.mxu0 %v5151
        %7066 = vmatpush1.bf16.msra.mxu0 %v5150
        %7067 = vmatprep.subr.bf16.mxu0 %v5159
        %7068 = vmatpush1.bf16.msra.mxu0 %v5158
        %7069 = vmatprep.subr.bf16.mxu0 %v5167
        %7070 = vmatpush1.bf16.msra.mxu0 %v5166
        %7071 = vmatprep.subr.bf16.mxu0 %v5175
        %7072 = vmatpush1.bf16.msra.mxu0 %v5174
        %7073 = vmatprep.subr.bf16.mxu0 %v5183
        %7074 = vmatpush1.bf16.msra.mxu0 %v5182
        %7075 = vmatprep.subr.bf16.mxu0 %v5191
        %7076 = vmatpush1.bf16.msra.mxu0 %v5190
        %7077 = vmatprep.subr.bf16.mxu0 %v5199
        %7078 = vmatpush1.bf16.msra.mxu0 %v5198
        %7079 = vmatprep.subr.bf16.mxu0 %v5207
        %7080 = vmatpush1.bf16.msra.mxu0 %v5206
        %7081 = vmatprep.subr.bf16.mxu0 %v5215
        %7082 = vmatpush1.bf16.msra.mxu0 %v5214
        %7083 = vmatprep.subr.bf16.mxu0 %v5223
        %7084 = vmatpush1.bf16.msra.mxu0 %v5222
        %7085 = vmatprep.subr.bf16.mxu0 %v5231
        %7086 = vmatpush1.bf16.msra.mxu0 %v5230
        %7087 = vmatprep.subr.bf16.mxu0 %v5239
        %7088 = vmatpush1.bf16.msra.mxu0 %v5238
        %7089 = vmatprep.mubr.bf16.mxu0 %v1383
        %7090 = vmatmul.mubr.bf16.gmra.mrb[0].mxu0 %v1382
        %v7091 = vpop.f32.mrb[0].mxu0
        %v7092 = vadd.f32 %v7051, %v7091
        %v7093 = vpop.f32.mrb[0].mxu0
        %v7094 = vadd.f32 %v7053, %v7093
        %v7095 = vpop.f32.mrb[0].mxu0
        %v7096 = vpop.f32.mrb[0].mxu0
        %7097 = vdwg.mxu0
        %7098 = vmatprep.subr.bf16.mxu0 %v5247
        %7099 = vmatpush1.bf16.msra.mxu0 %v5246
        %7100 = vmatprep.subr.bf16.mxu0 %v5255
        %7101 = vmatpush1.bf16.msra.mxu0 %v5254
        %7102 = vmatprep.subr.bf16.mxu0 %v5263
        %7103 = vmatpush1.bf16.msra.mxu0 %v5262
        %7104 = vmatprep.subr.bf16.mxu0 %v5271
        %7105 = vmatpush1.bf16.msra.mxu0 %v5270
        %7106 = vmatprep.subr.bf16.mxu0 %v5279
        %7107 = vmatpush1.bf16.msra.mxu0 %v5278
        %7108 = vmatprep.subr.bf16.mxu0 %v5287
        %7109 = vmatpush1.bf16.msra.mxu0 %v5286
        %7110 = vmatprep.subr.bf16.mxu0 %v5295
        %7111 = vmatpush1.bf16.msra.mxu0 %v5294
        %7112 = vmatprep.subr.bf16.mxu0 %v5303
        %7113 = vmatpush1.bf16.msra.mxu0 %v5302
        %7114 = vmatprep.subr.bf16.mxu0 %v5311
        %7115 = vmatpush1.bf16.msra.mxu0 %v5310
        %7116 = vmatprep.subr.bf16.mxu0 %v5319
        %7117 = vmatpush1.bf16.msra.mxu0 %v5318
        %7118 = vmatprep.subr.bf16.mxu0 %v5327
        %7119 = vmatpush1.bf16.msra.mxu0 %v5326
        %7120 = vmatprep.subr.bf16.mxu0 %v5335
        %7121 = vmatpush1.bf16.msra.mxu0 %v5334
        %7122 = vmatprep.subr.bf16.mxu0 %v5343
        %7123 = vmatpush1.bf16.msra.mxu0 %v5342
        %7124 = vmatprep.subr.bf16.mxu0 %v5351
        %7125 = vmatpush1.bf16.msra.mxu0 %v5350
        %7126 = vmatprep.subr.bf16.mxu0 %v5359
        %7127 = vmatpush1.bf16.msra.mxu0 %v5358
        %7128 = vmatprep.subr.bf16.mxu0 %v5367
        %7129 = vmatpush1.bf16.msra.mxu0 %v5366
        %7130 = vmatprep.mubr.bf16.mxu0 %v1385
        %7131 = vmatmul.mubr.bf16.gmra.mrb[0].mxu0 %v1384
        %v7132 = vpop.f32.mrb[0].mxu0
        %v7133 = vadd.f32 %v7092, %v7132
        %v7134 = vpop.f32.mrb[0].mxu0
        %v7135 = vadd.f32 %v7094, %v7134
        %v7136 = vpop.f32.mrb[0].mxu0
        %v7137 = vpop.f32.mrb[0].mxu0
        %7138 = vdwg.mxu0
        %7139 = vmatprep.subr.bf16.mxu0 %v5375
        %7140 = vmatpush1.bf16.msra.mxu0 %v5374
        %7141 = vmatprep.subr.bf16.mxu0 %v5383
        %7142 = vmatpush1.bf16.msra.mxu0 %v5382
        %7143 = vmatprep.subr.bf16.mxu0 %v5391
        %7144 = vmatpush1.bf16.msra.mxu0 %v5390
        %7145 = vmatprep.subr.bf16.mxu0 %v5399
        %7146 = vmatpush1.bf16.msra.mxu0 %v5398
        %7147 = vmatprep.subr.bf16.mxu0 %v5407
        %7148 = vmatpush1.bf16.msra.mxu0 %v5406
        %7149 = vmatprep.subr.bf16.mxu0 %v5415
        %7150 = vmatpush1.bf16.msra.mxu0 %v5414
        %7151 = vmatprep.subr.bf16.mxu0 %v5423
        %7152 = vmatpush1.bf16.msra.mxu0 %v5422
        %7153 = vmatprep.subr.bf16.mxu0 %v5431
        %7154 = vmatpush1.bf16.msra.mxu0 %v5430
        %7155 = vmatprep.subr.bf16.mxu0 %v5439
        %7156 = vmatpush1.bf16.msra.mxu0 %v5438
        %7157 = vmatprep.subr.bf16.mxu0 %v5447
        %7158 = vmatpush1.bf16.msra.mxu0 %v5446
        %7159 = vmatprep.subr.bf16.mxu0 %v5455
        %7160 = vmatpush1.bf16.msra.mxu0 %v5454
        %7161 = vmatprep.subr.bf16.mxu0 %v5463
        %7162 = vmatpush1.bf16.msra.mxu0 %v5462
        %7163 = vmatprep.subr.bf16.mxu0 %v5471
        %7164 = vmatpush1.bf16.msra.mxu0 %v5470
        %7165 = vmatprep.subr.bf16.mxu0 %v5479
        %7166 = vmatpush1.bf16.msra.mxu0 %v5478
        %7167 = vmatprep.subr.bf16.mxu0 %v5487
        %7168 = vmatpush1.bf16.msra.mxu0 %v5486
        %7169 = vmatprep.subr.bf16.mxu0 %v5495
        %7170 = vmatpush1.bf16.msra.mxu0 %v5494
        %7171 = vmatprep.mubr.bf16.mxu0 %v1387
        %7172 = vmatmul.mubr.bf16.gmra.mrb[0].mxu0 %v1386
        %v7173 = vpop.f32.mrb[0].mxu0
        %v7174 = vadd.f32 %v7133, %v7173
        %v7175 = vpop.f32.mrb[0].mxu0
        %v7176 = vadd.f32 %v7135, %v7175
        %v7177 = vpop.f32.mrb[0].mxu0
        %v7178 = vpop.f32.mrb[0].mxu0
        %7179 = vdwg.mxu0
        %7180 = vmatprep.subr.bf16.mxu0 %v4481
        %7181 = vmatpush1.bf16.msra.mxu0 %v4480
        %7182 = vmatprep.subr.bf16.mxu0 %v4489
        %7183 = vmatpush1.bf16.msra.mxu0 %v4488
        %7184 = vmatprep.subr.bf16.mxu0 %v4497
        %7185 = vmatpush1.bf16.msra.mxu0 %v4496
        %7186 = vmatprep.subr.bf16.mxu0 %v4505
        %7187 = vmatpush1.bf16.msra.mxu0 %v4504
        %7188 = vmatprep.subr.bf16.mxu0 %v4513
        %7189 = vmatpush1.bf16.msra.mxu0 %v4512
        %7190 = vmatprep.subr.bf16.mxu0 %v4521
        %7191 = vmatpush1.bf16.msra.mxu0 %v4520
        %7192 = vmatprep.subr.bf16.mxu0 %v4529
        %7193 = vmatpush1.bf16.msra.mxu0 %v4528
        %7194 = vmatprep.subr.bf16.mxu0 %v4537
        %7195 = vmatpush1.bf16.msra.mxu0 %v4536
        %7196 = vmatprep.subr.bf16.mxu0 %v4545
        %7197 = vmatpush1.bf16.msra.mxu0 %v4544
        %7198 = vmatprep.subr.bf16.mxu0 %v4553
        %7199 = vmatpush1.bf16.msra.mxu0 %v4552
        %7200 = vmatprep.subr.bf16.mxu0 %v4561
        %7201 = vmatpush1.bf16.msra.mxu0 %v4560
        %7202 = vmatprep.subr.bf16.mxu0 %v4569
        %7203 = vmatpush1.bf16.msra.mxu0 %v4568
        %7204 = vmatprep.subr.bf16.mxu0 %v4577
        %7205 = vmatpush1.bf16.msra.mxu0 %v4576
        %7206 = vmatprep.subr.bf16.mxu0 %v4585
        %7207 = vmatpush1.bf16.msra.mxu0 %v4584
        %7208 = vmatprep.subr.bf16.mxu0 %v4593
        %7209 = vmatpush1.bf16.msra.mxu0 %v4592
        %7210 = vmatprep.subr.bf16.mxu0 %v4601
        %7211 = vmatpush1.bf16.msra.mxu0 %v4600
        %7212 = vmatprep.mubr.bf16.mxu0 %v1373
        %7213 = vmatmul.mubr.bf16.gmra.mrb[0].mxu0 %v1372
        %v7214 = vpop.f32.mrb[0].mxu0
        %v7215 = vadd.f32 0.0, %v7214
        %v7216 = vpop.f32.mrb[0].mxu0
        %v7217 = vadd.f32 0.0, %v7216
        %v7218 = vpop.f32.mrb[0].mxu0
        %v7219 = vpop.f32.mrb[0].mxu0
        %7220 = vdwg.mxu0
        %7221 = vmatprep.subr.bf16.mxu0 %v4609
        %7222 = vmatpush1.bf16.msra.mxu0 %v4608
        %7223 = vmatprep.subr.bf16.mxu0 %v4617
        %7224 = vmatpush1.bf16.msra.mxu0 %v4616
        %7225 = vmatprep.subr.bf16.mxu0 %v4625
        %7226 = vmatpush1.bf16.msra.mxu0 %v4624
        %7227 = vmatprep.subr.bf16.mxu0 %v4633
        %7228 = vmatpush1.bf16.msra.mxu0 %v4632
        %7229 = vmatprep.subr.bf16.mxu0 %v4641
        %7230 = vmatpush1.bf16.msra.mxu0 %v4640
        %7231 = vmatprep.subr.bf16.mxu0 %v4649
        %7232 = vmatpush1.bf16.msra.mxu0 %v4648
        %7233 = vmatprep.subr.bf16.mxu0 %v4657
        %7234 = vmatpush1.bf16.msra.mxu0 %v4656
        %7235 = vmatprep.subr.bf16.mxu0 %v4665
        %7236 = vmatpush1.bf16.msra.mxu0 %v4664
        %7237 = vmatprep.subr.bf16.mxu0 %v4673
        %7238 = vmatpush1.bf16.msra.mxu0 %v4672
        %7239 = vmatprep.subr.bf16.mxu0 %v4681
        %7240 = vmatpush1.bf16.msra.mxu0 %v4680
        %7241 = vmatprep.subr.bf16.mxu0 %v4689
        %7242 = vmatpush1.bf16.msra.mxu0 %v4688
        %7243 = vmatprep.subr.bf16.mxu0 %v4697
        %7244 = vmatpush1.bf16.msra.mxu0 %v4696
        %7245 = vmatprep.subr.bf16.mxu0 %v4705
        %7246 = vmatpush1.bf16.msra.mxu0 %v4704
        %7247 = vmatprep.subr.bf16.mxu0 %v4713
        %7248 = vmatpush1.bf16.msra.mxu0 %v4712
        %7249 = vmatprep.subr.bf16.mxu0 %v4721
        %7250 = vmatpush1.bf16.msra.mxu0 %v4720
        %7251 = vmatprep.subr.bf16.mxu0 %v4729
        %7252 = vmatpush1.bf16.msra.mxu0 %v4728
        %7253 = vmatprep.mubr.bf16.mxu0 %v1375
        %7254 = vmatmul.mubr.bf16.gmra.mrb[0].mxu0 %v1374
        %v7255 = vpop.f32.mrb[0].mxu0
        %v7256 = vadd.f32 %v7215, %v7255
        %v7257 = vpop.f32.mrb[0].mxu0
        %v7258 = vadd.f32 %v7217, %v7257
        %v7259 = vpop.f32.mrb[0].mxu0
        %v7260 = vpop.f32.mrb[0].mxu0
        %7261 = vdwg.mxu0
        %7262 = vmatprep.subr.bf16.mxu0 %v4737
        %7263 = vmatpush1.bf16.msra.mxu0 %v4736
        %7264 = vmatprep.subr.bf16.mxu0 %v4745
        %7265 = vmatpush1.bf16.msra.mxu0 %v4744
        %7266 = vmatprep.subr.bf16.mxu0 %v4753
        %7267 = vmatpush1.bf16.msra.mxu0 %v4752
        %7268 = vmatprep.subr.bf16.mxu0 %v4761
        %7269 = vmatpush1.bf16.msra.mxu0 %v4760
        %7270 = vmatprep.subr.bf16.mxu0 %v4769
        %7271 = vmatpush1.bf16.msra.mxu0 %v4768
        %7272 = vmatprep.subr.bf16.mxu0 %v4777
        %7273 = vmatpush1.bf16.msra.mxu0 %v4776
        %7274 = vmatprep.subr.bf16.mxu0 %v4785
        %7275 = vmatpush1.bf16.msra.mxu0 %v4784
        %7276 = vmatprep.subr.bf16.mxu0 %v4793
        %7277 = vmatpush1.bf16.msra.mxu0 %v4792
        %7278 = vmatprep.subr.bf16.mxu0 %v4801
        %7279 = vmatpush1.bf16.msra.mxu0 %v4800
        %7280 = vmatprep.subr.bf16.mxu0 %v4809
        %7281 = vmatpush1.bf16.msra.mxu0 %v4808
        %7282 = vmatprep.subr.bf16.mxu0 %v4817
        %7283 = vmatpush1.bf16.msra.mxu0 %v4816
        %7284 = vmatprep.subr.bf16.mxu0 %v4825
        %7285 = vmatpush1.bf16.msra.mxu0 %v4824
        %7286 = vmatprep.subr.bf16.mxu0 %v4833
        %7287 = vmatpush1.bf16.msra.mxu0 %v4832
        %7288 = vmatprep.subr.bf16.mxu0 %v4841
        %7289 = vmatpush1.bf16.msra.mxu0 %v4840
        %7290 = vmatprep.subr.bf16.mxu0 %v4849
        %7291 = vmatpush1.bf16.msra.mxu0 %v4848
        %7292 = vmatprep.subr.bf16.mxu0 %v4857
        %7293 = vmatpush1.bf16.msra.mxu0 %v4856
        %7294 = vmatprep.mubr.bf16.mxu0 %v1377
        %7295 = vmatmul.mubr.bf16.gmra.mrb[0].mxu0 %v1376
        %v7296 = vpop.f32.mrb[0].mxu0
        %v7297 = vadd.f32 %v7256, %v7296
        %v7298 = vpop.f32.mrb[0].mxu0
        %v7299 = vadd.f32 %v7258, %v7298
        %v7300 = vpop.f32.mrb[0].mxu0
        %v7301 = vpop.f32.mrb[0].mxu0
        %7302 = vdwg.mxu0
        %7303 = vmatprep.subr.bf16.mxu0 %v4865
        %7304 = vmatpush1.bf16.msra.mxu0 %v4864
        %7305 = vmatprep.subr.bf16.mxu0 %v4873
        %7306 = vmatpush1.bf16.msra.mxu0 %v4872
        %7307 = vmatprep.subr.bf16.mxu0 %v4881
        %7308 = vmatpush1.bf16.msra.mxu0 %v4880
        %7309 = vmatprep.subr.bf16.mxu0 %v4889
        %7310 = vmatpush1.bf16.msra.mxu0 %v4888
        %7311 = vmatprep.subr.bf16.mxu0 %v4897
        %7312 = vmatpush1.bf16.msra.mxu0 %v4896
        %7313 = vmatprep.subr.bf16.mxu0 %v4905
        %7314 = vmatpush1.bf16.msra.mxu0 %v4904
        %7315 = vmatprep.subr.bf16.mxu0 %v4913
        %7316 = vmatpush1.bf16.msra.mxu0 %v4912
        %7317 = vmatprep.subr.bf16.mxu0 %v4921
        %7318 = vmatpush1.bf16.msra.mxu0 %v4920
        %7319 = vmatprep.subr.bf16.mxu0 %v4929
        %7320 = vmatpush1.bf16.msra.mxu0 %v4928
        %7321 = vmatprep.subr.bf16.mxu0 %v4937
        %7322 = vmatpush1.bf16.msra.mxu0 %v4936
        %7323 = vmatprep.subr.bf16.mxu0 %v4945
        %7324 = vmatpush1.bf16.msra.mxu0 %v4944
        %7325 = vmatprep.subr.bf16.mxu0 %v4953
        %7326 = vmatpush1.bf16.msra.mxu0 %v4952
        %7327 = vmatprep.subr.bf16.mxu0 %v4961
        %7328 = vmatpush1.bf16.msra.mxu0 %v4960
        %7329 = vmatprep.subr.bf16.mxu0 %v4969
        %7330 = vmatpush1.bf16.msra.mxu0 %v4968
        %7331 = vmatprep.subr.bf16.mxu0 %v4977
        %7332 = vmatpush1.bf16.msra.mxu0 %v4976
        %7333 = vmatprep.subr.bf16.mxu0 %v4985
        %7334 = vmatpush1.bf16.msra.mxu0 %v4984
        %7335 = vmatprep.mubr.bf16.mxu0 %v1379
        %7336 = vmatmul.mubr.bf16.gmra.mrb[0].mxu0 %v1378
        %v7337 = vpop.f32.mrb[0].mxu0
        %v7338 = vadd.f32 %v7297, %v7337
        %v7339 = vpop.f32.mrb[0].mxu0
        %v7340 = vadd.f32 %v7299, %v7339
        %v7341 = vpop.f32.mrb[0].mxu0
        %v7342 = vpop.f32.mrb[0].mxu0
        %7343 = vdwg.mxu0
        %7344 = vmatprep.subr.bf16.mxu0 %v4993
        %7345 = vmatpush1.bf16.msra.mxu0 %v4992
        %7346 = vmatprep.subr.bf16.mxu0 %v5001
        %7347 = vmatpush1.bf16.msra.mxu0 %v5000
        %7348 = vmatprep.subr.bf16.mxu0 %v5009
        %7349 = vmatpush1.bf16.msra.mxu0 %v5008
        %7350 = vmatprep.subr.bf16.mxu0 %v5017
        %7351 = vmatpush1.bf16.msra.mxu0 %v5016
        %7352 = vmatprep.subr.bf16.mxu0 %v5025
        %7353 = vmatpush1.bf16.msra.mxu0 %v5024
        %7354 = vmatprep.subr.bf16.mxu0 %v5033
        %7355 = vmatpush1.bf16.msra.mxu0 %v5032
        %7356 = vmatprep.subr.bf16.mxu0 %v5041
        %7357 = vmatpush1.bf16.msra.mxu0 %v5040
        %7358 = vmatprep.subr.bf16.mxu0 %v5049
        %7359 = vmatpush1.bf16.msra.mxu0 %v5048
        %7360 = vmatprep.subr.bf16.mxu0 %v5057
        %7361 = vmatpush1.bf16.msra.mxu0 %v5056
        %7362 = vmatprep.subr.bf16.mxu0 %v5065
        %7363 = vmatpush1.bf16.msra.mxu0 %v5064
        %7364 = vmatprep.subr.bf16.mxu0 %v5073
        %7365 = vmatpush1.bf16.msra.mxu0 %v5072
        %7366 = vmatprep.subr.bf16.mxu0 %v5081
        %7367 = vmatpush1.bf16.msra.mxu0 %v5080
        %7368 = vmatprep.subr.bf16.mxu0 %v5089
        %7369 = vmatpush1.bf16.msra.mxu0 %v5088
        %7370 = vmatprep.subr.bf16.mxu0 %v5097
        %7371 = vmatpush1.bf16.msra.mxu0 %v5096
        %7372 = vmatprep.subr.bf16.mxu0 %v5105
        %7373 = vmatpush1.bf16.msra.mxu0 %v5104
        %7374 = vmatprep.subr.bf16.mxu0 %v5113
        %7375 = vmatpush1.bf16.msra.mxu0 %v5112
        %7376 = vmatprep.mubr.bf16.mxu0 %v1381
        %7377 = vmatmul.mubr.bf16.gmra.mrb[0].mxu0 %v1380
        %v7378 = vpop.f32.mrb[0].mxu0
        %v7379 = vadd.f32 %v7338, %v7378
        %v7380 = vpop.f32.mrb[0].mxu0
        %v7381 = vadd.f32 %v7340, %v7380
        %v7382 = vpop.f32.mrb[0].mxu0
        %v7383 = vpop.f32.mrb[0].mxu0
        %7384 = vdwg.mxu0
        %7385 = vmatprep.subr.bf16.mxu0 %v5121
        %7386 = vmatpush1.bf16.msra.mxu0 %v5120
        %7387 = vmatprep.subr.bf16.mxu0 %v5129
        %7388 = vmatpush1.bf16.msra.mxu0 %v5128
        %7389 = vmatprep.subr.bf16.mxu0 %v5137
        %7390 = vmatpush1.bf16.msra.mxu0 %v5136
        %7391 = vmatprep.subr.bf16.mxu0 %v5145
        %7392 = vmatpush1.bf16.msra.mxu0 %v5144
        %7393 = vmatprep.subr.bf16.mxu0 %v5153
        %7394 = vmatpush1.bf16.msra.mxu0 %v5152
        %7395 = vmatprep.subr.bf16.mxu0 %v5161
        %7396 = vmatpush1.bf16.msra.mxu0 %v5160
        %7397 = vmatprep.subr.bf16.mxu0 %v5169
        %7398 = vmatpush1.bf16.msra.mxu0 %v5168
        %7399 = vmatprep.subr.bf16.mxu0 %v5177
        %7400 = vmatpush1.bf16.msra.mxu0 %v5176
        %7401 = vmatprep.subr.bf16.mxu0 %v5185
        %7402 = vmatpush1.bf16.msra.mxu0 %v5184
        %7403 = vmatprep.subr.bf16.mxu0 %v5193
        %7404 = vmatpush1.bf16.msra.mxu0 %v5192
        %7405 = vmatprep.subr.bf16.mxu0 %v5201
        %7406 = vmatpush1.bf16.msra.mxu0 %v5200
        %7407 = vmatprep.subr.bf16.mxu0 %v5209
        %7408 = vmatpush1.bf16.msra.mxu0 %v5208
        %7409 = vmatprep.subr.bf16.mxu0 %v5217
        %7410 = vmatpush1.bf16.msra.mxu0 %v5216
        %7411 = vmatprep.subr.bf16.mxu0 %v5225
        %7412 = vmatpush1.bf16.msra.mxu0 %v5224
        %7413 = vmatprep.subr.bf16.mxu0 %v5233
        %7414 = vmatpush1.bf16.msra.mxu0 %v5232
        %7415 = vmatprep.subr.bf16.mxu0 %v5241
        %7416 = vmatpush1.bf16.msra.mxu0 %v5240
        %7417 = vmatprep.mubr.bf16.mxu0 %v1383
        %7418 = vmatmul.mubr.bf16.gmra.mrb[0].mxu0 %v1382
        %v7419 = vpop.f32.mrb[0].mxu0
        %v7420 = vadd.f32 %v7379, %v7419
        %v7421 = vpop.f32.mrb[0].mxu0
        %v7422 = vadd.f32 %v7381, %v7421
        %v7423 = vpop.f32.mrb[0].mxu0
        %v7424 = vpop.f32.mrb[0].mxu0
        %7425 = vdwg.mxu0
        %7426 = vmatprep.subr.bf16.mxu0 %v5249
        %7427 = vmatpush1.bf16.msra.mxu0 %v5248
        %7428 = vmatprep.subr.bf16.mxu0 %v5257
        %7429 = vmatpush1.bf16.msra.mxu0 %v5256
        %7430 = vmatprep.subr.bf16.mxu0 %v5265
        %7431 = vmatpush1.bf16.msra.mxu0 %v5264
        %7432 = vmatprep.subr.bf16.mxu0 %v5273
        %7433 = vmatpush1.bf16.msra.mxu0 %v5272
        %7434 = vmatprep.subr.bf16.mxu0 %v5281
        %7435 = vmatpush1.bf16.msra.mxu0 %v5280
        %7436 = vmatprep.subr.bf16.mxu0 %v5289
        %7437 = vmatpush1.bf16.msra.mxu0 %v5288
        %7438 = vmatprep.subr.bf16.mxu0 %v5297
        %7439 = vmatpush1.bf16.msra.mxu0 %v5296
        %7440 = vmatprep.subr.bf16.mxu0 %v5305
        %7441 = vmatpush1.bf16.msra.mxu0 %v5304
        %7442 = vmatprep.subr.bf16.mxu0 %v5313
        %7443 = vmatpush1.bf16.msra.mxu0 %v5312
        %7444 = vmatprep.subr.bf16.mxu0 %v5321
        %7445 = vmatpush1.bf16.msra.mxu0 %v5320
        %7446 = vmatprep.subr.bf16.mxu0 %v5329
        %7447 = vmatpush1.bf16.msra.mxu0 %v5328
        %7448 = vmatprep.subr.bf16.mxu0 %v5337
        %7449 = vmatpush1.bf16.msra.mxu0 %v5336
        %7450 = vmatprep.subr.bf16.mxu0 %v5345
        %7451 = vmatpush1.bf16.msra.mxu0 %v5344
        %7452 = vmatprep.subr.bf16.mxu0 %v5353
        %7453 = vmatpush1.bf16.msra.mxu0 %v5352
        %7454 = vmatprep.subr.bf16.mxu0 %v5361
        %7455 = vmatpush1.bf16.msra.mxu0 %v5360
        %7456 = vmatprep.subr.bf16.mxu0 %v5369
        %7457 = vmatpush1.bf16.msra.mxu0 %v5368
        %7458 = vmatprep.mubr.bf16.mxu0 %v1385
        %7459 = vmatmul.mubr.bf16.gmra.mrb[0].mxu0 %v1384
        %v7460 = vpop.f32.mrb[0].mxu0
        %v7461 = vadd.f32 %v7420, %v7460
        %v7462 = vpop.f32.mrb[0].mxu0
        %v7463 = vadd.f32 %v7422, %v7462
        %v7464 = vpop.f32.mrb[0].mxu0
        %v7465 = vpop.f32.mrb[0].mxu0
        %7466 = vdwg.mxu0
        %7467 = vmatprep.subr.bf16.mxu0 %v5377
        %7468 = vmatpush1.bf16.msra.mxu0 %v5376
        %7469 = vmatprep.subr.bf16.mxu0 %v5385
        %7470 = vmatpush1.bf16.msra.mxu0 %v5384
        %7471 = vmatprep.subr.bf16.mxu0 %v5393
        %7472 = vmatpush1.bf16.msra.mxu0 %v5392
        %7473 = vmatprep.subr.bf16.mxu0 %v5401
        %7474 = vmatpush1.bf16.msra.mxu0 %v5400
        %7475 = vmatprep.subr.bf16.mxu0 %v5409
        %7476 = vmatpush1.bf16.msra.mxu0 %v5408
        %7477 = vmatprep.subr.bf16.mxu0 %v5417
        %7478 = vmatpush1.bf16.msra.mxu0 %v5416
        %7479 = vmatprep.subr.bf16.mxu0 %v5425
        %7480 = vmatpush1.bf16.msra.mxu0 %v5424
        %7481 = vmatprep.subr.bf16.mxu0 %v5433
        %7482 = vmatpush1.bf16.msra.mxu0 %v5432
        %7483 = vmatprep.subr.bf16.mxu0 %v5441
        %7484 = vmatpush1.bf16.msra.mxu0 %v5440
        %7485 = vmatprep.subr.bf16.mxu0 %v5449
        %7486 = vmatpush1.bf16.msra.mxu0 %v5448
        %7487 = vmatprep.subr.bf16.mxu0 %v5457
        %7488 = vmatpush1.bf16.msra.mxu0 %v5456
        %7489 = vmatprep.subr.bf16.mxu0 %v5465
        %7490 = vmatpush1.bf16.msra.mxu0 %v5464
        %7491 = vmatprep.subr.bf16.mxu0 %v5473
        %7492 = vmatpush1.bf16.msra.mxu0 %v5472
        %7493 = vmatprep.subr.bf16.mxu0 %v5481
        %7494 = vmatpush1.bf16.msra.mxu0 %v5480
        %7495 = vmatprep.subr.bf16.mxu0 %v5489
        %7496 = vmatpush1.bf16.msra.mxu0 %v5488
        %7497 = vmatprep.subr.bf16.mxu0 %v5497
        %7498 = vmatpush1.bf16.msra.mxu0 %v5496
        %7499 = vmatprep.mubr.bf16.mxu0 %v1387
        %7500 = vmatmul.mubr.bf16.gmra.mrb[0].mxu0 %v1386
        %v7501 = vpop.f32.mrb[0].mxu0
        %v7502 = vadd.f32 %v7461, %v7501
        %v7503 = vpop.f32.mrb[0].mxu0
        %v7504 = vadd.f32 %v7463, %v7503
        %v7505 = vpop.f32.mrb[0].mxu0
        %v7506 = vpop.f32.mrb[0].mxu0
        %7507 = vdwg.mxu0
        %7508 = vmatprep.subr.bf16.mxu0 %v4483
        %7509 = vmatpush1.bf16.msra.mxu0 %v4482
        %7510 = vmatprep.subr.bf16.mxu0 %v4491
        %7511 = vmatpush1.bf16.msra.mxu0 %v4490
        %7512 = vmatprep.subr.bf16.mxu0 %v4499
        %7513 = vmatpush1.bf16.msra.mxu0 %v4498
        %7514 = vmatprep.subr.bf16.mxu0 %v4507
        %7515 = vmatpush1.bf16.msra.mxu0 %v4506
        %7516 = vmatprep.subr.bf16.mxu0 %v4515
        %7517 = vmatpush1.bf16.msra.mxu0 %v4514
        %7518 = vmatprep.subr.bf16.mxu0 %v4523
        %7519 = vmatpush1.bf16.msra.mxu0 %v4522
        %7520 = vmatprep.subr.bf16.mxu0 %v4531
        %7521 = vmatpush1.bf16.msra.mxu0 %v4530
        %7522 = vmatprep.subr.bf16.mxu0 %v4539
        %7523 = vmatpush1.bf16.msra.mxu0 %v4538
        %7524 = vmatprep.subr.bf16.mxu0 %v4547
        %7525 = vmatpush1.bf16.msra.mxu0 %v4546
        %7526 = vmatprep.subr.bf16.mxu0 %v4555
        %7527 = vmatpush1.bf16.msra.mxu0 %v4554
        %7528 = vmatprep.subr.bf16.mxu0 %v4563
        %7529 = vmatpush1.bf16.msra.mxu0 %v4562
        %7530 = vmatprep.subr.bf16.mxu0 %v4571
        %7531 = vmatpush1.bf16.msra.mxu0 %v4570
        %7532 = vmatprep.subr.bf16.mxu0 %v4579
        %7533 = vmatpush1.bf16.msra.mxu0 %v4578
        %7534 = vmatprep.subr.bf16.mxu0 %v4587
        %7535 = vmatpush1.bf16.msra.mxu0 %v4586
        %7536 = vmatprep.subr.bf16.mxu0 %v4595
        %7537 = vmatpush1.bf16.msra.mxu0 %v4594
        %7538 = vmatprep.subr.bf16.mxu0 %v4603
        %7539 = vmatpush1.bf16.msra.mxu0 %v4602
        %7540 = vmatprep.mubr.bf16.mxu0 %v1373
        %7541 = vmatmul.mubr.bf16.gmra.mrb[0].mxu0 %v1372
        %v7542 = vpop.f32.mrb[0].mxu0
        %v7543 = vadd.f32 0.0, %v7542
        %v7544 = vpop.f32.mrb[0].mxu0
        %v7545 = vadd.f32 0.0, %v7544
        %v7546 = vpop.f32.mrb[0].mxu0
        %v7547 = vpop.f32.mrb[0].mxu0
        %7548 = vdwg.mxu0
        %7549 = vmatprep.subr.bf16.mxu0 %v4611
        %7550 = vmatpush1.bf16.msra.mxu0 %v4610
        %7551 = vmatprep.subr.bf16.mxu0 %v4619
        %7552 = vmatpush1.bf16.msra.mxu0 %v4618
        %7553 = vmatprep.subr.bf16.mxu0 %v4627
        %7554 = vmatpush1.bf16.msra.mxu0 %v4626
        %7555 = vmatprep.subr.bf16.mxu0 %v4635
        %7556 = vmatpush1.bf16.msra.mxu0 %v4634
        %7557 = vmatprep.subr.bf16.mxu0 %v4643
        %7558 = vmatpush1.bf16.msra.mxu0 %v4642
        %7559 = vmatprep.subr.bf16.mxu0 %v4651
        %7560 = vmatpush1.bf16.msra.mxu0 %v4650
        %7561 = vmatprep.subr.bf16.mxu0 %v4659
        %7562 = vmatpush1.bf16.msra.mxu0 %v4658
        %7563 = vmatprep.subr.bf16.mxu0 %v4667
        %7564 = vmatpush1.bf16.msra.mxu0 %v4666
        %7565 = vmatprep.subr.bf16.mxu0 %v4675
        %7566 = vmatpush1.bf16.msra.mxu0 %v4674
        %7567 = vmatprep.subr.bf16.mxu0 %v4683
        %7568 = vmatpush1.bf16.msra.mxu0 %v4682
        %7569 = vmatprep.subr.bf16.mxu0 %v4691
        %7570 = vmatpush1.bf16.msra.mxu0 %v4690
        %7571 = vmatprep.subr.bf16.mxu0 %v4699
        %7572 = vmatpush1.bf16.msra.mxu0 %v4698
        %7573 = vmatprep.subr.bf16.mxu0 %v4707
        %7574 = vmatpush1.bf16.msra.mxu0 %v4706
        %7575 = vmatprep.subr.bf16.mxu0 %v4715
        %7576 = vmatpush1.bf16.msra.mxu0 %v4714
        %7577 = vmatprep.subr.bf16.mxu0 %v4723
        %7578 = vmatpush1.bf16.msra.mxu0 %v4722
        %7579 = vmatprep.subr.bf16.mxu0 %v4731
        %7580 = vmatpush1.bf16.msra.mxu0 %v4730
        %7581 = vmatprep.mubr.bf16.mxu0 %v1375
        %7582 = vmatmul.mubr.bf16.gmra.mrb[0].mxu0 %v1374
        %v7583 = vpop.f32.mrb[0].mxu0
        %v7584 = vadd.f32 %v7543, %v7583
        %v7585 = vpop.f32.mrb[0].mxu0
        %v7586 = vadd.f32 %v7545, %v7585
        %v7587 = vpop.f32.mrb[0].mxu0
        %v7588 = vpop.f32.mrb[0].mxu0
        %7589 = vdwg.mxu0
        %7590 = vmatprep.subr.bf16.mxu0 %v4739
        %7591 = vmatpush1.bf16.msra.mxu0 %v4738
        %7592 = vmatprep.subr.bf16.mxu0 %v4747
        %7593 = vmatpush1.bf16.msra.mxu0 %v4746
        %7594 = vmatprep.subr.bf16.mxu0 %v4755
        %7595 = vmatpush1.bf16.msra.mxu0 %v4754
        %7596 = vmatprep.subr.bf16.mxu0 %v4763
        %7597 = vmatpush1.bf16.msra.mxu0 %v4762
        %7598 = vmatprep.subr.bf16.mxu0 %v4771
        %7599 = vmatpush1.bf16.msra.mxu0 %v4770
        %7600 = vmatprep.subr.bf16.mxu0 %v4779
        %7601 = vmatpush1.bf16.msra.mxu0 %v4778
        %7602 = vmatprep.subr.bf16.mxu0 %v4787
        %7603 = vmatpush1.bf16.msra.mxu0 %v4786
        %7604 = vmatprep.subr.bf16.mxu0 %v4795
        %7605 = vmatpush1.bf16.msra.mxu0 %v4794
        %7606 = vmatprep.subr.bf16.mxu0 %v4803
        %7607 = vmatpush1.bf16.msra.mxu0 %v4802
        %7608 = vmatprep.subr.bf16.mxu0 %v4811
        %7609 = vmatpush1.bf16.msra.mxu0 %v4810
        %7610 = vmatprep.subr.bf16.mxu0 %v4819
        %7611 = vmatpush1.bf16.msra.mxu0 %v4818
        %7612 = vmatprep.subr.bf16.mxu0 %v4827
        %7613 = vmatpush1.bf16.msra.mxu0 %v4826
        %7614 = vmatprep.subr.bf16.mxu0 %v4835
        %7615 = vmatpush1.bf16.msra.mxu0 %v4834
        %7616 = vmatprep.subr.bf16.mxu0 %v4843
        %7617 = vmatpush1.bf16.msra.mxu0 %v4842
        %7618 = vmatprep.subr.bf16.mxu0 %v4851
        %7619 = vmatpush1.bf16.msra.mxu0 %v4850
        %7620 = vmatprep.subr.bf16.mxu0 %v4859
        %7621 = vmatpush1.bf16.msra.mxu0 %v4858
        %7622 = vmatprep.mubr.bf16.mxu0 %v1377
        %7623 = vmatmul.mubr.bf16.gmra.mrb[0].mxu0 %v1376
        %v7624 = vpop.f32.mrb[0].mxu0
        %v7625 = vadd.f32 %v7584, %v7624
        %v7626 = vpop.f32.mrb[0].mxu0
        %v7627 = vadd.f32 %v7586, %v7626
        %v7628 = vpop.f32.mrb[0].mxu0
        %v7629 = vpop.f32.mrb[0].mxu0
        %7630 = vdwg.mxu0
        %7631 = vmatprep.subr.bf16.mxu0 %v4867
        %7632 = vmatpush1.bf16.msra.mxu0 %v4866
        %7633 = vmatprep.subr.bf16.mxu0 %v4875
        %7634 = vmatpush1.bf16.msra.mxu0 %v4874
        %7635 = vmatprep.subr.bf16.mxu0 %v4883
        %7636 = vmatpush1.bf16.msra.mxu0 %v4882
        %7637 = vmatprep.subr.bf16.mxu0 %v4891
        %7638 = vmatpush1.bf16.msra.mxu0 %v4890
        %7639 = vmatprep.subr.bf16.mxu0 %v4899
        %7640 = vmatpush1.bf16.msra.mxu0 %v4898
        %7641 = vmatprep.subr.bf16.mxu0 %v4907
        %7642 = vmatpush1.bf16.msra.mxu0 %v4906
        %7643 = vmatprep.subr.bf16.mxu0 %v4915
        %7644 = vmatpush1.bf16.msra.mxu0 %v4914
        %7645 = vmatprep.subr.bf16.mxu0 %v4923
        %7646 = vmatpush1.bf16.msra.mxu0 %v4922
        %7647 = vmatprep.subr.bf16.mxu0 %v4931
        %7648 = vmatpush1.bf16.msra.mxu0 %v4930
        %7649 = vmatprep.subr.bf16.mxu0 %v4939
        %7650 = vmatpush1.bf16.msra.mxu0 %v4938
        %7651 = vmatprep.subr.bf16.mxu0 %v4947
        %7652 = vmatpush1.bf16.msra.mxu0 %v4946
        %7653 = vmatprep.subr.bf16.mxu0 %v4955
        %7654 = vmatpush1.bf16.msra.mxu0 %v4954
        %7655 = vmatprep.subr.bf16.mxu0 %v4963
        %7656 = vmatpush1.bf16.msra.mxu0 %v4962
        %7657 = vmatprep.subr.bf16.mxu0 %v4971
        %7658 = vmatpush1.bf16.msra.mxu0 %v4970
        %7659 = vmatprep.subr.bf16.mxu0 %v4979
        %7660 = vmatpush1.bf16.msra.mxu0 %v4978
        %7661 = vmatprep.subr.bf16.mxu0 %v4987
        %7662 = vmatpush1.bf16.msra.mxu0 %v4986
        %7663 = vmatprep.mubr.bf16.mxu0 %v1379
        %7664 = vmatmul.mubr.bf16.gmra.mrb[0].mxu0 %v1378
        %v7665 = vpop.f32.mrb[0].mxu0
        %v7666 = vadd.f32 %v7625, %v7665
        %v7667 = vpop.f32.mrb[0].mxu0
        %v7668 = vadd.f32 %v7627, %v7667
        %v7669 = vpop.f32.mrb[0].mxu0
        %v7670 = vpop.f32.mrb[0].mxu0
        %7671 = vdwg.mxu0
        %7672 = vmatprep.subr.bf16.mxu0 %v4995
        %7673 = vmatpush1.bf16.msra.mxu0 %v4994
        %7674 = vmatprep.subr.bf16.mxu0 %v5003
        %7675 = vmatpush1.bf16.msra.mxu0 %v5002
        %7676 = vmatprep.subr.bf16.mxu0 %v5011
        %7677 = vmatpush1.bf16.msra.mxu0 %v5010
        %7678 = vmatprep.subr.bf16.mxu0 %v5019
        %7679 = vmatpush1.bf16.msra.mxu0 %v5018
        %7680 = vmatprep.subr.bf16.mxu0 %v5027
        %7681 = vmatpush1.bf16.msra.mxu0 %v5026
        %7682 = vmatprep.subr.bf16.mxu0 %v5035
        %7683 = vmatpush1.bf16.msra.mxu0 %v5034
        %7684 = vmatprep.subr.bf16.mxu0 %v5043
        %7685 = vmatpush1.bf16.msra.mxu0 %v5042
        %7686 = vmatprep.subr.bf16.mxu0 %v5051
        %7687 = vmatpush1.bf16.msra.mxu0 %v5050
        %7688 = vmatprep.subr.bf16.mxu0 %v5059
        %7689 = vmatpush1.bf16.msra.mxu0 %v5058
        %7690 = vmatprep.subr.bf16.mxu0 %v5067
        %7691 = vmatpush1.bf16.msra.mxu0 %v5066
        %7692 = vmatprep.subr.bf16.mxu0 %v5075
        %7693 = vmatpush1.bf16.msra.mxu0 %v5074
        %7694 = vmatprep.subr.bf16.mxu0 %v5083
        %7695 = vmatpush1.bf16.msra.mxu0 %v5082
        %7696 = vmatprep.subr.bf16.mxu0 %v5091
        %7697 = vmatpush1.bf16.msra.mxu0 %v5090
        %7698 = vmatprep.subr.bf16.mxu0 %v5099
        %7699 = vmatpush1.bf16.msra.mxu0 %v5098
        %7700 = vmatprep.subr.bf16.mxu0 %v5107
        %7701 = vmatpush1.bf16.msra.mxu0 %v5106
        %7702 = vmatprep.subr.bf16.mxu0 %v5115
        %7703 = vmatpush1.bf16.msra.mxu0 %v5114
        %7704 = vmatprep.mubr.bf16.mxu0 %v1381
        %7705 = vmatmul.mubr.bf16.gmra.mrb[0].mxu0 %v1380
        %v7706 = vpop.f32.mrb[0].mxu0
        %v7707 = vadd.f32 %v7666, %v7706
        %v7708 = vpop.f32.mrb[0].mxu0
        %v7709 = vadd.f32 %v7668, %v7708
        %v7710 = vpop.f32.mrb[0].mxu0
        %v7711 = vpop.f32.mrb[0].mxu0
        %7712 = vdwg.mxu0
        %7713 = vmatprep.subr.bf16.mxu0 %v5123
        %7714 = vmatpush1.bf16.msra.mxu0 %v5122
        %7715 = vmatprep.subr.bf16.mxu0 %v5131
        %7716 = vmatpush1.bf16.msra.mxu0 %v5130
        %7717 = vmatprep.subr.bf16.mxu0 %v5139
        %7718 = vmatpush1.bf16.msra.mxu0 %v5138
        %7719 = vmatprep.subr.bf16.mxu0 %v5147
        %7720 = vmatpush1.bf16.msra.mxu0 %v5146
        %7721 = vmatprep.subr.bf16.mxu0 %v5155
        %7722 = vmatpush1.bf16.msra.mxu0 %v5154
        %7723 = vmatprep.subr.bf16.mxu0 %v5163
        %7724 = vmatpush1.bf16.msra.mxu0 %v5162
        %7725 = vmatprep.subr.bf16.mxu0 %v5171
        %7726 = vmatpush1.bf16.msra.mxu0 %v5170
        %7727 = vmatprep.subr.bf16.mxu0 %v5179
        %7728 = vmatpush1.bf16.msra.mxu0 %v5178
        %7729 = vmatprep.subr.bf16.mxu0 %v5187
        %7730 = vmatpush1.bf16.msra.mxu0 %v5186
        %7731 = vmatprep.subr.bf16.mxu0 %v5195
        %7732 = vmatpush1.bf16.msra.mxu0 %v5194
        %7733 = vmatprep.subr.bf16.mxu0 %v5203
        %7734 = vmatpush1.bf16.msra.mxu0 %v5202
        %7735 = vmatprep.subr.bf16.mxu0 %v5211
        %7736 = vmatpush1.bf16.msra.mxu0 %v5210
        %7737 = vmatprep.subr.bf16.mxu0 %v5219
        %7738 = vmatpush1.bf16.msra.mxu0 %v5218
        %7739 = vmatprep.subr.bf16.mxu0 %v5227
        %7740 = vmatpush1.bf16.msra.mxu0 %v5226
        %7741 = vmatprep.subr.bf16.mxu0 %v5235
        %7742 = vmatpush1.bf16.msra.mxu0 %v5234
        %7743 = vmatprep.subr.bf16.mxu0 %v5243
        %7744 = vmatpush1.bf16.msra.mxu0 %v5242
        %7745 = vmatprep.mubr.bf16.mxu0 %v1383
        %7746 = vmatmul.mubr.bf16.gmra.mrb[0].mxu0 %v1382
        %v7747 = vpop.f32.mrb[0].mxu0
        %v7748 = vadd.f32 %v7707, %v7747
        %v7749 = vpop.f32.mrb[0].mxu0
        %v7750 = vadd.f32 %v7709, %v7749
        %v7751 = vpop.f32.mrb[0].mxu0
        %v7752 = vpop.f32.mrb[0].mxu0
        %7753 = vdwg.mxu0
        %7754 = vmatprep.subr.bf16.mxu0 %v5251
        %7755 = vmatpush1.bf16.msra.mxu0 %v5250
        %7756 = vmatprep.subr.bf16.mxu0 %v5259
        %7757 = vmatpush1.bf16.msra.mxu0 %v5258
        %7758 = vmatprep.subr.bf16.mxu0 %v5267
        %7759 = vmatpush1.bf16.msra.mxu0 %v5266
        %7760 = vmatprep.subr.bf16.mxu0 %v5275
        %7761 = vmatpush1.bf16.msra.mxu0 %v5274
        %7762 = vmatprep.subr.bf16.mxu0 %v5283
        %7763 = vmatpush1.bf16.msra.mxu0 %v5282
        %7764 = vmatprep.subr.bf16.mxu0 %v5291
        %7765 = vmatpush1.bf16.msra.mxu0 %v5290
        %7766 = vmatprep.subr.bf16.mxu0 %v5299
        %7767 = vmatpush1.bf16.msra.mxu0 %v5298
        %7768 = vmatprep.subr.bf16.mxu0 %v5307
        %7769 = vmatpush1.bf16.msra.mxu0 %v5306
        %7770 = vmatprep.subr.bf16.mxu0 %v5315
        %7771 = vmatpush1.bf16.msra.mxu0 %v5314
        %7772 = vmatprep.subr.bf16.mxu0 %v5323
        %7773 = vmatpush1.bf16.msra.mxu0 %v5322
        %7774 = vmatprep.subr.bf16.mxu0 %v5331
        %7775 = vmatpush1.bf16.msra.mxu0 %v5330
        %7776 = vmatprep.subr.bf16.mxu0 %v5339
        %7777 = vmatpush1.bf16.msra.mxu0 %v5338
        %7778 = vmatprep.subr.bf16.mxu0 %v5347
        %7779 = vmatpush1.bf16.msra.mxu0 %v5346
        %7780 = vmatprep.subr.bf16.mxu0 %v5355
        %7781 = vmatpush1.bf16.msra.mxu0 %v5354
        %7782 = vmatprep.subr.bf16.mxu0 %v5363
        %7783 = vmatpush1.bf16.msra.mxu0 %v5362
        %7784 = vmatprep.subr.bf16.mxu0 %v5371
        %7785 = vmatpush1.bf16.msra.mxu0 %v5370
        %7786 = vmatprep.mubr.bf16.mxu0 %v1385
        %7787 = vmatmul.mubr.bf16.gmra.mrb[0].mxu0 %v1384
        %v7788 = vpop.f32.mrb[0].mxu0
        %v7789 = vadd.f32 %v7748, %v7788
        %v7790 = vpop.f32.mrb[0].mxu0
        %v7791 = vadd.f32 %v7750, %v7790
        %v7792 = vpop.f32.mrb[0].mxu0
        %v7793 = vpop.f32.mrb[0].mxu0
        %7794 = vdwg.mxu0
        %7795 = vmatprep.subr.bf16.mxu0 %v5379
        %7796 = vmatpush1.bf16.msra.mxu0 %v5378
        %7797 = vmatprep.subr.bf16.mxu0 %v5387
        %7798 = vmatpush1.bf16.msra.mxu0 %v5386
        %7799 = vmatprep.subr.bf16.mxu0 %v5395
        %7800 = vmatpush1.bf16.msra.mxu0 %v5394
        %7801 = vmatprep.subr.bf16.mxu0 %v5403
        %7802 = vmatpush1.bf16.msra.mxu0 %v5402
        %7803 = vmatprep.subr.bf16.mxu0 %v5411
        %7804 = vmatpush1.bf16.msra.mxu0 %v5410
        %7805 = vmatprep.subr.bf16.mxu0 %v5419
        %7806 = vmatpush1.bf16.msra.mxu0 %v5418
        %7807 = vmatprep.subr.bf16.mxu0 %v5427
        %7808 = vmatpush1.bf16.msra.mxu0 %v5426
        %7809 = vmatprep.subr.bf16.mxu0 %v5435
        %7810 = vmatpush1.bf16.msra.mxu0 %v5434
        %7811 = vmatprep.subr.bf16.mxu0 %v5443
        %7812 = vmatpush1.bf16.msra.mxu0 %v5442
        %7813 = vmatprep.subr.bf16.mxu0 %v5451
        %7814 = vmatpush1.bf16.msra.mxu0 %v5450
        %7815 = vmatprep.subr.bf16.mxu0 %v5459
        %7816 = vmatpush1.bf16.msra.mxu0 %v5458
        %7817 = vmatprep.subr.bf16.mxu0 %v5467
        %7818 = vmatpush1.bf16.msra.mxu0 %v5466
        %7819 = vmatprep.subr.bf16.mxu0 %v5475
        %7820 = vmatpush1.bf16.msra.mxu0 %v5474
        %7821 = vmatprep.subr.bf16.mxu0 %v5483
        %7822 = vmatpush1.bf16.msra.mxu0 %v5482
        %7823 = vmatprep.subr.bf16.mxu0 %v5491
        %7824 = vmatpush1.bf16.msra.mxu0 %v5490
        %7825 = vmatprep.subr.bf16.mxu0 %v5499
        %7826 = vmatpush1.bf16.msra.mxu0 %v5498
        %7827 = vmatprep.mubr.bf16.mxu0 %v1387
        %7828 = vmatmul.mubr.bf16.gmra.mrb[0].mxu0 %v1386
        %v7829 = vpop.f32.mrb[0].mxu0
        %v7830 = vadd.f32 %v7789, %v7829
        %v7831 = vpop.f32.mrb[0].mxu0
        %v7832 = vadd.f32 %v7791, %v7831
        %v7833 = vpop.f32.mrb[0].mxu0
        %v7834 = vpop.f32.mrb[0].mxu0
        %7835 = vdwg.mxu0
        %v7836 = vadd.f32 %v308, %v6846
        %v7837 = vadd.f32 %v309, %v6848
        %v7838 = vadd.f32 %v310, %v7174
        %v7839 = vadd.f32 %v311, %v7176
        %v7840 = vadd.f32 %v312, %v7502
        %v7841 = vadd.f32 %v313, %v7504
        %v7842 = vadd.f32 %v314, %v7830
        %v7843 = vadd.f32 %v315, %v7832
        %7844 = vst [vmem:[#allocation2] sm:$0xff] %v7836
        %7845 = vst [vmem:[#allocation2 + $0x8] sm:$0xff] %v7837
        %7846 = vst [vmem:[#allocation2 + $0x10] sm:$0xff] %v7838
        %7847 = vst [vmem:[#allocation2 + $0x18] sm:$0xff] %v7839
        %7848 = vst [vmem:[#allocation2 + $0x20] sm:$0xff] %v7840
        %7849 = vst [vmem:[#allocation2 + $0x28] sm:$0xff] %v7841
        %7850 = vst [vmem:[#allocation2 + $0x30] sm:$0xff] %v7842
        %7851 = vst [vmem:[#allocation2 + $0x38] sm:$0xff] %v7843
        %p7852 = scmp.eq.s32.totalorder %s22, 1
        // Predicated region
        $region61: #{shallow2_forward.1} parent=39 // pred_check
          %p7853 = pneg %p7852
        $region62: #{shallow2_forward.1} parent=39 // pred_check_branch
          %7855 = sbr.rel (%p7853) target = $region64
        $region63: #{shallow2_forward.1} parent=39 // pred_region
          %v7856 = vld [vmem:[#allocation2] sm:$0xff]
          %v7857 = vld [vmem:[#allocation2 + $0x8] sm:$0xff]
          %v7858 = vld [vmem:[#allocation2 + $0x10] sm:$0xff]
          %v7859 = vld [vmem:[#allocation2 + $0x18] sm:$0xff]
          %v7860 = vld [vmem:[#allocation2 + $0x20] sm:$0xff]
          %v7861 = vld [vmem:[#allocation2 + $0x28] sm:$0xff]
          %v7862 = vld [vmem:[#allocation2 + $0x30] sm:$0xff]
          %v7863 = vld [vmem:[#allocation2 + $0x38] sm:$0xff]
          %v7864 = vld [vmem:[#allocation6] sm:$0x77]
          %v7865 = vld [vmem:[#allocation6 + $0x8] sm:$0x77]
          %v7866 = vld [vmem:[#allocation6 + $0x10] sm:$0x77]
          %v7867 = vld [vmem:[#allocation6 + $0x18] sm:$0x77]
          %v7872 = vlaneseq
          %v7873 = vshrl.u32 %v7872, 7
          %v7874 = vsub.s32 0, %v7873
          %v7875 = vrot.slane %v7864, %v7874
          %v7876 = vlaneseq
          %v7877 = vshrl.u32 %v7876, 7
          %v7878 = vsub.s32 4, %v7877
          %v7879 = vrot.slane %v7864, %v7878
          %v7880 = vlaneseq
          %v7881 = vshrl.u32 %v7880, 7
          %v7882 = vsub.s32 0, %v7881
          %v7883 = vrot.slane %v7865, %v7882
          %v7884 = vlaneseq
          %v7885 = vshrl.u32 %v7884, 7
          %v7886 = vsub.s32 4, %v7885
          %v7887 = vrot.slane %v7865, %v7886
          %v7888 = vlaneseq
          %v7889 = vshrl.u32 %v7888, 7
          %v7890 = vsub.s32 0, %v7889
          %v7891 = vrot.slane %v7866, %v7890
          %v7892 = vlaneseq
          %v7893 = vshrl.u32 %v7892, 7
          %v7894 = vsub.s32 4, %v7893
          %v7895 = vrot.slane %v7866, %v7894
          %v7896 = vlaneseq
          %v7897 = vshrl.u32 %v7896, 7
          %v7898 = vsub.s32 0, %v7897
          %v7899 = vrot.slane %v7867, %v7898
          %v7900 = vlaneseq
          %v7901 = vshrl.u32 %v7900, 7
          %v7902 = vsub.s32 4, %v7901
          %v7903 = vrot.slane %v7867, %v7902
          %v7912 = vlaneseq
          %v7913 = vshrl.u32 %v7912, 7
          %v7914 = vsub.s32 0, %v7913
          %v7915 = vrot.slane %v7875, %v7914
          %v7916 = vlaneseq
          %v7917 = vshrl.u32 %v7916, 7
          %v7918 = vsub.s32 0, %v7917
          %v7919 = vrot.slane %v7879, %v7918
          %v7920 = vlaneseq
          %v7921 = vshrl.u32 %v7920, 7
          %v7922 = vsub.s32 0, %v7921
          %v7923 = vrot.slane %v7883, %v7922
          %v7924 = vlaneseq
          %v7925 = vshrl.u32 %v7924, 7
          %v7926 = vsub.s32 0, %v7925
          %v7927 = vrot.slane %v7887, %v7926
          %v7928 = vlaneseq
          %v7929 = vshrl.u32 %v7928, 7
          %v7930 = vsub.s32 0, %v7929
          %v7931 = vrot.slane %v7891, %v7930
          %v7932 = vlaneseq
          %v7933 = vshrl.u32 %v7932, 7
          %v7934 = vsub.s32 0, %v7933
          %v7935 = vrot.slane %v7895, %v7934
          %v7936 = vlaneseq
          %v7937 = vshrl.u32 %v7936, 7
          %v7938 = vsub.s32 0, %v7937
          %v7939 = vrot.slane %v7899, %v7938
          %v7940 = vlaneseq
          %v7941 = vshrl.u32 %v7940, 7
          %v7942 = vsub.s32 0, %v7941
          %v7943 = vrot.slane %v7903, %v7942
          %v7944 = vadd.f32 %v7856, %v7915
          %v7945 = vadd.f32 %v7857, %v7919
          %v7946 = vadd.f32 %v7858, %v7923
          %v7947 = vadd.f32 %v7859, %v7927
          %v7948 = vadd.f32 %v7860, %v7931
          %v7949 = vadd.f32 %v7861, %v7935
          %v7950 = vadd.f32 %v7862, %v7939
          %v7951 = vadd.f32 %v7863, %v7943
          %v7952 = vrot.slane %v7944, 4
          %v7953 = vadd.f32 %v7944, %v7952
          %v7954 = vrot.slane %v7953, 2
          %v7955 = vadd.f32 %v7953, %v7954
          %v7956 = vrot.slane %v7955, 1
          %v7957 = vadd.f32 %v7955, %v7956
          %v7958 = vrot.slane %v7945, 4
          %v7959 = vadd.f32 %v7945, %v7958
          %v7960 = vrot.slane %v7959, 2
          %v7961 = vadd.f32 %v7959, %v7960
          %v7962 = vrot.slane %v7961, 1
          %v7963 = vadd.f32 %v7961, %v7962
          %v7964 = vrot.slane %v7946, 4
          %v7965 = vadd.f32 %v7946, %v7964
          %v7966 = vrot.slane %v7965, 2
          %v7967 = vadd.f32 %v7965, %v7966
          %v7968 = vrot.slane %v7967, 1
          %v7969 = vadd.f32 %v7967, %v7968
          %v7970 = vrot.slane %v7947, 4
          %v7971 = vadd.f32 %v7947, %v7970
          %v7972 = vrot.slane %v7971, 2
          %v7973 = vadd.f32 %v7971, %v7972
          %v7974 = vrot.slane %v7973, 1
          %v7975 = vadd.f32 %v7973, %v7974
          %v7976 = vrot.slane %v7948, 4
          %v7977 = vadd.f32 %v7948, %v7976
          %v7978 = vrot.slane %v7977, 2
          %v7979 = vadd.f32 %v7977, %v7978
          %v7980 = vrot.slane %v7979, 1
          %v7981 = vadd.f32 %v7979, %v7980
          %v7982 = vrot.slane %v7949, 4
          %v7983 = vadd.f32 %v7949, %v7982
          %v7984 = vrot.slane %v7983, 2
          %v7985 = vadd.f32 %v7983, %v7984
          %v7986 = vrot.slane %v7985, 1
          %v7987 = vadd.f32 %v7985, %v7986
          %v7988 = vrot.slane %v7950, 4
          %v7989 = vadd.f32 %v7950, %v7988
          %v7990 = vrot.slane %v7989, 2
          %v7991 = vadd.f32 %v7989, %v7990
          %v7992 = vrot.slane %v7991, 1
          %v7993 = vadd.f32 %v7991, %v7992
          %v7994 = vrot.slane %v7951, 4
          %v7995 = vadd.f32 %v7951, %v7994
          %v7996 = vrot.slane %v7995, 2
          %v7997 = vadd.f32 %v7995, %v7996
          %v7998 = vrot.slane %v7997, 1
          %v7999 = vadd.f32 %v7997, %v7998
          %v8000 = vrcp.pop 8.0
          %v8001 = vmul.f32 %v7957, %v8000
          %v8002 = vmul.f32 %v7963, %v8000
          %v8003 = vmul.f32 %v7969, %v8000
          %v8004 = vmul.f32 %v7975, %v8000
          %v8005 = vmul.f32 %v7981, %v8000
          %v8006 = vmul.f32 %v7987, %v8000
          %v8007 = vmul.f32 %v7993, %v8000
          %v8008 = vmul.f32 %v7999, %v8000
          %v8009 = vsub.f32 %v7944, %v8001
          %v8010 = vsub.f32 %v7945, %v8002
          %v8011 = vsub.f32 %v7946, %v8003
          %v8012 = vsub.f32 %v7947, %v8004
          %v8013 = vsub.f32 %v7948, %v8005
          %v8014 = vsub.f32 %v7949, %v8006
          %v8015 = vsub.f32 %v7950, %v8007
          %v8016 = vsub.f32 %v7951, %v8008
          %v8017 = vmul.f32 %v8009, %v8009
          %v8018 = vmul.f32 %v8010, %v8010
          %v8019 = vmul.f32 %v8011, %v8011
          %v8020 = vmul.f32 %v8012, %v8012
          %v8021 = vmul.f32 %v8013, %v8013
          %v8022 = vmul.f32 %v8014, %v8014
          %v8023 = vmul.f32 %v8015, %v8015
          %v8024 = vmul.f32 %v8016, %v8016
          %v8025 = vrot.slane %v8017, 4
          %v8026 = vadd.f32 %v8017, %v8025
          %v8027 = vrot.slane %v8026, 2
          %v8028 = vadd.f32 %v8026, %v8027
          %v8029 = vrot.slane %v8028, 1
          %v8030 = vadd.f32 %v8028, %v8029
          %v8031 = vrot.slane %v8018, 4
          %v8032 = vadd.f32 %v8018, %v8031
          %v8033 = vrot.slane %v8032, 2
          %v8034 = vadd.f32 %v8032, %v8033
          %v8035 = vrot.slane %v8034, 1
          %v8036 = vadd.f32 %v8034, %v8035
          %v8037 = vrot.slane %v8019, 4
          %v8038 = vadd.f32 %v8019, %v8037
          %v8039 = vrot.slane %v8038, 2
          %v8040 = vadd.f32 %v8038, %v8039
          %v8041 = vrot.slane %v8040, 1
          %v8042 = vadd.f32 %v8040, %v8041
          %v8043 = vrot.slane %v8020, 4
          %v8044 = vadd.f32 %v8020, %v8043
          %v8045 = vrot.slane %v8044, 2
          %v8046 = vadd.f32 %v8044, %v8045
          %v8047 = vrot.slane %v8046, 1
          %v8048 = vadd.f32 %v8046, %v8047
          %v8049 = vrot.slane %v8021, 4
          %v8050 = vadd.f32 %v8021, %v8049
          %v8051 = vrot.slane %v8050, 2
          %v8052 = vadd.f32 %v8050, %v8051
          %v8053 = vrot.slane %v8052, 1
          %v8054 = vadd.f32 %v8052, %v8053
          %v8055 = vrot.slane %v8022, 4
          %v8056 = vadd.f32 %v8022, %v8055
          %v8057 = vrot.slane %v8056, 2
          %v8058 = vadd.f32 %v8056, %v8057
          %v8059 = vrot.slane %v8058, 1
          %v8060 = vadd.f32 %v8058, %v8059
          %v8061 = vrot.slane %v8023, 4
          %v8062 = vadd.f32 %v8023, %v8061
          %v8063 = vrot.slane %v8062, 2
          %v8064 = vadd.f32 %v8062, %v8063
          %v8065 = vrot.slane %v8064, 1
          %v8066 = vadd.f32 %v8064, %v8065
          %v8067 = vrot.slane %v8024, 4
          %v8068 = vadd.f32 %v8024, %v8067
          %v8069 = vrot.slane %v8068, 2
          %v8070 = vadd.f32 %v8068, %v8069
          %v8071 = vrot.slane %v8070, 1
          %v8072 = vadd.f32 %v8070, %v8071
          %v8073 = vmul.f32 %v8030, %v8000
          %v8074 = vmul.f32 %v8036, %v8000
          %v8075 = vmul.f32 %v8042, %v8000
          %v8076 = vmul.f32 %v8048, %v8000
          %v8077 = vmul.f32 %v8054, %v8000
          %v8078 = vmul.f32 %v8060, %v8000
          %v8079 = vmul.f32 %v8066, %v8000
          %v8080 = vmul.f32 %v8072, %v8000
          %v8081 = vadd.f32 %v8073, 1e-05
          %v8082 = vadd.f32 %v8074, 1e-05
          %v8083 = vadd.f32 %v8075, 1e-05
          %v8084 = vadd.f32 %v8076, 1e-05
          %v8085 = vadd.f32 %v8077, 1e-05
          %v8086 = vadd.f32 %v8078, 1e-05
          %v8087 = vadd.f32 %v8079, 1e-05
          %v8088 = vadd.f32 %v8080, 1e-05
          %v8089 = vrsqrt.pop %v8081
          %v8090 = vrsqrt.pop %v8082
          %v8091 = vrsqrt.pop %v8083
          %v8092 = vrsqrt.pop %v8084
          %v8093 = vrsqrt.pop %v8085
          %v8094 = vrsqrt.pop %v8086
          %v8095 = vrsqrt.pop %v8087
          %v8096 = vrsqrt.pop %v8088
          %v8097 = vmul.f32 %v8009, %v8089
          %v8098 = vmul.f32 %v8010, %v8090
          %v8099 = vmul.f32 %v8011, %v8091
          %v8100 = vmul.f32 %v8012, %v8092
          %v8101 = vmul.f32 %v8013, %v8093
          %v8102 = vmul.f32 %v8014, %v8094
          %v8103 = vmul.f32 %v8015, %v8095
          %v8104 = vmul.f32 %v8016, %v8096
          %v8105 = vlaneseq
          %v8106 = vshrl.u32 %v8105, 7
          %v8107 = vsub.s32 1, %v8106
          %v8108 = vrot.slane %v7864, %v8107
          %v8109 = vlaneseq
          %v8110 = vshrl.u32 %v8109, 7
          %v8111 = vsub.s32 5, %v8110
          %v8112 = vrot.slane %v7864, %v8111
          %v8113 = vlaneseq
          %v8114 = vshrl.u32 %v8113, 7
          %v8115 = vsub.s32 1, %v8114
          %v8116 = vrot.slane %v7865, %v8115
          %v8117 = vlaneseq
          %v8118 = vshrl.u32 %v8117, 7
          %v8119 = vsub.s32 5, %v8118
          %v8120 = vrot.slane %v7865, %v8119
          %v8121 = vlaneseq
          %v8122 = vshrl.u32 %v8121, 7
          %v8123 = vsub.s32 1, %v8122
          %v8124 = vrot.slane %v7866, %v8123
          %v8125 = vlaneseq
          %v8126 = vshrl.u32 %v8125, 7
          %v8127 = vsub.s32 5, %v8126
          %v8128 = vrot.slane %v7866, %v8127
          %v8129 = vlaneseq
          %v8130 = vshrl.u32 %v8129, 7
          %v8131 = vsub.s32 1, %v8130
          %v8132 = vrot.slane %v7867, %v8131
          %v8133 = vlaneseq
          %v8134 = vshrl.u32 %v8133, 7
          %v8135 = vsub.s32 5, %v8134
          %v8136 = vrot.slane %v7867, %v8135
          %v8145 = vlaneseq
          %v8146 = vshrl.u32 %v8145, 7
          %v8147 = vsub.s32 1, %v8146
          %v8148 = vrot.slane %v8108, %v8147
          %v8149 = vlaneseq
          %v8150 = vshrl.u32 %v8149, 7
          %v8151 = vsub.s32 1, %v8150
          %v8152 = vrot.slane %v8112, %v8151
          %v8153 = vlaneseq
          %v8154 = vshrl.u32 %v8153, 7
          %v8155 = vsub.s32 1, %v8154
          %v8156 = vrot.slane %v8116, %v8155
          %v8157 = vlaneseq
          %v8158 = vshrl.u32 %v8157, 7
          %v8159 = vsub.s32 1, %v8158
          %v8160 = vrot.slane %v8120, %v8159
          %v8161 = vlaneseq
          %v8162 = vshrl.u32 %v8161, 7
          %v8163 = vsub.s32 1, %v8162
          %v8164 = vrot.slane %v8124, %v8163
          %v8165 = vlaneseq
          %v8166 = vshrl.u32 %v8165, 7
          %v8167 = vsub.s32 1, %v8166
          %v8168 = vrot.slane %v8128, %v8167
          %v8169 = vlaneseq
          %v8170 = vshrl.u32 %v8169, 7
          %v8171 = vsub.s32 1, %v8170
          %v8172 = vrot.slane %v8132, %v8171
          %v8173 = vlaneseq
          %v8174 = vshrl.u32 %v8173, 7
          %v8175 = vsub.s32 1, %v8174
          %v8176 = vrot.slane %v8136, %v8175
          %v8177 = vmul.f32 %v8148, %v8097
          %v8178 = vmul.f32 %v8152, %v8098
          %v8179 = vmul.f32 %v8156, %v8099
          %v8180 = vmul.f32 %v8160, %v8100
          %v8181 = vmul.f32 %v8164, %v8101
          %v8182 = vmul.f32 %v8168, %v8102
          %v8183 = vmul.f32 %v8172, %v8103
          %v8184 = vmul.f32 %v8176, %v8104
          %v8185 = vlaneseq
          %v8186 = vshrl.u32 %v8185, 7
          %v8187 = vsub.s32 2, %v8186
          %v8188 = vrot.slane %v7864, %v8187
          %v8189 = vlaneseq
          %v8190 = vshrl.u32 %v8189, 7
          %v8191 = vsub.s32 6, %v8190
          %v8192 = vrot.slane %v7864, %v8191
          %v8193 = vlaneseq
          %v8194 = vshrl.u32 %v8193, 7
          %v8195 = vsub.s32 2, %v8194
          %v8196 = vrot.slane %v7865, %v8195
          %v8197 = vlaneseq
          %v8198 = vshrl.u32 %v8197, 7
          %v8199 = vsub.s32 6, %v8198
          %v8200 = vrot.slane %v7865, %v8199
          %v8201 = vlaneseq
          %v8202 = vshrl.u32 %v8201, 7
          %v8203 = vsub.s32 2, %v8202
          %v8204 = vrot.slane %v7866, %v8203
          %v8205 = vlaneseq
          %v8206 = vshrl.u32 %v8205, 7
          %v8207 = vsub.s32 6, %v8206
          %v8208 = vrot.slane %v7866, %v8207
          %v8209 = vlaneseq
          %v8210 = vshrl.u32 %v8209, 7
          %v8211 = vsub.s32 2, %v8210
          %v8212 = vrot.slane %v7867, %v8211
          %v8213 = vlaneseq
          %v8214 = vshrl.u32 %v8213, 7
          %v8215 = vsub.s32 6, %v8214
          %v8216 = vrot.slane %v7867, %v8215
          %v8225 = vlaneseq
          %v8226 = vshrl.u32 %v8225, 7
          %v8227 = vsub.s32 2, %v8226
          %v8228 = vrot.slane %v8188, %v8227
          %v8229 = vlaneseq
          %v8230 = vshrl.u32 %v8229, 7
          %v8231 = vsub.s32 2, %v8230
          %v8232 = vrot.slane %v8192, %v8231
          %v8233 = vlaneseq
          %v8234 = vshrl.u32 %v8233, 7
          %v8235 = vsub.s32 2, %v8234
          %v8236 = vrot.slane %v8196, %v8235
          %v8237 = vlaneseq
          %v8238 = vshrl.u32 %v8237, 7
          %v8239 = vsub.s32 2, %v8238
          %v8240 = vrot.slane %v8200, %v8239
          %v8241 = vlaneseq
          %v8242 = vshrl.u32 %v8241, 7
          %v8243 = vsub.s32 2, %v8242
          %v8244 = vrot.slane %v8204, %v8243
          %v8245 = vlaneseq
          %v8246 = vshrl.u32 %v8245, 7
          %v8247 = vsub.s32 2, %v8246
          %v8248 = vrot.slane %v8208, %v8247
          %v8249 = vlaneseq
          %v8250 = vshrl.u32 %v8249, 7
          %v8251 = vsub.s32 2, %v8250
          %v8252 = vrot.slane %v8212, %v8251
          %v8253 = vlaneseq
          %v8254 = vshrl.u32 %v8253, 7
          %v8255 = vsub.s32 2, %v8254
          %v8256 = vrot.slane %v8216, %v8255
          %v8257 = vadd.f32 %v8177, %v8228
          %v8258 = vadd.f32 %v8178, %v8232
          %v8259 = vadd.f32 %v8179, %v8236
          %v8260 = vadd.f32 %v8180, %v8240
          %v8261 = vadd.f32 %v8181, %v8244
          %v8262 = vadd.f32 %v8182, %v8248
          %v8263 = vadd.f32 %v8183, %v8252
          %v8264 = vadd.f32 %v8184, %v8256
          %vm8265 = vcmp.ge.f32.partialorder %v8257, 0.0
          %vm8266 = vcmp.ge.f32.partialorder %v8258, 0.0
          %vm8267 = vcmp.ge.f32.partialorder %v8259, 0.0
          %vm8268 = vcmp.ge.f32.partialorder %v8260, 0.0
          %vm8269 = vcmp.ge.f32.partialorder %v8261, 0.0
          %vm8270 = vcmp.ge.f32.partialorder %v8262, 0.0
          %vm8271 = vcmp.ge.f32.partialorder %v8263, 0.0
          %vm8272 = vcmp.ge.f32.partialorder %v8264, 0.0
          %v8273 = vmul.f32 %v8257, 0.01
          %v8274 = vmul.f32 %v8258, 0.01
          %v8275 = vmul.f32 %v8259, 0.01
          %v8276 = vmul.f32 %v8260, 0.01
          %v8277 = vmul.f32 %v8261, 0.01
          %v8278 = vmul.f32 %v8262, 0.01
          %v8279 = vmul.f32 %v8263, 0.01
          %v8280 = vmul.f32 %v8264, 0.01
          %v8281 = vsel %vm8265, %v8257, %v8273
          %v8282 = vsel %vm8266, %v8258, %v8274
          %v8283 = vsel %vm8267, %v8259, %v8275
          %v8284 = vsel %vm8268, %v8260, %v8276
          %v8285 = vsel %vm8269, %v8261, %v8277
          %v8286 = vsel %vm8270, %v8262, %v8278
          %v8287 = vsel %vm8271, %v8263, %v8279
          %v8288 = vsel %vm8272, %v8264, %v8280
          %v8289 = vpack.c.bf16 %v8281, %v8281
          %v8290 = vpack.c.bf16 %v8282, %v8282
          %v8291 = vpack.c.bf16 %v8283, %v8283
          %v8292 = vpack.c.bf16 %v8284, %v8284
          %v8293 = vpack.c.bf16 %v8285, %v8285
          %v8294 = vpack.c.bf16 %v8286, %v8286
          %v8295 = vpack.c.bf16 %v8287, %v8287
          %v8296 = vpack.c.bf16 %v8288, %v8288
          %v8297 = vld [vmem:[#allocation8] sm:$0xf]
          %v8298 = vld [vmem:[#allocation8 + $0x4] sm:$0xf]
          %v8299 = vld [vmem:[#allocation8 + $0x8] sm:$0xf]
          %v8300 = vld [vmem:[#allocation8 + $0xc] sm:$0xf]
          %v8301 = vld [vmem:[#allocation8 + $0x10] sm:$0xf]
          %v8302 = vld [vmem:[#allocation8 + $0x14] sm:$0xf]
          %v8303 = vld [vmem:[#allocation8 + $0x18] sm:$0xf]
          %v8304 = vld [vmem:[#allocation8 + $0x1c] sm:$0xf]
          %v8305 = vld [vmem:[#allocation8 + $0x20] sm:$0xf]
          %v8306 = vld [vmem:[#allocation8 + $0x24] sm:$0xf]
          %v8307 = vld [vmem:[#allocation8 + $0x28] sm:$0xf]
          %v8308 = vld [vmem:[#allocation8 + $0x2c] sm:$0xf]
          %v8309 = vld [vmem:[#allocation8 + $0x30] sm:$0xf]
          %v8310 = vld [vmem:[#allocation8 + $0x34] sm:$0xf]
          %v8311 = vld [vmem:[#allocation8 + $0x38] sm:$0xf]
          %v8312 = vld [vmem:[#allocation8 + $0x3c] sm:$0xf]
          %v8313 = vld [vmem:[#allocation8 + $0x40] sm:$0xf]
          %v8314 = vld [vmem:[#allocation8 + $0x44] sm:$0xf]
          %v8315 = vld [vmem:[#allocation8 + $0x48] sm:$0xf]
          %v8316 = vld [vmem:[#allocation8 + $0x4c] sm:$0xf]
          %v8317 = vld [vmem:[#allocation8 + $0x50] sm:$0xf]
          %v8318 = vld [vmem:[#allocation8 + $0x54] sm:$0xf]
          %v8319 = vld [vmem:[#allocation8 + $0x58] sm:$0xf]
          %v8320 = vld [vmem:[#allocation8 + $0x5c] sm:$0xf]
          %v8321 = vld [vmem:[#allocation8 + $0x60] sm:$0xf]
          %v8322 = vld [vmem:[#allocation8 + $0x64] sm:$0xf]
          %v8323 = vld [vmem:[#allocation8 + $0x68] sm:$0xf]
          %v8324 = vld [vmem:[#allocation8 + $0x6c] sm:$0xf]
          %v8325 = vld [vmem:[#allocation8 + $0x70] sm:$0xf]
          %v8326 = vld [vmem:[#allocation8 + $0x74] sm:$0xf]
          %v8327 = vld [vmem:[#allocation8 + $0x78] sm:$0xf]
          %v8328 = vld [vmem:[#allocation8 + $0x7c] sm:$0xf]
          %v8329 = vld [vmem:[#allocation8 + $0x80] sm:$0xf]
          %v8330 = vld [vmem:[#allocation8 + $0x84] sm:$0xf]
          %v8331 = vld [vmem:[#allocation8 + $0x88] sm:$0xf]
          %v8332 = vld [vmem:[#allocation8 + $0x8c] sm:$0xf]
          %v8333 = vld [vmem:[#allocation8 + $0x90] sm:$0xf]
          %v8334 = vld [vmem:[#allocation8 + $0x94] sm:$0xf]
          %v8335 = vld [vmem:[#allocation8 + $0x98] sm:$0xf]
          %v8336 = vld [vmem:[#allocation8 + $0x9c] sm:$0xf]
          %v8337 = vld [vmem:[#allocation8 + $0xa0] sm:$0xf]
          %v8338 = vld [vmem:[#allocation8 + $0xa4] sm:$0xf]
          %v8339 = vld [vmem:[#allocation8 + $0xa8] sm:$0xf]
          %v8340 = vld [vmem:[#allocation8 + $0xac] sm:$0xf]
          %v8341 = vld [vmem:[#allocation8 + $0xb0] sm:$0xf]
          %v8342 = vld [vmem:[#allocation8 + $0xb4] sm:$0xf]
          %v8343 = vld [vmem:[#allocation8 + $0xb8] sm:$0xf]
          %v8344 = vld [vmem:[#allocation8 + $0xbc] sm:$0xf]
          %v8345 = vld [vmem:[#allocation8 + $0xc0] sm:$0xf]
          %v8346 = vld [vmem:[#allocation8 + $0xc4] sm:$0xf]
          %v8347 = vld [vmem:[#allocation8 + $0xc8] sm:$0xf]
          %v8348 = vld [vmem:[#allocation8 + $0xcc] sm:$0xf]
          %v8349 = vld [vmem:[#allocation8 + $0xd0] sm:$0xf]
          %v8350 = vld [vmem:[#allocation8 + $0xd4] sm:$0xf]
          %v8351 = vld [vmem:[#allocation8 + $0xd8] sm:$0xf]
          %v8352 = vld [vmem:[#allocation8 + $0xdc] sm:$0xf]
          %v8353 = vld [vmem:[#allocation8 + $0xe0] sm:$0xf]
          %v8354 = vld [vmem:[#allocation8 + $0xe4] sm:$0xf]
          %v8355 = vld [vmem:[#allocation8 + $0xe8] sm:$0xf]
          %v8356 = vld [vmem:[#allocation8 + $0xec] sm:$0xf]
          %v8357 = vld [vmem:[#allocation8 + $0xf0] sm:$0xf]
          %v8358 = vld [vmem:[#allocation8 + $0xf4] sm:$0xf]
          %v8359 = vld [vmem:[#allocation8 + $0xf8] sm:$0xf]
          %v8360 = vld [vmem:[#allocation8 + $0xfc] sm:$0xf]
          %v8361 = vld [vmem:[#allocation8 + $0x100] sm:$0xf]
          %v8362 = vld [vmem:[#allocation8 + $0x104] sm:$0xf]
          %v8363 = vld [vmem:[#allocation8 + $0x108] sm:$0xf]
          %v8364 = vld [vmem:[#allocation8 + $0x10c] sm:$0xf]
          %v8365 = vld [vmem:[#allocation8 + $0x110] sm:$0xf]
          %v8366 = vld [vmem:[#allocation8 + $0x114] sm:$0xf]
          %v8367 = vld [vmem:[#allocation8 + $0x118] sm:$0xf]
          %v8368 = vld [vmem:[#allocation8 + $0x11c] sm:$0xf]
          %v8369 = vld [vmem:[#allocation8 + $0x120] sm:$0xf]
          %v8370 = vld [vmem:[#allocation8 + $0x124] sm:$0xf]
          %v8371 = vld [vmem:[#allocation8 + $0x128] sm:$0xf]
          %v8372 = vld [vmem:[#allocation8 + $0x12c] sm:$0xf]
          %v8373 = vld [vmem:[#allocation8 + $0x130] sm:$0xf]
          %v8374 = vld [vmem:[#allocation8 + $0x134] sm:$0xf]
          %v8375 = vld [vmem:[#allocation8 + $0x138] sm:$0xf]
          %v8376 = vld [vmem:[#allocation8 + $0x13c] sm:$0xf]
          %v8377 = vld [vmem:[#allocation8 + $0x140] sm:$0xf]
          %v8378 = vld [vmem:[#allocation8 + $0x144] sm:$0xf]
          %v8379 = vld [vmem:[#allocation8 + $0x148] sm:$0xf]
          %v8380 = vld [vmem:[#allocation8 + $0x14c] sm:$0xf]
          %v8381 = vld [vmem:[#allocation8 + $0x150] sm:$0xf]
          %v8382 = vld [vmem:[#allocation8 + $0x154] sm:$0xf]
          %v8383 = vld [vmem:[#allocation8 + $0x158] sm:$0xf]
          %v8384 = vld [vmem:[#allocation8 + $0x15c] sm:$0xf]
          %v8385 = vld [vmem:[#allocation8 + $0x160] sm:$0xf]
          %v8386 = vld [vmem:[#allocation8 + $0x164] sm:$0xf]
          %v8387 = vld [vmem:[#allocation8 + $0x168] sm:$0xf]
          %v8388 = vld [vmem:[#allocation8 + $0x16c] sm:$0xf]
          %v8389 = vld [vmem:[#allocation8 + $0x170] sm:$0xf]
          %v8390 = vld [vmem:[#allocation8 + $0x174] sm:$0xf]
          %v8391 = vld [vmem:[#allocation8 + $0x178] sm:$0xf]
          %v8392 = vld [vmem:[#allocation8 + $0x17c] sm:$0xf]
          %v8393 = vld [vmem:[#allocation8 + $0x180] sm:$0xf]
          %v8394 = vld [vmem:[#allocation8 + $0x184] sm:$0xf]
          %v8395 = vld [vmem:[#allocation8 + $0x188] sm:$0xf]
          %v8396 = vld [vmem:[#allocation8 + $0x18c] sm:$0xf]
          %v8397 = vld [vmem:[#allocation8 + $0x190] sm:$0xf]
          %v8398 = vld [vmem:[#allocation8 + $0x194] sm:$0xf]
          %v8399 = vld [vmem:[#allocation8 + $0x198] sm:$0xf]
          %v8400 = vld [vmem:[#allocation8 + $0x19c] sm:$0xf]
          %v8401 = vld [vmem:[#allocation8 + $0x1a0] sm:$0xf]
          %v8402 = vld [vmem:[#allocation8 + $0x1a4] sm:$0xf]
          %v8403 = vld [vmem:[#allocation8 + $0x1a8] sm:$0xf]
          %v8404 = vld [vmem:[#allocation8 + $0x1ac] sm:$0xf]
          %v8405 = vld [vmem:[#allocation8 + $0x1b0] sm:$0xf]
          %v8406 = vld [vmem:[#allocation8 + $0x1b4] sm:$0xf]
          %v8407 = vld [vmem:[#allocation8 + $0x1b8] sm:$0xf]
          %v8408 = vld [vmem:[#allocation8 + $0x1bc] sm:$0xf]
          %v8409 = vld [vmem:[#allocation8 + $0x1c0] sm:$0xf]
          %v8410 = vld [vmem:[#allocation8 + $0x1c4] sm:$0xf]
          %v8411 = vld [vmem:[#allocation8 + $0x1c8] sm:$0xf]
          %v8412 = vld [vmem:[#allocation8 + $0x1cc] sm:$0xf]
          %v8413 = vld [vmem:[#allocation8 + $0x1d0] sm:$0xf]
          %v8414 = vld [vmem:[#allocation8 + $0x1d4] sm:$0xf]
          %v8415 = vld [vmem:[#allocation8 + $0x1d8] sm:$0xf]
          %v8416 = vld [vmem:[#allocation8 + $0x1dc] sm:$0xf]
          %v8417 = vld [vmem:[#allocation8 + $0x1e0] sm:$0xf]
          %v8418 = vld [vmem:[#allocation8 + $0x1e4] sm:$0xf]
          %v8419 = vld [vmem:[#allocation8 + $0x1e8] sm:$0xf]
          %v8420 = vld [vmem:[#allocation8 + $0x1ec] sm:$0xf]
          %v8421 = vld [vmem:[#allocation8 + $0x1f0] sm:$0xf]
          %v8422 = vld [vmem:[#allocation8 + $0x1f4] sm:$0xf]
          %v8423 = vld [vmem:[#allocation8 + $0x1f8] sm:$0xf]
          %v8424 = vld [vmem:[#allocation8 + $0x1fc] sm:$0xf]
          %v8425 = vld [vmem:[#allocation9] sm:$0x7]
          %v8426 = vlaneseq
          %v8427 = vshrl.u32 %v8426, 7
          %v8428 = vsub.s32 0, %v8427
          %v8429 = vrot.slane %v8425, %v8428
          %v8558 = vunpack.c.l.b16 %v8297
          %v8559 = vunpack.c.l.b16 %v8298
          %v8560 = vunpack.c.l.b16 %v8299
          %v8561 = vunpack.c.l.b16 %v8300
          %v8562 = vunpack.c.l.b16 %v8301
          %v8563 = vunpack.c.l.b16 %v8302
          %v8564 = vunpack.c.l.b16 %v8303
          %v8565 = vunpack.c.l.b16 %v8304
          %v8566 = vunpack.c.l.b16 %v8305
          %v8567 = vunpack.c.l.b16 %v8306
          %v8568 = vunpack.c.l.b16 %v8307
          %v8569 = vunpack.c.l.b16 %v8308
          %v8570 = vunpack.c.l.b16 %v8309
          %v8571 = vunpack.c.l.b16 %v8310
          %v8572 = vunpack.c.l.b16 %v8311
          %v8573 = vunpack.c.l.b16 %v8312
          %v8574 = vunpack.c.l.b16 %v8313
          %v8575 = vunpack.c.l.b16 %v8314
          %v8576 = vunpack.c.l.b16 %v8315
          %v8577 = vunpack.c.l.b16 %v8316
          %v8578 = vunpack.c.l.b16 %v8317
          %v8579 = vunpack.c.l.b16 %v8318
          %v8580 = vunpack.c.l.b16 %v8319
          %v8581 = vunpack.c.l.b16 %v8320
          %v8582 = vunpack.c.l.b16 %v8321
          %v8583 = vunpack.c.l.b16 %v8322
          %v8584 = vunpack.c.l.b16 %v8323
          %v8585 = vunpack.c.l.b16 %v8324
          %v8586 = vunpack.c.l.b16 %v8325
          %v8587 = vunpack.c.l.b16 %v8326
          %v8588 = vunpack.c.l.b16 %v8327
          %v8589 = vunpack.c.l.b16 %v8328
          %v8590 = vunpack.c.l.b16 %v8329
          %v8591 = vunpack.c.l.b16 %v8330
          %v8592 = vunpack.c.l.b16 %v8331
          %v8593 = vunpack.c.l.b16 %v8332
          %v8594 = vunpack.c.l.b16 %v8333
          %v8595 = vunpack.c.l.b16 %v8334
          %v8596 = vunpack.c.l.b16 %v8335
          %v8597 = vunpack.c.l.b16 %v8336
          %v8598 = vunpack.c.l.b16 %v8337
          %v8599 = vunpack.c.l.b16 %v8338
          %v8600 = vunpack.c.l.b16 %v8339
          %v8601 = vunpack.c.l.b16 %v8340
          %v8602 = vunpack.c.l.b16 %v8341
          %v8603 = vunpack.c.l.b16 %v8342
          %v8604 = vunpack.c.l.b16 %v8343
          %v8605 = vunpack.c.l.b16 %v8344
          %v8606 = vunpack.c.l.b16 %v8345
          %v8607 = vunpack.c.l.b16 %v8346
          %v8608 = vunpack.c.l.b16 %v8347
          %v8609 = vunpack.c.l.b16 %v8348
          %v8610 = vunpack.c.l.b16 %v8349
          %v8611 = vunpack.c.l.b16 %v8350
          %v8612 = vunpack.c.l.b16 %v8351
          %v8613 = vunpack.c.l.b16 %v8352
          %v8614 = vunpack.c.l.b16 %v8353
          %v8615 = vunpack.c.l.b16 %v8354
          %v8616 = vunpack.c.l.b16 %v8355
          %v8617 = vunpack.c.l.b16 %v8356
          %v8618 = vunpack.c.l.b16 %v8357
          %v8619 = vunpack.c.l.b16 %v8358
          %v8620 = vunpack.c.l.b16 %v8359
          %v8621 = vunpack.c.l.b16 %v8360
          %v8622 = vunpack.c.l.b16 %v8361
          %v8623 = vunpack.c.l.b16 %v8362
          %v8624 = vunpack.c.l.b16 %v8363
          %v8625 = vunpack.c.l.b16 %v8364
          %v8626 = vunpack.c.l.b16 %v8365
          %v8627 = vunpack.c.l.b16 %v8366
          %v8628 = vunpack.c.l.b16 %v8367
          %v8629 = vunpack.c.l.b16 %v8368
          %v8630 = vunpack.c.l.b16 %v8369
          %v8631 = vunpack.c.l.b16 %v8370
          %v8632 = vunpack.c.l.b16 %v8371
          %v8633 = vunpack.c.l.b16 %v8372
          %v8634 = vunpack.c.l.b16 %v8373
          %v8635 = vunpack.c.l.b16 %v8374
          %v8636 = vunpack.c.l.b16 %v8375
          %v8637 = vunpack.c.l.b16 %v8376
          %v8638 = vunpack.c.l.b16 %v8377
          %v8639 = vunpack.c.l.b16 %v8378
          %v8640 = vunpack.c.l.b16 %v8379
          %v8641 = vunpack.c.l.b16 %v8380
          %v8642 = vunpack.c.l.b16 %v8381
          %v8643 = vunpack.c.l.b16 %v8382
          %v8644 = vunpack.c.l.b16 %v8383
          %v8645 = vunpack.c.l.b16 %v8384
          %v8646 = vunpack.c.l.b16 %v8385
          %v8647 = vunpack.c.l.b16 %v8386
          %v8648 = vunpack.c.l.b16 %v8387
          %v8649 = vunpack.c.l.b16 %v8388
          %v8650 = vunpack.c.l.b16 %v8389
          %v8651 = vunpack.c.l.b16 %v8390
          %v8652 = vunpack.c.l.b16 %v8391
          %v8653 = vunpack.c.l.b16 %v8392
          %v8654 = vunpack.c.l.b16 %v8393
          %v8655 = vunpack.c.l.b16 %v8394
          %v8656 = vunpack.c.l.b16 %v8395
          %v8657 = vunpack.c.l.b16 %v8396
          %v8658 = vunpack.c.l.b16 %v8397
          %v8659 = vunpack.c.l.b16 %v8398
          %v8660 = vunpack.c.l.b16 %v8399
          %v8661 = vunpack.c.l.b16 %v8400
          %v8662 = vunpack.c.l.b16 %v8401
          %v8663 = vunpack.c.l.b16 %v8402
          %v8664 = vunpack.c.l.b16 %v8403
          %v8665 = vunpack.c.l.b16 %v8404
          %v8666 = vunpack.c.l.b16 %v8405
          %v8667 = vunpack.c.l.b16 %v8406
          %v8668 = vunpack.c.l.b16 %v8407
          %v8669 = vunpack.c.l.b16 %v8408
          %v8670 = vunpack.c.l.b16 %v8409
          %v8671 = vunpack.c.l.b16 %v8410
          %v8672 = vunpack.c.l.b16 %v8411
          %v8673 = vunpack.c.l.b16 %v8412
          %v8674 = vunpack.c.l.b16 %v8413
          %v8675 = vunpack.c.l.b16 %v8414
          %v8676 = vunpack.c.l.b16 %v8415
          %v8677 = vunpack.c.l.b16 %v8416
          %v8678 = vunpack.c.l.b16 %v8417
          %v8679 = vunpack.c.l.b16 %v8418
          %v8680 = vunpack.c.l.b16 %v8419
          %v8681 = vunpack.c.l.b16 %v8420
          %v8682 = vunpack.c.l.b16 %v8421
          %v8683 = vunpack.c.l.b16 %v8422
          %v8684 = vunpack.c.l.b16 %v8423
          %v8685 = vunpack.c.l.b16 %v8424
          %v8686 = vpack.c.b16 %v8559, %v8558
          %v8687 = vpack.c.b16 %v8561, %v8560
          %v8688 = vpack.c.b16 %v8563, %v8562
          %v8689 = vpack.c.b16 %v8565, %v8564
          %v8690 = vpack.c.b16 %v8567, %v8566
          %v8691 = vpack.c.b16 %v8569, %v8568
          %v8692 = vpack.c.b16 %v8571, %v8570
          %v8693 = vpack.c.b16 %v8573, %v8572
          %v8694 = vpack.c.b16 %v8575, %v8574
          %v8695 = vpack.c.b16 %v8577, %v8576
          %v8696 = vpack.c.b16 %v8579, %v8578
          %v8697 = vpack.c.b16 %v8581, %v8580
          %v8698 = vpack.c.b16 %v8583, %v8582
          %v8699 = vpack.c.b16 %v8585, %v8584
          %v8700 = vpack.c.b16 %v8587, %v8586
          %v8701 = vpack.c.b16 %v8589, %v8588
          %v8702 = vpack.c.b16 %v8591, %v8590
          %v8703 = vpack.c.b16 %v8593, %v8592
          %v8704 = vpack.c.b16 %v8595, %v8594
          %v8705 = vpack.c.b16 %v8597, %v8596
          %v8706 = vpack.c.b16 %v8599, %v8598
          %v8707 = vpack.c.b16 %v8601, %v8600
          %v8708 = vpack.c.b16 %v8603, %v8602
          %v8709 = vpack.c.b16 %v8605, %v8604
          %v8710 = vpack.c.b16 %v8607, %v8606
          %v8711 = vpack.c.b16 %v8609, %v8608
          %v8712 = vpack.c.b16 %v8611, %v8610
          %v8713 = vpack.c.b16 %v8613, %v8612
          %v8714 = vpack.c.b16 %v8615, %v8614
          %v8715 = vpack.c.b16 %v8617, %v8616
          %v8716 = vpack.c.b16 %v8619, %v8618
          %v8717 = vpack.c.b16 %v8621, %v8620
          %v8718 = vpack.c.b16 %v8623, %v8622
          %v8719 = vpack.c.b16 %v8625, %v8624
          %v8720 = vpack.c.b16 %v8627, %v8626
          %v8721 = vpack.c.b16 %v8629, %v8628
          %v8722 = vpack.c.b16 %v8631, %v8630
          %v8723 = vpack.c.b16 %v8633, %v8632
          %v8724 = vpack.c.b16 %v8635, %v8634
          %v8725 = vpack.c.b16 %v8637, %v8636
          %v8726 = vpack.c.b16 %v8639, %v8638
          %v8727 = vpack.c.b16 %v8641, %v8640
          %v8728 = vpack.c.b16 %v8643, %v8642
          %v8729 = vpack.c.b16 %v8645, %v8644
          %v8730 = vpack.c.b16 %v8647, %v8646
          %v8731 = vpack.c.b16 %v8649, %v8648
          %v8732 = vpack.c.b16 %v8651, %v8650
          %v8733 = vpack.c.b16 %v8653, %v8652
          %v8734 = vpack.c.b16 %v8655, %v8654
          %v8735 = vpack.c.b16 %v8657, %v8656
          %v8736 = vpack.c.b16 %v8659, %v8658
          %v8737 = vpack.c.b16 %v8661, %v8660
          %v8738 = vpack.c.b16 %v8663, %v8662
          %v8739 = vpack.c.b16 %v8665, %v8664
          %v8740 = vpack.c.b16 %v8667, %v8666
          %v8741 = vpack.c.b16 %v8669, %v8668
          %v8742 = vpack.c.b16 %v8671, %v8670
          %v8743 = vpack.c.b16 %v8673, %v8672
          %v8744 = vpack.c.b16 %v8675, %v8674
          %v8745 = vpack.c.b16 %v8677, %v8676
          %v8746 = vpack.c.b16 %v8679, %v8678
          %v8747 = vpack.c.b16 %v8681, %v8680
          %v8748 = vpack.c.b16 %v8683, %v8682
          %v8749 = vpack.c.b16 %v8685, %v8684
          %8814 = vmatprep.subr.bf16.mxu0 0
          %8815 = vmatpush1.bf16.msra.mxu0 %v8686
          %8816 = vmatprep.subr.bf16.mxu0 0
          %8817 = vmatpush1.bf16.msra.mxu0 %v8687
          %8818 = vmatprep.subr.bf16.mxu0 0
          %8819 = vmatpush1.bf16.msra.mxu0 %v8688
          %8820 = vmatprep.subr.bf16.mxu0 0
          %8821 = vmatpush1.bf16.msra.mxu0 %v8689
          %8822 = vmatprep.subr.bf16.mxu0 0
          %8823 = vmatpush1.bf16.msra.mxu0 %v8690
          %8824 = vmatprep.subr.bf16.mxu0 0
          %8825 = vmatpush1.bf16.msra.mxu0 %v8691
          %8826 = vmatprep.subr.bf16.mxu0 0
          %8827 = vmatpush1.bf16.msra.mxu0 %v8692
          %8828 = vmatprep.subr.bf16.mxu0 0
          %8829 = vmatpush1.bf16.msra.mxu0 %v8693
          %8830 = vmatprep.subr.bf16.mxu0 0
          %8831 = vmatpush1.bf16.msra.mxu0 %v8694
          %8832 = vmatprep.subr.bf16.mxu0 0
          %8833 = vmatpush1.bf16.msra.mxu0 %v8695
          %8834 = vmatprep.subr.bf16.mxu0 0
          %8835 = vmatpush1.bf16.msra.mxu0 %v8696
          %8836 = vmatprep.subr.bf16.mxu0 0
          %8837 = vmatpush1.bf16.msra.mxu0 %v8697
          %8838 = vmatprep.subr.bf16.mxu0 0
          %8839 = vmatpush1.bf16.msra.mxu0 %v8698
          %8840 = vmatprep.subr.bf16.mxu0 0
          %8841 = vmatpush1.bf16.msra.mxu0 %v8699
          %8842 = vmatprep.subr.bf16.mxu0 0
          %8843 = vmatpush1.bf16.msra.mxu0 %v8700
          %8844 = vmatprep.subr.bf16.mxu0 0
          %8845 = vmatpush1.bf16.msra.mxu0 %v8701
          %8846 = vmatprep.mubr.bf16.mxu0 %v8290
          %8847 = vmatmul.mubr.bf16.gmra.mrb[0].mxu0 %v8289
          %v8848 = vpop.f32.mrb[0].mxu0
          %v8849 = vadd.f32 %v8429, %v8848
          %v8850 = vpop.f32.mrb[0].mxu0
          %v8851 = vpop.f32.mrb[0].mxu0
          %v8852 = vpop.f32.mrb[0].mxu0
          %8853 = vdwg.mxu0
          %8854 = vmatprep.subr.bf16.mxu0 0
          %8855 = vmatpush1.bf16.msra.mxu0 %v8702
          %8856 = vmatprep.subr.bf16.mxu0 0
          %8857 = vmatpush1.bf16.msra.mxu0 %v8703
          %8858 = vmatprep.subr.bf16.mxu0 0
          %8859 = vmatpush1.bf16.msra.mxu0 %v8704
          %8860 = vmatprep.subr.bf16.mxu0 0
          %8861 = vmatpush1.bf16.msra.mxu0 %v8705
          %8862 = vmatprep.subr.bf16.mxu0 0
          %8863 = vmatpush1.bf16.msra.mxu0 %v8706
          %8864 = vmatprep.subr.bf16.mxu0 0
          %8865 = vmatpush1.bf16.msra.mxu0 %v8707
          %8866 = vmatprep.subr.bf16.mxu0 0
          %8867 = vmatpush1.bf16.msra.mxu0 %v8708
          %8868 = vmatprep.subr.bf16.mxu0 0
          %8869 = vmatpush1.bf16.msra.mxu0 %v8709
          %8870 = vmatprep.subr.bf16.mxu0 0
          %8871 = vmatpush1.bf16.msra.mxu0 %v8710
          %8872 = vmatprep.subr.bf16.mxu0 0
          %8873 = vmatpush1.bf16.msra.mxu0 %v8711
          %8874 = vmatprep.subr.bf16.mxu0 0
          %8875 = vmatpush1.bf16.msra.mxu0 %v8712
          %8876 = vmatprep.subr.bf16.mxu0 0
          %8877 = vmatpush1.bf16.msra.mxu0 %v8713
          %8878 = vmatprep.subr.bf16.mxu0 0
          %8879 = vmatpush1.bf16.msra.mxu0 %v8714
          %8880 = vmatprep.subr.bf16.mxu0 0
          %8881 = vmatpush1.bf16.msra.mxu0 %v8715
          %8882 = vmatprep.subr.bf16.mxu0 0
          %8883 = vmatpush1.bf16.msra.mxu0 %v8716
          %8884 = vmatprep.subr.bf16.mxu0 0
          %8885 = vmatpush1.bf16.msra.mxu0 %v8717
          %8886 = vmatprep.mubr.bf16.mxu0 %v8292
          %8887 = vmatmul.mubr.bf16.gmra.mrb[0].mxu0 %v8291
          %v8888 = vpop.f32.mrb[0].mxu0
          %v8889 = vadd.f32 %v8849, %v8888
          %v8890 = vpop.f32.mrb[0].mxu0
          %v8891 = vpop.f32.mrb[0].mxu0
          %v8892 = vpop.f32.mrb[0].mxu0
          %8893 = vdwg.mxu0
          %8894 = vmatprep.subr.bf16.mxu0 0
          %8895 = vmatpush1.bf16.msra.mxu0 %v8718
          %8896 = vmatprep.subr.bf16.mxu0 0
          %8897 = vmatpush1.bf16.msra.mxu0 %v8719
          %8898 = vmatprep.subr.bf16.mxu0 0
          %8899 = vmatpush1.bf16.msra.mxu0 %v8720
          %8900 = vmatprep.subr.bf16.mxu0 0
          %8901 = vmatpush1.bf16.msra.mxu0 %v8721
          %8902 = vmatprep.subr.bf16.mxu0 0
          %8903 = vmatpush1.bf16.msra.mxu0 %v8722
          %8904 = vmatprep.subr.bf16.mxu0 0
          %8905 = vmatpush1.bf16.msra.mxu0 %v8723
          %8906 = vmatprep.subr.bf16.mxu0 0
          %8907 = vmatpush1.bf16.msra.mxu0 %v8724
          %8908 = vmatprep.subr.bf16.mxu0 0
          %8909 = vmatpush1.bf16.msra.mxu0 %v8725
          %8910 = vmatprep.subr.bf16.mxu0 0
          %8911 = vmatpush1.bf16.msra.mxu0 %v8726
          %8912 = vmatprep.subr.bf16.mxu0 0
          %8913 = vmatpush1.bf16.msra.mxu0 %v8727
          %8914 = vmatprep.subr.bf16.mxu0 0
          %8915 = vmatpush1.bf16.msra.mxu0 %v8728
          %8916 = vmatprep.subr.bf16.mxu0 0
          %8917 = vmatpush1.bf16.msra.mxu0 %v8729
          %8918 = vmatprep.subr.bf16.mxu0 0
          %8919 = vmatpush1.bf16.msra.mxu0 %v8730
          %8920 = vmatprep.subr.bf16.mxu0 0
          %8921 = vmatpush1.bf16.msra.mxu0 %v8731
          %8922 = vmatprep.subr.bf16.mxu0 0
          %8923 = vmatpush1.bf16.msra.mxu0 %v8732
          %8924 = vmatprep.subr.bf16.mxu0 0
          %8925 = vmatpush1.bf16.msra.mxu0 %v8733
          %8926 = vmatprep.mubr.bf16.mxu0 %v8294
          %8927 = vmatmul.mubr.bf16.gmra.mrb[0].mxu0 %v8293
          %v8928 = vpop.f32.mrb[0].mxu0
          %v8929 = vadd.f32 %v8889, %v8928
          %v8930 = vpop.f32.mrb[0].mxu0
          %v8931 = vpop.f32.mrb[0].mxu0
          %v8932 = vpop.f32.mrb[0].mxu0
          %8933 = vdwg.mxu0
          %8934 = vmatprep.subr.bf16.mxu0 0
          %8935 = vmatpush1.bf16.msra.mxu0 %v8734
          %8936 = vmatprep.subr.bf16.mxu0 0
          %8937 = vmatpush1.bf16.msra.mxu0 %v8735
          %8938 = vmatprep.subr.bf16.mxu0 0
          %8939 = vmatpush1.bf16.msra.mxu0 %v8736
          %8940 = vmatprep.subr.bf16.mxu0 0
          %8941 = vmatpush1.bf16.msra.mxu0 %v8737
          %8942 = vmatprep.subr.bf16.mxu0 0
          %8943 = vmatpush1.bf16.msra.mxu0 %v8738
          %8944 = vmatprep.subr.bf16.mxu0 0
          %8945 = vmatpush1.bf16.msra.mxu0 %v8739
          %8946 = vmatprep.subr.bf16.mxu0 0
          %8947 = vmatpush1.bf16.msra.mxu0 %v8740
          %8948 = vmatprep.subr.bf16.mxu0 0
          %8949 = vmatpush1.bf16.msra.mxu0 %v8741
          %8950 = vmatprep.subr.bf16.mxu0 0
          %8951 = vmatpush1.bf16.msra.mxu0 %v8742
          %8952 = vmatprep.subr.bf16.mxu0 0
          %8953 = vmatpush1.bf16.msra.mxu0 %v8743
          %8954 = vmatprep.subr.bf16.mxu0 0
          %8955 = vmatpush1.bf16.msra.mxu0 %v8744
          %8956 = vmatprep.subr.bf16.mxu0 0
          %8957 = vmatpush1.bf16.msra.mxu0 %v8745
          %8958 = vmatprep.subr.bf16.mxu0 0
          %8959 = vmatpush1.bf16.msra.mxu0 %v8746
          %8960 = vmatprep.subr.bf16.mxu0 0
          %8961 = vmatpush1.bf16.msra.mxu0 %v8747
          %8962 = vmatprep.subr.bf16.mxu0 0
          %8963 = vmatpush1.bf16.msra.mxu0 %v8748
          %8964 = vmatprep.subr.bf16.mxu0 0
          %8965 = vmatpush1.bf16.msra.mxu0 %v8749
          %8966 = vmatprep.mubr.bf16.mxu0 %v8296
          %8967 = vmatmul.mubr.bf16.gmra.mrb[0].mxu0 %v8295
          %v8968 = vpop.f32.mrb[0].mxu0
          %v8969 = vadd.f32 %v8929, %v8968
          %v8970 = vpop.f32.mrb[0].mxu0
          %v8971 = vpop.f32.mrb[0].mxu0
          %v8972 = vpop.f32.mrb[0].mxu0
          %8973 = vdwg.mxu0
          %v8974 = vrot.slane %v8969, 4
          %v8975 = vadd.f32 %v8969, %v8974
          %v8976 = vrot.slane %v8975, 2
          %v8977 = vadd.f32 %v8975, %v8976
          %v8978 = vrot.slane %v8977, 1
          %v8979 = vadd.f32 %v8977, %v8978
          %v8980 = vmul.f32 %v8979, %v8000
          %v8981 = vsub.f32 %v8969, %v8980
          %v8982 = vmul.f32 %v8981, %v8981
          %v8983 = vrot.slane %v8982, 4
          %v8984 = vadd.f32 %v8982, %v8983
          %v8985 = vrot.slane %v8984, 2
          %v8986 = vadd.f32 %v8984, %v8985
          %v8987 = vrot.slane %v8986, 1
          %v8988 = vadd.f32 %v8986, %v8987
          %v8989 = vmul.f32 %v8988, %v8000
          %v8990 = vadd.f32 %v8989, 1e-05
          %v8991 = vrsqrt.pop %v8990
          %v8992 = vmul.f32 %v8981, %v8991
          %v8993 = vlaneseq
          %v8994 = vshrl.u32 %v8993, 7
          %v8995 = vsub.s32 1, %v8994
          %v8996 = vrot.slane %v8425, %v8995
          %v8997 = vmul.f32 %v8996, %v8992
          %v8998 = vlaneseq
          %v8999 = vshrl.u32 %v8998, 7
          %v9000 = vsub.s32 2, %v8999
          %v9001 = vrot.slane %v8425, %v9000
          %v9002 = vadd.f32 %v8997, %v9001
          %vm9003 = vcmp.ge.f32.partialorder %v9002, 0.0
          %v9004 = vmul.f32 %v9002, 0.01
          %v9005 = vsel %vm9003, %v9002, %v9004
          %9006 = vst [vmem:[#allocation11] sm:$0xff] %v9005
        $region64: #{shallow2_forward.1} parent=39 // pred_fallthru
          _
        // Predicated region
        $region65: #{shallow2_forward.1} parent=39 // pred_check
          %p9007 = pneg %p150
        $region66: #{shallow2_forward.1} parent=39 // pred_check_branch
          %9009 = sbr.rel (%p9007) target = $region68
        $region67: #{shallow2_forward.1} parent=39 // pred_region
          %s9011 = ssub.s32 128, 128
          %9012 = vsyncadd [#allocation5], %s9011
          %s9014 = sshll.u32 [#allocation11], 4
          %s9015 = int_to_ptr.vmem [resolvable:$true] %s9014
          %9017 = dma.vmem_to_hbm [thread:$0]  %s9015, 128, %s5, [#allocation5]
        $region68: #{shallow2_forward.1} parent=39 // pred_fallthru
          _
        // Predicated region
        $region69: #{shallow2_forward.1} parent=39 // pred_check
          %p9018 = pneg %p150
        $region70: #{shallow2_forward.1} parent=39 // pred_check_branch
          %9020 = sbr.rel (%p9018) target = $region72
        $region71: #{shallow2_forward.1} parent=39 // pred_region
          %9021 = dma.done [#allocation5], 128
        $region72: #{shallow2_forward.1} parent=39 // pred_fallthru
          _
      $region40: #{shallow2_forward.1} parent=5 // pred_fallthru
        _
      %p9022 = scmp.le.s32.totalorder 2, %s17
      // Predicated region
      $region73: #{shallow2_forward.1} parent=5 // pred_check
        %p9023 = pneg %p9022
      $region74: #{shallow2_forward.1} parent=5 // pred_check_branch
        %9025 = sbr.rel (%p9023) target = $region76
      $region75: #{shallow2_forward.1} parent=5 // pred_region
        %s9026 = ssub.s32 %s17, 2
      $region76: #{shallow2_forward.1} parent=5 // pred_fallthru
        _
    $region6: #{shallow2_forward.1} parent=1 // loop_footer
      %s21 = sadd.s32 1, %s17
    $region7: #{shallow2_forward.1} parent=1 // loop_footer_branch
      %16 = sbr.rel target = $region3
    $region8: #{shallow2_forward.1} parent=1 // loop_exit
      _
    %9027 = vsyncpa [#allocation4], 1
    %s9028 = scalar_lea.sflag [#allocation4], 1
    %9029 = vsyncpa %s9028, 1
    %9030 = vsyncpa [#allocation7], 1
    %9031 = vsyncpa [#allocation10], 1
    %9032 = vsyncpa [#allocation5], 1
    %s9033 = scalar_lea.sflag [#allocation5], 1
    %9034 = vsyncpa %s9033, 1

</llo_original>
